<compile_context>
chip_gen: v7x
topology: tpu7x:2x2x1
jax: 0.10.0
libtpu: 0.0.40
codegen_flags: <defaults>
</compile_context>

<pallas_src>
import functools

import jax
import jax.numpy as jnp
from jax.experimental import pallas as pl
from jax.experimental.pallas import tpu as pltpu


def _round_up(x, m):
    return (x + m - 1) // m * m


def _vmem_capacity_bytes():
    try:
        return int(pltpu.get_tpu_info().vmem_capacity_bytes)
    except Exception:
        return 64 * 1024 * 1024          # conservative (v7x-sized) fallback


def _pick_batch_tile(B):
    """Batch tile (multiple of 8).  Keeps >= 4 grid steps along the parallel
    axis when the batch allows it, so on v7x both TensorCores get a pipelined
    stream of steps instead of one un-overlapped step each."""
    b8 = _round_up(B, 8)
    if b8 >= 32:
        return max(8, min(64, (b8 // 4) // 8 * 8))
    return b8


def _pick_spatial_chunk(P, TB, C, kp, override=None):
    """Largest multiple-of-8 divisor of P whose per-step working set fits the
    VMEM budget.  Accounts for the f32 activation chunk, the double-buffered
    lane-padded (kp < 128 -> 128 lanes) bf16 patch rows, resident weights and
    biases, the f32 pooled accumulator and the double-buffered output block."""
    if override is None:
        vmem = _vmem_capacity_bytes()
        resident = (2 * kp * C * 2          # conv weight (dbl-buffered bf16)
                    + 2 * C * 128 * 4       # linear weight (dbl-buffered f32)
                    + 16 * C * 4            # biases (sublane-padded)
                    + TB * C * 4            # pooled-sum accumulator scratch
                    + 2 * TB * 128 * 4)     # output block (dbl-buffered)
        budget = max(int(vmem * 0.4) - resident, 1)
        per_row = TB * (C * 4 + 2 * 128 * 2)   # f32 h row + 2x lane-padded patches
        tp = max(8, budget // per_row)
    else:
        tp = int(override)
    if tp >= P:
        return P
    divs = [d for d in range(8, P + 1, 8) if P % d == 0]
    if not divs:
        return P
    fitting = [d for d in divs if d <= tp]
    return max(fitting) if fitting else min(divs)


def _encoder_linear_kernel(patches_ref, wc_ref, bc_ref, wl_ref, bl_ref,
                           out_ref, acc_ref, *, tb, tp, inv_p):
    """One (batch-tile i, spatial-chunk k) grid step.

    patches_ref : [TB*TP, Kp] bf16   patch rows of this chunk (row = b*TP + t)
    wc_ref      : [Kp, C]     bf16   conv weight (grid-invariant -> resident)
    bc_ref      : [1, C]      f32    conv bias
    wl_ref      : [C, Fp]     f32    linear weight (lane-dense Fp)
    bl_ref      : [1, Fp]     f32    linear bias
    out_ref     : [TB, Fp]    f32    written only at the last spatial step
    acc_ref     : [TB, C]     f32    pooled-sum accumulator (VMEM scratch)
    """
    k = pl.program_id(1)

    @pl.when(k == 0)
    def _():
        acc_ref[...] = jnp.zeros_like(acc_ref)

    # conv-as-matmul on the MXU.  K is shallow (32) but this is the only MXU
    # work per chunk; wc's index_map is (0, 0) so the [32, 640] weight stays
    # resident in VMEM across all grid steps.
    h = jnp.dot(patches_ref[...], wc_ref[...],
                preferred_element_type=jnp.float32)            # [TB*TP, C] f32
    h = jnp.maximum(h + bc_ref[...], 0.0)                      # bias + ReLU (f32)
    # global-average-pool partial sum: plain VPU/XLU reduction (no pool matmul,
    # no bf16 copy of h).
    acc_ref[...] += h.reshape(tb, tp, -1).sum(axis=1)          # [TB, C] f32

    @pl.when(k == pl.num_programs(1) - 1)
    def _():
        pooled = acc_ref[...] * inv_p                          # [TB, C] f32
        out_ref[...] = (jnp.dot(pooled, wl_ref[...],
                                preferred_element_type=jnp.float32)
                        + bl_ref[...])                         # [TB, Fp] f32


def encoder_linear_forward(x_nchw, w_conv, b_conv, w_lin, b_lin,
                           spatial_chunk=None):
    """x_nchw: [B, Cin, H, W] float32.  Returns [B, 64] float32."""
    B, Cin, H, W = x_nchw.shape
    KH = KW = 3
    Cout = w_conv.shape[0]               # 640
    F = w_lin.shape[0]                   # 64
    P = H * W
    K = KH * KW * Cin
    KP = _round_up(K, 32)                # pad contraction dim (27 -> 32)
    FP = _round_up(F, 128)               # lane-dense output width

    TB = _pick_batch_tile(B)
    BP = _round_up(B, TB)
    n_b = BP // TB
    TP = _pick_spatial_chunk(P, TB, Cout, KP, override=spatial_chunk)
    n_k = P // TP

    # ---- glue: im2col on NHWC (tap order ky, kx, c); only x is transposed ----
    # TODO(synk): an in-kernel 9-tap gather on the padded NHWC x would avoid the
    #             ~9x patch duplication in HBM; kept host-side (jit-fused) since
    #             it is negligible at these shapes.
    x_nhwc = jnp.transpose(x_nchw, (0, 2, 3, 1)).astype(jnp.bfloat16)
    xp = jnp.pad(x_nhwc, ((0, 0), (1, 1), (1, 1), (0, 0)))
    taps = [xp[:, ky:ky + H, kx:kx + W, :] for ky in range(KH) for kx in range(KW)]
    patches = jnp.concatenate(taps, axis=-1).reshape(B, P, K)        # [B, P, K]
    patches = jnp.pad(patches, ((0, BP - B), (0, 0), (0, KP - K)))   # [BP, P, Kp]
    # reorder rows to (spatial-chunk, batch, within-chunk) so each (batch-tile x
    # spatial-chunk) block is a contiguous [TB*TP, Kp] slab: block index k*n_b+i.
    patches = (patches.reshape(BP, n_k, TP, KP)
               .transpose(1, 0, 2, 3)
               .reshape(n_k * BP * TP, KP))

    # conv weight [Cout, Cin, 3, 3] -> [(ky,kx,c), Cout], matching the tap order
    wc_mat = jnp.transpose(w_conv, (2, 3, 1, 0)).reshape(K, Cout)
    wc_mat = jnp.pad(wc_mat, ((0, KP - K), (0, 0))).astype(jnp.bfloat16)
    bc_mat = b_conv.reshape(1, Cout).astype(jnp.float32)
    # linear weight [F, C] (PyTorch) -> [C, Fp]; bias -> [1, Fp]; zero-padded.
    # Kept f32: it is tiny and keeps the head matmul un-quantized.
    wl_mat = jnp.pad(w_lin.T, ((0, 0), (0, FP - F))).astype(jnp.float32)
    bl_mat = jnp.pad(b_lin, (0, FP - F)).reshape(1, FP).astype(jnp.float32)

    vmem_limit = int(min(_vmem_capacity_bytes() * 3 // 4, 96 * 1024 * 1024))

    cost = pl.CostEstimate(
        flops=(2 * BP * P * KP * Cout          # conv matmul
               + 2 * BP * P * Cout             # bias + ReLU + pool adds
               + 2 * BP * Cout * FP),          # linear head
        transcendentals=0,
        bytes_accessed=(patches.size * 2 + wc_mat.size * 2 + bc_mat.size * 4
                        + wl_mat.size * 4 + bl_mat.size * 4 + BP * FP * 4),
    )

    kernel = functools.partial(_encoder_linear_kernel,
                               tb=TB, tp=TP, inv_p=float(1.0 / P))

    out = pl.pallas_call(
        kernel,
        out_shape=jax.ShapeDtypeStruct((BP, FP), jnp.float32),
        grid_spec=pltpu.PrefetchScalarGridSpec(
            num_scalar_prefetch=0,
            grid=(n_b, n_k),
            in_specs=[
                pl.BlockSpec((TB * TP, KP), lambda i, k: (k * n_b + i, 0)),
                pl.BlockSpec((KP, Cout), lambda i, k: (0, 0)),   # resident weights
                pl.BlockSpec((1, Cout), lambda i, k: (0, 0)),
                pl.BlockSpec((Cout, FP), lambda i, k: (0, 0)),
                pl.BlockSpec((1, FP), lambda i, k: (0, 0)),
            ],
            out_specs=pl.BlockSpec((TB, FP), lambda i, k: (i, 0)),
            scratch_shapes=[pltpu.VMEM((TB, Cout), jnp.float32)],
        ),
        compiler_params=pltpu.CompilerParams(
            dimension_semantics=("parallel", "arbitrary"),
            vmem_limit_bytes=vmem_limit),
        cost_estimate=cost,
    )(patches, wc_mat, bc_mat, wl_mat, bl_mat)
    return out[:B, :F]


def _reference(x_nchw, w_conv, b_conv, w_lin, b_lin):
    """Plain-JAX f32 reference of the same computation (correctness check)."""
    conv = jax.lax.conv_general_dilated(
        x_nchw, w_conv, window_strides=(1, 1), padding="SAME",
        dimension_numbers=("NCHW", "OIHW", "NCHW"))
    conv = jnp.maximum(conv + b_conv[None, :, None, None], 0.0)
    pooled = conv.mean(axis=(2, 3))                              # [B, 640]
    return pooled @ w_lin.T + b_lin[None, :]


if __name__ == "__main__":
    key = jax.random.PRNGKey(0)
    k_x, k_wc, k_bc, k_wl, k_bl = jax.random.split(key, 5)

    B, Cin, H, W = 32, 3, 16, 16        # small, but exercises batch tiling
    Cenc, Fout = 640, 64                # Linear(640, 64) of the module

    x = jax.random.normal(k_x, (B, Cin, H, W), dtype=jnp.float32)
    w_conv = 0.05 * jax.random.normal(k_wc, (Cenc, Cin, 3, 3), dtype=jnp.float32)
    b_conv = 0.01 * jax.random.normal(k_bc, (Cenc,), dtype=jnp.float32)
    w_lin = 0.05 * jax.random.normal(k_wl, (Fout, Cenc), dtype=jnp.float32)
    b_lin = 0.01 * jax.random.normal(k_bl, (Fout,), dtype=jnp.float32)

    ref = _reference(x, w_conv, b_conv, w_lin, b_lin)

    # default (VMEM-budget-driven) tiling
    out = jax.block_until_ready(
        jax.jit(encoder_linear_forward)(x, w_conv, b_conv, w_lin, b_lin))
    assert out.shape == (B, Fout)
    err = float(jnp.max(jnp.abs(out - ref)))
    assert jnp.allclose(out, ref, atol=2e-2, rtol=2e-2), (
        "mismatch vs reference (default tiling), max abs err = %g" % err)

    # force several spatial chunks to exercise the accumulation grid axis
    out_chunked = jax.block_until_ready(
        encoder_linear_forward(x, w_conv, b_conv, w_lin, b_lin, spatial_chunk=64))
    err_c = float(jnp.max(jnp.abs(out_chunked - ref)))
    assert jnp.allclose(out_chunked, ref, atol=2e-2, rtol=2e-2), (
        "mismatch vs reference (chunked), max abs err = %g" % err_c)

    print("KERNEL_OK")
</pallas_src>

<mosaic_0001>
module attributes {stable_mosaic.version = 11 : i64} {
  func.func @_encoder_linear_kernel(%arg0: i32, %arg1: i32, %arg2: memref<2048x32xbf16, #tpu.memory_space<vmem>>, %arg3: memref<32x640xbf16, #tpu.memory_space<vmem>>, %arg4: memref<1x640xf32, #tpu.memory_space<vmem>>, %arg5: memref<640x128xf32, #tpu.memory_space<vmem>>, %arg6: memref<1x128xf32, #tpu.memory_space<vmem>>, %arg7: memref<8x128xf32, #tpu.memory_space<vmem>>, %arg8: memref<8x640xf32, #tpu.memory_space<vmem>>) attributes {dimension_semantics = [#tpu.dimension_semantics<parallel>, #tpu.dimension_semantics<arbitrary>], iteration_bounds = array<i64: 4, 1>, scalar_prefetch = 0 : i64, scratch_operands = 1 : i64, tpu.core_type = #tpu.core_type<tc>, window_params = [{transform_indices = @transform_0, window_bounds = array<i64: 2048, 32>}, {pipeline_mode = #tpu.pipeline_mode<synchronous>, transform_indices = @transform_1, window_bounds = array<i64: 32, 640>}, {pipeline_mode = #tpu.pipeline_mode<synchronous>, transform_indices = @transform_2, window_bounds = array<i64: 1, 640>}, {pipeline_mode = #tpu.pipeline_mode<synchronous>, transform_indices = @transform_3, window_bounds = array<i64: 640, 128>}, {pipeline_mode = #tpu.pipeline_mode<synchronous>, transform_indices = @transform_4, window_bounds = array<i64: 1, 128>}, {transform_indices = @transform_5, window_bounds = array<i64: 8, 128>}]} {
    %c0_i32 = arith.constant 0 : i32
    %0 = arith.cmpi eq, %arg1, %c0_i32 : i32
    %1 = arith.extui %0 : i1 to i32
    %c0_i32_0 = arith.constant 0 : i32
    %2 = arith.cmpi ne, %1, %c0_i32_0 : i32
    scf.if %2 {
      %cst_14 = arith.constant 0.000000e+00 : f32
      %19 = vector.broadcast %cst_14 : f32 to vector<8x640xf32>
      %c0_15 = arith.constant 0 : index
      %c0_16 = arith.constant 0 : index
      %20 = vector.load %arg8[%c0_15, %c0_16] : memref<8x640xf32, #tpu.memory_space<vmem>>, vector<8x640xf32>
      tpu.vector_store %arg8[%c0_15, %c0_16], %19 {strides = array<i32>} : memref<8x640xf32, #tpu.memory_space<vmem>>, vector<8x640xf32>,
    } else {
    }
    %c0 = arith.constant 0 : index
    %c0_1 = arith.constant 0 : index
    %3 = vector.load %arg2[%c0, %c0_1] : memref<2048x32xbf16, #tpu.memory_space<vmem>>, vector<2048x32xbf16>
    %c0_2 = arith.constant 0 : index
    %c0_3 = arith.constant 0 : index
    %4 = vector.load %arg3[%c0_2, %c0_3] : memref<32x640xbf16, #tpu.memory_space<vmem>>, vector<32x640xbf16>
    %cst = arith.constant dense<0.000000e+00> : vector<2048x640xf32>
    %5 = tpu.matmul %3, %4, %cst {dimension_numbers = #tpu.dot_dimension_numbers<[1], [0], [0], [1], [0, 0, 1, 1], [], []>} : vector<2048x32xbf16>, vector<32x640xbf16>, vector<2048x640xf32> -> vector<2048x640xf32>
    %c0_4 = arith.constant 0 : index
    %c0_5 = arith.constant 0 : index
    %6 = vector.load %arg4[%c0_4, %c0_5] : memref<1x640xf32, #tpu.memory_space<vmem>>, vector<1x640xf32>
    %7 = vector.broadcast %6 : vector<1x640xf32> to vector<2048x640xf32>
    %8 = arith.addf %5, %7 : vector<2048x640xf32>
    %cst_6 = arith.constant 0.000000e+00 : f32
    %9 = vector.broadcast %cst_6 : f32 to vector<2048x640xf32>
    %10 = arith.maximumf %8, %9 : vector<2048x640xf32>
    %c0_7 = arith.constant 0 : index
    %c0_8 = arith.constant 0 : index
    %11 = vector.load %arg8[%c0_7, %c0_8] : memref<8x640xf32, #tpu.memory_space<vmem>>, vector<8x640xf32>
    %12 = vector.shape_cast %10 : vector<2048x640xf32> to vector<8x256x640xf32>
    %cst_9 = arith.constant dense<0.000000e+00> : vector<8x640xf32>
    %13 = vector.multi_reduction <add>, %12, %cst_9 [1] : vector<8x256x640xf32> to vector<8x640xf32>
    %14 = arith.addf %11, %13 : vector<8x640xf32>
    %c0_10 = arith.constant 0 : index
    %c0_11 = arith.constant 0 : index
    %15 = vector.load %arg8[%c0_10, %c0_11] : memref<8x640xf32, #tpu.memory_space<vmem>>, vector<8x640xf32>
    tpu.vector_store %arg8[%c0_10, %c0_11], %14 {strides = array<i32>} : memref<8x640xf32, #tpu.memory_space<vmem>>, vector<8x640xf32>,
    %c0_i32_12 = arith.constant 0 : i32
    %16 = arith.cmpi eq, %arg1, %c0_i32_12 : i32
    %17 = arith.extui %16 : i1 to i32
    %c0_i32_13 = arith.constant 0 : i32
    %18 = arith.cmpi ne, %17, %c0_i32_13 : i32
    scf.if %18 {
      %c0_14 = arith.constant 0 : index
      %c0_15 = arith.constant 0 : index
      %19 = vector.load %arg8[%c0_14, %c0_15] : memref<8x640xf32, #tpu.memory_space<vmem>>, vector<8x640xf32>
      %cst_16 = arith.constant 3.906250e-03 : f32
      %20 = vector.broadcast %cst_16 : f32 to vector<8x640xf32>
      %21 = arith.mulf %19, %20 : vector<8x640xf32>
      %c0_17 = arith.constant 0 : index
      %c0_18 = arith.constant 0 : index
      %22 = vector.load %arg5[%c0_17, %c0_18] : memref<640x128xf32, #tpu.memory_space<vmem>>, vector<640x128xf32>
      %cst_19 = arith.constant dense<0.000000e+00> : vector<8x128xf32>
      %23 = tpu.matmul %21, %22, %cst_19 {dimension_numbers = #tpu.dot_dimension_numbers<[1], [0], [0], [1], [0, 0, 1, 1], [], []>} : vector<8x640xf32>, vector<640x128xf32>, vector<8x128xf32> -> vector<8x128xf32>
      %c0_20 = arith.constant 0 : index
      %c0_21 = arith.constant 0 : index
      %24 = vector.load %arg6[%c0_20, %c0_21] : memref<1x128xf32, #tpu.memory_space<vmem>>, vector<1x128xf32>
      %25 = vector.broadcast %24 : vector<1x128xf32> to vector<8x128xf32>
      %26 = arith.addf %23, %25 : vector<8x128xf32>
      %c0_22 = arith.constant 0 : index
      %c0_23 = arith.constant 0 : index
      %27 = vector.load %arg7[%c0_22, %c0_23] : memref<8x128xf32, #tpu.memory_space<vmem>>, vector<8x128xf32>
      tpu.vector_store %arg7[%c0_22, %c0_23], %26 {strides = array<i32>} : memref<8x128xf32, #tpu.memory_space<vmem>>, vector<8x128xf32>,
    } else {
    }
    return
  }
  func.func @transform_0(%arg0: i32, %arg1: i32) -> (i32, i32) {
    %c4_i32 = arith.constant 4 : i32
    %0 = arith.muli %arg1, %c4_i32 : i32
    %1 = arith.addi %0, %arg0 : i32
    %c0_i32 = arith.constant 0 : i32
    %c0_i32_0 = arith.constant 0 : i32
    return %1, %c0_i32 : i32, i32
  }
  func.func @transform_1(%arg0: i32, %arg1: i32) -> (i32, i32) {
    %c0_i32 = arith.constant 0 : i32
    %c0_i32_0 = arith.constant 0 : i32
    %c0_i32_1 = arith.constant 0 : i32
    return %c0_i32, %c0_i32_0 : i32, i32
  }
  func.func @transform_2(%arg0: i32, %arg1: i32) -> (i32, i32) {
    %c0_i32 = arith.constant 0 : i32
    %c0_i32_0 = arith.constant 0 : i32
    %c0_i32_1 = arith.constant 0 : i32
    return %c0_i32, %c0_i32_0 : i32, i32
  }
  func.func @transform_3(%arg0: i32, %arg1: i32) -> (i32, i32) {
    %c0_i32 = arith.constant 0 : i32
    %c0_i32_0 = arith.constant 0 : i32
    %c0_i32_1 = arith.constant 0 : i32
    return %c0_i32, %c0_i32_0 : i32, i32
  }
  func.func @transform_4(%arg0: i32, %arg1: i32) -> (i32, i32) {
    %c0_i32 = arith.constant 0 : i32
    %c0_i32_0 = arith.constant 0 : i32
    %c0_i32_1 = arith.constant 0 : i32
    return %c0_i32, %c0_i32_0 : i32, i32
  }
  func.func @transform_5(%arg0: i32, %arg1: i32) -> (i32, i32) {
    %c0_i32 = arith.constant 0 : i32
    %c0_i32_0 = arith.constant 0 : i32
    return %arg0, %c0_i32 : i32, i32
  }
}

</mosaic_0001>

<llo_original>
// kernel: encoder_linear_forward.1
$region0: #{encoder_linear_forward.1}
  #allocation0 [shape = 'u32[]', space=smem, size = 0x4, offset = 0x4, fixed_abs, tag = 'smem constant byte address 0x4 - core index']
  #allocation1 [shape = 'u32[144,128]{1,0:T(1,128)}', space=vmem, size = 0x12000, scoped, tag = 'internal scratch']
  #allocation2 [shape = 'f32[8,640]{1,0:T(8,128)}', space=vmem, size = 0x5000, scoped, tag = 'scratch operand']
  %s0 = inlined_call_operand.vmem [shape: bf16[8192,32], index: 0, kind: input, shape index: {}]
  %s1 = inlined_call_operand.vmem [shape: bf16[32,640], index: 1, kind: input, shape index: {}]
  %s2 = inlined_call_operand.vmem [shape: f32[1,640], index: 2, kind: input, shape index: {}]
  %s3 = inlined_call_operand.vmem [shape: f32[640,128], index: 3, kind: input, shape index: {}]
  %s4 = inlined_call_operand.vmem [shape: f32[1,128], index: 4, kind: input, shape index: {}]
  %s5 = inlined_call_operand.hbm [shape: f32[32,128], index: 5, kind: output, shape index: {}]
  %s6 = sld [smem:[#allocation0]]
  $region61: #{encoder_linear_forward.1} parent=0
    _
  %s8 = ssub.s32 1, %s6
  %s9 = scalar_select 0, %s8, %s6
  $region1: #{encoder_linear_forward.1} parent=0
    #allocation3 [shape = 'u8[8192]{0}', space=vmem, size = 0x2000, scoped, tag = 'output window, operand 0']
    #allocation4 [shape = 's32[2]{0}', space=sflag, size = 0x8, scoped, tag = 'scoped memory for encoder_linear_forward.1']
    %10 = vsyncpa [#allocation4], 0
    %s11 = scalar_lea.sflag [#allocation4], 1
    %12 = vsyncpa %s11, 0
    loop: start=0, step=1, limit=6
    $region2: #{encoder_linear_forward.1} parent=1 // loop_pre_header
      _
    $region3: #{encoder_linear_forward.1} parent=1 // loop_header
      %s14 = sphi 0, %s18
      %p15 = scmp.ge.s32.totalorder %s14, 6
      %s21 = sphi 0, %s33
      %s22 = sphi 0, %s29
      %s23 = sphi 0, %s21
      %s24 = sphi 0, %s22
      %s25 = sphi 0, %s23
      %s26 = sphi 0, %s24
      %s40 = sphi 0, %s42
      %s43 = sphi 0, %s40
      %s44 = sphi 0, %s43
      %s60 = sphi 0, %s44
      %s64 = sphi 0, %s64
      %s66 = sphi 0, %s64
      %s67 = sphi 0, %s66
      %s81 = sphi 0, %s67
      %s85 = sphi 0, %s85
      %s87 = sphi 0, %s85
      %s88 = sphi 0, %s87
      %s102 = sphi 0, %s88
      %s106 = sphi 0, %s106
      %s108 = sphi 0, %s106
      %s109 = sphi 0, %s108
      %s123 = sphi 0, %s109
      %s127 = sphi 0, %s127
      %s129 = sphi 0, %s127
      %s130 = sphi 0, %s129
      %s144 = sphi 0, %s130
      %s150 = sphi 0, %s152
      %s153 = sphi 0, %s150
      %s154 = sphi 0, %s153
      %s170 = sphi 0, %s154
    $region4: #{encoder_linear_forward.1} parent=1 // loop_header_branch
      %17 = sbr.rel (%p15) target = $region8
    $region5: #{encoder_linear_forward.1} parent=1 // loop_body
      %s19 = ssub.s32 %s14, 1
      %s20 = ssub.s32 %s14, 2
      %s27 = sadd.s32 1, %s22
      %p28 = scmp.ge.s32.totalorder %s27, 1
      %s29 = scalar_select %p28, 0, %s27
      %s30 = sadd.s32 1, %s21
      %s31 = scalar_select %p28, %s30, %s21
      %p32 = scmp.ge.s32.totalorder %s31, 4
      %s33 = scalar_select %p32, 0, %s31
      %s34 = smul.u32 %s22, 4
      %s35 = sadd.s32 %s34, %s21
      %s36 = smul.u32 %s29, 4
      %s37 = sadd.s32 %s36, %s33
      %s38 = ssub.s32 %s35, %s37
      %p39 = scmp.eq.s32.totalorder %s38, 0
      %s41 = sadd.s32 %s40, 1
      %s42 = scalar_select %p39, %s40, %s41
      %p45 = pneg %p39
      %p46 = scmp.eq.s32.totalorder %s14, 3
      %p47 = por %p45, %p46
      %p48 = scmp.ne.s32.totalorder %s40, %s43
      %p49 = scmp.eq.s32.totalorder %s14, 0
      %p50 = por %p48, %p49
      %p51 = scmp.ne.s32.totalorder %s40, %s43
      %p52 = scmp.eq.s32.totalorder %s19, 3
      %p53 = por %p51, %p52
      %p54 = scmp.ne.s32.totalorder %s43, %s44
      %p55 = scmp.eq.s32.totalorder %s19, 0
      %p56 = por %p54, %p55
      %p57 = scmp.ne.s32.totalorder %s43, %s44
      %p58 = scmp.eq.s32.totalorder %s20, 3
      %p59 = por %p57, %p58
      %p61 = scmp.ne.s32.totalorder %s44, %s60
      %p62 = scmp.eq.s32.totalorder %s20, 0
      %p63 = por %p61, %p62
      %s65 = sadd.s32 %s64, 1
      %p68 = scmp.eq.s32.totalorder %s14, 3
      %p69 = scmp.ne.s32.totalorder %s64, %s66
      %p70 = scmp.eq.s32.totalorder %s14, 0
      %p71 = por %p69, %p70
      %p72 = scmp.ne.s32.totalorder %s64, %s66
      %p73 = scmp.eq.s32.totalorder %s19, 3
      %p74 = por %p72, %p73
      %p75 = scmp.ne.s32.totalorder %s66, %s67
      %p76 = scmp.eq.s32.totalorder %s19, 0
      %p77 = por %p75, %p76
      %p78 = scmp.ne.s32.totalorder %s66, %s67
      %p79 = scmp.eq.s32.totalorder %s20, 3
      %p80 = por %p78, %p79
      %p82 = scmp.ne.s32.totalorder %s67, %s81
      %p83 = scmp.eq.s32.totalorder %s20, 0
      %p84 = por %p82, %p83
      %s86 = sadd.s32 %s85, 1
      %p89 = scmp.eq.s32.totalorder %s14, 3
      %p90 = scmp.ne.s32.totalorder %s85, %s87
      %p91 = scmp.eq.s32.totalorder %s14, 0
      %p92 = por %p90, %p91
      %p93 = scmp.ne.s32.totalorder %s85, %s87
      %p94 = scmp.eq.s32.totalorder %s19, 3
      %p95 = por %p93, %p94
      %p96 = scmp.ne.s32.totalorder %s87, %s88
      %p97 = scmp.eq.s32.totalorder %s19, 0
      %p98 = por %p96, %p97
      %p99 = scmp.ne.s32.totalorder %s87, %s88
      %p100 = scmp.eq.s32.totalorder %s20, 3
      %p101 = por %p99, %p100
      %p103 = scmp.ne.s32.totalorder %s88, %s102
      %p104 = scmp.eq.s32.totalorder %s20, 0
      %p105 = por %p103, %p104
      %s107 = sadd.s32 %s106, 1
      %p110 = scmp.eq.s32.totalorder %s14, 3
      %p111 = scmp.ne.s32.totalorder %s106, %s108
      %p112 = scmp.eq.s32.totalorder %s14, 0
      %p113 = por %p111, %p112
      %p114 = scmp.ne.s32.totalorder %s106, %s108
      %p115 = scmp.eq.s32.totalorder %s19, 3
      %p116 = por %p114, %p115
      %p117 = scmp.ne.s32.totalorder %s108, %s109
      %p118 = scmp.eq.s32.totalorder %s19, 0
      %p119 = por %p117, %p118
      %p120 = scmp.ne.s32.totalorder %s108, %s109
      %p121 = scmp.eq.s32.totalorder %s20, 3
      %p122 = por %p120, %p121
      %p124 = scmp.ne.s32.totalorder %s109, %s123
      %p125 = scmp.eq.s32.totalorder %s20, 0
      %p126 = por %p124, %p125
      %s128 = sadd.s32 %s127, 1
      %p131 = scmp.eq.s32.totalorder %s14, 3
      %p132 = scmp.ne.s32.totalorder %s127, %s129
      %p133 = scmp.eq.s32.totalorder %s14, 0
      %p134 = por %p132, %p133
      %p135 = scmp.ne.s32.totalorder %s127, %s129
      %p136 = scmp.eq.s32.totalorder %s19, 3
      %p137 = por %p135, %p136
      %p138 = scmp.ne.s32.totalorder %s129, %s130
      %p139 = scmp.eq.s32.totalorder %s19, 0
      %p140 = por %p138, %p139
      %p141 = scmp.ne.s32.totalorder %s129, %s130
      %p142 = scmp.eq.s32.totalorder %s20, 3
      %p143 = por %p141, %p142
      %p145 = scmp.ne.s32.totalorder %s130, %s144
      %p146 = scmp.eq.s32.totalorder %s20, 0
      %p147 = por %p145, %p146
      %s148 = ssub.s32 %s21, %s33
      %p149 = scmp.eq.s32.totalorder %s148, 0
      %s151 = sadd.s32 %s150, 1
      %s152 = scalar_select %p149, %s150, %s151
      %p155 = pneg %p149
      %p156 = scmp.eq.s32.totalorder %s14, 3
      %p157 = por %p155, %p156
      %p158 = scmp.ne.s32.totalorder %s150, %s153
      %p159 = scmp.eq.s32.totalorder %s14, 0
      %p160 = por %p158, %p159
      %p161 = scmp.ne.s32.totalorder %s150, %s153
      %p162 = scmp.eq.s32.totalorder %s19, 3
      %p163 = por %p161, %p162
      %p164 = scmp.ne.s32.totalorder %s153, %s154
      %p165 = scmp.eq.s32.totalorder %s19, 0
      %p166 = por %p164, %p165
      %p167 = scmp.ne.s32.totalorder %s153, %s154
      %p168 = scmp.eq.s32.totalorder %s20, 3
      %p169 = por %p167, %p168
      %p171 = scmp.ne.s32.totalorder %s154, %s170
      %p172 = scmp.eq.s32.totalorder %s20, 0
      %p173 = por %p171, %p172
      %p174 = scmp.le.s32.totalorder 1, %s14
      %p175 = scmp.lt.s32.totalorder %s14, 5
      %p176 = pnand %p174, %p175
      %p177 = pneg %p176
      // Predicated region
      $region9: #{encoder_linear_forward.1} parent=5 // pred_check
        _
      $region10: #{encoder_linear_forward.1} parent=5 // pred_check_branch
        %179 = sbr.rel (%p176) target = $region12
      $region11: #{encoder_linear_forward.1} parent=5 // pred_region
        %s180 = ssub.s32 %s14, 1
        // Predicated region
        $region13: #{encoder_linear_forward.1} parent=11 // pred_check
          %p181 = pneg %p77
        $region14: #{encoder_linear_forward.1} parent=11 // pred_check_branch
          %183 = sbr.rel (%p181) target = $region16
        $region15: #{encoder_linear_forward.1} parent=11 // pred_region
          _
        $region16: #{encoder_linear_forward.1} parent=11 // pred_fallthru
          _
        // Predicated region
        $region17: #{encoder_linear_forward.1} parent=11 // pred_check
          %p184 = pneg %p98
        $region18: #{encoder_linear_forward.1} parent=11 // pred_check_branch
          %186 = sbr.rel (%p184) target = $region20
        $region19: #{encoder_linear_forward.1} parent=11 // pred_region
          _
        $region20: #{encoder_linear_forward.1} parent=11 // pred_fallthru
          _
        // Predicated region
        $region21: #{encoder_linear_forward.1} parent=11 // pred_check
          %p187 = pneg %p119
        $region22: #{encoder_linear_forward.1} parent=11 // pred_check_branch
          %189 = sbr.rel (%p187) target = $region24
        $region23: #{encoder_linear_forward.1} parent=11 // pred_region
          _
        $region24: #{encoder_linear_forward.1} parent=11 // pred_fallthru
          _
        // Predicated region
        $region25: #{encoder_linear_forward.1} parent=11 // pred_check
          %p190 = pneg %p140
        $region26: #{encoder_linear_forward.1} parent=11 // pred_check_branch
          %192 = sbr.rel (%p190) target = $region28
        $region27: #{encoder_linear_forward.1} parent=11 // pred_region
          _
        $region28: #{encoder_linear_forward.1} parent=11 // pred_fallthru
          _
      $region12: #{encoder_linear_forward.1} parent=5 // pred_fallthru
        _
      %p193 = scmp.lt.s32.totalorder %s14, 4
      // Predicated region
      $region29: #{encoder_linear_forward.1} parent=5 // pred_check
        %p194 = pneg %p193
      $region30: #{encoder_linear_forward.1} parent=5 // pred_check_branch
        %196 = sbr.rel (%p194) target = $region32
      $region31: #{encoder_linear_forward.1} parent=5 // pred_region
        // Predicated region
        $region33: #{encoder_linear_forward.1} parent=31 // pred_check
          %p197 = pneg %p50
        $region34: #{encoder_linear_forward.1} parent=31 // pred_check_branch
          %199 = sbr.rel (%p197) target = $region36
        $region35: #{encoder_linear_forward.1} parent=31 // pred_region
          %s200 = smul.u32 %s22, 4
          %s201 = sadd.s32 %s200, %s21
          %s202 = smul.u32 256, %s201
          %p203 = scmp.lt.s32.totalorder %s202, 1023
          %s204 = scalar_select %p203, %s202, 1023
          %s205 = smul.addr %s204, 4
          %s206 = scalar_lea.vmem %s0, %s205
          %s207 = smul.u32 %s22, 4
          %s208 = sadd.s32 %s207, %s21
          %s209 = smul.u32 256, %s208
        $region36: #{encoder_linear_forward.1} parent=31 // pred_fallthru
          _
      $region32: #{encoder_linear_forward.1} parent=5 // pred_fallthru
        _
      %p210 = scmp.le.s32.totalorder 1, %s14
      %p211 = scmp.lt.s32.totalorder %s14, 5
      %p212 = pnand %p210, %p211
      %p213 = pneg %p212
      // Predicated region
      $region37: #{encoder_linear_forward.1} parent=5 // pred_check
        _
      $region38: #{encoder_linear_forward.1} parent=5 // pred_check_branch
        %215 = sbr.rel (%p212) target = $region40
      $region39: #{encoder_linear_forward.1} parent=5 // pred_region
        %s216 = ssub.s32 %s14, 1
        %s217 = smul.u32 %s24, 4
        %s218 = sadd.s32 %s217, %s23
        %s219 = smul.u32 256, %s218
        %p220 = scmp.lt.s32.totalorder %s219, 1023
        %s221 = scalar_select %p220, %s219, 1023
        %s222 = smul.addr %s221, 4
        %s223 = scalar_lea.vmem %s0, %s222
        %p224 = pneg %p56
        %p225 = pneg %p53
        %p226 = pneg %p77
        %p227 = pneg %p74
        %p228 = pneg %p98
        %p229 = pneg %p95
        %p230 = pneg %p119
        %p231 = pneg %p116
        %p232 = pneg %p140
        %p233 = pneg %p137
        %p234 = pneg %p166
        %p235 = pneg %p163
        %s236 = sand.u32 %s153, 1
        %s237 = scalar_lea.sflag [#allocation4], %s236
        %s238 = sand.u32 %s153, 1
        %s239 = smul.addr %s238, 8
        %s240 = scalar_lea.vmem [#allocation3], %s239
        %s241 = smul.u32 %s24, 4
        %s242 = sadd.s32 %s241, %s23
        %s243 = smul.u32 256, %s242
        %p244 = scmp.lt.s32.totalorder %s243, 1023
        %s245 = scalar_select %p244, %s243, 1023
        %s246 = smul.addr %s245, 4
        %s247 = scalar_lea.vmem %s0, %s246
        %s248 = smul.u32 %s24, 4
        %s249 = sadd.s32 %s248, %s23
        %s250 = smul.u32 256, %s249
        %p252 = scmp.eq.s32.totalorder %s24, 0
        // Predicated region
        $region41: #{encoder_linear_forward.1} parent=39 // pred_check
          %p253 = pneg %p252
        $region42: #{encoder_linear_forward.1} parent=39 // pred_check_branch
          %255 = sbr.rel (%p253) target = $region44
        $region43: #{encoder_linear_forward.1} parent=39 // pred_region
          %256 = vst [vmem:[#allocation2] sm:$0xff] 0.0
          %257 = vst [vmem:[#allocation2 + $0x8] sm:$0xff] 0.0
          %258 = vst [vmem:[#allocation2 + $0x10] sm:$0xff] 0.0
          %259 = vst [vmem:[#allocation2 + $0x18] sm:$0xff] 0.0
          %260 = vst [vmem:[#allocation2 + $0x20] sm:$0xff] 0.0
        $region44: #{encoder_linear_forward.1} parent=39 // pred_fallthru
          _
        %v261 = vld [vmem:[%s247] sm:$0xf]
        %v262 = vld [vmem:[%s247 + $0x4] sm:$0xf]
        %v263 = vld [vmem:[%s247 + $0x8] sm:$0xf]
        %v264 = vld [vmem:[%s247 + $0xc] sm:$0xf]
        %v265 = vld [vmem:[%s247 + $0x10] sm:$0xf]
        %v266 = vld [vmem:[%s247 + $0x14] sm:$0xf]
        %v267 = vld [vmem:[%s247 + $0x18] sm:$0xf]
        %v268 = vld [vmem:[%s247 + $0x1c] sm:$0xf]
        %v269 = vld [vmem:[%s247 + $0x20] sm:$0xf]
        %v270 = vld [vmem:[%s247 + $0x24] sm:$0xf]
        %v271 = vld [vmem:[%s247 + $0x28] sm:$0xf]
        %v272 = vld [vmem:[%s247 + $0x2c] sm:$0xf]
        %v273 = vld [vmem:[%s247 + $0x30] sm:$0xf]
        %v274 = vld [vmem:[%s247 + $0x34] sm:$0xf]
        %v275 = vld [vmem:[%s247 + $0x38] sm:$0xf]
        %v276 = vld [vmem:[%s247 + $0x3c] sm:$0xf]
        %v277 = vld [vmem:[%s247 + $0x40] sm:$0xf]
        %v278 = vld [vmem:[%s247 + $0x44] sm:$0xf]
        %v279 = vld [vmem:[%s247 + $0x48] sm:$0xf]
        %v280 = vld [vmem:[%s247 + $0x4c] sm:$0xf]
        %v281 = vld [vmem:[%s247 + $0x50] sm:$0xf]
        %v282 = vld [vmem:[%s247 + $0x54] sm:$0xf]
        %v283 = vld [vmem:[%s247 + $0x58] sm:$0xf]
        %v284 = vld [vmem:[%s247 + $0x5c] sm:$0xf]
        %v285 = vld [vmem:[%s247 + $0x60] sm:$0xf]
        %v286 = vld [vmem:[%s247 + $0x64] sm:$0xf]
        %v287 = vld [vmem:[%s247 + $0x68] sm:$0xf]
        %v288 = vld [vmem:[%s247 + $0x6c] sm:$0xf]
        %v289 = vld [vmem:[%s247 + $0x70] sm:$0xf]
        %v290 = vld [vmem:[%s247 + $0x74] sm:$0xf]
        %v291 = vld [vmem:[%s247 + $0x78] sm:$0xf]
        %v292 = vld [vmem:[%s247 + $0x7c] sm:$0xf]
        %v293 = vld [vmem:[%s247 + $0x80] sm:$0xf]
        %v294 = vld [vmem:[%s247 + $0x84] sm:$0xf]
        %v295 = vld [vmem:[%s247 + $0x88] sm:$0xf]
        %v296 = vld [vmem:[%s247 + $0x8c] sm:$0xf]
        %v297 = vld [vmem:[%s247 + $0x90] sm:$0xf]
        %v298 = vld [vmem:[%s247 + $0x94] sm:$0xf]
        %v299 = vld [vmem:[%s247 + $0x98] sm:$0xf]
        %v300 = vld [vmem:[%s247 + $0x9c] sm:$0xf]
        %v301 = vld [vmem:[%s247 + $0xa0] sm:$0xf]
        %v302 = vld [vmem:[%s247 + $0xa4] sm:$0xf]
        %v303 = vld [vmem:[%s247 + $0xa8] sm:$0xf]
        %v304 = vld [vmem:[%s247 + $0xac] sm:$0xf]
        %v305 = vld [vmem:[%s247 + $0xb0] sm:$0xf]
        %v306 = vld [vmem:[%s247 + $0xb4] sm:$0xf]
        %v307 = vld [vmem:[%s247 + $0xb8] sm:$0xf]
        %v308 = vld [vmem:[%s247 + $0xbc] sm:$0xf]
        %v309 = vld [vmem:[%s247 + $0xc0] sm:$0xf]
        %v310 = vld [vmem:[%s247 + $0xc4] sm:$0xf]
        %v311 = vld [vmem:[%s247 + $0xc8] sm:$0xf]
        %v312 = vld [vmem:[%s247 + $0xcc] sm:$0xf]
        %v313 = vld [vmem:[%s247 + $0xd0] sm:$0xf]
        %v314 = vld [vmem:[%s247 + $0xd4] sm:$0xf]
        %v315 = vld [vmem:[%s247 + $0xd8] sm:$0xf]
        %v316 = vld [vmem:[%s247 + $0xdc] sm:$0xf]
        %v317 = vld [vmem:[%s247 + $0xe0] sm:$0xf]
        %v318 = vld [vmem:[%s247 + $0xe4] sm:$0xf]
        %v319 = vld [vmem:[%s247 + $0xe8] sm:$0xf]
        %v320 = vld [vmem:[%s247 + $0xec] sm:$0xf]
        %v321 = vld [vmem:[%s247 + $0xf0] sm:$0xf]
        %v322 = vld [vmem:[%s247 + $0xf4] sm:$0xf]
        %v323 = vld [vmem:[%s247 + $0xf8] sm:$0xf]
        %v324 = vld [vmem:[%s247 + $0xfc] sm:$0xf]
        %v325 = vld [vmem:[%s247 + $0x100] sm:$0xf]
        %v326 = vld [vmem:[%s247 + $0x104] sm:$0xf]
        %v327 = vld [vmem:[%s247 + $0x108] sm:$0xf]
        %v328 = vld [vmem:[%s247 + $0x10c] sm:$0xf]
        %v329 = vld [vmem:[%s247 + $0x110] sm:$0xf]
        %v330 = vld [vmem:[%s247 + $0x114] sm:$0xf]
        %v331 = vld [vmem:[%s247 + $0x118] sm:$0xf]
        %v332 = vld [vmem:[%s247 + $0x11c] sm:$0xf]
        %v333 = vld [vmem:[%s247 + $0x120] sm:$0xf]
        %v334 = vld [vmem:[%s247 + $0x124] sm:$0xf]
        %v335 = vld [vmem:[%s247 + $0x128] sm:$0xf]
        %v336 = vld [vmem:[%s247 + $0x12c] sm:$0xf]
        %v337 = vld [vmem:[%s247 + $0x130] sm:$0xf]
        %v338 = vld [vmem:[%s247 + $0x134] sm:$0xf]
        %v339 = vld [vmem:[%s247 + $0x138] sm:$0xf]
        %v340 = vld [vmem:[%s247 + $0x13c] sm:$0xf]
        %v341 = vld [vmem:[%s247 + $0x140] sm:$0xf]
        %v342 = vld [vmem:[%s247 + $0x144] sm:$0xf]
        %v343 = vld [vmem:[%s247 + $0x148] sm:$0xf]
        %v344 = vld [vmem:[%s247 + $0x14c] sm:$0xf]
        %v345 = vld [vmem:[%s247 + $0x150] sm:$0xf]
        %v346 = vld [vmem:[%s247 + $0x154] sm:$0xf]
        %v347 = vld [vmem:[%s247 + $0x158] sm:$0xf]
        %v348 = vld [vmem:[%s247 + $0x15c] sm:$0xf]
        %v349 = vld [vmem:[%s247 + $0x160] sm:$0xf]
        %v350 = vld [vmem:[%s247 + $0x164] sm:$0xf]
        %v351 = vld [vmem:[%s247 + $0x168] sm:$0xf]
        %v352 = vld [vmem:[%s247 + $0x16c] sm:$0xf]
        %v353 = vld [vmem:[%s247 + $0x170] sm:$0xf]
        %v354 = vld [vmem:[%s247 + $0x174] sm:$0xf]
        %v355 = vld [vmem:[%s247 + $0x178] sm:$0xf]
        %v356 = vld [vmem:[%s247 + $0x17c] sm:$0xf]
        %v357 = vld [vmem:[%s247 + $0x180] sm:$0xf]
        %v358 = vld [vmem:[%s247 + $0x184] sm:$0xf]
        %v359 = vld [vmem:[%s247 + $0x188] sm:$0xf]
        %v360 = vld [vmem:[%s247 + $0x18c] sm:$0xf]
        %v361 = vld [vmem:[%s247 + $0x190] sm:$0xf]
        %v362 = vld [vmem:[%s247 + $0x194] sm:$0xf]
        %v363 = vld [vmem:[%s247 + $0x198] sm:$0xf]
        %v364 = vld [vmem:[%s247 + $0x19c] sm:$0xf]
        %v365 = vld [vmem:[%s247 + $0x1a0] sm:$0xf]
        %v366 = vld [vmem:[%s247 + $0x1a4] sm:$0xf]
        %v367 = vld [vmem:[%s247 + $0x1a8] sm:$0xf]
        %v368 = vld [vmem:[%s247 + $0x1ac] sm:$0xf]
        %v369 = vld [vmem:[%s247 + $0x1b0] sm:$0xf]
        %v370 = vld [vmem:[%s247 + $0x1b4] sm:$0xf]
        %v371 = vld [vmem:[%s247 + $0x1b8] sm:$0xf]
        %v372 = vld [vmem:[%s247 + $0x1bc] sm:$0xf]
        %v373 = vld [vmem:[%s247 + $0x1c0] sm:$0xf]
        %v374 = vld [vmem:[%s247 + $0x1c4] sm:$0xf]
        %v375 = vld [vmem:[%s247 + $0x1c8] sm:$0xf]
        %v376 = vld [vmem:[%s247 + $0x1cc] sm:$0xf]
        %v377 = vld [vmem:[%s247 + $0x1d0] sm:$0xf]
        %v378 = vld [vmem:[%s247 + $0x1d4] sm:$0xf]
        %v379 = vld [vmem:[%s247 + $0x1d8] sm:$0xf]
        %v380 = vld [vmem:[%s247 + $0x1dc] sm:$0xf]
        %v381 = vld [vmem:[%s247 + $0x1e0] sm:$0xf]
        %v382 = vld [vmem:[%s247 + $0x1e4] sm:$0xf]
        %v383 = vld [vmem:[%s247 + $0x1e8] sm:$0xf]
        %v384 = vld [vmem:[%s247 + $0x1ec] sm:$0xf]
        %v385 = vld [vmem:[%s247 + $0x1f0] sm:$0xf]
        %v386 = vld [vmem:[%s247 + $0x1f4] sm:$0xf]
        %v387 = vld [vmem:[%s247 + $0x1f8] sm:$0xf]
        %v388 = vld [vmem:[%s247 + $0x1fc] sm:$0xf]
        %v389 = vld [vmem:[%s247 + $0x200] sm:$0xf]
        %v390 = vld [vmem:[%s247 + $0x204] sm:$0xf]
        %v391 = vld [vmem:[%s247 + $0x208] sm:$0xf]
        %v392 = vld [vmem:[%s247 + $0x20c] sm:$0xf]
        %v393 = vld [vmem:[%s247 + $0x210] sm:$0xf]
        %v394 = vld [vmem:[%s247 + $0x214] sm:$0xf]
        %v395 = vld [vmem:[%s247 + $0x218] sm:$0xf]
        %v396 = vld [vmem:[%s247 + $0x21c] sm:$0xf]
        %v397 = vld [vmem:[%s247 + $0x220] sm:$0xf]
        %v398 = vld [vmem:[%s247 + $0x224] sm:$0xf]
        %v399 = vld [vmem:[%s247 + $0x228] sm:$0xf]
        %v400 = vld [vmem:[%s247 + $0x22c] sm:$0xf]
        %v401 = vld [vmem:[%s247 + $0x230] sm:$0xf]
        %v402 = vld [vmem:[%s247 + $0x234] sm:$0xf]
        %v403 = vld [vmem:[%s247 + $0x238] sm:$0xf]
        %v404 = vld [vmem:[%s247 + $0x23c] sm:$0xf]
        %v405 = vld [vmem:[%s247 + $0x240] sm:$0xf]
        %v406 = vld [vmem:[%s247 + $0x244] sm:$0xf]
        %v407 = vld [vmem:[%s247 + $0x248] sm:$0xf]
        %v408 = vld [vmem:[%s247 + $0x24c] sm:$0xf]
        %v409 = vld [vmem:[%s247 + $0x250] sm:$0xf]
        %v410 = vld [vmem:[%s247 + $0x254] sm:$0xf]
        %v411 = vld [vmem:[%s247 + $0x258] sm:$0xf]
        %v412 = vld [vmem:[%s247 + $0x25c] sm:$0xf]
        %v413 = vld [vmem:[%s247 + $0x260] sm:$0xf]
        %v414 = vld [vmem:[%s247 + $0x264] sm:$0xf]
        %v415 = vld [vmem:[%s247 + $0x268] sm:$0xf]
        %v416 = vld [vmem:[%s247 + $0x26c] sm:$0xf]
        %v417 = vld [vmem:[%s247 + $0x270] sm:$0xf]
        %v418 = vld [vmem:[%s247 + $0x274] sm:$0xf]
        %v419 = vld [vmem:[%s247 + $0x278] sm:$0xf]
        %v420 = vld [vmem:[%s247 + $0x27c] sm:$0xf]
        %v421 = vld [vmem:[%s247 + $0x280] sm:$0xf]
        %v422 = vld [vmem:[%s247 + $0x284] sm:$0xf]
        %v423 = vld [vmem:[%s247 + $0x288] sm:$0xf]
        %v424 = vld [vmem:[%s247 + $0x28c] sm:$0xf]
        %v425 = vld [vmem:[%s247 + $0x290] sm:$0xf]
        %v426 = vld [vmem:[%s247 + $0x294] sm:$0xf]
        %v427 = vld [vmem:[%s247 + $0x298] sm:$0xf]
        %v428 = vld [vmem:[%s247 + $0x29c] sm:$0xf]
        %v429 = vld [vmem:[%s247 + $0x2a0] sm:$0xf]
        %v430 = vld [vmem:[%s247 + $0x2a4] sm:$0xf]
        %v431 = vld [vmem:[%s247 + $0x2a8] sm:$0xf]
        %v432 = vld [vmem:[%s247 + $0x2ac] sm:$0xf]
        %v433 = vld [vmem:[%s247 + $0x2b0] sm:$0xf]
        %v434 = vld [vmem:[%s247 + $0x2b4] sm:$0xf]
        %v435 = vld [vmem:[%s247 + $0x2b8] sm:$0xf]
        %v436 = vld [vmem:[%s247 + $0x2bc] sm:$0xf]
        %v437 = vld [vmem:[%s247 + $0x2c0] sm:$0xf]
        %v438 = vld [vmem:[%s247 + $0x2c4] sm:$0xf]
        %v439 = vld [vmem:[%s247 + $0x2c8] sm:$0xf]
        %v440 = vld [vmem:[%s247 + $0x2cc] sm:$0xf]
        %v441 = vld [vmem:[%s247 + $0x2d0] sm:$0xf]
        %v442 = vld [vmem:[%s247 + $0x2d4] sm:$0xf]
        %v443 = vld [vmem:[%s247 + $0x2d8] sm:$0xf]
        %v444 = vld [vmem:[%s247 + $0x2dc] sm:$0xf]
        %v445 = vld [vmem:[%s247 + $0x2e0] sm:$0xf]
        %v446 = vld [vmem:[%s247 + $0x2e4] sm:$0xf]
        %v447 = vld [vmem:[%s247 + $0x2e8] sm:$0xf]
        %v448 = vld [vmem:[%s247 + $0x2ec] sm:$0xf]
        %v449 = vld [vmem:[%s247 + $0x2f0] sm:$0xf]
        %v450 = vld [vmem:[%s247 + $0x2f4] sm:$0xf]
        %v451 = vld [vmem:[%s247 + $0x2f8] sm:$0xf]
        %v452 = vld [vmem:[%s247 + $0x2fc] sm:$0xf]
        %v453 = vld [vmem:[%s247 + $0x300] sm:$0xf]
        %v454 = vld [vmem:[%s247 + $0x304] sm:$0xf]
        %v455 = vld [vmem:[%s247 + $0x308] sm:$0xf]
        %v456 = vld [vmem:[%s247 + $0x30c] sm:$0xf]
        %v457 = vld [vmem:[%s247 + $0x310] sm:$0xf]
        %v458 = vld [vmem:[%s247 + $0x314] sm:$0xf]
        %v459 = vld [vmem:[%s247 + $0x318] sm:$0xf]
        %v460 = vld [vmem:[%s247 + $0x31c] sm:$0xf]
        %v461 = vld [vmem:[%s247 + $0x320] sm:$0xf]
        %v462 = vld [vmem:[%s247 + $0x324] sm:$0xf]
        %v463 = vld [vmem:[%s247 + $0x328] sm:$0xf]
        %v464 = vld [vmem:[%s247 + $0x32c] sm:$0xf]
        %v465 = vld [vmem:[%s247 + $0x330] sm:$0xf]
        %v466 = vld [vmem:[%s247 + $0x334] sm:$0xf]
        %v467 = vld [vmem:[%s247 + $0x338] sm:$0xf]
        %v468 = vld [vmem:[%s247 + $0x33c] sm:$0xf]
        %v469 = vld [vmem:[%s247 + $0x340] sm:$0xf]
        %v470 = vld [vmem:[%s247 + $0x344] sm:$0xf]
        %v471 = vld [vmem:[%s247 + $0x348] sm:$0xf]
        %v472 = vld [vmem:[%s247 + $0x34c] sm:$0xf]
        %v473 = vld [vmem:[%s247 + $0x350] sm:$0xf]
        %v474 = vld [vmem:[%s247 + $0x354] sm:$0xf]
        %v475 = vld [vmem:[%s247 + $0x358] sm:$0xf]
        %v476 = vld [vmem:[%s247 + $0x35c] sm:$0xf]
        %v477 = vld [vmem:[%s247 + $0x360] sm:$0xf]
        %v478 = vld [vmem:[%s247 + $0x364] sm:$0xf]
        %v479 = vld [vmem:[%s247 + $0x368] sm:$0xf]
        %v480 = vld [vmem:[%s247 + $0x36c] sm:$0xf]
        %v481 = vld [vmem:[%s247 + $0x370] sm:$0xf]
        %v482 = vld [vmem:[%s247 + $0x374] sm:$0xf]
        %v483 = vld [vmem:[%s247 + $0x378] sm:$0xf]
        %v484 = vld [vmem:[%s247 + $0x37c] sm:$0xf]
        %v485 = vld [vmem:[%s247 + $0x380] sm:$0xf]
        %v486 = vld [vmem:[%s247 + $0x384] sm:$0xf]
        %v487 = vld [vmem:[%s247 + $0x388] sm:$0xf]
        %v488 = vld [vmem:[%s247 + $0x38c] sm:$0xf]
        %v489 = vld [vmem:[%s247 + $0x390] sm:$0xf]
        %v490 = vld [vmem:[%s247 + $0x394] sm:$0xf]
        %v491 = vld [vmem:[%s247 + $0x398] sm:$0xf]
        %v492 = vld [vmem:[%s247 + $0x39c] sm:$0xf]
        %v493 = vld [vmem:[%s247 + $0x3a0] sm:$0xf]
        %v494 = vld [vmem:[%s247 + $0x3a4] sm:$0xf]
        %v495 = vld [vmem:[%s247 + $0x3a8] sm:$0xf]
        %v496 = vld [vmem:[%s247 + $0x3ac] sm:$0xf]
        %v497 = vld [vmem:[%s247 + $0x3b0] sm:$0xf]
        %v498 = vld [vmem:[%s247 + $0x3b4] sm:$0xf]
        %v499 = vld [vmem:[%s247 + $0x3b8] sm:$0xf]
        %v500 = vld [vmem:[%s247 + $0x3bc] sm:$0xf]
        %v501 = vld [vmem:[%s247 + $0x3c0] sm:$0xf]
        %v502 = vld [vmem:[%s247 + $0x3c4] sm:$0xf]
        %v503 = vld [vmem:[%s247 + $0x3c8] sm:$0xf]
        %v504 = vld [vmem:[%s247 + $0x3cc] sm:$0xf]
        %v505 = vld [vmem:[%s247 + $0x3d0] sm:$0xf]
        %v506 = vld [vmem:[%s247 + $0x3d4] sm:$0xf]
        %v507 = vld [vmem:[%s247 + $0x3d8] sm:$0xf]
        %v508 = vld [vmem:[%s247 + $0x3dc] sm:$0xf]
        %v509 = vld [vmem:[%s247 + $0x3e0] sm:$0xf]
        %v510 = vld [vmem:[%s247 + $0x3e4] sm:$0xf]
        %v511 = vld [vmem:[%s247 + $0x3e8] sm:$0xf]
        %v512 = vld [vmem:[%s247 + $0x3ec] sm:$0xf]
        %v513 = vld [vmem:[%s247 + $0x3f0] sm:$0xf]
        %v514 = vld [vmem:[%s247 + $0x3f4] sm:$0xf]
        %v515 = vld [vmem:[%s247 + $0x3f8] sm:$0xf]
        %v516 = vld [vmem:[%s247 + $0x3fc] sm:$0xf]
        %v517 = vld [vmem:[%s1] sm:$0xff]
        %v518 = vld [vmem:[%s1 + $0x8] sm:$0xff]
        %v519 = vld [vmem:[%s1 + $0x10] sm:$0xf]
        %v520 = vld [vmem:[%s1 + $0x14] sm:$0xff]
        %v521 = vld [vmem:[%s1 + $0x1c] sm:$0xff]
        %v522 = vld [vmem:[%s1 + $0x24] sm:$0xf]
        %v523 = vld [vmem:[%s1 + $0x28] sm:$0xff]
        %v524 = vld [vmem:[%s1 + $0x30] sm:$0xff]
        %v525 = vld [vmem:[%s1 + $0x38] sm:$0xf]
        %v526 = vld [vmem:[%s1 + $0x3c] sm:$0xff]
        %v527 = vld [vmem:[%s1 + $0x44] sm:$0xff]
        %v528 = vld [vmem:[%s1 + $0x4c] sm:$0xf]
        %v529 = vld [vmem:[%s2] sm:$0x1f]
        %v531 = vlaneseq
        %v532 = vshrl.u32 %v531, 7
        %v533 = vsub.s32 0, %v532
        %v534 = vrot.slane %v529, %v533
        %v535 = vlaneseq
        %v536 = vshrl.u32 %v535, 7
        %v537 = vsub.s32 1, %v536
        %v538 = vrot.slane %v529, %v537
        %v539 = vlaneseq
        %v540 = vshrl.u32 %v539, 7
        %v541 = vsub.s32 2, %v540
        %v542 = vrot.slane %v529, %v541
        %v543 = vlaneseq
        %v544 = vshrl.u32 %v543, 7
        %v545 = vsub.s32 3, %v544
        %v546 = vrot.slane %v529, %v545
        %v547 = vlaneseq
        %v548 = vshrl.u32 %v547, 7
        %v549 = vsub.s32 4, %v548
        %v550 = vrot.slane %v529, %v549
        %v812 = vunpack.c.l.b16 %v261
        %v813 = vunpack.c.l.b16 %v262
        %v814 = vunpack.c.l.b16 %v263
        %v815 = vunpack.c.l.b16 %v264
        %v816 = vunpack.c.l.b16 %v265
        %v817 = vunpack.c.l.b16 %v266
        %v818 = vunpack.c.l.b16 %v267
        %v819 = vunpack.c.l.b16 %v268
        %v820 = vunpack.c.l.b16 %v269
        %v821 = vunpack.c.l.b16 %v270
        %v822 = vunpack.c.l.b16 %v271
        %v823 = vunpack.c.l.b16 %v272
        %v824 = vunpack.c.l.b16 %v273
        %v825 = vunpack.c.l.b16 %v274
        %v826 = vunpack.c.l.b16 %v275
        %v827 = vunpack.c.l.b16 %v276
        %v828 = vunpack.c.l.b16 %v277
        %v829 = vunpack.c.l.b16 %v278
        %v830 = vunpack.c.l.b16 %v279
        %v831 = vunpack.c.l.b16 %v280
        %v832 = vunpack.c.l.b16 %v281
        %v833 = vunpack.c.l.b16 %v282
        %v834 = vunpack.c.l.b16 %v283
        %v835 = vunpack.c.l.b16 %v284
        %v836 = vunpack.c.l.b16 %v285
        %v837 = vunpack.c.l.b16 %v286
        %v838 = vunpack.c.l.b16 %v287
        %v839 = vunpack.c.l.b16 %v288
        %v840 = vunpack.c.l.b16 %v289
        %v841 = vunpack.c.l.b16 %v290
        %v842 = vunpack.c.l.b16 %v291
        %v843 = vunpack.c.l.b16 %v292
        %v844 = vunpack.c.l.b16 %v293
        %v845 = vunpack.c.l.b16 %v294
        %v846 = vunpack.c.l.b16 %v295
        %v847 = vunpack.c.l.b16 %v296
        %v848 = vunpack.c.l.b16 %v297
        %v849 = vunpack.c.l.b16 %v298
        %v850 = vunpack.c.l.b16 %v299
        %v851 = vunpack.c.l.b16 %v300
        %v852 = vunpack.c.l.b16 %v301
        %v853 = vunpack.c.l.b16 %v302
        %v854 = vunpack.c.l.b16 %v303
        %v855 = vunpack.c.l.b16 %v304
        %v856 = vunpack.c.l.b16 %v305
        %v857 = vunpack.c.l.b16 %v306
        %v858 = vunpack.c.l.b16 %v307
        %v859 = vunpack.c.l.b16 %v308
        %v860 = vunpack.c.l.b16 %v309
        %v861 = vunpack.c.l.b16 %v310
        %v862 = vunpack.c.l.b16 %v311
        %v863 = vunpack.c.l.b16 %v312
        %v864 = vunpack.c.l.b16 %v313
        %v865 = vunpack.c.l.b16 %v314
        %v866 = vunpack.c.l.b16 %v315
        %v867 = vunpack.c.l.b16 %v316
        %v868 = vunpack.c.l.b16 %v317
        %v869 = vunpack.c.l.b16 %v318
        %v870 = vunpack.c.l.b16 %v319
        %v871 = vunpack.c.l.b16 %v320
        %v872 = vunpack.c.l.b16 %v321
        %v873 = vunpack.c.l.b16 %v322
        %v874 = vunpack.c.l.b16 %v323
        %v875 = vunpack.c.l.b16 %v324
        %v876 = vunpack.c.l.b16 %v325
        %v877 = vunpack.c.l.b16 %v326
        %v878 = vunpack.c.l.b16 %v327
        %v879 = vunpack.c.l.b16 %v328
        %v880 = vunpack.c.l.b16 %v329
        %v881 = vunpack.c.l.b16 %v330
        %v882 = vunpack.c.l.b16 %v331
        %v883 = vunpack.c.l.b16 %v332
        %v884 = vunpack.c.l.b16 %v333
        %v885 = vunpack.c.l.b16 %v334
        %v886 = vunpack.c.l.b16 %v335
        %v887 = vunpack.c.l.b16 %v336
        %v888 = vunpack.c.l.b16 %v337
        %v889 = vunpack.c.l.b16 %v338
        %v890 = vunpack.c.l.b16 %v339
        %v891 = vunpack.c.l.b16 %v340
        %v892 = vunpack.c.l.b16 %v341
        %v893 = vunpack.c.l.b16 %v342
        %v894 = vunpack.c.l.b16 %v343
        %v895 = vunpack.c.l.b16 %v344
        %v896 = vunpack.c.l.b16 %v345
        %v897 = vunpack.c.l.b16 %v346
        %v898 = vunpack.c.l.b16 %v347
        %v899 = vunpack.c.l.b16 %v348
        %v900 = vunpack.c.l.b16 %v349
        %v901 = vunpack.c.l.b16 %v350
        %v902 = vunpack.c.l.b16 %v351
        %v903 = vunpack.c.l.b16 %v352
        %v904 = vunpack.c.l.b16 %v353
        %v905 = vunpack.c.l.b16 %v354
        %v906 = vunpack.c.l.b16 %v355
        %v907 = vunpack.c.l.b16 %v356
        %v908 = vunpack.c.l.b16 %v357
        %v909 = vunpack.c.l.b16 %v358
        %v910 = vunpack.c.l.b16 %v359
        %v911 = vunpack.c.l.b16 %v360
        %v912 = vunpack.c.l.b16 %v361
        %v913 = vunpack.c.l.b16 %v362
        %v914 = vunpack.c.l.b16 %v363
        %v915 = vunpack.c.l.b16 %v364
        %v916 = vunpack.c.l.b16 %v365
        %v917 = vunpack.c.l.b16 %v366
        %v918 = vunpack.c.l.b16 %v367
        %v919 = vunpack.c.l.b16 %v368
        %v920 = vunpack.c.l.b16 %v369
        %v921 = vunpack.c.l.b16 %v370
        %v922 = vunpack.c.l.b16 %v371
        %v923 = vunpack.c.l.b16 %v372
        %v924 = vunpack.c.l.b16 %v373
        %v925 = vunpack.c.l.b16 %v374
        %v926 = vunpack.c.l.b16 %v375
        %v927 = vunpack.c.l.b16 %v376
        %v928 = vunpack.c.l.b16 %v377
        %v929 = vunpack.c.l.b16 %v378
        %v930 = vunpack.c.l.b16 %v379
        %v931 = vunpack.c.l.b16 %v380
        %v932 = vunpack.c.l.b16 %v381
        %v933 = vunpack.c.l.b16 %v382
        %v934 = vunpack.c.l.b16 %v383
        %v935 = vunpack.c.l.b16 %v384
        %v936 = vunpack.c.l.b16 %v385
        %v937 = vunpack.c.l.b16 %v386
        %v938 = vunpack.c.l.b16 %v387
        %v939 = vunpack.c.l.b16 %v388
        %v940 = vunpack.c.l.b16 %v389
        %v941 = vunpack.c.l.b16 %v390
        %v942 = vunpack.c.l.b16 %v391
        %v943 = vunpack.c.l.b16 %v392
        %v944 = vunpack.c.l.b16 %v393
        %v945 = vunpack.c.l.b16 %v394
        %v946 = vunpack.c.l.b16 %v395
        %v947 = vunpack.c.l.b16 %v396
        %v948 = vunpack.c.l.b16 %v397
        %v949 = vunpack.c.l.b16 %v398
        %v950 = vunpack.c.l.b16 %v399
        %v951 = vunpack.c.l.b16 %v400
        %v952 = vunpack.c.l.b16 %v401
        %v953 = vunpack.c.l.b16 %v402
        %v954 = vunpack.c.l.b16 %v403
        %v955 = vunpack.c.l.b16 %v404
        %v956 = vunpack.c.l.b16 %v405
        %v957 = vunpack.c.l.b16 %v406
        %v958 = vunpack.c.l.b16 %v407
        %v959 = vunpack.c.l.b16 %v408
        %v960 = vunpack.c.l.b16 %v409
        %v961 = vunpack.c.l.b16 %v410
        %v962 = vunpack.c.l.b16 %v411
        %v963 = vunpack.c.l.b16 %v412
        %v964 = vunpack.c.l.b16 %v413
        %v965 = vunpack.c.l.b16 %v414
        %v966 = vunpack.c.l.b16 %v415
        %v967 = vunpack.c.l.b16 %v416
        %v968 = vunpack.c.l.b16 %v417
        %v969 = vunpack.c.l.b16 %v418
        %v970 = vunpack.c.l.b16 %v419
        %v971 = vunpack.c.l.b16 %v420
        %v972 = vunpack.c.l.b16 %v421
        %v973 = vunpack.c.l.b16 %v422
        %v974 = vunpack.c.l.b16 %v423
        %v975 = vunpack.c.l.b16 %v424
        %v976 = vunpack.c.l.b16 %v425
        %v977 = vunpack.c.l.b16 %v426
        %v978 = vunpack.c.l.b16 %v427
        %v979 = vunpack.c.l.b16 %v428
        %v980 = vunpack.c.l.b16 %v429
        %v981 = vunpack.c.l.b16 %v430
        %v982 = vunpack.c.l.b16 %v431
        %v983 = vunpack.c.l.b16 %v432
        %v984 = vunpack.c.l.b16 %v433
        %v985 = vunpack.c.l.b16 %v434
        %v986 = vunpack.c.l.b16 %v435
        %v987 = vunpack.c.l.b16 %v436
        %v988 = vunpack.c.l.b16 %v437
        %v989 = vunpack.c.l.b16 %v438
        %v990 = vunpack.c.l.b16 %v439
        %v991 = vunpack.c.l.b16 %v440
        %v992 = vunpack.c.l.b16 %v441
        %v993 = vunpack.c.l.b16 %v442
        %v994 = vunpack.c.l.b16 %v443
        %v995 = vunpack.c.l.b16 %v444
        %v996 = vunpack.c.l.b16 %v445
        %v997 = vunpack.c.l.b16 %v446
        %v998 = vunpack.c.l.b16 %v447
        %v999 = vunpack.c.l.b16 %v448
        %v1000 = vunpack.c.l.b16 %v449
        %v1001 = vunpack.c.l.b16 %v450
        %v1002 = vunpack.c.l.b16 %v451
        %v1003 = vunpack.c.l.b16 %v452
        %v1004 = vunpack.c.l.b16 %v453
        %v1005 = vunpack.c.l.b16 %v454
        %v1006 = vunpack.c.l.b16 %v455
        %v1007 = vunpack.c.l.b16 %v456
        %v1008 = vunpack.c.l.b16 %v457
        %v1009 = vunpack.c.l.b16 %v458
        %v1010 = vunpack.c.l.b16 %v459
        %v1011 = vunpack.c.l.b16 %v460
        %v1012 = vunpack.c.l.b16 %v461
        %v1013 = vunpack.c.l.b16 %v462
        %v1014 = vunpack.c.l.b16 %v463
        %v1015 = vunpack.c.l.b16 %v464
        %v1016 = vunpack.c.l.b16 %v465
        %v1017 = vunpack.c.l.b16 %v466
        %v1018 = vunpack.c.l.b16 %v467
        %v1019 = vunpack.c.l.b16 %v468
        %v1020 = vunpack.c.l.b16 %v469
        %v1021 = vunpack.c.l.b16 %v470
        %v1022 = vunpack.c.l.b16 %v471
        %v1023 = vunpack.c.l.b16 %v472
        %v1024 = vunpack.c.l.b16 %v473
        %v1025 = vunpack.c.l.b16 %v474
        %v1026 = vunpack.c.l.b16 %v475
        %v1027 = vunpack.c.l.b16 %v476
        %v1028 = vunpack.c.l.b16 %v477
        %v1029 = vunpack.c.l.b16 %v478
        %v1030 = vunpack.c.l.b16 %v479
        %v1031 = vunpack.c.l.b16 %v480
        %v1032 = vunpack.c.l.b16 %v481
        %v1033 = vunpack.c.l.b16 %v482
        %v1034 = vunpack.c.l.b16 %v483
        %v1035 = vunpack.c.l.b16 %v484
        %v1036 = vunpack.c.l.b16 %v485
        %v1037 = vunpack.c.l.b16 %v486
        %v1038 = vunpack.c.l.b16 %v487
        %v1039 = vunpack.c.l.b16 %v488
        %v1040 = vunpack.c.l.b16 %v489
        %v1041 = vunpack.c.l.b16 %v490
        %v1042 = vunpack.c.l.b16 %v491
        %v1043 = vunpack.c.l.b16 %v492
        %v1044 = vunpack.c.l.b16 %v493
        %v1045 = vunpack.c.l.b16 %v494
        %v1046 = vunpack.c.l.b16 %v495
        %v1047 = vunpack.c.l.b16 %v496
        %v1048 = vunpack.c.l.b16 %v497
        %v1049 = vunpack.c.l.b16 %v498
        %v1050 = vunpack.c.l.b16 %v499
        %v1051 = vunpack.c.l.b16 %v500
        %v1052 = vunpack.c.l.b16 %v501
        %v1053 = vunpack.c.l.b16 %v502
        %v1054 = vunpack.c.l.b16 %v503
        %v1055 = vunpack.c.l.b16 %v504
        %v1056 = vunpack.c.l.b16 %v505
        %v1057 = vunpack.c.l.b16 %v506
        %v1058 = vunpack.c.l.b16 %v507
        %v1059 = vunpack.c.l.b16 %v508
        %v1060 = vunpack.c.l.b16 %v509
        %v1061 = vunpack.c.l.b16 %v510
        %v1062 = vunpack.c.l.b16 %v511
        %v1063 = vunpack.c.l.b16 %v512
        %v1064 = vunpack.c.l.b16 %v513
        %v1065 = vunpack.c.l.b16 %v514
        %v1066 = vunpack.c.l.b16 %v515
        %v1067 = vunpack.c.l.b16 %v516
        %v1068 = vpack.c.b16 %v813, %v812
        %v1069 = vpack.c.b16 %v815, %v814
        %v1070 = vpack.c.b16 %v817, %v816
        %v1071 = vpack.c.b16 %v819, %v818
        %v1072 = vpack.c.b16 %v821, %v820
        %v1073 = vpack.c.b16 %v823, %v822
        %v1074 = vpack.c.b16 %v825, %v824
        %v1075 = vpack.c.b16 %v827, %v826
        %v1076 = vpack.c.b16 %v829, %v828
        %v1077 = vpack.c.b16 %v831, %v830
        %v1078 = vpack.c.b16 %v833, %v832
        %v1079 = vpack.c.b16 %v835, %v834
        %v1080 = vpack.c.b16 %v837, %v836
        %v1081 = vpack.c.b16 %v839, %v838
        %v1082 = vpack.c.b16 %v841, %v840
        %v1083 = vpack.c.b16 %v843, %v842
        %v1084 = vpack.c.b16 %v845, %v844
        %v1085 = vpack.c.b16 %v847, %v846
        %v1086 = vpack.c.b16 %v849, %v848
        %v1087 = vpack.c.b16 %v851, %v850
        %v1088 = vpack.c.b16 %v853, %v852
        %v1089 = vpack.c.b16 %v855, %v854
        %v1090 = vpack.c.b16 %v857, %v856
        %v1091 = vpack.c.b16 %v859, %v858
        %v1092 = vpack.c.b16 %v861, %v860
        %v1093 = vpack.c.b16 %v863, %v862
        %v1094 = vpack.c.b16 %v865, %v864
        %v1095 = vpack.c.b16 %v867, %v866
        %v1096 = vpack.c.b16 %v869, %v868
        %v1097 = vpack.c.b16 %v871, %v870
        %v1098 = vpack.c.b16 %v873, %v872
        %v1099 = vpack.c.b16 %v875, %v874
        %v1100 = vpack.c.b16 %v877, %v876
        %v1101 = vpack.c.b16 %v879, %v878
        %v1102 = vpack.c.b16 %v881, %v880
        %v1103 = vpack.c.b16 %v883, %v882
        %v1104 = vpack.c.b16 %v885, %v884
        %v1105 = vpack.c.b16 %v887, %v886
        %v1106 = vpack.c.b16 %v889, %v888
        %v1107 = vpack.c.b16 %v891, %v890
        %v1108 = vpack.c.b16 %v893, %v892
        %v1109 = vpack.c.b16 %v895, %v894
        %v1110 = vpack.c.b16 %v897, %v896
        %v1111 = vpack.c.b16 %v899, %v898
        %v1112 = vpack.c.b16 %v901, %v900
        %v1113 = vpack.c.b16 %v903, %v902
        %v1114 = vpack.c.b16 %v905, %v904
        %v1115 = vpack.c.b16 %v907, %v906
        %v1116 = vpack.c.b16 %v909, %v908
        %v1117 = vpack.c.b16 %v911, %v910
        %v1118 = vpack.c.b16 %v913, %v912
        %v1119 = vpack.c.b16 %v915, %v914
        %v1120 = vpack.c.b16 %v917, %v916
        %v1121 = vpack.c.b16 %v919, %v918
        %v1122 = vpack.c.b16 %v921, %v920
        %v1123 = vpack.c.b16 %v923, %v922
        %v1124 = vpack.c.b16 %v925, %v924
        %v1125 = vpack.c.b16 %v927, %v926
        %v1126 = vpack.c.b16 %v929, %v928
        %v1127 = vpack.c.b16 %v931, %v930
        %v1128 = vpack.c.b16 %v933, %v932
        %v1129 = vpack.c.b16 %v935, %v934
        %v1130 = vpack.c.b16 %v937, %v936
        %v1131 = vpack.c.b16 %v939, %v938
        %v1132 = vpack.c.b16 %v941, %v940
        %v1133 = vpack.c.b16 %v943, %v942
        %v1134 = vpack.c.b16 %v945, %v944
        %v1135 = vpack.c.b16 %v947, %v946
        %v1136 = vpack.c.b16 %v949, %v948
        %v1137 = vpack.c.b16 %v951, %v950
        %v1138 = vpack.c.b16 %v953, %v952
        %v1139 = vpack.c.b16 %v955, %v954
        %v1140 = vpack.c.b16 %v957, %v956
        %v1141 = vpack.c.b16 %v959, %v958
        %v1142 = vpack.c.b16 %v961, %v960
        %v1143 = vpack.c.b16 %v963, %v962
        %v1144 = vpack.c.b16 %v965, %v964
        %v1145 = vpack.c.b16 %v967, %v966
        %v1146 = vpack.c.b16 %v969, %v968
        %v1147 = vpack.c.b16 %v971, %v970
        %v1148 = vpack.c.b16 %v973, %v972
        %v1149 = vpack.c.b16 %v975, %v974
        %v1150 = vpack.c.b16 %v977, %v976
        %v1151 = vpack.c.b16 %v979, %v978
        %v1152 = vpack.c.b16 %v981, %v980
        %v1153 = vpack.c.b16 %v983, %v982
        %v1154 = vpack.c.b16 %v985, %v984
        %v1155 = vpack.c.b16 %v987, %v986
        %v1156 = vpack.c.b16 %v989, %v988
        %v1157 = vpack.c.b16 %v991, %v990
        %v1158 = vpack.c.b16 %v993, %v992
        %v1159 = vpack.c.b16 %v995, %v994
        %v1160 = vpack.c.b16 %v997, %v996
        %v1161 = vpack.c.b16 %v999, %v998
        %v1162 = vpack.c.b16 %v1001, %v1000
        %v1163 = vpack.c.b16 %v1003, %v1002
        %v1164 = vpack.c.b16 %v1005, %v1004
        %v1165 = vpack.c.b16 %v1007, %v1006
        %v1166 = vpack.c.b16 %v1009, %v1008
        %v1167 = vpack.c.b16 %v1011, %v1010
        %v1168 = vpack.c.b16 %v1013, %v1012
        %v1169 = vpack.c.b16 %v1015, %v1014
        %v1170 = vpack.c.b16 %v1017, %v1016
        %v1171 = vpack.c.b16 %v1019, %v1018
        %v1172 = vpack.c.b16 %v1021, %v1020
        %v1173 = vpack.c.b16 %v1023, %v1022
        %v1174 = vpack.c.b16 %v1025, %v1024
        %v1175 = vpack.c.b16 %v1027, %v1026
        %v1176 = vpack.c.b16 %v1029, %v1028
        %v1177 = vpack.c.b16 %v1031, %v1030
        %v1178 = vpack.c.b16 %v1033, %v1032
        %v1179 = vpack.c.b16 %v1035, %v1034
        %v1180 = vpack.c.b16 %v1037, %v1036
        %v1181 = vpack.c.b16 %v1039, %v1038
        %v1182 = vpack.c.b16 %v1041, %v1040
        %v1183 = vpack.c.b16 %v1043, %v1042
        %v1184 = vpack.c.b16 %v1045, %v1044
        %v1185 = vpack.c.b16 %v1047, %v1046
        %v1186 = vpack.c.b16 %v1049, %v1048
        %v1187 = vpack.c.b16 %v1051, %v1050
        %v1188 = vpack.c.b16 %v1053, %v1052
        %v1189 = vpack.c.b16 %v1055, %v1054
        %v1190 = vpack.c.b16 %v1057, %v1056
        %v1191 = vpack.c.b16 %v1059, %v1058
        %v1192 = vpack.c.b16 %v1061, %v1060
        %v1193 = vpack.c.b16 %v1063, %v1062
        %v1194 = vpack.c.b16 %v1065, %v1064
        %v1195 = vpack.c.b16 %v1067, %v1066
        %v1208 = vunpack.c.l.b16 %v517
        %v1209 = vunpack.c.h.b16 %v517
        %v1210 = vunpack.c.l.b16 %v518
        %v1211 = vunpack.c.h.b16 %v518
        %v1212 = vunpack.c.l.b16 %v519
        %v1213 = vunpack.c.l.b16 %v520
        %v1214 = vunpack.c.h.b16 %v520
        %v1215 = vunpack.c.l.b16 %v521
        %v1216 = vunpack.c.h.b16 %v521
        %v1217 = vunpack.c.l.b16 %v522
        %v1218 = vunpack.c.l.b16 %v523
        %v1219 = vunpack.c.h.b16 %v523
        %v1220 = vunpack.c.l.b16 %v524
        %v1221 = vunpack.c.h.b16 %v524
        %v1222 = vunpack.c.l.b16 %v525
        %v1223 = vunpack.c.l.b16 %v526
        %v1224 = vunpack.c.h.b16 %v526
        %v1225 = vunpack.c.l.b16 %v527
        %v1226 = vunpack.c.h.b16 %v527
        %v1227 = vunpack.c.l.b16 %v528
        %v1228 = vpack.c.b16 %v1213, %v1208
        %v1229 = vpack.c.b16 %v1214, %v1209
        %v1230 = vpack.c.b16 %v1215, %v1210
        %v1231 = vpack.c.b16 %v1216, %v1211
        %v1232 = vpack.c.b16 %v1217, %v1212
        %v1233 = vpack.c.b16 %v1223, %v1218
        %v1234 = vpack.c.b16 %v1224, %v1219
        %v1235 = vpack.c.b16 %v1225, %v1220
        %v1236 = vpack.c.b16 %v1226, %v1221
        %v1237 = vpack.c.b16 %v1227, %v1222
        %vm1248 = vcmask 261120
        %v1250 = vsel %vm1248, %v1068, 0
        %v1253 = vsel %vm1248, %v1069, 0
        %v1256 = vsel %vm1248, %v1070, 0
        %v1259 = vsel %vm1248, %v1071, 0
        %v1262 = vsel %vm1248, %v1072, 0
        %v1265 = vsel %vm1248, %v1073, 0
        %v1268 = vsel %vm1248, %v1074, 0
        %v1271 = vsel %vm1248, %v1075, 0
        %v1274 = vsel %vm1248, %v1076, 0
        %v1277 = vsel %vm1248, %v1077, 0
        %v1280 = vsel %vm1248, %v1078, 0
        %v1283 = vsel %vm1248, %v1079, 0
        %v1286 = vsel %vm1248, %v1080, 0
        %v1289 = vsel %vm1248, %v1081, 0
        %v1292 = vsel %vm1248, %v1082, 0
        %v1295 = vsel %vm1248, %v1083, 0
        %v1298 = vsel %vm1248, %v1084, 0
        %v1301 = vsel %vm1248, %v1085, 0
        %v1304 = vsel %vm1248, %v1086, 0
        %v1307 = vsel %vm1248, %v1087, 0
        %v1310 = vsel %vm1248, %v1088, 0
        %v1313 = vsel %vm1248, %v1089, 0
        %v1316 = vsel %vm1248, %v1090, 0
        %v1319 = vsel %vm1248, %v1091, 0
        %v1322 = vsel %vm1248, %v1092, 0
        %v1325 = vsel %vm1248, %v1093, 0
        %v1328 = vsel %vm1248, %v1094, 0
        %v1331 = vsel %vm1248, %v1095, 0
        %v1334 = vsel %vm1248, %v1096, 0
        %v1337 = vsel %vm1248, %v1097, 0
        %v1340 = vsel %vm1248, %v1098, 0
        %v1343 = vsel %vm1248, %v1099, 0
        %v1346 = vsel %vm1248, %v1100, 0
        %v1349 = vsel %vm1248, %v1101, 0
        %v1352 = vsel %vm1248, %v1102, 0
        %v1355 = vsel %vm1248, %v1103, 0
        %v1358 = vsel %vm1248, %v1104, 0
        %v1361 = vsel %vm1248, %v1105, 0
        %v1364 = vsel %vm1248, %v1106, 0
        %v1367 = vsel %vm1248, %v1107, 0
        %v1370 = vsel %vm1248, %v1108, 0
        %v1373 = vsel %vm1248, %v1109, 0
        %v1376 = vsel %vm1248, %v1110, 0
        %v1379 = vsel %vm1248, %v1111, 0
        %v1382 = vsel %vm1248, %v1112, 0
        %v1385 = vsel %vm1248, %v1113, 0
        %v1388 = vsel %vm1248, %v1114, 0
        %v1391 = vsel %vm1248, %v1115, 0
        %v1394 = vsel %vm1248, %v1116, 0
        %v1397 = vsel %vm1248, %v1117, 0
        %v1400 = vsel %vm1248, %v1118, 0
        %v1403 = vsel %vm1248, %v1119, 0
        %v1406 = vsel %vm1248, %v1120, 0
        %v1409 = vsel %vm1248, %v1121, 0
        %v1412 = vsel %vm1248, %v1122, 0
        %v1415 = vsel %vm1248, %v1123, 0
        %v1418 = vsel %vm1248, %v1124, 0
        %v1421 = vsel %vm1248, %v1125, 0
        %v1424 = vsel %vm1248, %v1126, 0
        %v1427 = vsel %vm1248, %v1127, 0
        %v1430 = vsel %vm1248, %v1128, 0
        %v1433 = vsel %vm1248, %v1129, 0
        %v1436 = vsel %vm1248, %v1130, 0
        %v1439 = vsel %vm1248, %v1131, 0
        %v1442 = vsel %vm1248, %v1132, 0
        %v1445 = vsel %vm1248, %v1133, 0
        %v1448 = vsel %vm1248, %v1134, 0
        %v1451 = vsel %vm1248, %v1135, 0
        %v1454 = vsel %vm1248, %v1136, 0
        %v1457 = vsel %vm1248, %v1137, 0
        %v1460 = vsel %vm1248, %v1138, 0
        %v1463 = vsel %vm1248, %v1139, 0
        %v1466 = vsel %vm1248, %v1140, 0
        %v1469 = vsel %vm1248, %v1141, 0
        %v1472 = vsel %vm1248, %v1142, 0
        %v1475 = vsel %vm1248, %v1143, 0
        %v1478 = vsel %vm1248, %v1144, 0
        %v1481 = vsel %vm1248, %v1145, 0
        %v1484 = vsel %vm1248, %v1146, 0
        %v1487 = vsel %vm1248, %v1147, 0
        %v1490 = vsel %vm1248, %v1148, 0
        %v1493 = vsel %vm1248, %v1149, 0
        %v1496 = vsel %vm1248, %v1150, 0
        %v1499 = vsel %vm1248, %v1151, 0
        %v1502 = vsel %vm1248, %v1152, 0
        %v1505 = vsel %vm1248, %v1153, 0
        %v1508 = vsel %vm1248, %v1154, 0
        %v1511 = vsel %vm1248, %v1155, 0
        %v1514 = vsel %vm1248, %v1156, 0
        %v1517 = vsel %vm1248, %v1157, 0
        %v1520 = vsel %vm1248, %v1158, 0
        %v1523 = vsel %vm1248, %v1159, 0
        %v1526 = vsel %vm1248, %v1160, 0
        %v1529 = vsel %vm1248, %v1161, 0
        %v1532 = vsel %vm1248, %v1162, 0
        %v1535 = vsel %vm1248, %v1163, 0
        %v1538 = vsel %vm1248, %v1164, 0
        %v1541 = vsel %vm1248, %v1165, 0
        %v1544 = vsel %vm1248, %v1166, 0
        %v1547 = vsel %vm1248, %v1167, 0
        %v1550 = vsel %vm1248, %v1168, 0
        %v1553 = vsel %vm1248, %v1169, 0
        %v1556 = vsel %vm1248, %v1170, 0
        %v1559 = vsel %vm1248, %v1171, 0
        %v1562 = vsel %vm1248, %v1172, 0
        %v1565 = vsel %vm1248, %v1173, 0
        %v1568 = vsel %vm1248, %v1174, 0
        %v1571 = vsel %vm1248, %v1175, 0
        %v1574 = vsel %vm1248, %v1176, 0
        %v1577 = vsel %vm1248, %v1177, 0
        %v1580 = vsel %vm1248, %v1178, 0
        %v1583 = vsel %vm1248, %v1179, 0
        %v1586 = vsel %vm1248, %v1180, 0
        %v1589 = vsel %vm1248, %v1181, 0
        %v1592 = vsel %vm1248, %v1182, 0
        %v1595 = vsel %vm1248, %v1183, 0
        %v1598 = vsel %vm1248, %v1184, 0
        %v1601 = vsel %vm1248, %v1185, 0
        %v1604 = vsel %vm1248, %v1186, 0
        %v1607 = vsel %vm1248, %v1187, 0
        %v1610 = vsel %vm1248, %v1188, 0
        %v1613 = vsel %vm1248, %v1189, 0
        %v1616 = vsel %vm1248, %v1190, 0
        %v1619 = vsel %vm1248, %v1191, 0
        %v1622 = vsel %vm1248, %v1192, 0
        %v1625 = vsel %vm1248, %v1193, 0
        %v1628 = vsel %vm1248, %v1194, 0
        %v1631 = vsel %vm1248, %v1195, 0
        %1633 = vmatprep.subr.bf16.mxu0 %v1229
        %1634 = vmatpush1.bf16.msra.mxu0 %v1228
        %1635 = vmatprep.subr.bf16.mxu0 %v1234
        %1636 = vmatpush1.bf16.msra.mxu0 %v1233
        %1637 = vmatprep.subr.bf16.mxu0 0
        %1638 = vmatpush1.bf16.msra.mxu0 0
        %1639 = vmatprep.subr.bf16.mxu0 0
        %1640 = vmatpush1.bf16.msra.mxu0 0
        %1641 = vmatprep.subr.bf16.mxu0 0
        %1642 = vmatpush1.bf16.msra.mxu0 0
        %1643 = vmatprep.subr.bf16.mxu0 0
        %1644 = vmatpush1.bf16.msra.mxu0 0
        %1645 = vmatprep.subr.bf16.mxu0 0
        %1646 = vmatpush1.bf16.msra.mxu0 0
        %1647 = vmatprep.subr.bf16.mxu0 0
        %1648 = vmatpush1.bf16.msra.mxu0 0
        %1649 = vmatprep.subr.bf16.mxu0 0
        %1650 = vmatpush1.bf16.msra.mxu0 0
        %1651 = vmatprep.subr.bf16.mxu0 0
        %1652 = vmatpush1.bf16.msra.mxu0 0
        %1653 = vmatprep.subr.bf16.mxu0 0
        %1654 = vmatpush1.bf16.msra.mxu0 0
        %1655 = vmatprep.subr.bf16.mxu0 0
        %1656 = vmatpush1.bf16.msra.mxu0 0
        %1657 = vmatprep.subr.bf16.mxu0 0
        %1658 = vmatpush1.bf16.msra.mxu0 0
        %1659 = vmatprep.subr.bf16.mxu0 0
        %1660 = vmatpush1.bf16.msra.mxu0 0
        %1661 = vmatprep.subr.bf16.mxu0 0
        %1662 = vmatpush1.bf16.msra.mxu0 0
        %1663 = vmatprep.subr.bf16.mxu0 0
        %1664 = vmatpush1.bf16.msra.mxu0 0
        %1665 = vmatprep.mubr.bf16.mxu0 0
        %1666 = vmatmul.mubr.bf16.gmra.mrb[0].mxu0 %v1250
        %v1667 = vpop.f32.mrb[0].mxu0
        %v1668 = vadd.f32 %v534, %v1667
        %v1669 = vpop.f32.mrb[0].mxu0
        %v1670 = vadd.f32 %v538, %v1669
        %v1671 = vpop.f32.mrb[0].mxu0
        %v1672 = vadd.f32 %v534, %v1671
        %v1673 = vpop.f32.mrb[0].mxu0
        %v1674 = vadd.f32 %v538, %v1673
        %1675 = vmatprep.mubr.bf16.mxu0 0
        %1676 = vmatmul.mubr.bf16.gmra.mrb[0].mxu0 %v1253
        %v1677 = vpop.f32.mrb[0].mxu0
        %v1678 = vadd.f32 %v534, %v1677
        %v1679 = vpop.f32.mrb[0].mxu0
        %v1680 = vadd.f32 %v538, %v1679
        %v1681 = vpop.f32.mrb[0].mxu0
        %v1682 = vadd.f32 %v534, %v1681
        %v1683 = vpop.f32.mrb[0].mxu0
        %v1684 = vadd.f32 %v538, %v1683
        %1685 = vmatprep.mubr.bf16.mxu0 0
        %1686 = vmatmul.mubr.bf16.gmra.mrb[0].mxu0 %v1256
        %v1687 = vpop.f32.mrb[0].mxu0
        %v1688 = vadd.f32 %v534, %v1687
        %v1689 = vpop.f32.mrb[0].mxu0
        %v1690 = vadd.f32 %v538, %v1689
        %v1691 = vpop.f32.mrb[0].mxu0
        %v1692 = vadd.f32 %v534, %v1691
        %v1693 = vpop.f32.mrb[0].mxu0
        %v1694 = vadd.f32 %v538, %v1693
        %1695 = vmatprep.mubr.bf16.mxu0 0
        %1696 = vmatmul.mubr.bf16.gmra.mrb[0].mxu0 %v1259
        %v1697 = vpop.f32.mrb[0].mxu0
        %v1698 = vadd.f32 %v534, %v1697
        %v1699 = vpop.f32.mrb[0].mxu0
        %v1700 = vadd.f32 %v538, %v1699
        %v1701 = vpop.f32.mrb[0].mxu0
        %v1702 = vadd.f32 %v534, %v1701
        %v1703 = vpop.f32.mrb[0].mxu0
        %v1704 = vadd.f32 %v538, %v1703
        %1705 = vmatprep.mubr.bf16.mxu0 0
        %1706 = vmatmul.mubr.bf16.gmra.mrb[0].mxu0 %v1262
        %v1707 = vpop.f32.mrb[0].mxu0
        %v1708 = vadd.f32 %v534, %v1707
        %v1709 = vpop.f32.mrb[0].mxu0
        %v1710 = vadd.f32 %v538, %v1709
        %v1711 = vpop.f32.mrb[0].mxu0
        %v1712 = vadd.f32 %v534, %v1711
        %v1713 = vpop.f32.mrb[0].mxu0
        %v1714 = vadd.f32 %v538, %v1713
        %1715 = vmatprep.mubr.bf16.mxu0 0
        %1716 = vmatmul.mubr.bf16.gmra.mrb[0].mxu0 %v1265
        %v1717 = vpop.f32.mrb[0].mxu0
        %v1718 = vadd.f32 %v534, %v1717
        %v1719 = vpop.f32.mrb[0].mxu0
        %v1720 = vadd.f32 %v538, %v1719
        %v1721 = vpop.f32.mrb[0].mxu0
        %v1722 = vadd.f32 %v534, %v1721
        %v1723 = vpop.f32.mrb[0].mxu0
        %v1724 = vadd.f32 %v538, %v1723
        %1725 = vmatprep.mubr.bf16.mxu0 0
        %1726 = vmatmul.mubr.bf16.gmra.mrb[0].mxu0 %v1268
        %v1727 = vpop.f32.mrb[0].mxu0
        %v1728 = vadd.f32 %v534, %v1727
        %v1729 = vpop.f32.mrb[0].mxu0
        %v1730 = vadd.f32 %v538, %v1729
        %v1731 = vpop.f32.mrb[0].mxu0
        %v1732 = vadd.f32 %v534, %v1731
        %v1733 = vpop.f32.mrb[0].mxu0
        %v1734 = vadd.f32 %v538, %v1733
        %1735 = vmatprep.mubr.bf16.mxu0 0
        %1736 = vmatmul.mubr.bf16.gmra.mrb[0].mxu0 %v1271
        %v1737 = vpop.f32.mrb[0].mxu0
        %v1738 = vadd.f32 %v534, %v1737
        %v1739 = vpop.f32.mrb[0].mxu0
        %v1740 = vadd.f32 %v538, %v1739
        %v1741 = vpop.f32.mrb[0].mxu0
        %v1742 = vadd.f32 %v534, %v1741
        %v1743 = vpop.f32.mrb[0].mxu0
        %v1744 = vadd.f32 %v538, %v1743
        %1745 = vmatprep.mubr.bf16.mxu0 0
        %1746 = vmatmul.mubr.bf16.gmra.mrb[0].mxu0 %v1274
        %v1747 = vpop.f32.mrb[0].mxu0
        %v1748 = vadd.f32 %v534, %v1747
        %v1749 = vpop.f32.mrb[0].mxu0
        %v1750 = vadd.f32 %v538, %v1749
        %v1751 = vpop.f32.mrb[0].mxu0
        %v1752 = vadd.f32 %v534, %v1751
        %v1753 = vpop.f32.mrb[0].mxu0
        %v1754 = vadd.f32 %v538, %v1753
        %1755 = vmatprep.mubr.bf16.mxu0 0
        %1756 = vmatmul.mubr.bf16.gmra.mrb[0].mxu0 %v1277
        %v1757 = vpop.f32.mrb[0].mxu0
        %v1758 = vadd.f32 %v534, %v1757
        %v1759 = vpop.f32.mrb[0].mxu0
        %v1760 = vadd.f32 %v538, %v1759
        %v1761 = vpop.f32.mrb[0].mxu0
        %v1762 = vadd.f32 %v534, %v1761
        %v1763 = vpop.f32.mrb[0].mxu0
        %v1764 = vadd.f32 %v538, %v1763
        %1765 = vmatprep.mubr.bf16.mxu0 0
        %1766 = vmatmul.mubr.bf16.gmra.mrb[0].mxu0 %v1280
        %v1767 = vpop.f32.mrb[0].mxu0
        %v1768 = vadd.f32 %v534, %v1767
        %v1769 = vpop.f32.mrb[0].mxu0
        %v1770 = vadd.f32 %v538, %v1769
        %v1771 = vpop.f32.mrb[0].mxu0
        %v1772 = vadd.f32 %v534, %v1771
        %v1773 = vpop.f32.mrb[0].mxu0
        %v1774 = vadd.f32 %v538, %v1773
        %1775 = vmatprep.mubr.bf16.mxu0 0
        %1776 = vmatmul.mubr.bf16.gmra.mrb[0].mxu0 %v1283
        %v1777 = vpop.f32.mrb[0].mxu0
        %v1778 = vadd.f32 %v534, %v1777
        %v1779 = vpop.f32.mrb[0].mxu0
        %v1780 = vadd.f32 %v538, %v1779
        %v1781 = vpop.f32.mrb[0].mxu0
        %v1782 = vadd.f32 %v534, %v1781
        %v1783 = vpop.f32.mrb[0].mxu0
        %v1784 = vadd.f32 %v538, %v1783
        %1785 = vmatprep.mubr.bf16.mxu0 0
        %1786 = vmatmul.mubr.bf16.gmra.mrb[0].mxu0 %v1286
        %v1787 = vpop.f32.mrb[0].mxu0
        %v1788 = vadd.f32 %v534, %v1787
        %v1789 = vpop.f32.mrb[0].mxu0
        %v1790 = vadd.f32 %v538, %v1789
        %v1791 = vpop.f32.mrb[0].mxu0
        %v1792 = vadd.f32 %v534, %v1791
        %v1793 = vpop.f32.mrb[0].mxu0
        %v1794 = vadd.f32 %v538, %v1793
        %1795 = vmatprep.mubr.bf16.mxu0 0
        %1796 = vmatmul.mubr.bf16.gmra.mrb[0].mxu0 %v1289
        %v1797 = vpop.f32.mrb[0].mxu0
        %v1798 = vadd.f32 %v534, %v1797
        %v1799 = vpop.f32.mrb[0].mxu0
        %v1800 = vadd.f32 %v538, %v1799
        %v1801 = vpop.f32.mrb[0].mxu0
        %v1802 = vadd.f32 %v534, %v1801
        %v1803 = vpop.f32.mrb[0].mxu0
        %v1804 = vadd.f32 %v538, %v1803
        %1805 = vmatprep.mubr.bf16.mxu0 0
        %1806 = vmatmul.mubr.bf16.gmra.mrb[0].mxu0 %v1292
        %v1807 = vpop.f32.mrb[0].mxu0
        %v1808 = vadd.f32 %v534, %v1807
        %v1809 = vpop.f32.mrb[0].mxu0
        %v1810 = vadd.f32 %v538, %v1809
        %v1811 = vpop.f32.mrb[0].mxu0
        %v1812 = vadd.f32 %v534, %v1811
        %v1813 = vpop.f32.mrb[0].mxu0
        %v1814 = vadd.f32 %v538, %v1813
        %1815 = vmatprep.mubr.bf16.mxu0 0
        %1816 = vmatmul.mubr.bf16.gmra.mrb[0].mxu0 %v1295
        %v1817 = vpop.f32.mrb[0].mxu0
        %v1818 = vadd.f32 %v534, %v1817
        %v1819 = vpop.f32.mrb[0].mxu0
        %v1820 = vadd.f32 %v538, %v1819
        %v1821 = vpop.f32.mrb[0].mxu0
        %v1822 = vadd.f32 %v534, %v1821
        %v1823 = vpop.f32.mrb[0].mxu0
        %v1824 = vadd.f32 %v538, %v1823
        %1825 = vmatprep.mubr.bf16.mxu0 0
        %1826 = vmatmul.mubr.bf16.gmra.mrb[0].mxu0 %v1298
        %v1827 = vpop.f32.mrb[0].mxu0
        %v1828 = vadd.f32 %v534, %v1827
        %v1829 = vpop.f32.mrb[0].mxu0
        %v1830 = vadd.f32 %v538, %v1829
        %v1831 = vpop.f32.mrb[0].mxu0
        %v1832 = vadd.f32 %v534, %v1831
        %v1833 = vpop.f32.mrb[0].mxu0
        %v1834 = vadd.f32 %v538, %v1833
        %1835 = vmatprep.mubr.bf16.mxu0 0
        %1836 = vmatmul.mubr.bf16.gmra.mrb[0].mxu0 %v1301
        %v1837 = vpop.f32.mrb[0].mxu0
        %v1838 = vadd.f32 %v534, %v1837
        %v1839 = vpop.f32.mrb[0].mxu0
        %v1840 = vadd.f32 %v538, %v1839
        %v1841 = vpop.f32.mrb[0].mxu0
        %v1842 = vadd.f32 %v534, %v1841
        %v1843 = vpop.f32.mrb[0].mxu0
        %v1844 = vadd.f32 %v538, %v1843
        %1845 = vmatprep.mubr.bf16.mxu0 0
        %1846 = vmatmul.mubr.bf16.gmra.mrb[0].mxu0 %v1304
        %v1847 = vpop.f32.mrb[0].mxu0
        %v1848 = vadd.f32 %v534, %v1847
        %v1849 = vpop.f32.mrb[0].mxu0
        %v1850 = vadd.f32 %v538, %v1849
        %v1851 = vpop.f32.mrb[0].mxu0
        %v1852 = vadd.f32 %v534, %v1851
        %v1853 = vpop.f32.mrb[0].mxu0
        %v1854 = vadd.f32 %v538, %v1853
        %1855 = vmatprep.mubr.bf16.mxu0 0
        %1856 = vmatmul.mubr.bf16.gmra.mrb[0].mxu0 %v1307
        %v1857 = vpop.f32.mrb[0].mxu0
        %v1858 = vadd.f32 %v534, %v1857
        %v1859 = vpop.f32.mrb[0].mxu0
        %v1860 = vadd.f32 %v538, %v1859
        %v1861 = vpop.f32.mrb[0].mxu0
        %v1862 = vadd.f32 %v534, %v1861
        %v1863 = vpop.f32.mrb[0].mxu0
        %v1864 = vadd.f32 %v538, %v1863
        %1865 = vmatprep.mubr.bf16.mxu0 0
        %1866 = vmatmul.mubr.bf16.gmra.mrb[0].mxu0 %v1310
        %v1867 = vpop.f32.mrb[0].mxu0
        %v1868 = vadd.f32 %v534, %v1867
        %v1869 = vpop.f32.mrb[0].mxu0
        %v1870 = vadd.f32 %v538, %v1869
        %v1871 = vpop.f32.mrb[0].mxu0
        %v1872 = vadd.f32 %v534, %v1871
        %v1873 = vpop.f32.mrb[0].mxu0
        %v1874 = vadd.f32 %v538, %v1873
        %1875 = vmatprep.mubr.bf16.mxu0 0
        %1876 = vmatmul.mubr.bf16.gmra.mrb[0].mxu0 %v1313
        %v1877 = vpop.f32.mrb[0].mxu0
        %v1878 = vadd.f32 %v534, %v1877
        %v1879 = vpop.f32.mrb[0].mxu0
        %v1880 = vadd.f32 %v538, %v1879
        %v1881 = vpop.f32.mrb[0].mxu0
        %v1882 = vadd.f32 %v534, %v1881
        %v1883 = vpop.f32.mrb[0].mxu0
        %v1884 = vadd.f32 %v538, %v1883
        %1885 = vmatprep.mubr.bf16.mxu0 0
        %1886 = vmatmul.mubr.bf16.gmra.mrb[0].mxu0 %v1316
        %v1887 = vpop.f32.mrb[0].mxu0
        %v1888 = vadd.f32 %v534, %v1887
        %v1889 = vpop.f32.mrb[0].mxu0
        %v1890 = vadd.f32 %v538, %v1889
        %v1891 = vpop.f32.mrb[0].mxu0
        %v1892 = vadd.f32 %v534, %v1891
        %v1893 = vpop.f32.mrb[0].mxu0
        %v1894 = vadd.f32 %v538, %v1893
        %1895 = vmatprep.mubr.bf16.mxu0 0
        %1896 = vmatmul.mubr.bf16.gmra.mrb[0].mxu0 %v1319
        %v1897 = vpop.f32.mrb[0].mxu0
        %v1898 = vadd.f32 %v534, %v1897
        %v1899 = vpop.f32.mrb[0].mxu0
        %v1900 = vadd.f32 %v538, %v1899
        %v1901 = vpop.f32.mrb[0].mxu0
        %v1902 = vadd.f32 %v534, %v1901
        %v1903 = vpop.f32.mrb[0].mxu0
        %v1904 = vadd.f32 %v538, %v1903
        %1905 = vmatprep.mubr.bf16.mxu0 0
        %1906 = vmatmul.mubr.bf16.gmra.mrb[0].mxu0 %v1322
        %v1907 = vpop.f32.mrb[0].mxu0
        %v1908 = vadd.f32 %v534, %v1907
        %v1909 = vpop.f32.mrb[0].mxu0
        %v1910 = vadd.f32 %v538, %v1909
        %v1911 = vpop.f32.mrb[0].mxu0
        %v1912 = vadd.f32 %v534, %v1911
        %v1913 = vpop.f32.mrb[0].mxu0
        %v1914 = vadd.f32 %v538, %v1913
        %1915 = vmatprep.mubr.bf16.mxu0 0
        %1916 = vmatmul.mubr.bf16.gmra.mrb[0].mxu0 %v1325
        %v1917 = vpop.f32.mrb[0].mxu0
        %v1918 = vadd.f32 %v534, %v1917
        %v1919 = vpop.f32.mrb[0].mxu0
        %v1920 = vadd.f32 %v538, %v1919
        %v1921 = vpop.f32.mrb[0].mxu0
        %v1922 = vadd.f32 %v534, %v1921
        %v1923 = vpop.f32.mrb[0].mxu0
        %v1924 = vadd.f32 %v538, %v1923
        %1925 = vmatprep.mubr.bf16.mxu0 0
        %1926 = vmatmul.mubr.bf16.gmra.mrb[0].mxu0 %v1328
        %v1927 = vpop.f32.mrb[0].mxu0
        %v1928 = vadd.f32 %v534, %v1927
        %v1929 = vpop.f32.mrb[0].mxu0
        %v1930 = vadd.f32 %v538, %v1929
        %v1931 = vpop.f32.mrb[0].mxu0
        %v1932 = vadd.f32 %v534, %v1931
        %v1933 = vpop.f32.mrb[0].mxu0
        %v1934 = vadd.f32 %v538, %v1933
        %1935 = vmatprep.mubr.bf16.mxu0 0
        %1936 = vmatmul.mubr.bf16.gmra.mrb[0].mxu0 %v1331
        %v1937 = vpop.f32.mrb[0].mxu0
        %v1938 = vadd.f32 %v534, %v1937
        %v1939 = vpop.f32.mrb[0].mxu0
        %v1940 = vadd.f32 %v538, %v1939
        %v1941 = vpop.f32.mrb[0].mxu0
        %v1942 = vadd.f32 %v534, %v1941
        %v1943 = vpop.f32.mrb[0].mxu0
        %v1944 = vadd.f32 %v538, %v1943
        %1945 = vmatprep.mubr.bf16.mxu0 0
        %1946 = vmatmul.mubr.bf16.gmra.mrb[0].mxu0 %v1334
        %v1947 = vpop.f32.mrb[0].mxu0
        %v1948 = vadd.f32 %v534, %v1947
        %v1949 = vpop.f32.mrb[0].mxu0
        %v1950 = vadd.f32 %v538, %v1949
        %v1951 = vpop.f32.mrb[0].mxu0
        %v1952 = vadd.f32 %v534, %v1951
        %v1953 = vpop.f32.mrb[0].mxu0
        %v1954 = vadd.f32 %v538, %v1953
        %1955 = vmatprep.mubr.bf16.mxu0 0
        %1956 = vmatmul.mubr.bf16.gmra.mrb[0].mxu0 %v1337
        %v1957 = vpop.f32.mrb[0].mxu0
        %v1958 = vadd.f32 %v534, %v1957
        %v1959 = vpop.f32.mrb[0].mxu0
        %v1960 = vadd.f32 %v538, %v1959
        %v1961 = vpop.f32.mrb[0].mxu0
        %v1962 = vadd.f32 %v534, %v1961
        %v1963 = vpop.f32.mrb[0].mxu0
        %v1964 = vadd.f32 %v538, %v1963
        %1965 = vmatprep.mubr.bf16.mxu0 0
        %1966 = vmatmul.mubr.bf16.gmra.mrb[0].mxu0 %v1340
        %v1967 = vpop.f32.mrb[0].mxu0
        %v1968 = vadd.f32 %v534, %v1967
        %v1969 = vpop.f32.mrb[0].mxu0
        %v1970 = vadd.f32 %v538, %v1969
        %v1971 = vpop.f32.mrb[0].mxu0
        %v1972 = vadd.f32 %v534, %v1971
        %v1973 = vpop.f32.mrb[0].mxu0
        %v1974 = vadd.f32 %v538, %v1973
        %1975 = vmatprep.mubr.bf16.mxu0 0
        %1976 = vmatmul.mubr.bf16.gmra.mrb[0].mxu0 %v1343
        %v1977 = vpop.f32.mrb[0].mxu0
        %v1978 = vadd.f32 %v534, %v1977
        %v1979 = vpop.f32.mrb[0].mxu0
        %v1980 = vadd.f32 %v538, %v1979
        %v1981 = vpop.f32.mrb[0].mxu0
        %v1982 = vadd.f32 %v534, %v1981
        %v1983 = vpop.f32.mrb[0].mxu0
        %v1984 = vadd.f32 %v538, %v1983
        %1985 = vmatprep.mubr.bf16.mxu0 0
        %1986 = vmatmul.mubr.bf16.gmra.mrb[0].mxu0 %v1346
        %v1987 = vpop.f32.mrb[0].mxu0
        %v1988 = vadd.f32 %v534, %v1987
        %v1989 = vpop.f32.mrb[0].mxu0
        %v1990 = vadd.f32 %v538, %v1989
        %v1991 = vpop.f32.mrb[0].mxu0
        %v1992 = vadd.f32 %v534, %v1991
        %v1993 = vpop.f32.mrb[0].mxu0
        %v1994 = vadd.f32 %v538, %v1993
        %1995 = vmatprep.mubr.bf16.mxu0 0
        %1996 = vmatmul.mubr.bf16.gmra.mrb[0].mxu0 %v1349
        %v1997 = vpop.f32.mrb[0].mxu0
        %v1998 = vadd.f32 %v534, %v1997
        %v1999 = vpop.f32.mrb[0].mxu0
        %v2000 = vadd.f32 %v538, %v1999
        %v2001 = vpop.f32.mrb[0].mxu0
        %v2002 = vadd.f32 %v534, %v2001
        %v2003 = vpop.f32.mrb[0].mxu0
        %v2004 = vadd.f32 %v538, %v2003
        %2005 = vmatprep.mubr.bf16.mxu0 0
        %2006 = vmatmul.mubr.bf16.gmra.mrb[0].mxu0 %v1352
        %v2007 = vpop.f32.mrb[0].mxu0
        %v2008 = vadd.f32 %v534, %v2007
        %v2009 = vpop.f32.mrb[0].mxu0
        %v2010 = vadd.f32 %v538, %v2009
        %v2011 = vpop.f32.mrb[0].mxu0
        %v2012 = vadd.f32 %v534, %v2011
        %v2013 = vpop.f32.mrb[0].mxu0
        %v2014 = vadd.f32 %v538, %v2013
        %2015 = vmatprep.mubr.bf16.mxu0 0
        %2016 = vmatmul.mubr.bf16.gmra.mrb[0].mxu0 %v1355
        %v2017 = vpop.f32.mrb[0].mxu0
        %v2018 = vadd.f32 %v534, %v2017
        %v2019 = vpop.f32.mrb[0].mxu0
        %v2020 = vadd.f32 %v538, %v2019
        %v2021 = vpop.f32.mrb[0].mxu0
        %v2022 = vadd.f32 %v534, %v2021
        %v2023 = vpop.f32.mrb[0].mxu0
        %v2024 = vadd.f32 %v538, %v2023
        %2025 = vmatprep.mubr.bf16.mxu0 0
        %2026 = vmatmul.mubr.bf16.gmra.mrb[0].mxu0 %v1358
        %v2027 = vpop.f32.mrb[0].mxu0
        %v2028 = vadd.f32 %v534, %v2027
        %v2029 = vpop.f32.mrb[0].mxu0
        %v2030 = vadd.f32 %v538, %v2029
        %v2031 = vpop.f32.mrb[0].mxu0
        %v2032 = vadd.f32 %v534, %v2031
        %v2033 = vpop.f32.mrb[0].mxu0
        %v2034 = vadd.f32 %v538, %v2033
        %2035 = vmatprep.mubr.bf16.mxu0 0
        %2036 = vmatmul.mubr.bf16.gmra.mrb[0].mxu0 %v1361
        %v2037 = vpop.f32.mrb[0].mxu0
        %v2038 = vadd.f32 %v534, %v2037
        %v2039 = vpop.f32.mrb[0].mxu0
        %v2040 = vadd.f32 %v538, %v2039
        %v2041 = vpop.f32.mrb[0].mxu0
        %v2042 = vadd.f32 %v534, %v2041
        %v2043 = vpop.f32.mrb[0].mxu0
        %v2044 = vadd.f32 %v538, %v2043
        %2045 = vmatprep.mubr.bf16.mxu0 0
        %2046 = vmatmul.mubr.bf16.gmra.mrb[0].mxu0 %v1364
        %v2047 = vpop.f32.mrb[0].mxu0
        %v2048 = vadd.f32 %v534, %v2047
        %v2049 = vpop.f32.mrb[0].mxu0
        %v2050 = vadd.f32 %v538, %v2049
        %v2051 = vpop.f32.mrb[0].mxu0
        %v2052 = vadd.f32 %v534, %v2051
        %v2053 = vpop.f32.mrb[0].mxu0
        %v2054 = vadd.f32 %v538, %v2053
        %2055 = vmatprep.mubr.bf16.mxu0 0
        %2056 = vmatmul.mubr.bf16.gmra.mrb[0].mxu0 %v1367
        %v2057 = vpop.f32.mrb[0].mxu0
        %v2058 = vadd.f32 %v534, %v2057
        %v2059 = vpop.f32.mrb[0].mxu0
        %v2060 = vadd.f32 %v538, %v2059
        %v2061 = vpop.f32.mrb[0].mxu0
        %v2062 = vadd.f32 %v534, %v2061
        %v2063 = vpop.f32.mrb[0].mxu0
        %v2064 = vadd.f32 %v538, %v2063
        %2065 = vmatprep.mubr.bf16.mxu0 0
        %2066 = vmatmul.mubr.bf16.gmra.mrb[0].mxu0 %v1370
        %v2067 = vpop.f32.mrb[0].mxu0
        %v2068 = vadd.f32 %v534, %v2067
        %v2069 = vpop.f32.mrb[0].mxu0
        %v2070 = vadd.f32 %v538, %v2069
        %v2071 = vpop.f32.mrb[0].mxu0
        %v2072 = vadd.f32 %v534, %v2071
        %v2073 = vpop.f32.mrb[0].mxu0
        %v2074 = vadd.f32 %v538, %v2073
        %2075 = vmatprep.mubr.bf16.mxu0 0
        %2076 = vmatmul.mubr.bf16.gmra.mrb[0].mxu0 %v1373
        %v2077 = vpop.f32.mrb[0].mxu0
        %v2078 = vadd.f32 %v534, %v2077
        %v2079 = vpop.f32.mrb[0].mxu0
        %v2080 = vadd.f32 %v538, %v2079
        %v2081 = vpop.f32.mrb[0].mxu0
        %v2082 = vadd.f32 %v534, %v2081
        %v2083 = vpop.f32.mrb[0].mxu0
        %v2084 = vadd.f32 %v538, %v2083
        %2085 = vmatprep.mubr.bf16.mxu0 0
        %2086 = vmatmul.mubr.bf16.gmra.mrb[0].mxu0 %v1376
        %v2087 = vpop.f32.mrb[0].mxu0
        %v2088 = vadd.f32 %v534, %v2087
        %v2089 = vpop.f32.mrb[0].mxu0
        %v2090 = vadd.f32 %v538, %v2089
        %v2091 = vpop.f32.mrb[0].mxu0
        %v2092 = vadd.f32 %v534, %v2091
        %v2093 = vpop.f32.mrb[0].mxu0
        %v2094 = vadd.f32 %v538, %v2093
        %2095 = vmatprep.mubr.bf16.mxu0 0
        %2096 = vmatmul.mubr.bf16.gmra.mrb[0].mxu0 %v1379
        %v2097 = vpop.f32.mrb[0].mxu0
        %v2098 = vadd.f32 %v534, %v2097
        %v2099 = vpop.f32.mrb[0].mxu0
        %v2100 = vadd.f32 %v538, %v2099
        %v2101 = vpop.f32.mrb[0].mxu0
        %v2102 = vadd.f32 %v534, %v2101
        %v2103 = vpop.f32.mrb[0].mxu0
        %v2104 = vadd.f32 %v538, %v2103
        %2105 = vmatprep.mubr.bf16.mxu0 0
        %2106 = vmatmul.mubr.bf16.gmra.mrb[0].mxu0 %v1382
        %v2107 = vpop.f32.mrb[0].mxu0
        %v2108 = vadd.f32 %v534, %v2107
        %v2109 = vpop.f32.mrb[0].mxu0
        %v2110 = vadd.f32 %v538, %v2109
        %v2111 = vpop.f32.mrb[0].mxu0
        %v2112 = vadd.f32 %v534, %v2111
        %v2113 = vpop.f32.mrb[0].mxu0
        %v2114 = vadd.f32 %v538, %v2113
        %2115 = vmatprep.mubr.bf16.mxu0 0
        %2116 = vmatmul.mubr.bf16.gmra.mrb[0].mxu0 %v1385
        %v2117 = vpop.f32.mrb[0].mxu0
        %v2118 = vadd.f32 %v534, %v2117
        %v2119 = vpop.f32.mrb[0].mxu0
        %v2120 = vadd.f32 %v538, %v2119
        %v2121 = vpop.f32.mrb[0].mxu0
        %v2122 = vadd.f32 %v534, %v2121
        %v2123 = vpop.f32.mrb[0].mxu0
        %v2124 = vadd.f32 %v538, %v2123
        %2125 = vmatprep.mubr.bf16.mxu0 0
        %2126 = vmatmul.mubr.bf16.gmra.mrb[0].mxu0 %v1388
        %v2127 = vpop.f32.mrb[0].mxu0
        %v2128 = vadd.f32 %v534, %v2127
        %v2129 = vpop.f32.mrb[0].mxu0
        %v2130 = vadd.f32 %v538, %v2129
        %v2131 = vpop.f32.mrb[0].mxu0
        %v2132 = vadd.f32 %v534, %v2131
        %v2133 = vpop.f32.mrb[0].mxu0
        %v2134 = vadd.f32 %v538, %v2133
        %2135 = vmatprep.mubr.bf16.mxu0 0
        %2136 = vmatmul.mubr.bf16.gmra.mrb[0].mxu0 %v1391
        %v2137 = vpop.f32.mrb[0].mxu0
        %v2138 = vadd.f32 %v534, %v2137
        %v2139 = vpop.f32.mrb[0].mxu0
        %v2140 = vadd.f32 %v538, %v2139
        %v2141 = vpop.f32.mrb[0].mxu0
        %v2142 = vadd.f32 %v534, %v2141
        %v2143 = vpop.f32.mrb[0].mxu0
        %v2144 = vadd.f32 %v538, %v2143
        %2145 = vmatprep.mubr.bf16.mxu0 0
        %2146 = vmatmul.mubr.bf16.gmra.mrb[0].mxu0 %v1394
        %v2147 = vpop.f32.mrb[0].mxu0
        %v2148 = vadd.f32 %v534, %v2147
        %v2149 = vpop.f32.mrb[0].mxu0
        %v2150 = vadd.f32 %v538, %v2149
        %v2151 = vpop.f32.mrb[0].mxu0
        %v2152 = vadd.f32 %v534, %v2151
        %v2153 = vpop.f32.mrb[0].mxu0
        %v2154 = vadd.f32 %v538, %v2153
        %2155 = vmatprep.mubr.bf16.mxu0 0
        %2156 = vmatmul.mubr.bf16.gmra.mrb[0].mxu0 %v1397
        %v2157 = vpop.f32.mrb[0].mxu0
        %v2158 = vadd.f32 %v534, %v2157
        %v2159 = vpop.f32.mrb[0].mxu0
        %v2160 = vadd.f32 %v538, %v2159
        %v2161 = vpop.f32.mrb[0].mxu0
        %v2162 = vadd.f32 %v534, %v2161
        %v2163 = vpop.f32.mrb[0].mxu0
        %v2164 = vadd.f32 %v538, %v2163
        %2165 = vmatprep.mubr.bf16.mxu0 0
        %2166 = vmatmul.mubr.bf16.gmra.mrb[0].mxu0 %v1400
        %v2167 = vpop.f32.mrb[0].mxu0
        %v2168 = vadd.f32 %v534, %v2167
        %v2169 = vpop.f32.mrb[0].mxu0
        %v2170 = vadd.f32 %v538, %v2169
        %v2171 = vpop.f32.mrb[0].mxu0
        %v2172 = vadd.f32 %v534, %v2171
        %v2173 = vpop.f32.mrb[0].mxu0
        %v2174 = vadd.f32 %v538, %v2173
        %2175 = vmatprep.mubr.bf16.mxu0 0
        %2176 = vmatmul.mubr.bf16.gmra.mrb[0].mxu0 %v1403
        %v2177 = vpop.f32.mrb[0].mxu0
        %v2178 = vadd.f32 %v534, %v2177
        %v2179 = vpop.f32.mrb[0].mxu0
        %v2180 = vadd.f32 %v538, %v2179
        %v2181 = vpop.f32.mrb[0].mxu0
        %v2182 = vadd.f32 %v534, %v2181
        %v2183 = vpop.f32.mrb[0].mxu0
        %v2184 = vadd.f32 %v538, %v2183
        %2185 = vmatprep.mubr.bf16.mxu0 0
        %2186 = vmatmul.mubr.bf16.gmra.mrb[0].mxu0 %v1406
        %v2187 = vpop.f32.mrb[0].mxu0
        %v2188 = vadd.f32 %v534, %v2187
        %v2189 = vpop.f32.mrb[0].mxu0
        %v2190 = vadd.f32 %v538, %v2189
        %v2191 = vpop.f32.mrb[0].mxu0
        %v2192 = vadd.f32 %v534, %v2191
        %v2193 = vpop.f32.mrb[0].mxu0
        %v2194 = vadd.f32 %v538, %v2193
        %2195 = vmatprep.mubr.bf16.mxu0 0
        %2196 = vmatmul.mubr.bf16.gmra.mrb[0].mxu0 %v1409
        %v2197 = vpop.f32.mrb[0].mxu0
        %v2198 = vadd.f32 %v534, %v2197
        %v2199 = vpop.f32.mrb[0].mxu0
        %v2200 = vadd.f32 %v538, %v2199
        %v2201 = vpop.f32.mrb[0].mxu0
        %v2202 = vadd.f32 %v534, %v2201
        %v2203 = vpop.f32.mrb[0].mxu0
        %v2204 = vadd.f32 %v538, %v2203
        %2205 = vmatprep.mubr.bf16.mxu0 0
        %2206 = vmatmul.mubr.bf16.gmra.mrb[0].mxu0 %v1412
        %v2207 = vpop.f32.mrb[0].mxu0
        %v2208 = vadd.f32 %v534, %v2207
        %v2209 = vpop.f32.mrb[0].mxu0
        %v2210 = vadd.f32 %v538, %v2209
        %v2211 = vpop.f32.mrb[0].mxu0
        %v2212 = vadd.f32 %v534, %v2211
        %v2213 = vpop.f32.mrb[0].mxu0
        %v2214 = vadd.f32 %v538, %v2213
        %2215 = vmatprep.mubr.bf16.mxu0 0
        %2216 = vmatmul.mubr.bf16.gmra.mrb[0].mxu0 %v1415
        %v2217 = vpop.f32.mrb[0].mxu0
        %v2218 = vadd.f32 %v534, %v2217
        %v2219 = vpop.f32.mrb[0].mxu0
        %v2220 = vadd.f32 %v538, %v2219
        %v2221 = vpop.f32.mrb[0].mxu0
        %v2222 = vadd.f32 %v534, %v2221
        %v2223 = vpop.f32.mrb[0].mxu0
        %v2224 = vadd.f32 %v538, %v2223
        %2225 = vmatprep.mubr.bf16.mxu0 0
        %2226 = vmatmul.mubr.bf16.gmra.mrb[0].mxu0 %v1418
        %v2227 = vpop.f32.mrb[0].mxu0
        %v2228 = vadd.f32 %v534, %v2227
        %v2229 = vpop.f32.mrb[0].mxu0
        %v2230 = vadd.f32 %v538, %v2229
        %v2231 = vpop.f32.mrb[0].mxu0
        %v2232 = vadd.f32 %v534, %v2231
        %v2233 = vpop.f32.mrb[0].mxu0
        %v2234 = vadd.f32 %v538, %v2233
        %2235 = vmatprep.mubr.bf16.mxu0 0
        %2236 = vmatmul.mubr.bf16.gmra.mrb[0].mxu0 %v1421
        %v2237 = vpop.f32.mrb[0].mxu0
        %v2238 = vadd.f32 %v534, %v2237
        %v2239 = vpop.f32.mrb[0].mxu0
        %v2240 = vadd.f32 %v538, %v2239
        %v2241 = vpop.f32.mrb[0].mxu0
        %v2242 = vadd.f32 %v534, %v2241
        %v2243 = vpop.f32.mrb[0].mxu0
        %v2244 = vadd.f32 %v538, %v2243
        %2245 = vmatprep.mubr.bf16.mxu0 0
        %2246 = vmatmul.mubr.bf16.gmra.mrb[0].mxu0 %v1424
        %v2247 = vpop.f32.mrb[0].mxu0
        %v2248 = vadd.f32 %v534, %v2247
        %v2249 = vpop.f32.mrb[0].mxu0
        %v2250 = vadd.f32 %v538, %v2249
        %v2251 = vpop.f32.mrb[0].mxu0
        %v2252 = vadd.f32 %v534, %v2251
        %v2253 = vpop.f32.mrb[0].mxu0
        %v2254 = vadd.f32 %v538, %v2253
        %2255 = vmatprep.mubr.bf16.mxu0 0
        %2256 = vmatmul.mubr.bf16.gmra.mrb[0].mxu0 %v1427
        %v2257 = vpop.f32.mrb[0].mxu0
        %v2258 = vadd.f32 %v534, %v2257
        %v2259 = vpop.f32.mrb[0].mxu0
        %v2260 = vadd.f32 %v538, %v2259
        %v2261 = vpop.f32.mrb[0].mxu0
        %v2262 = vadd.f32 %v534, %v2261
        %v2263 = vpop.f32.mrb[0].mxu0
        %v2264 = vadd.f32 %v538, %v2263
        %2265 = vmatprep.mubr.bf16.mxu0 0
        %2266 = vmatmul.mubr.bf16.gmra.mrb[0].mxu0 %v1430
        %v2267 = vpop.f32.mrb[0].mxu0
        %v2268 = vadd.f32 %v534, %v2267
        %v2269 = vpop.f32.mrb[0].mxu0
        %v2270 = vadd.f32 %v538, %v2269
        %v2271 = vpop.f32.mrb[0].mxu0
        %v2272 = vadd.f32 %v534, %v2271
        %v2273 = vpop.f32.mrb[0].mxu0
        %v2274 = vadd.f32 %v538, %v2273
        %2275 = vmatprep.mubr.bf16.mxu0 0
        %2276 = vmatmul.mubr.bf16.gmra.mrb[0].mxu0 %v1433
        %v2277 = vpop.f32.mrb[0].mxu0
        %v2278 = vadd.f32 %v534, %v2277
        %v2279 = vpop.f32.mrb[0].mxu0
        %v2280 = vadd.f32 %v538, %v2279
        %v2281 = vpop.f32.mrb[0].mxu0
        %v2282 = vadd.f32 %v534, %v2281
        %v2283 = vpop.f32.mrb[0].mxu0
        %v2284 = vadd.f32 %v538, %v2283
        %2285 = vmatprep.mubr.bf16.mxu0 0
        %2286 = vmatmul.mubr.bf16.gmra.mrb[0].mxu0 %v1436
        %v2287 = vpop.f32.mrb[0].mxu0
        %v2288 = vadd.f32 %v534, %v2287
        %v2289 = vpop.f32.mrb[0].mxu0
        %v2290 = vadd.f32 %v538, %v2289
        %v2291 = vpop.f32.mrb[0].mxu0
        %v2292 = vadd.f32 %v534, %v2291
        %v2293 = vpop.f32.mrb[0].mxu0
        %v2294 = vadd.f32 %v538, %v2293
        %2295 = vmatprep.mubr.bf16.mxu0 0
        %2296 = vmatmul.mubr.bf16.gmra.mrb[0].mxu0 %v1439
        %v2297 = vpop.f32.mrb[0].mxu0
        %v2298 = vadd.f32 %v534, %v2297
        %v2299 = vpop.f32.mrb[0].mxu0
        %v2300 = vadd.f32 %v538, %v2299
        %v2301 = vpop.f32.mrb[0].mxu0
        %v2302 = vadd.f32 %v534, %v2301
        %v2303 = vpop.f32.mrb[0].mxu0
        %v2304 = vadd.f32 %v538, %v2303
        %2305 = vmatprep.mubr.bf16.mxu0 0
        %2306 = vmatmul.mubr.bf16.gmra.mrb[0].mxu0 %v1442
        %v2307 = vpop.f32.mrb[0].mxu0
        %v2308 = vadd.f32 %v534, %v2307
        %v2309 = vpop.f32.mrb[0].mxu0
        %v2310 = vadd.f32 %v538, %v2309
        %v2311 = vpop.f32.mrb[0].mxu0
        %v2312 = vadd.f32 %v534, %v2311
        %v2313 = vpop.f32.mrb[0].mxu0
        %v2314 = vadd.f32 %v538, %v2313
        %2315 = vmatprep.mubr.bf16.mxu0 0
        %2316 = vmatmul.mubr.bf16.gmra.mrb[0].mxu0 %v1445
        %v2317 = vpop.f32.mrb[0].mxu0
        %v2318 = vadd.f32 %v534, %v2317
        %v2319 = vpop.f32.mrb[0].mxu0
        %v2320 = vadd.f32 %v538, %v2319
        %v2321 = vpop.f32.mrb[0].mxu0
        %v2322 = vadd.f32 %v534, %v2321
        %v2323 = vpop.f32.mrb[0].mxu0
        %v2324 = vadd.f32 %v538, %v2323
        %2325 = vmatprep.mubr.bf16.mxu0 0
        %2326 = vmatmul.mubr.bf16.gmra.mrb[0].mxu0 %v1448
        %v2327 = vpop.f32.mrb[0].mxu0
        %v2328 = vadd.f32 %v534, %v2327
        %v2329 = vpop.f32.mrb[0].mxu0
        %v2330 = vadd.f32 %v538, %v2329
        %v2331 = vpop.f32.mrb[0].mxu0
        %v2332 = vadd.f32 %v534, %v2331
        %v2333 = vpop.f32.mrb[0].mxu0
        %v2334 = vadd.f32 %v538, %v2333
        %2335 = vmatprep.mubr.bf16.mxu0 0
        %2336 = vmatmul.mubr.bf16.gmra.mrb[0].mxu0 %v1451
        %v2337 = vpop.f32.mrb[0].mxu0
        %v2338 = vadd.f32 %v534, %v2337
        %v2339 = vpop.f32.mrb[0].mxu0
        %v2340 = vadd.f32 %v538, %v2339
        %v2341 = vpop.f32.mrb[0].mxu0
        %v2342 = vadd.f32 %v534, %v2341
        %v2343 = vpop.f32.mrb[0].mxu0
        %v2344 = vadd.f32 %v538, %v2343
        %2345 = vmatprep.mubr.bf16.mxu0 0
        %2346 = vmatmul.mubr.bf16.gmra.mrb[0].mxu0 %v1454
        %v2347 = vpop.f32.mrb[0].mxu0
        %v2348 = vadd.f32 %v534, %v2347
        %v2349 = vpop.f32.mrb[0].mxu0
        %v2350 = vadd.f32 %v538, %v2349
        %v2351 = vpop.f32.mrb[0].mxu0
        %v2352 = vadd.f32 %v534, %v2351
        %v2353 = vpop.f32.mrb[0].mxu0
        %v2354 = vadd.f32 %v538, %v2353
        %2355 = vmatprep.mubr.bf16.mxu0 0
        %2356 = vmatmul.mubr.bf16.gmra.mrb[0].mxu0 %v1457
        %v2357 = vpop.f32.mrb[0].mxu0
        %v2358 = vadd.f32 %v534, %v2357
        %v2359 = vpop.f32.mrb[0].mxu0
        %v2360 = vadd.f32 %v538, %v2359
        %v2361 = vpop.f32.mrb[0].mxu0
        %v2362 = vadd.f32 %v534, %v2361
        %v2363 = vpop.f32.mrb[0].mxu0
        %v2364 = vadd.f32 %v538, %v2363
        %2365 = vmatprep.mubr.bf16.mxu0 0
        %2366 = vmatmul.mubr.bf16.gmra.mrb[0].mxu0 %v1460
        %v2367 = vpop.f32.mrb[0].mxu0
        %v2368 = vadd.f32 %v534, %v2367
        %v2369 = vpop.f32.mrb[0].mxu0
        %v2370 = vadd.f32 %v538, %v2369
        %v2371 = vpop.f32.mrb[0].mxu0
        %v2372 = vadd.f32 %v534, %v2371
        %v2373 = vpop.f32.mrb[0].mxu0
        %v2374 = vadd.f32 %v538, %v2373
        %2375 = vmatprep.mubr.bf16.mxu0 0
        %2376 = vmatmul.mubr.bf16.gmra.mrb[0].mxu0 %v1463
        %v2377 = vpop.f32.mrb[0].mxu0
        %v2378 = vadd.f32 %v534, %v2377
        %v2379 = vpop.f32.mrb[0].mxu0
        %v2380 = vadd.f32 %v538, %v2379
        %v2381 = vpop.f32.mrb[0].mxu0
        %v2382 = vadd.f32 %v534, %v2381
        %v2383 = vpop.f32.mrb[0].mxu0
        %v2384 = vadd.f32 %v538, %v2383
        %2385 = vmatprep.mubr.bf16.mxu0 0
        %2386 = vmatmul.mubr.bf16.gmra.mrb[0].mxu0 %v1466
        %v2387 = vpop.f32.mrb[0].mxu0
        %v2388 = vadd.f32 %v534, %v2387
        %v2389 = vpop.f32.mrb[0].mxu0
        %v2390 = vadd.f32 %v538, %v2389
        %v2391 = vpop.f32.mrb[0].mxu0
        %v2392 = vadd.f32 %v534, %v2391
        %v2393 = vpop.f32.mrb[0].mxu0
        %v2394 = vadd.f32 %v538, %v2393
        %2395 = vmatprep.mubr.bf16.mxu0 0
        %2396 = vmatmul.mubr.bf16.gmra.mrb[0].mxu0 %v1469
        %v2397 = vpop.f32.mrb[0].mxu0
        %v2398 = vadd.f32 %v534, %v2397
        %v2399 = vpop.f32.mrb[0].mxu0
        %v2400 = vadd.f32 %v538, %v2399
        %v2401 = vpop.f32.mrb[0].mxu0
        %v2402 = vadd.f32 %v534, %v2401
        %v2403 = vpop.f32.mrb[0].mxu0
        %v2404 = vadd.f32 %v538, %v2403
        %2405 = vmatprep.mubr.bf16.mxu0 0
        %2406 = vmatmul.mubr.bf16.gmra.mrb[0].mxu0 %v1472
        %v2407 = vpop.f32.mrb[0].mxu0
        %v2408 = vadd.f32 %v534, %v2407
        %v2409 = vpop.f32.mrb[0].mxu0
        %v2410 = vadd.f32 %v538, %v2409
        %v2411 = vpop.f32.mrb[0].mxu0
        %v2412 = vadd.f32 %v534, %v2411
        %v2413 = vpop.f32.mrb[0].mxu0
        %v2414 = vadd.f32 %v538, %v2413
        %2415 = vmatprep.mubr.bf16.mxu0 0
        %2416 = vmatmul.mubr.bf16.gmra.mrb[0].mxu0 %v1475
        %v2417 = vpop.f32.mrb[0].mxu0
        %v2418 = vadd.f32 %v534, %v2417
        %v2419 = vpop.f32.mrb[0].mxu0
        %v2420 = vadd.f32 %v538, %v2419
        %v2421 = vpop.f32.mrb[0].mxu0
        %v2422 = vadd.f32 %v534, %v2421
        %v2423 = vpop.f32.mrb[0].mxu0
        %v2424 = vadd.f32 %v538, %v2423
        %2425 = vmatprep.mubr.bf16.mxu0 0
        %2426 = vmatmul.mubr.bf16.gmra.mrb[0].mxu0 %v1478
        %v2427 = vpop.f32.mrb[0].mxu0
        %v2428 = vadd.f32 %v534, %v2427
        %v2429 = vpop.f32.mrb[0].mxu0
        %v2430 = vadd.f32 %v538, %v2429
        %v2431 = vpop.f32.mrb[0].mxu0
        %v2432 = vadd.f32 %v534, %v2431
        %v2433 = vpop.f32.mrb[0].mxu0
        %v2434 = vadd.f32 %v538, %v2433
        %2435 = vmatprep.mubr.bf16.mxu0 0
        %2436 = vmatmul.mubr.bf16.gmra.mrb[0].mxu0 %v1481
        %v2437 = vpop.f32.mrb[0].mxu0
        %v2438 = vadd.f32 %v534, %v2437
        %v2439 = vpop.f32.mrb[0].mxu0
        %v2440 = vadd.f32 %v538, %v2439
        %v2441 = vpop.f32.mrb[0].mxu0
        %v2442 = vadd.f32 %v534, %v2441
        %v2443 = vpop.f32.mrb[0].mxu0
        %v2444 = vadd.f32 %v538, %v2443
        %2445 = vmatprep.mubr.bf16.mxu0 0
        %2446 = vmatmul.mubr.bf16.gmra.mrb[0].mxu0 %v1484
        %v2447 = vpop.f32.mrb[0].mxu0
        %v2448 = vadd.f32 %v534, %v2447
        %v2449 = vpop.f32.mrb[0].mxu0
        %v2450 = vadd.f32 %v538, %v2449
        %v2451 = vpop.f32.mrb[0].mxu0
        %v2452 = vadd.f32 %v534, %v2451
        %v2453 = vpop.f32.mrb[0].mxu0
        %v2454 = vadd.f32 %v538, %v2453
        %2455 = vmatprep.mubr.bf16.mxu0 0
        %2456 = vmatmul.mubr.bf16.gmra.mrb[0].mxu0 %v1487
        %v2457 = vpop.f32.mrb[0].mxu0
        %v2458 = vadd.f32 %v534, %v2457
        %v2459 = vpop.f32.mrb[0].mxu0
        %v2460 = vadd.f32 %v538, %v2459
        %v2461 = vpop.f32.mrb[0].mxu0
        %v2462 = vadd.f32 %v534, %v2461
        %v2463 = vpop.f32.mrb[0].mxu0
        %v2464 = vadd.f32 %v538, %v2463
        %2465 = vmatprep.mubr.bf16.mxu0 0
        %2466 = vmatmul.mubr.bf16.gmra.mrb[0].mxu0 %v1490
        %v2467 = vpop.f32.mrb[0].mxu0
        %v2468 = vadd.f32 %v534, %v2467
        %v2469 = vpop.f32.mrb[0].mxu0
        %v2470 = vadd.f32 %v538, %v2469
        %v2471 = vpop.f32.mrb[0].mxu0
        %v2472 = vadd.f32 %v534, %v2471
        %v2473 = vpop.f32.mrb[0].mxu0
        %v2474 = vadd.f32 %v538, %v2473
        %2475 = vmatprep.mubr.bf16.mxu0 0
        %2476 = vmatmul.mubr.bf16.gmra.mrb[0].mxu0 %v1493
        %v2477 = vpop.f32.mrb[0].mxu0
        %v2478 = vadd.f32 %v534, %v2477
        %v2479 = vpop.f32.mrb[0].mxu0
        %v2480 = vadd.f32 %v538, %v2479
        %v2481 = vpop.f32.mrb[0].mxu0
        %v2482 = vadd.f32 %v534, %v2481
        %v2483 = vpop.f32.mrb[0].mxu0
        %v2484 = vadd.f32 %v538, %v2483
        %2485 = vmatprep.mubr.bf16.mxu0 0
        %2486 = vmatmul.mubr.bf16.gmra.mrb[0].mxu0 %v1496
        %v2487 = vpop.f32.mrb[0].mxu0
        %v2488 = vadd.f32 %v534, %v2487
        %v2489 = vpop.f32.mrb[0].mxu0
        %v2490 = vadd.f32 %v538, %v2489
        %v2491 = vpop.f32.mrb[0].mxu0
        %v2492 = vadd.f32 %v534, %v2491
        %v2493 = vpop.f32.mrb[0].mxu0
        %v2494 = vadd.f32 %v538, %v2493
        %2495 = vmatprep.mubr.bf16.mxu0 0
        %2496 = vmatmul.mubr.bf16.gmra.mrb[0].mxu0 %v1499
        %v2497 = vpop.f32.mrb[0].mxu0
        %v2498 = vadd.f32 %v534, %v2497
        %v2499 = vpop.f32.mrb[0].mxu0
        %v2500 = vadd.f32 %v538, %v2499
        %v2501 = vpop.f32.mrb[0].mxu0
        %v2502 = vadd.f32 %v534, %v2501
        %v2503 = vpop.f32.mrb[0].mxu0
        %v2504 = vadd.f32 %v538, %v2503
        %2505 = vmatprep.mubr.bf16.mxu0 0
        %2506 = vmatmul.mubr.bf16.gmra.mrb[0].mxu0 %v1502
        %v2507 = vpop.f32.mrb[0].mxu0
        %v2508 = vadd.f32 %v534, %v2507
        %v2509 = vpop.f32.mrb[0].mxu0
        %v2510 = vadd.f32 %v538, %v2509
        %v2511 = vpop.f32.mrb[0].mxu0
        %v2512 = vadd.f32 %v534, %v2511
        %v2513 = vpop.f32.mrb[0].mxu0
        %v2514 = vadd.f32 %v538, %v2513
        %2515 = vmatprep.mubr.bf16.mxu0 0
        %2516 = vmatmul.mubr.bf16.gmra.mrb[0].mxu0 %v1505
        %v2517 = vpop.f32.mrb[0].mxu0
        %v2518 = vadd.f32 %v534, %v2517
        %v2519 = vpop.f32.mrb[0].mxu0
        %v2520 = vadd.f32 %v538, %v2519
        %v2521 = vpop.f32.mrb[0].mxu0
        %v2522 = vadd.f32 %v534, %v2521
        %v2523 = vpop.f32.mrb[0].mxu0
        %v2524 = vadd.f32 %v538, %v2523
        %2525 = vmatprep.mubr.bf16.mxu0 0
        %2526 = vmatmul.mubr.bf16.gmra.mrb[0].mxu0 %v1508
        %v2527 = vpop.f32.mrb[0].mxu0
        %v2528 = vadd.f32 %v534, %v2527
        %v2529 = vpop.f32.mrb[0].mxu0
        %v2530 = vadd.f32 %v538, %v2529
        %v2531 = vpop.f32.mrb[0].mxu0
        %v2532 = vadd.f32 %v534, %v2531
        %v2533 = vpop.f32.mrb[0].mxu0
        %v2534 = vadd.f32 %v538, %v2533
        %2535 = vmatprep.mubr.bf16.mxu0 0
        %2536 = vmatmul.mubr.bf16.gmra.mrb[0].mxu0 %v1511
        %v2537 = vpop.f32.mrb[0].mxu0
        %v2538 = vadd.f32 %v534, %v2537
        %v2539 = vpop.f32.mrb[0].mxu0
        %v2540 = vadd.f32 %v538, %v2539
        %v2541 = vpop.f32.mrb[0].mxu0
        %v2542 = vadd.f32 %v534, %v2541
        %v2543 = vpop.f32.mrb[0].mxu0
        %v2544 = vadd.f32 %v538, %v2543
        %2545 = vmatprep.mubr.bf16.mxu0 0
        %2546 = vmatmul.mubr.bf16.gmra.mrb[0].mxu0 %v1514
        %v2547 = vpop.f32.mrb[0].mxu0
        %v2548 = vadd.f32 %v534, %v2547
        %v2549 = vpop.f32.mrb[0].mxu0
        %v2550 = vadd.f32 %v538, %v2549
        %v2551 = vpop.f32.mrb[0].mxu0
        %v2552 = vadd.f32 %v534, %v2551
        %v2553 = vpop.f32.mrb[0].mxu0
        %v2554 = vadd.f32 %v538, %v2553
        %2555 = vmatprep.mubr.bf16.mxu0 0
        %2556 = vmatmul.mubr.bf16.gmra.mrb[0].mxu0 %v1517
        %v2557 = vpop.f32.mrb[0].mxu0
        %v2558 = vadd.f32 %v534, %v2557
        %v2559 = vpop.f32.mrb[0].mxu0
        %v2560 = vadd.f32 %v538, %v2559
        %v2561 = vpop.f32.mrb[0].mxu0
        %v2562 = vadd.f32 %v534, %v2561
        %v2563 = vpop.f32.mrb[0].mxu0
        %v2564 = vadd.f32 %v538, %v2563
        %2565 = vmatprep.mubr.bf16.mxu0 0
        %2566 = vmatmul.mubr.bf16.gmra.mrb[0].mxu0 %v1520
        %v2567 = vpop.f32.mrb[0].mxu0
        %v2568 = vadd.f32 %v534, %v2567
        %v2569 = vpop.f32.mrb[0].mxu0
        %v2570 = vadd.f32 %v538, %v2569
        %v2571 = vpop.f32.mrb[0].mxu0
        %v2572 = vadd.f32 %v534, %v2571
        %v2573 = vpop.f32.mrb[0].mxu0
        %v2574 = vadd.f32 %v538, %v2573
        %2575 = vmatprep.mubr.bf16.mxu0 0
        %2576 = vmatmul.mubr.bf16.gmra.mrb[0].mxu0 %v1523
        %v2577 = vpop.f32.mrb[0].mxu0
        %v2578 = vadd.f32 %v534, %v2577
        %v2579 = vpop.f32.mrb[0].mxu0
        %v2580 = vadd.f32 %v538, %v2579
        %v2581 = vpop.f32.mrb[0].mxu0
        %v2582 = vadd.f32 %v534, %v2581
        %v2583 = vpop.f32.mrb[0].mxu0
        %v2584 = vadd.f32 %v538, %v2583
        %2585 = vmatprep.mubr.bf16.mxu0 0
        %2586 = vmatmul.mubr.bf16.gmra.mrb[0].mxu0 %v1526
        %v2587 = vpop.f32.mrb[0].mxu0
        %v2588 = vadd.f32 %v534, %v2587
        %v2589 = vpop.f32.mrb[0].mxu0
        %v2590 = vadd.f32 %v538, %v2589
        %v2591 = vpop.f32.mrb[0].mxu0
        %v2592 = vadd.f32 %v534, %v2591
        %v2593 = vpop.f32.mrb[0].mxu0
        %v2594 = vadd.f32 %v538, %v2593
        %2595 = vmatprep.mubr.bf16.mxu0 0
        %2596 = vmatmul.mubr.bf16.gmra.mrb[0].mxu0 %v1529
        %v2597 = vpop.f32.mrb[0].mxu0
        %v2598 = vadd.f32 %v534, %v2597
        %v2599 = vpop.f32.mrb[0].mxu0
        %v2600 = vadd.f32 %v538, %v2599
        %v2601 = vpop.f32.mrb[0].mxu0
        %v2602 = vadd.f32 %v534, %v2601
        %v2603 = vpop.f32.mrb[0].mxu0
        %v2604 = vadd.f32 %v538, %v2603
        %2605 = vmatprep.mubr.bf16.mxu0 0
        %2606 = vmatmul.mubr.bf16.gmra.mrb[0].mxu0 %v1532
        %v2607 = vpop.f32.mrb[0].mxu0
        %v2608 = vadd.f32 %v534, %v2607
        %v2609 = vpop.f32.mrb[0].mxu0
        %v2610 = vadd.f32 %v538, %v2609
        %v2611 = vpop.f32.mrb[0].mxu0
        %v2612 = vadd.f32 %v534, %v2611
        %v2613 = vpop.f32.mrb[0].mxu0
        %v2614 = vadd.f32 %v538, %v2613
        %2615 = vmatprep.mubr.bf16.mxu0 0
        %2616 = vmatmul.mubr.bf16.gmra.mrb[0].mxu0 %v1535
        %v2617 = vpop.f32.mrb[0].mxu0
        %v2618 = vadd.f32 %v534, %v2617
        %v2619 = vpop.f32.mrb[0].mxu0
        %v2620 = vadd.f32 %v538, %v2619
        %v2621 = vpop.f32.mrb[0].mxu0
        %v2622 = vadd.f32 %v534, %v2621
        %v2623 = vpop.f32.mrb[0].mxu0
        %v2624 = vadd.f32 %v538, %v2623
        %2625 = vmatprep.mubr.bf16.mxu0 0
        %2626 = vmatmul.mubr.bf16.gmra.mrb[0].mxu0 %v1538
        %v2627 = vpop.f32.mrb[0].mxu0
        %v2628 = vadd.f32 %v534, %v2627
        %v2629 = vpop.f32.mrb[0].mxu0
        %v2630 = vadd.f32 %v538, %v2629
        %v2631 = vpop.f32.mrb[0].mxu0
        %v2632 = vadd.f32 %v534, %v2631
        %v2633 = vpop.f32.mrb[0].mxu0
        %v2634 = vadd.f32 %v538, %v2633
        %2635 = vmatprep.mubr.bf16.mxu0 0
        %2636 = vmatmul.mubr.bf16.gmra.mrb[0].mxu0 %v1541
        %v2637 = vpop.f32.mrb[0].mxu0
        %v2638 = vadd.f32 %v534, %v2637
        %v2639 = vpop.f32.mrb[0].mxu0
        %v2640 = vadd.f32 %v538, %v2639
        %v2641 = vpop.f32.mrb[0].mxu0
        %v2642 = vadd.f32 %v534, %v2641
        %v2643 = vpop.f32.mrb[0].mxu0
        %v2644 = vadd.f32 %v538, %v2643
        %2645 = vmatprep.mubr.bf16.mxu0 0
        %2646 = vmatmul.mubr.bf16.gmra.mrb[0].mxu0 %v1544
        %v2647 = vpop.f32.mrb[0].mxu0
        %v2648 = vadd.f32 %v534, %v2647
        %v2649 = vpop.f32.mrb[0].mxu0
        %v2650 = vadd.f32 %v538, %v2649
        %v2651 = vpop.f32.mrb[0].mxu0
        %v2652 = vadd.f32 %v534, %v2651
        %v2653 = vpop.f32.mrb[0].mxu0
        %v2654 = vadd.f32 %v538, %v2653
        %2655 = vmatprep.mubr.bf16.mxu0 0
        %2656 = vmatmul.mubr.bf16.gmra.mrb[0].mxu0 %v1547
        %v2657 = vpop.f32.mrb[0].mxu0
        %v2658 = vadd.f32 %v534, %v2657
        %v2659 = vpop.f32.mrb[0].mxu0
        %v2660 = vadd.f32 %v538, %v2659
        %v2661 = vpop.f32.mrb[0].mxu0
        %v2662 = vadd.f32 %v534, %v2661
        %v2663 = vpop.f32.mrb[0].mxu0
        %v2664 = vadd.f32 %v538, %v2663
        %2665 = vmatprep.mubr.bf16.mxu0 0
        %2666 = vmatmul.mubr.bf16.gmra.mrb[0].mxu0 %v1550
        %v2667 = vpop.f32.mrb[0].mxu0
        %v2668 = vadd.f32 %v534, %v2667
        %v2669 = vpop.f32.mrb[0].mxu0
        %v2670 = vadd.f32 %v538, %v2669
        %v2671 = vpop.f32.mrb[0].mxu0
        %v2672 = vadd.f32 %v534, %v2671
        %v2673 = vpop.f32.mrb[0].mxu0
        %v2674 = vadd.f32 %v538, %v2673
        %2675 = vmatprep.mubr.bf16.mxu0 0
        %2676 = vmatmul.mubr.bf16.gmra.mrb[0].mxu0 %v1553
        %v2677 = vpop.f32.mrb[0].mxu0
        %v2678 = vadd.f32 %v534, %v2677
        %v2679 = vpop.f32.mrb[0].mxu0
        %v2680 = vadd.f32 %v538, %v2679
        %v2681 = vpop.f32.mrb[0].mxu0
        %v2682 = vadd.f32 %v534, %v2681
        %v2683 = vpop.f32.mrb[0].mxu0
        %v2684 = vadd.f32 %v538, %v2683
        %2685 = vmatprep.mubr.bf16.mxu0 0
        %2686 = vmatmul.mubr.bf16.gmra.mrb[0].mxu0 %v1556
        %v2687 = vpop.f32.mrb[0].mxu0
        %v2688 = vadd.f32 %v534, %v2687
        %v2689 = vpop.f32.mrb[0].mxu0
        %v2690 = vadd.f32 %v538, %v2689
        %v2691 = vpop.f32.mrb[0].mxu0
        %v2692 = vadd.f32 %v534, %v2691
        %v2693 = vpop.f32.mrb[0].mxu0
        %v2694 = vadd.f32 %v538, %v2693
        %2695 = vmatprep.mubr.bf16.mxu0 0
        %2696 = vmatmul.mubr.bf16.gmra.mrb[0].mxu0 %v1559
        %v2697 = vpop.f32.mrb[0].mxu0
        %v2698 = vadd.f32 %v534, %v2697
        %v2699 = vpop.f32.mrb[0].mxu0
        %v2700 = vadd.f32 %v538, %v2699
        %v2701 = vpop.f32.mrb[0].mxu0
        %v2702 = vadd.f32 %v534, %v2701
        %v2703 = vpop.f32.mrb[0].mxu0
        %v2704 = vadd.f32 %v538, %v2703
        %2705 = vmatprep.mubr.bf16.mxu0 0
        %2706 = vmatmul.mubr.bf16.gmra.mrb[0].mxu0 %v1562
        %v2707 = vpop.f32.mrb[0].mxu0
        %v2708 = vadd.f32 %v534, %v2707
        %v2709 = vpop.f32.mrb[0].mxu0
        %v2710 = vadd.f32 %v538, %v2709
        %v2711 = vpop.f32.mrb[0].mxu0
        %v2712 = vadd.f32 %v534, %v2711
        %v2713 = vpop.f32.mrb[0].mxu0
        %v2714 = vadd.f32 %v538, %v2713
        %2715 = vmatprep.mubr.bf16.mxu0 0
        %2716 = vmatmul.mubr.bf16.gmra.mrb[0].mxu0 %v1565
        %v2717 = vpop.f32.mrb[0].mxu0
        %v2718 = vadd.f32 %v534, %v2717
        %v2719 = vpop.f32.mrb[0].mxu0
        %v2720 = vadd.f32 %v538, %v2719
        %v2721 = vpop.f32.mrb[0].mxu0
        %v2722 = vadd.f32 %v534, %v2721
        %v2723 = vpop.f32.mrb[0].mxu0
        %v2724 = vadd.f32 %v538, %v2723
        %2725 = vmatprep.mubr.bf16.mxu0 0
        %2726 = vmatmul.mubr.bf16.gmra.mrb[0].mxu0 %v1568
        %v2727 = vpop.f32.mrb[0].mxu0
        %v2728 = vadd.f32 %v534, %v2727
        %v2729 = vpop.f32.mrb[0].mxu0
        %v2730 = vadd.f32 %v538, %v2729
        %v2731 = vpop.f32.mrb[0].mxu0
        %v2732 = vadd.f32 %v534, %v2731
        %v2733 = vpop.f32.mrb[0].mxu0
        %v2734 = vadd.f32 %v538, %v2733
        %2735 = vmatprep.mubr.bf16.mxu0 0
        %2736 = vmatmul.mubr.bf16.gmra.mrb[0].mxu0 %v1571
        %v2737 = vpop.f32.mrb[0].mxu0
        %v2738 = vadd.f32 %v534, %v2737
        %v2739 = vpop.f32.mrb[0].mxu0
        %v2740 = vadd.f32 %v538, %v2739
        %v2741 = vpop.f32.mrb[0].mxu0
        %v2742 = vadd.f32 %v534, %v2741
        %v2743 = vpop.f32.mrb[0].mxu0
        %v2744 = vadd.f32 %v538, %v2743
        %2745 = vmatprep.mubr.bf16.mxu0 0
        %2746 = vmatmul.mubr.bf16.gmra.mrb[0].mxu0 %v1574
        %v2747 = vpop.f32.mrb[0].mxu0
        %v2748 = vadd.f32 %v534, %v2747
        %v2749 = vpop.f32.mrb[0].mxu0
        %v2750 = vadd.f32 %v538, %v2749
        %v2751 = vpop.f32.mrb[0].mxu0
        %v2752 = vadd.f32 %v534, %v2751
        %v2753 = vpop.f32.mrb[0].mxu0
        %v2754 = vadd.f32 %v538, %v2753
        %2755 = vmatprep.mubr.bf16.mxu0 0
        %2756 = vmatmul.mubr.bf16.gmra.mrb[0].mxu0 %v1577
        %v2757 = vpop.f32.mrb[0].mxu0
        %v2758 = vadd.f32 %v534, %v2757
        %v2759 = vpop.f32.mrb[0].mxu0
        %v2760 = vadd.f32 %v538, %v2759
        %v2761 = vpop.f32.mrb[0].mxu0
        %v2762 = vadd.f32 %v534, %v2761
        %v2763 = vpop.f32.mrb[0].mxu0
        %v2764 = vadd.f32 %v538, %v2763
        %2765 = vmatprep.mubr.bf16.mxu0 0
        %2766 = vmatmul.mubr.bf16.gmra.mrb[0].mxu0 %v1580
        %v2767 = vpop.f32.mrb[0].mxu0
        %v2768 = vadd.f32 %v534, %v2767
        %v2769 = vpop.f32.mrb[0].mxu0
        %v2770 = vadd.f32 %v538, %v2769
        %v2771 = vpop.f32.mrb[0].mxu0
        %v2772 = vadd.f32 %v534, %v2771
        %v2773 = vpop.f32.mrb[0].mxu0
        %v2774 = vadd.f32 %v538, %v2773
        %2775 = vmatprep.mubr.bf16.mxu0 0
        %2776 = vmatmul.mubr.bf16.gmra.mrb[0].mxu0 %v1583
        %v2777 = vpop.f32.mrb[0].mxu0
        %v2778 = vadd.f32 %v534, %v2777
        %v2779 = vpop.f32.mrb[0].mxu0
        %v2780 = vadd.f32 %v538, %v2779
        %v2781 = vpop.f32.mrb[0].mxu0
        %v2782 = vadd.f32 %v534, %v2781
        %v2783 = vpop.f32.mrb[0].mxu0
        %v2784 = vadd.f32 %v538, %v2783
        %2785 = vmatprep.mubr.bf16.mxu0 0
        %2786 = vmatmul.mubr.bf16.gmra.mrb[0].mxu0 %v1586
        %v2787 = vpop.f32.mrb[0].mxu0
        %v2788 = vadd.f32 %v534, %v2787
        %v2789 = vpop.f32.mrb[0].mxu0
        %v2790 = vadd.f32 %v538, %v2789
        %v2791 = vpop.f32.mrb[0].mxu0
        %v2792 = vadd.f32 %v534, %v2791
        %v2793 = vpop.f32.mrb[0].mxu0
        %v2794 = vadd.f32 %v538, %v2793
        %2795 = vmatprep.mubr.bf16.mxu0 0
        %2796 = vmatmul.mubr.bf16.gmra.mrb[0].mxu0 %v1589
        %v2797 = vpop.f32.mrb[0].mxu0
        %v2798 = vadd.f32 %v534, %v2797
        %v2799 = vpop.f32.mrb[0].mxu0
        %v2800 = vadd.f32 %v538, %v2799
        %v2801 = vpop.f32.mrb[0].mxu0
        %v2802 = vadd.f32 %v534, %v2801
        %v2803 = vpop.f32.mrb[0].mxu0
        %v2804 = vadd.f32 %v538, %v2803
        %2805 = vmatprep.mubr.bf16.mxu0 0
        %2806 = vmatmul.mubr.bf16.gmra.mrb[0].mxu0 %v1592
        %v2807 = vpop.f32.mrb[0].mxu0
        %v2808 = vadd.f32 %v534, %v2807
        %v2809 = vpop.f32.mrb[0].mxu0
        %v2810 = vadd.f32 %v538, %v2809
        %v2811 = vpop.f32.mrb[0].mxu0
        %v2812 = vadd.f32 %v534, %v2811
        %v2813 = vpop.f32.mrb[0].mxu0
        %v2814 = vadd.f32 %v538, %v2813
        %2815 = vmatprep.mubr.bf16.mxu0 0
        %2816 = vmatmul.mubr.bf16.gmra.mrb[0].mxu0 %v1595
        %v2817 = vpop.f32.mrb[0].mxu0
        %v2818 = vadd.f32 %v534, %v2817
        %v2819 = vpop.f32.mrb[0].mxu0
        %v2820 = vadd.f32 %v538, %v2819
        %v2821 = vpop.f32.mrb[0].mxu0
        %v2822 = vadd.f32 %v534, %v2821
        %v2823 = vpop.f32.mrb[0].mxu0
        %v2824 = vadd.f32 %v538, %v2823
        %2825 = vmatprep.mubr.bf16.mxu0 0
        %2826 = vmatmul.mubr.bf16.gmra.mrb[0].mxu0 %v1598
        %v2827 = vpop.f32.mrb[0].mxu0
        %v2828 = vadd.f32 %v534, %v2827
        %v2829 = vpop.f32.mrb[0].mxu0
        %v2830 = vadd.f32 %v538, %v2829
        %v2831 = vpop.f32.mrb[0].mxu0
        %v2832 = vadd.f32 %v534, %v2831
        %v2833 = vpop.f32.mrb[0].mxu0
        %v2834 = vadd.f32 %v538, %v2833
        %2835 = vmatprep.mubr.bf16.mxu0 0
        %2836 = vmatmul.mubr.bf16.gmra.mrb[0].mxu0 %v1601
        %v2837 = vpop.f32.mrb[0].mxu0
        %v2838 = vadd.f32 %v534, %v2837
        %v2839 = vpop.f32.mrb[0].mxu0
        %v2840 = vadd.f32 %v538, %v2839
        %v2841 = vpop.f32.mrb[0].mxu0
        %v2842 = vadd.f32 %v534, %v2841
        %v2843 = vpop.f32.mrb[0].mxu0
        %v2844 = vadd.f32 %v538, %v2843
        %2845 = vmatprep.mubr.bf16.mxu0 0
        %2846 = vmatmul.mubr.bf16.gmra.mrb[0].mxu0 %v1604
        %v2847 = vpop.f32.mrb[0].mxu0
        %v2848 = vadd.f32 %v534, %v2847
        %v2849 = vpop.f32.mrb[0].mxu0
        %v2850 = vadd.f32 %v538, %v2849
        %v2851 = vpop.f32.mrb[0].mxu0
        %v2852 = vadd.f32 %v534, %v2851
        %v2853 = vpop.f32.mrb[0].mxu0
        %v2854 = vadd.f32 %v538, %v2853
        %2855 = vmatprep.mubr.bf16.mxu0 0
        %2856 = vmatmul.mubr.bf16.gmra.mrb[0].mxu0 %v1607
        %v2857 = vpop.f32.mrb[0].mxu0
        %v2858 = vadd.f32 %v534, %v2857
        %v2859 = vpop.f32.mrb[0].mxu0
        %v2860 = vadd.f32 %v538, %v2859
        %v2861 = vpop.f32.mrb[0].mxu0
        %v2862 = vadd.f32 %v534, %v2861
        %v2863 = vpop.f32.mrb[0].mxu0
        %v2864 = vadd.f32 %v538, %v2863
        %2865 = vmatprep.mubr.bf16.mxu0 0
        %2866 = vmatmul.mubr.bf16.gmra.mrb[0].mxu0 %v1610
        %v2867 = vpop.f32.mrb[0].mxu0
        %v2868 = vadd.f32 %v534, %v2867
        %v2869 = vpop.f32.mrb[0].mxu0
        %v2870 = vadd.f32 %v538, %v2869
        %v2871 = vpop.f32.mrb[0].mxu0
        %v2872 = vadd.f32 %v534, %v2871
        %v2873 = vpop.f32.mrb[0].mxu0
        %v2874 = vadd.f32 %v538, %v2873
        %2875 = vmatprep.mubr.bf16.mxu0 0
        %2876 = vmatmul.mubr.bf16.gmra.mrb[0].mxu0 %v1613
        %v2877 = vpop.f32.mrb[0].mxu0
        %v2878 = vadd.f32 %v534, %v2877
        %v2879 = vpop.f32.mrb[0].mxu0
        %v2880 = vadd.f32 %v538, %v2879
        %v2881 = vpop.f32.mrb[0].mxu0
        %v2882 = vadd.f32 %v534, %v2881
        %v2883 = vpop.f32.mrb[0].mxu0
        %v2884 = vadd.f32 %v538, %v2883
        %2885 = vmatprep.mubr.bf16.mxu0 0
        %2886 = vmatmul.mubr.bf16.gmra.mrb[0].mxu0 %v1616
        %v2887 = vpop.f32.mrb[0].mxu0
        %v2888 = vadd.f32 %v534, %v2887
        %v2889 = vpop.f32.mrb[0].mxu0
        %v2890 = vadd.f32 %v538, %v2889
        %v2891 = vpop.f32.mrb[0].mxu0
        %v2892 = vadd.f32 %v534, %v2891
        %v2893 = vpop.f32.mrb[0].mxu0
        %v2894 = vadd.f32 %v538, %v2893
        %2895 = vmatprep.mubr.bf16.mxu0 0
        %2896 = vmatmul.mubr.bf16.gmra.mrb[0].mxu0 %v1619
        %v2897 = vpop.f32.mrb[0].mxu0
        %v2898 = vadd.f32 %v534, %v2897
        %v2899 = vpop.f32.mrb[0].mxu0
        %v2900 = vadd.f32 %v538, %v2899
        %v2901 = vpop.f32.mrb[0].mxu0
        %v2902 = vadd.f32 %v534, %v2901
        %v2903 = vpop.f32.mrb[0].mxu0
        %v2904 = vadd.f32 %v538, %v2903
        %2905 = vmatprep.mubr.bf16.mxu0 0
        %2906 = vmatmul.mubr.bf16.gmra.mrb[0].mxu0 %v1622
        %v2907 = vpop.f32.mrb[0].mxu0
        %v2908 = vadd.f32 %v534, %v2907
        %v2909 = vpop.f32.mrb[0].mxu0
        %v2910 = vadd.f32 %v538, %v2909
        %v2911 = vpop.f32.mrb[0].mxu0
        %v2912 = vadd.f32 %v534, %v2911
        %v2913 = vpop.f32.mrb[0].mxu0
        %v2914 = vadd.f32 %v538, %v2913
        %2915 = vmatprep.mubr.bf16.mxu0 0
        %2916 = vmatmul.mubr.bf16.gmra.mrb[0].mxu0 %v1625
        %v2917 = vpop.f32.mrb[0].mxu0
        %v2918 = vadd.f32 %v534, %v2917
        %v2919 = vpop.f32.mrb[0].mxu0
        %v2920 = vadd.f32 %v538, %v2919
        %v2921 = vpop.f32.mrb[0].mxu0
        %v2922 = vadd.f32 %v534, %v2921
        %v2923 = vpop.f32.mrb[0].mxu0
        %v2924 = vadd.f32 %v538, %v2923
        %2925 = vmatprep.mubr.bf16.mxu0 0
        %2926 = vmatmul.mubr.bf16.gmra.mrb[0].mxu0 %v1628
        %v2927 = vpop.f32.mrb[0].mxu0
        %v2928 = vadd.f32 %v534, %v2927
        %v2929 = vpop.f32.mrb[0].mxu0
        %v2930 = vadd.f32 %v538, %v2929
        %v2931 = vpop.f32.mrb[0].mxu0
        %v2932 = vadd.f32 %v534, %v2931
        %v2933 = vpop.f32.mrb[0].mxu0
        %v2934 = vadd.f32 %v538, %v2933
        %2935 = vmatprep.mubr.bf16.mxu0 0
        %2936 = vmatmul.mubr.bf16.gmra.mrb[0].mxu0 %v1631
        %v2937 = vpop.f32.mrb[0].mxu0
        %v2938 = vadd.f32 %v534, %v2937
        %v2939 = vpop.f32.mrb[0].mxu0
        %v2940 = vadd.f32 %v538, %v2939
        %v2941 = vpop.f32.mrb[0].mxu0
        %v2942 = vadd.f32 %v534, %v2941
        %v2943 = vpop.f32.mrb[0].mxu0
        %v2944 = vadd.f32 %v538, %v2943
        %2945 = vdwg.mxu0
        %2946 = vmatprep.subr.bf16.mxu0 %v1231
        %2947 = vmatpush1.bf16.msra.mxu0 %v1230
        %2948 = vmatprep.subr.bf16.mxu0 %v1236
        %2949 = vmatpush1.bf16.msra.mxu0 %v1235
        %2950 = vmatprep.subr.bf16.mxu0 0
        %2951 = vmatpush1.bf16.msra.mxu0 0
        %2952 = vmatprep.subr.bf16.mxu0 0
        %2953 = vmatpush1.bf16.msra.mxu0 0
        %2954 = vmatprep.subr.bf16.mxu0 0
        %2955 = vmatpush1.bf16.msra.mxu0 0
        %2956 = vmatprep.subr.bf16.mxu0 0
        %2957 = vmatpush1.bf16.msra.mxu0 0
        %2958 = vmatprep.subr.bf16.mxu0 0
        %2959 = vmatpush1.bf16.msra.mxu0 0
        %2960 = vmatprep.subr.bf16.mxu0 0
        %2961 = vmatpush1.bf16.msra.mxu0 0
        %2962 = vmatprep.subr.bf16.mxu0 0
        %2963 = vmatpush1.bf16.msra.mxu0 0
        %2964 = vmatprep.subr.bf16.mxu0 0
        %2965 = vmatpush1.bf16.msra.mxu0 0
        %2966 = vmatprep.subr.bf16.mxu0 0
        %2967 = vmatpush1.bf16.msra.mxu0 0
        %2968 = vmatprep.subr.bf16.mxu0 0
        %2969 = vmatpush1.bf16.msra.mxu0 0
        %2970 = vmatprep.subr.bf16.mxu0 0
        %2971 = vmatpush1.bf16.msra.mxu0 0
        %2972 = vmatprep.subr.bf16.mxu0 0
        %2973 = vmatpush1.bf16.msra.mxu0 0
        %2974 = vmatprep.subr.bf16.mxu0 0
        %2975 = vmatpush1.bf16.msra.mxu0 0
        %2976 = vmatprep.subr.bf16.mxu0 0
        %2977 = vmatpush1.bf16.msra.mxu0 0
        %2978 = vmatprep.mubr.bf16.mxu0 0
        %2979 = vmatmul.mubr.bf16.gmra.mrb[0].mxu0 %v1250
        %v2980 = vpop.f32.mrb[0].mxu0
        %v2981 = vadd.f32 %v542, %v2980
        %v2982 = vpop.f32.mrb[0].mxu0
        %v2983 = vadd.f32 %v546, %v2982
        %v2984 = vpop.f32.mrb[0].mxu0
        %v2985 = vadd.f32 %v542, %v2984
        %v2986 = vpop.f32.mrb[0].mxu0
        %v2987 = vadd.f32 %v546, %v2986
        %2988 = vmatprep.mubr.bf16.mxu0 0
        %2989 = vmatmul.mubr.bf16.gmra.mrb[0].mxu0 %v1253
        %v2990 = vpop.f32.mrb[0].mxu0
        %v2991 = vadd.f32 %v542, %v2990
        %v2992 = vpop.f32.mrb[0].mxu0
        %v2993 = vadd.f32 %v546, %v2992
        %v2994 = vpop.f32.mrb[0].mxu0
        %v2995 = vadd.f32 %v542, %v2994
        %v2996 = vpop.f32.mrb[0].mxu0
        %v2997 = vadd.f32 %v546, %v2996
        %2998 = vmatprep.mubr.bf16.mxu0 0
        %2999 = vmatmul.mubr.bf16.gmra.mrb[0].mxu0 %v1256
        %v3000 = vpop.f32.mrb[0].mxu0
        %v3001 = vadd.f32 %v542, %v3000
        %v3002 = vpop.f32.mrb[0].mxu0
        %v3003 = vadd.f32 %v546, %v3002
        %v3004 = vpop.f32.mrb[0].mxu0
        %v3005 = vadd.f32 %v542, %v3004
        %v3006 = vpop.f32.mrb[0].mxu0
        %v3007 = vadd.f32 %v546, %v3006
        %3008 = vmatprep.mubr.bf16.mxu0 0
        %3009 = vmatmul.mubr.bf16.gmra.mrb[0].mxu0 %v1259
        %v3010 = vpop.f32.mrb[0].mxu0
        %v3011 = vadd.f32 %v542, %v3010
        %v3012 = vpop.f32.mrb[0].mxu0
        %v3013 = vadd.f32 %v546, %v3012
        %v3014 = vpop.f32.mrb[0].mxu0
        %v3015 = vadd.f32 %v542, %v3014
        %v3016 = vpop.f32.mrb[0].mxu0
        %v3017 = vadd.f32 %v546, %v3016
        %3018 = vmatprep.mubr.bf16.mxu0 0
        %3019 = vmatmul.mubr.bf16.gmra.mrb[0].mxu0 %v1262
        %v3020 = vpop.f32.mrb[0].mxu0
        %v3021 = vadd.f32 %v542, %v3020
        %v3022 = vpop.f32.mrb[0].mxu0
        %v3023 = vadd.f32 %v546, %v3022
        %v3024 = vpop.f32.mrb[0].mxu0
        %v3025 = vadd.f32 %v542, %v3024
        %v3026 = vpop.f32.mrb[0].mxu0
        %v3027 = vadd.f32 %v546, %v3026
        %3028 = vmatprep.mubr.bf16.mxu0 0
        %3029 = vmatmul.mubr.bf16.gmra.mrb[0].mxu0 %v1265
        %v3030 = vpop.f32.mrb[0].mxu0
        %v3031 = vadd.f32 %v542, %v3030
        %v3032 = vpop.f32.mrb[0].mxu0
        %v3033 = vadd.f32 %v546, %v3032
        %v3034 = vpop.f32.mrb[0].mxu0
        %v3035 = vadd.f32 %v542, %v3034
        %v3036 = vpop.f32.mrb[0].mxu0
        %v3037 = vadd.f32 %v546, %v3036
        %3038 = vmatprep.mubr.bf16.mxu0 0
        %3039 = vmatmul.mubr.bf16.gmra.mrb[0].mxu0 %v1268
        %v3040 = vpop.f32.mrb[0].mxu0
        %v3041 = vadd.f32 %v542, %v3040
        %v3042 = vpop.f32.mrb[0].mxu0
        %v3043 = vadd.f32 %v546, %v3042
        %v3044 = vpop.f32.mrb[0].mxu0
        %v3045 = vadd.f32 %v542, %v3044
        %v3046 = vpop.f32.mrb[0].mxu0
        %v3047 = vadd.f32 %v546, %v3046
        %3048 = vmatprep.mubr.bf16.mxu0 0
        %3049 = vmatmul.mubr.bf16.gmra.mrb[0].mxu0 %v1271
        %v3050 = vpop.f32.mrb[0].mxu0
        %v3051 = vadd.f32 %v542, %v3050
        %v3052 = vpop.f32.mrb[0].mxu0
        %v3053 = vadd.f32 %v546, %v3052
        %v3054 = vpop.f32.mrb[0].mxu0
        %v3055 = vadd.f32 %v542, %v3054
        %v3056 = vpop.f32.mrb[0].mxu0
        %v3057 = vadd.f32 %v546, %v3056
        %3058 = vmatprep.mubr.bf16.mxu0 0
        %3059 = vmatmul.mubr.bf16.gmra.mrb[0].mxu0 %v1274
        %v3060 = vpop.f32.mrb[0].mxu0
        %v3061 = vadd.f32 %v542, %v3060
        %v3062 = vpop.f32.mrb[0].mxu0
        %v3063 = vadd.f32 %v546, %v3062
        %v3064 = vpop.f32.mrb[0].mxu0
        %v3065 = vadd.f32 %v542, %v3064
        %v3066 = vpop.f32.mrb[0].mxu0
        %v3067 = vadd.f32 %v546, %v3066
        %3068 = vmatprep.mubr.bf16.mxu0 0
        %3069 = vmatmul.mubr.bf16.gmra.mrb[0].mxu0 %v1277
        %v3070 = vpop.f32.mrb[0].mxu0
        %v3071 = vadd.f32 %v542, %v3070
        %v3072 = vpop.f32.mrb[0].mxu0
        %v3073 = vadd.f32 %v546, %v3072
        %v3074 = vpop.f32.mrb[0].mxu0
        %v3075 = vadd.f32 %v542, %v3074
        %v3076 = vpop.f32.mrb[0].mxu0
        %v3077 = vadd.f32 %v546, %v3076
        %3078 = vmatprep.mubr.bf16.mxu0 0
        %3079 = vmatmul.mubr.bf16.gmra.mrb[0].mxu0 %v1280
        %v3080 = vpop.f32.mrb[0].mxu0
        %v3081 = vadd.f32 %v542, %v3080
        %v3082 = vpop.f32.mrb[0].mxu0
        %v3083 = vadd.f32 %v546, %v3082
        %v3084 = vpop.f32.mrb[0].mxu0
        %v3085 = vadd.f32 %v542, %v3084
        %v3086 = vpop.f32.mrb[0].mxu0
        %v3087 = vadd.f32 %v546, %v3086
        %3088 = vmatprep.mubr.bf16.mxu0 0
        %3089 = vmatmul.mubr.bf16.gmra.mrb[0].mxu0 %v1283
        %v3090 = vpop.f32.mrb[0].mxu0
        %v3091 = vadd.f32 %v542, %v3090
        %v3092 = vpop.f32.mrb[0].mxu0
        %v3093 = vadd.f32 %v546, %v3092
        %v3094 = vpop.f32.mrb[0].mxu0
        %v3095 = vadd.f32 %v542, %v3094
        %v3096 = vpop.f32.mrb[0].mxu0
        %v3097 = vadd.f32 %v546, %v3096
        %3098 = vmatprep.mubr.bf16.mxu0 0
        %3099 = vmatmul.mubr.bf16.gmra.mrb[0].mxu0 %v1286
        %v3100 = vpop.f32.mrb[0].mxu0
        %v3101 = vadd.f32 %v542, %v3100
        %v3102 = vpop.f32.mrb[0].mxu0
        %v3103 = vadd.f32 %v546, %v3102
        %v3104 = vpop.f32.mrb[0].mxu0
        %v3105 = vadd.f32 %v542, %v3104
        %v3106 = vpop.f32.mrb[0].mxu0
        %v3107 = vadd.f32 %v546, %v3106
        %3108 = vmatprep.mubr.bf16.mxu0 0
        %3109 = vmatmul.mubr.bf16.gmra.mrb[0].mxu0 %v1289
        %v3110 = vpop.f32.mrb[0].mxu0
        %v3111 = vadd.f32 %v542, %v3110
        %v3112 = vpop.f32.mrb[0].mxu0
        %v3113 = vadd.f32 %v546, %v3112
        %v3114 = vpop.f32.mrb[0].mxu0
        %v3115 = vadd.f32 %v542, %v3114
        %v3116 = vpop.f32.mrb[0].mxu0
        %v3117 = vadd.f32 %v546, %v3116
        %3118 = vmatprep.mubr.bf16.mxu0 0
        %3119 = vmatmul.mubr.bf16.gmra.mrb[0].mxu0 %v1292
        %v3120 = vpop.f32.mrb[0].mxu0
        %v3121 = vadd.f32 %v542, %v3120
        %v3122 = vpop.f32.mrb[0].mxu0
        %v3123 = vadd.f32 %v546, %v3122
        %v3124 = vpop.f32.mrb[0].mxu0
        %v3125 = vadd.f32 %v542, %v3124
        %v3126 = vpop.f32.mrb[0].mxu0
        %v3127 = vadd.f32 %v546, %v3126
        %3128 = vmatprep.mubr.bf16.mxu0 0
        %3129 = vmatmul.mubr.bf16.gmra.mrb[0].mxu0 %v1295
        %v3130 = vpop.f32.mrb[0].mxu0
        %v3131 = vadd.f32 %v542, %v3130
        %v3132 = vpop.f32.mrb[0].mxu0
        %v3133 = vadd.f32 %v546, %v3132
        %v3134 = vpop.f32.mrb[0].mxu0
        %v3135 = vadd.f32 %v542, %v3134
        %v3136 = vpop.f32.mrb[0].mxu0
        %v3137 = vadd.f32 %v546, %v3136
        %3138 = vmatprep.mubr.bf16.mxu0 0
        %3139 = vmatmul.mubr.bf16.gmra.mrb[0].mxu0 %v1298
        %v3140 = vpop.f32.mrb[0].mxu0
        %v3141 = vadd.f32 %v542, %v3140
        %v3142 = vpop.f32.mrb[0].mxu0
        %v3143 = vadd.f32 %v546, %v3142
        %v3144 = vpop.f32.mrb[0].mxu0
        %v3145 = vadd.f32 %v542, %v3144
        %v3146 = vpop.f32.mrb[0].mxu0
        %v3147 = vadd.f32 %v546, %v3146
        %3148 = vmatprep.mubr.bf16.mxu0 0
        %3149 = vmatmul.mubr.bf16.gmra.mrb[0].mxu0 %v1301
        %v3150 = vpop.f32.mrb[0].mxu0
        %v3151 = vadd.f32 %v542, %v3150
        %v3152 = vpop.f32.mrb[0].mxu0
        %v3153 = vadd.f32 %v546, %v3152
        %v3154 = vpop.f32.mrb[0].mxu0
        %v3155 = vadd.f32 %v542, %v3154
        %v3156 = vpop.f32.mrb[0].mxu0
        %v3157 = vadd.f32 %v546, %v3156
        %3158 = vmatprep.mubr.bf16.mxu0 0
        %3159 = vmatmul.mubr.bf16.gmra.mrb[0].mxu0 %v1304
        %v3160 = vpop.f32.mrb[0].mxu0
        %v3161 = vadd.f32 %v542, %v3160
        %v3162 = vpop.f32.mrb[0].mxu0
        %v3163 = vadd.f32 %v546, %v3162
        %v3164 = vpop.f32.mrb[0].mxu0
        %v3165 = vadd.f32 %v542, %v3164
        %v3166 = vpop.f32.mrb[0].mxu0
        %v3167 = vadd.f32 %v546, %v3166
        %3168 = vmatprep.mubr.bf16.mxu0 0
        %3169 = vmatmul.mubr.bf16.gmra.mrb[0].mxu0 %v1307
        %v3170 = vpop.f32.mrb[0].mxu0
        %v3171 = vadd.f32 %v542, %v3170
        %v3172 = vpop.f32.mrb[0].mxu0
        %v3173 = vadd.f32 %v546, %v3172
        %v3174 = vpop.f32.mrb[0].mxu0
        %v3175 = vadd.f32 %v542, %v3174
        %v3176 = vpop.f32.mrb[0].mxu0
        %v3177 = vadd.f32 %v546, %v3176
        %3178 = vmatprep.mubr.bf16.mxu0 0
        %3179 = vmatmul.mubr.bf16.gmra.mrb[0].mxu0 %v1310
        %v3180 = vpop.f32.mrb[0].mxu0
        %v3181 = vadd.f32 %v542, %v3180
        %v3182 = vpop.f32.mrb[0].mxu0
        %v3183 = vadd.f32 %v546, %v3182
        %v3184 = vpop.f32.mrb[0].mxu0
        %v3185 = vadd.f32 %v542, %v3184
        %v3186 = vpop.f32.mrb[0].mxu0
        %v3187 = vadd.f32 %v546, %v3186
        %3188 = vmatprep.mubr.bf16.mxu0 0
        %3189 = vmatmul.mubr.bf16.gmra.mrb[0].mxu0 %v1313
        %v3190 = vpop.f32.mrb[0].mxu0
        %v3191 = vadd.f32 %v542, %v3190
        %v3192 = vpop.f32.mrb[0].mxu0
        %v3193 = vadd.f32 %v546, %v3192
        %v3194 = vpop.f32.mrb[0].mxu0
        %v3195 = vadd.f32 %v542, %v3194
        %v3196 = vpop.f32.mrb[0].mxu0
        %v3197 = vadd.f32 %v546, %v3196
        %3198 = vmatprep.mubr.bf16.mxu0 0
        %3199 = vmatmul.mubr.bf16.gmra.mrb[0].mxu0 %v1316
        %v3200 = vpop.f32.mrb[0].mxu0
        %v3201 = vadd.f32 %v542, %v3200
        %v3202 = vpop.f32.mrb[0].mxu0
        %v3203 = vadd.f32 %v546, %v3202
        %v3204 = vpop.f32.mrb[0].mxu0
        %v3205 = vadd.f32 %v542, %v3204
        %v3206 = vpop.f32.mrb[0].mxu0
        %v3207 = vadd.f32 %v546, %v3206
        %3208 = vmatprep.mubr.bf16.mxu0 0
        %3209 = vmatmul.mubr.bf16.gmra.mrb[0].mxu0 %v1319
        %v3210 = vpop.f32.mrb[0].mxu0
        %v3211 = vadd.f32 %v542, %v3210
        %v3212 = vpop.f32.mrb[0].mxu0
        %v3213 = vadd.f32 %v546, %v3212
        %v3214 = vpop.f32.mrb[0].mxu0
        %v3215 = vadd.f32 %v542, %v3214
        %v3216 = vpop.f32.mrb[0].mxu0
        %v3217 = vadd.f32 %v546, %v3216
        %3218 = vmatprep.mubr.bf16.mxu0 0
        %3219 = vmatmul.mubr.bf16.gmra.mrb[0].mxu0 %v1322
        %v3220 = vpop.f32.mrb[0].mxu0
        %v3221 = vadd.f32 %v542, %v3220
        %v3222 = vpop.f32.mrb[0].mxu0
        %v3223 = vadd.f32 %v546, %v3222
        %v3224 = vpop.f32.mrb[0].mxu0
        %v3225 = vadd.f32 %v542, %v3224
        %v3226 = vpop.f32.mrb[0].mxu0
        %v3227 = vadd.f32 %v546, %v3226
        %3228 = vmatprep.mubr.bf16.mxu0 0
        %3229 = vmatmul.mubr.bf16.gmra.mrb[0].mxu0 %v1325
        %v3230 = vpop.f32.mrb[0].mxu0
        %v3231 = vadd.f32 %v542, %v3230
        %v3232 = vpop.f32.mrb[0].mxu0
        %v3233 = vadd.f32 %v546, %v3232
        %v3234 = vpop.f32.mrb[0].mxu0
        %v3235 = vadd.f32 %v542, %v3234
        %v3236 = vpop.f32.mrb[0].mxu0
        %v3237 = vadd.f32 %v546, %v3236
        %3238 = vmatprep.mubr.bf16.mxu0 0
        %3239 = vmatmul.mubr.bf16.gmra.mrb[0].mxu0 %v1328
        %v3240 = vpop.f32.mrb[0].mxu0
        %v3241 = vadd.f32 %v542, %v3240
        %v3242 = vpop.f32.mrb[0].mxu0
        %v3243 = vadd.f32 %v546, %v3242
        %v3244 = vpop.f32.mrb[0].mxu0
        %v3245 = vadd.f32 %v542, %v3244
        %v3246 = vpop.f32.mrb[0].mxu0
        %v3247 = vadd.f32 %v546, %v3246
        %3248 = vmatprep.mubr.bf16.mxu0 0
        %3249 = vmatmul.mubr.bf16.gmra.mrb[0].mxu0 %v1331
        %v3250 = vpop.f32.mrb[0].mxu0
        %v3251 = vadd.f32 %v542, %v3250
        %v3252 = vpop.f32.mrb[0].mxu0
        %v3253 = vadd.f32 %v546, %v3252
        %v3254 = vpop.f32.mrb[0].mxu0
        %v3255 = vadd.f32 %v542, %v3254
        %v3256 = vpop.f32.mrb[0].mxu0
        %v3257 = vadd.f32 %v546, %v3256
        %3258 = vmatprep.mubr.bf16.mxu0 0
        %3259 = vmatmul.mubr.bf16.gmra.mrb[0].mxu0 %v1334
        %v3260 = vpop.f32.mrb[0].mxu0
        %v3261 = vadd.f32 %v542, %v3260
        %v3262 = vpop.f32.mrb[0].mxu0
        %v3263 = vadd.f32 %v546, %v3262
        %v3264 = vpop.f32.mrb[0].mxu0
        %v3265 = vadd.f32 %v542, %v3264
        %v3266 = vpop.f32.mrb[0].mxu0
        %v3267 = vadd.f32 %v546, %v3266
        %3268 = vmatprep.mubr.bf16.mxu0 0
        %3269 = vmatmul.mubr.bf16.gmra.mrb[0].mxu0 %v1337
        %v3270 = vpop.f32.mrb[0].mxu0
        %v3271 = vadd.f32 %v542, %v3270
        %v3272 = vpop.f32.mrb[0].mxu0
        %v3273 = vadd.f32 %v546, %v3272
        %v3274 = vpop.f32.mrb[0].mxu0
        %v3275 = vadd.f32 %v542, %v3274
        %v3276 = vpop.f32.mrb[0].mxu0
        %v3277 = vadd.f32 %v546, %v3276
        %3278 = vmatprep.mubr.bf16.mxu0 0
        %3279 = vmatmul.mubr.bf16.gmra.mrb[0].mxu0 %v1340
        %v3280 = vpop.f32.mrb[0].mxu0
        %v3281 = vadd.f32 %v542, %v3280
        %v3282 = vpop.f32.mrb[0].mxu0
        %v3283 = vadd.f32 %v546, %v3282
        %v3284 = vpop.f32.mrb[0].mxu0
        %v3285 = vadd.f32 %v542, %v3284
        %v3286 = vpop.f32.mrb[0].mxu0
        %v3287 = vadd.f32 %v546, %v3286
        %3288 = vmatprep.mubr.bf16.mxu0 0
        %3289 = vmatmul.mubr.bf16.gmra.mrb[0].mxu0 %v1343
        %v3290 = vpop.f32.mrb[0].mxu0
        %v3291 = vadd.f32 %v542, %v3290
        %v3292 = vpop.f32.mrb[0].mxu0
        %v3293 = vadd.f32 %v546, %v3292
        %v3294 = vpop.f32.mrb[0].mxu0
        %v3295 = vadd.f32 %v542, %v3294
        %v3296 = vpop.f32.mrb[0].mxu0
        %v3297 = vadd.f32 %v546, %v3296
        %3298 = vmatprep.mubr.bf16.mxu0 0
        %3299 = vmatmul.mubr.bf16.gmra.mrb[0].mxu0 %v1346
        %v3300 = vpop.f32.mrb[0].mxu0
        %v3301 = vadd.f32 %v542, %v3300
        %v3302 = vpop.f32.mrb[0].mxu0
        %v3303 = vadd.f32 %v546, %v3302
        %v3304 = vpop.f32.mrb[0].mxu0
        %v3305 = vadd.f32 %v542, %v3304
        %v3306 = vpop.f32.mrb[0].mxu0
        %v3307 = vadd.f32 %v546, %v3306
        %3308 = vmatprep.mubr.bf16.mxu0 0
        %3309 = vmatmul.mubr.bf16.gmra.mrb[0].mxu0 %v1349
        %v3310 = vpop.f32.mrb[0].mxu0
        %v3311 = vadd.f32 %v542, %v3310
        %v3312 = vpop.f32.mrb[0].mxu0
        %v3313 = vadd.f32 %v546, %v3312
        %v3314 = vpop.f32.mrb[0].mxu0
        %v3315 = vadd.f32 %v542, %v3314
        %v3316 = vpop.f32.mrb[0].mxu0
        %v3317 = vadd.f32 %v546, %v3316
        %3318 = vmatprep.mubr.bf16.mxu0 0
        %3319 = vmatmul.mubr.bf16.gmra.mrb[0].mxu0 %v1352
        %v3320 = vpop.f32.mrb[0].mxu0
        %v3321 = vadd.f32 %v542, %v3320
        %v3322 = vpop.f32.mrb[0].mxu0
        %v3323 = vadd.f32 %v546, %v3322
        %v3324 = vpop.f32.mrb[0].mxu0
        %v3325 = vadd.f32 %v542, %v3324
        %v3326 = vpop.f32.mrb[0].mxu0
        %v3327 = vadd.f32 %v546, %v3326
        %3328 = vmatprep.mubr.bf16.mxu0 0
        %3329 = vmatmul.mubr.bf16.gmra.mrb[0].mxu0 %v1355
        %v3330 = vpop.f32.mrb[0].mxu0
        %v3331 = vadd.f32 %v542, %v3330
        %v3332 = vpop.f32.mrb[0].mxu0
        %v3333 = vadd.f32 %v546, %v3332
        %v3334 = vpop.f32.mrb[0].mxu0
        %v3335 = vadd.f32 %v542, %v3334
        %v3336 = vpop.f32.mrb[0].mxu0
        %v3337 = vadd.f32 %v546, %v3336
        %3338 = vmatprep.mubr.bf16.mxu0 0
        %3339 = vmatmul.mubr.bf16.gmra.mrb[0].mxu0 %v1358
        %v3340 = vpop.f32.mrb[0].mxu0
        %v3341 = vadd.f32 %v542, %v3340
        %v3342 = vpop.f32.mrb[0].mxu0
        %v3343 = vadd.f32 %v546, %v3342
        %v3344 = vpop.f32.mrb[0].mxu0
        %v3345 = vadd.f32 %v542, %v3344
        %v3346 = vpop.f32.mrb[0].mxu0
        %v3347 = vadd.f32 %v546, %v3346
        %3348 = vmatprep.mubr.bf16.mxu0 0
        %3349 = vmatmul.mubr.bf16.gmra.mrb[0].mxu0 %v1361
        %v3350 = vpop.f32.mrb[0].mxu0
        %v3351 = vadd.f32 %v542, %v3350
        %v3352 = vpop.f32.mrb[0].mxu0
        %v3353 = vadd.f32 %v546, %v3352
        %v3354 = vpop.f32.mrb[0].mxu0
        %v3355 = vadd.f32 %v542, %v3354
        %v3356 = vpop.f32.mrb[0].mxu0
        %v3357 = vadd.f32 %v546, %v3356
        %3358 = vmatprep.mubr.bf16.mxu0 0
        %3359 = vmatmul.mubr.bf16.gmra.mrb[0].mxu0 %v1364
        %v3360 = vpop.f32.mrb[0].mxu0
        %v3361 = vadd.f32 %v542, %v3360
        %v3362 = vpop.f32.mrb[0].mxu0
        %v3363 = vadd.f32 %v546, %v3362
        %v3364 = vpop.f32.mrb[0].mxu0
        %v3365 = vadd.f32 %v542, %v3364
        %v3366 = vpop.f32.mrb[0].mxu0
        %v3367 = vadd.f32 %v546, %v3366
        %3368 = vmatprep.mubr.bf16.mxu0 0
        %3369 = vmatmul.mubr.bf16.gmra.mrb[0].mxu0 %v1367
        %v3370 = vpop.f32.mrb[0].mxu0
        %v3371 = vadd.f32 %v542, %v3370
        %v3372 = vpop.f32.mrb[0].mxu0
        %v3373 = vadd.f32 %v546, %v3372
        %v3374 = vpop.f32.mrb[0].mxu0
        %v3375 = vadd.f32 %v542, %v3374
        %v3376 = vpop.f32.mrb[0].mxu0
        %v3377 = vadd.f32 %v546, %v3376
        %3378 = vmatprep.mubr.bf16.mxu0 0
        %3379 = vmatmul.mubr.bf16.gmra.mrb[0].mxu0 %v1370
        %v3380 = vpop.f32.mrb[0].mxu0
        %v3381 = vadd.f32 %v542, %v3380
        %v3382 = vpop.f32.mrb[0].mxu0
        %v3383 = vadd.f32 %v546, %v3382
        %v3384 = vpop.f32.mrb[0].mxu0
        %v3385 = vadd.f32 %v542, %v3384
        %v3386 = vpop.f32.mrb[0].mxu0
        %v3387 = vadd.f32 %v546, %v3386
        %3388 = vmatprep.mubr.bf16.mxu0 0
        %3389 = vmatmul.mubr.bf16.gmra.mrb[0].mxu0 %v1373
        %v3390 = vpop.f32.mrb[0].mxu0
        %v3391 = vadd.f32 %v542, %v3390
        %v3392 = vpop.f32.mrb[0].mxu0
        %v3393 = vadd.f32 %v546, %v3392
        %v3394 = vpop.f32.mrb[0].mxu0
        %v3395 = vadd.f32 %v542, %v3394
        %v3396 = vpop.f32.mrb[0].mxu0
        %v3397 = vadd.f32 %v546, %v3396
        %3398 = vmatprep.mubr.bf16.mxu0 0
        %3399 = vmatmul.mubr.bf16.gmra.mrb[0].mxu0 %v1376
        %v3400 = vpop.f32.mrb[0].mxu0
        %v3401 = vadd.f32 %v542, %v3400
        %v3402 = vpop.f32.mrb[0].mxu0
        %v3403 = vadd.f32 %v546, %v3402
        %v3404 = vpop.f32.mrb[0].mxu0
        %v3405 = vadd.f32 %v542, %v3404
        %v3406 = vpop.f32.mrb[0].mxu0
        %v3407 = vadd.f32 %v546, %v3406
        %3408 = vmatprep.mubr.bf16.mxu0 0
        %3409 = vmatmul.mubr.bf16.gmra.mrb[0].mxu0 %v1379
        %v3410 = vpop.f32.mrb[0].mxu0
        %v3411 = vadd.f32 %v542, %v3410
        %v3412 = vpop.f32.mrb[0].mxu0
        %v3413 = vadd.f32 %v546, %v3412
        %v3414 = vpop.f32.mrb[0].mxu0
        %v3415 = vadd.f32 %v542, %v3414
        %v3416 = vpop.f32.mrb[0].mxu0
        %v3417 = vadd.f32 %v546, %v3416
        %3418 = vmatprep.mubr.bf16.mxu0 0
        %3419 = vmatmul.mubr.bf16.gmra.mrb[0].mxu0 %v1382
        %v3420 = vpop.f32.mrb[0].mxu0
        %v3421 = vadd.f32 %v542, %v3420
        %v3422 = vpop.f32.mrb[0].mxu0
        %v3423 = vadd.f32 %v546, %v3422
        %v3424 = vpop.f32.mrb[0].mxu0
        %v3425 = vadd.f32 %v542, %v3424
        %v3426 = vpop.f32.mrb[0].mxu0
        %v3427 = vadd.f32 %v546, %v3426
        %3428 = vmatprep.mubr.bf16.mxu0 0
        %3429 = vmatmul.mubr.bf16.gmra.mrb[0].mxu0 %v1385
        %v3430 = vpop.f32.mrb[0].mxu0
        %v3431 = vadd.f32 %v542, %v3430
        %v3432 = vpop.f32.mrb[0].mxu0
        %v3433 = vadd.f32 %v546, %v3432
        %v3434 = vpop.f32.mrb[0].mxu0
        %v3435 = vadd.f32 %v542, %v3434
        %v3436 = vpop.f32.mrb[0].mxu0
        %v3437 = vadd.f32 %v546, %v3436
        %3438 = vmatprep.mubr.bf16.mxu0 0
        %3439 = vmatmul.mubr.bf16.gmra.mrb[0].mxu0 %v1388
        %v3440 = vpop.f32.mrb[0].mxu0
        %v3441 = vadd.f32 %v542, %v3440
        %v3442 = vpop.f32.mrb[0].mxu0
        %v3443 = vadd.f32 %v546, %v3442
        %v3444 = vpop.f32.mrb[0].mxu0
        %v3445 = vadd.f32 %v542, %v3444
        %v3446 = vpop.f32.mrb[0].mxu0
        %v3447 = vadd.f32 %v546, %v3446
        %3448 = vmatprep.mubr.bf16.mxu0 0
        %3449 = vmatmul.mubr.bf16.gmra.mrb[0].mxu0 %v1391
        %v3450 = vpop.f32.mrb[0].mxu0
        %v3451 = vadd.f32 %v542, %v3450
        %v3452 = vpop.f32.mrb[0].mxu0
        %v3453 = vadd.f32 %v546, %v3452
        %v3454 = vpop.f32.mrb[0].mxu0
        %v3455 = vadd.f32 %v542, %v3454
        %v3456 = vpop.f32.mrb[0].mxu0
        %v3457 = vadd.f32 %v546, %v3456
        %3458 = vmatprep.mubr.bf16.mxu0 0
        %3459 = vmatmul.mubr.bf16.gmra.mrb[0].mxu0 %v1394
        %v3460 = vpop.f32.mrb[0].mxu0
        %v3461 = vadd.f32 %v542, %v3460
        %v3462 = vpop.f32.mrb[0].mxu0
        %v3463 = vadd.f32 %v546, %v3462
        %v3464 = vpop.f32.mrb[0].mxu0
        %v3465 = vadd.f32 %v542, %v3464
        %v3466 = vpop.f32.mrb[0].mxu0
        %v3467 = vadd.f32 %v546, %v3466
        %3468 = vmatprep.mubr.bf16.mxu0 0
        %3469 = vmatmul.mubr.bf16.gmra.mrb[0].mxu0 %v1397
        %v3470 = vpop.f32.mrb[0].mxu0
        %v3471 = vadd.f32 %v542, %v3470
        %v3472 = vpop.f32.mrb[0].mxu0
        %v3473 = vadd.f32 %v546, %v3472
        %v3474 = vpop.f32.mrb[0].mxu0
        %v3475 = vadd.f32 %v542, %v3474
        %v3476 = vpop.f32.mrb[0].mxu0
        %v3477 = vadd.f32 %v546, %v3476
        %3478 = vmatprep.mubr.bf16.mxu0 0
        %3479 = vmatmul.mubr.bf16.gmra.mrb[0].mxu0 %v1400
        %v3480 = vpop.f32.mrb[0].mxu0
        %v3481 = vadd.f32 %v542, %v3480
        %v3482 = vpop.f32.mrb[0].mxu0
        %v3483 = vadd.f32 %v546, %v3482
        %v3484 = vpop.f32.mrb[0].mxu0
        %v3485 = vadd.f32 %v542, %v3484
        %v3486 = vpop.f32.mrb[0].mxu0
        %v3487 = vadd.f32 %v546, %v3486
        %3488 = vmatprep.mubr.bf16.mxu0 0
        %3489 = vmatmul.mubr.bf16.gmra.mrb[0].mxu0 %v1403
        %v3490 = vpop.f32.mrb[0].mxu0
        %v3491 = vadd.f32 %v542, %v3490
        %v3492 = vpop.f32.mrb[0].mxu0
        %v3493 = vadd.f32 %v546, %v3492
        %v3494 = vpop.f32.mrb[0].mxu0
        %v3495 = vadd.f32 %v542, %v3494
        %v3496 = vpop.f32.mrb[0].mxu0
        %v3497 = vadd.f32 %v546, %v3496
        %3498 = vmatprep.mubr.bf16.mxu0 0
        %3499 = vmatmul.mubr.bf16.gmra.mrb[0].mxu0 %v1406
        %v3500 = vpop.f32.mrb[0].mxu0
        %v3501 = vadd.f32 %v542, %v3500
        %v3502 = vpop.f32.mrb[0].mxu0
        %v3503 = vadd.f32 %v546, %v3502
        %v3504 = vpop.f32.mrb[0].mxu0
        %v3505 = vadd.f32 %v542, %v3504
        %v3506 = vpop.f32.mrb[0].mxu0
        %v3507 = vadd.f32 %v546, %v3506
        %3508 = vmatprep.mubr.bf16.mxu0 0
        %3509 = vmatmul.mubr.bf16.gmra.mrb[0].mxu0 %v1409
        %v3510 = vpop.f32.mrb[0].mxu0
        %v3511 = vadd.f32 %v542, %v3510
        %v3512 = vpop.f32.mrb[0].mxu0
        %v3513 = vadd.f32 %v546, %v3512
        %v3514 = vpop.f32.mrb[0].mxu0
        %v3515 = vadd.f32 %v542, %v3514
        %v3516 = vpop.f32.mrb[0].mxu0
        %v3517 = vadd.f32 %v546, %v3516
        %3518 = vmatprep.mubr.bf16.mxu0 0
        %3519 = vmatmul.mubr.bf16.gmra.mrb[0].mxu0 %v1412
        %v3520 = vpop.f32.mrb[0].mxu0
        %v3521 = vadd.f32 %v542, %v3520
        %v3522 = vpop.f32.mrb[0].mxu0
        %v3523 = vadd.f32 %v546, %v3522
        %v3524 = vpop.f32.mrb[0].mxu0
        %v3525 = vadd.f32 %v542, %v3524
        %v3526 = vpop.f32.mrb[0].mxu0
        %v3527 = vadd.f32 %v546, %v3526
        %3528 = vmatprep.mubr.bf16.mxu0 0
        %3529 = vmatmul.mubr.bf16.gmra.mrb[0].mxu0 %v1415
        %v3530 = vpop.f32.mrb[0].mxu0
        %v3531 = vadd.f32 %v542, %v3530
        %v3532 = vpop.f32.mrb[0].mxu0
        %v3533 = vadd.f32 %v546, %v3532
        %v3534 = vpop.f32.mrb[0].mxu0
        %v3535 = vadd.f32 %v542, %v3534
        %v3536 = vpop.f32.mrb[0].mxu0
        %v3537 = vadd.f32 %v546, %v3536
        %3538 = vmatprep.mubr.bf16.mxu0 0
        %3539 = vmatmul.mubr.bf16.gmra.mrb[0].mxu0 %v1418
        %v3540 = vpop.f32.mrb[0].mxu0
        %v3541 = vadd.f32 %v542, %v3540
        %v3542 = vpop.f32.mrb[0].mxu0
        %v3543 = vadd.f32 %v546, %v3542
        %v3544 = vpop.f32.mrb[0].mxu0
        %v3545 = vadd.f32 %v542, %v3544
        %v3546 = vpop.f32.mrb[0].mxu0
        %v3547 = vadd.f32 %v546, %v3546
        %3548 = vmatprep.mubr.bf16.mxu0 0
        %3549 = vmatmul.mubr.bf16.gmra.mrb[0].mxu0 %v1421
        %v3550 = vpop.f32.mrb[0].mxu0
        %v3551 = vadd.f32 %v542, %v3550
        %v3552 = vpop.f32.mrb[0].mxu0
        %v3553 = vadd.f32 %v546, %v3552
        %v3554 = vpop.f32.mrb[0].mxu0
        %v3555 = vadd.f32 %v542, %v3554
        %v3556 = vpop.f32.mrb[0].mxu0
        %v3557 = vadd.f32 %v546, %v3556
        %3558 = vmatprep.mubr.bf16.mxu0 0
        %3559 = vmatmul.mubr.bf16.gmra.mrb[0].mxu0 %v1424
        %v3560 = vpop.f32.mrb[0].mxu0
        %v3561 = vadd.f32 %v542, %v3560
        %v3562 = vpop.f32.mrb[0].mxu0
        %v3563 = vadd.f32 %v546, %v3562
        %v3564 = vpop.f32.mrb[0].mxu0
        %v3565 = vadd.f32 %v542, %v3564
        %v3566 = vpop.f32.mrb[0].mxu0
        %v3567 = vadd.f32 %v546, %v3566
        %3568 = vmatprep.mubr.bf16.mxu0 0
        %3569 = vmatmul.mubr.bf16.gmra.mrb[0].mxu0 %v1427
        %v3570 = vpop.f32.mrb[0].mxu0
        %v3571 = vadd.f32 %v542, %v3570
        %v3572 = vpop.f32.mrb[0].mxu0
        %v3573 = vadd.f32 %v546, %v3572
        %v3574 = vpop.f32.mrb[0].mxu0
        %v3575 = vadd.f32 %v542, %v3574
        %v3576 = vpop.f32.mrb[0].mxu0
        %v3577 = vadd.f32 %v546, %v3576
        %3578 = vmatprep.mubr.bf16.mxu0 0
        %3579 = vmatmul.mubr.bf16.gmra.mrb[0].mxu0 %v1430
        %v3580 = vpop.f32.mrb[0].mxu0
        %v3581 = vadd.f32 %v542, %v3580
        %v3582 = vpop.f32.mrb[0].mxu0
        %v3583 = vadd.f32 %v546, %v3582
        %v3584 = vpop.f32.mrb[0].mxu0
        %v3585 = vadd.f32 %v542, %v3584
        %v3586 = vpop.f32.mrb[0].mxu0
        %v3587 = vadd.f32 %v546, %v3586
        %3588 = vmatprep.mubr.bf16.mxu0 0
        %3589 = vmatmul.mubr.bf16.gmra.mrb[0].mxu0 %v1433
        %v3590 = vpop.f32.mrb[0].mxu0
        %v3591 = vadd.f32 %v542, %v3590
        %v3592 = vpop.f32.mrb[0].mxu0
        %v3593 = vadd.f32 %v546, %v3592
        %v3594 = vpop.f32.mrb[0].mxu0
        %v3595 = vadd.f32 %v542, %v3594
        %v3596 = vpop.f32.mrb[0].mxu0
        %v3597 = vadd.f32 %v546, %v3596
        %3598 = vmatprep.mubr.bf16.mxu0 0
        %3599 = vmatmul.mubr.bf16.gmra.mrb[0].mxu0 %v1436
        %v3600 = vpop.f32.mrb[0].mxu0
        %v3601 = vadd.f32 %v542, %v3600
        %v3602 = vpop.f32.mrb[0].mxu0
        %v3603 = vadd.f32 %v546, %v3602
        %v3604 = vpop.f32.mrb[0].mxu0
        %v3605 = vadd.f32 %v542, %v3604
        %v3606 = vpop.f32.mrb[0].mxu0
        %v3607 = vadd.f32 %v546, %v3606
        %3608 = vmatprep.mubr.bf16.mxu0 0
        %3609 = vmatmul.mubr.bf16.gmra.mrb[0].mxu0 %v1439
        %v3610 = vpop.f32.mrb[0].mxu0
        %v3611 = vadd.f32 %v542, %v3610
        %v3612 = vpop.f32.mrb[0].mxu0
        %v3613 = vadd.f32 %v546, %v3612
        %v3614 = vpop.f32.mrb[0].mxu0
        %v3615 = vadd.f32 %v542, %v3614
        %v3616 = vpop.f32.mrb[0].mxu0
        %v3617 = vadd.f32 %v546, %v3616
        %3618 = vmatprep.mubr.bf16.mxu0 0
        %3619 = vmatmul.mubr.bf16.gmra.mrb[0].mxu0 %v1442
        %v3620 = vpop.f32.mrb[0].mxu0
        %v3621 = vadd.f32 %v542, %v3620
        %v3622 = vpop.f32.mrb[0].mxu0
        %v3623 = vadd.f32 %v546, %v3622
        %v3624 = vpop.f32.mrb[0].mxu0
        %v3625 = vadd.f32 %v542, %v3624
        %v3626 = vpop.f32.mrb[0].mxu0
        %v3627 = vadd.f32 %v546, %v3626
        %3628 = vmatprep.mubr.bf16.mxu0 0
        %3629 = vmatmul.mubr.bf16.gmra.mrb[0].mxu0 %v1445
        %v3630 = vpop.f32.mrb[0].mxu0
        %v3631 = vadd.f32 %v542, %v3630
        %v3632 = vpop.f32.mrb[0].mxu0
        %v3633 = vadd.f32 %v546, %v3632
        %v3634 = vpop.f32.mrb[0].mxu0
        %v3635 = vadd.f32 %v542, %v3634
        %v3636 = vpop.f32.mrb[0].mxu0
        %v3637 = vadd.f32 %v546, %v3636
        %3638 = vmatprep.mubr.bf16.mxu0 0
        %3639 = vmatmul.mubr.bf16.gmra.mrb[0].mxu0 %v1448
        %v3640 = vpop.f32.mrb[0].mxu0
        %v3641 = vadd.f32 %v542, %v3640
        %v3642 = vpop.f32.mrb[0].mxu0
        %v3643 = vadd.f32 %v546, %v3642
        %v3644 = vpop.f32.mrb[0].mxu0
        %v3645 = vadd.f32 %v542, %v3644
        %v3646 = vpop.f32.mrb[0].mxu0
        %v3647 = vadd.f32 %v546, %v3646
        %3648 = vmatprep.mubr.bf16.mxu0 0
        %3649 = vmatmul.mubr.bf16.gmra.mrb[0].mxu0 %v1451
        %v3650 = vpop.f32.mrb[0].mxu0
        %v3651 = vadd.f32 %v542, %v3650
        %v3652 = vpop.f32.mrb[0].mxu0
        %v3653 = vadd.f32 %v546, %v3652
        %v3654 = vpop.f32.mrb[0].mxu0
        %v3655 = vadd.f32 %v542, %v3654
        %v3656 = vpop.f32.mrb[0].mxu0
        %v3657 = vadd.f32 %v546, %v3656
        %3658 = vmatprep.mubr.bf16.mxu0 0
        %3659 = vmatmul.mubr.bf16.gmra.mrb[0].mxu0 %v1454
        %v3660 = vpop.f32.mrb[0].mxu0
        %v3661 = vadd.f32 %v542, %v3660
        %v3662 = vpop.f32.mrb[0].mxu0
        %v3663 = vadd.f32 %v546, %v3662
        %v3664 = vpop.f32.mrb[0].mxu0
        %v3665 = vadd.f32 %v542, %v3664
        %v3666 = vpop.f32.mrb[0].mxu0
        %v3667 = vadd.f32 %v546, %v3666
        %3668 = vmatprep.mubr.bf16.mxu0 0
        %3669 = vmatmul.mubr.bf16.gmra.mrb[0].mxu0 %v1457
        %v3670 = vpop.f32.mrb[0].mxu0
        %v3671 = vadd.f32 %v542, %v3670
        %v3672 = vpop.f32.mrb[0].mxu0
        %v3673 = vadd.f32 %v546, %v3672
        %v3674 = vpop.f32.mrb[0].mxu0
        %v3675 = vadd.f32 %v542, %v3674
        %v3676 = vpop.f32.mrb[0].mxu0
        %v3677 = vadd.f32 %v546, %v3676
        %3678 = vmatprep.mubr.bf16.mxu0 0
        %3679 = vmatmul.mubr.bf16.gmra.mrb[0].mxu0 %v1460
        %v3680 = vpop.f32.mrb[0].mxu0
        %v3681 = vadd.f32 %v542, %v3680
        %v3682 = vpop.f32.mrb[0].mxu0
        %v3683 = vadd.f32 %v546, %v3682
        %v3684 = vpop.f32.mrb[0].mxu0
        %v3685 = vadd.f32 %v542, %v3684
        %v3686 = vpop.f32.mrb[0].mxu0
        %v3687 = vadd.f32 %v546, %v3686
        %3688 = vmatprep.mubr.bf16.mxu0 0
        %3689 = vmatmul.mubr.bf16.gmra.mrb[0].mxu0 %v1463
        %v3690 = vpop.f32.mrb[0].mxu0
        %v3691 = vadd.f32 %v542, %v3690
        %v3692 = vpop.f32.mrb[0].mxu0
        %v3693 = vadd.f32 %v546, %v3692
        %v3694 = vpop.f32.mrb[0].mxu0
        %v3695 = vadd.f32 %v542, %v3694
        %v3696 = vpop.f32.mrb[0].mxu0
        %v3697 = vadd.f32 %v546, %v3696
        %3698 = vmatprep.mubr.bf16.mxu0 0
        %3699 = vmatmul.mubr.bf16.gmra.mrb[0].mxu0 %v1466
        %v3700 = vpop.f32.mrb[0].mxu0
        %v3701 = vadd.f32 %v542, %v3700
        %v3702 = vpop.f32.mrb[0].mxu0
        %v3703 = vadd.f32 %v546, %v3702
        %v3704 = vpop.f32.mrb[0].mxu0
        %v3705 = vadd.f32 %v542, %v3704
        %v3706 = vpop.f32.mrb[0].mxu0
        %v3707 = vadd.f32 %v546, %v3706
        %3708 = vmatprep.mubr.bf16.mxu0 0
        %3709 = vmatmul.mubr.bf16.gmra.mrb[0].mxu0 %v1469
        %v3710 = vpop.f32.mrb[0].mxu0
        %v3711 = vadd.f32 %v542, %v3710
        %v3712 = vpop.f32.mrb[0].mxu0
        %v3713 = vadd.f32 %v546, %v3712
        %v3714 = vpop.f32.mrb[0].mxu0
        %v3715 = vadd.f32 %v542, %v3714
        %v3716 = vpop.f32.mrb[0].mxu0
        %v3717 = vadd.f32 %v546, %v3716
        %3718 = vmatprep.mubr.bf16.mxu0 0
        %3719 = vmatmul.mubr.bf16.gmra.mrb[0].mxu0 %v1472
        %v3720 = vpop.f32.mrb[0].mxu0
        %v3721 = vadd.f32 %v542, %v3720
        %v3722 = vpop.f32.mrb[0].mxu0
        %v3723 = vadd.f32 %v546, %v3722
        %v3724 = vpop.f32.mrb[0].mxu0
        %v3725 = vadd.f32 %v542, %v3724
        %v3726 = vpop.f32.mrb[0].mxu0
        %v3727 = vadd.f32 %v546, %v3726
        %3728 = vmatprep.mubr.bf16.mxu0 0
        %3729 = vmatmul.mubr.bf16.gmra.mrb[0].mxu0 %v1475
        %v3730 = vpop.f32.mrb[0].mxu0
        %v3731 = vadd.f32 %v542, %v3730
        %v3732 = vpop.f32.mrb[0].mxu0
        %v3733 = vadd.f32 %v546, %v3732
        %v3734 = vpop.f32.mrb[0].mxu0
        %v3735 = vadd.f32 %v542, %v3734
        %v3736 = vpop.f32.mrb[0].mxu0
        %v3737 = vadd.f32 %v546, %v3736
        %3738 = vmatprep.mubr.bf16.mxu0 0
        %3739 = vmatmul.mubr.bf16.gmra.mrb[0].mxu0 %v1478
        %v3740 = vpop.f32.mrb[0].mxu0
        %v3741 = vadd.f32 %v542, %v3740
        %v3742 = vpop.f32.mrb[0].mxu0
        %v3743 = vadd.f32 %v546, %v3742
        %v3744 = vpop.f32.mrb[0].mxu0
        %v3745 = vadd.f32 %v542, %v3744
        %v3746 = vpop.f32.mrb[0].mxu0
        %v3747 = vadd.f32 %v546, %v3746
        %3748 = vmatprep.mubr.bf16.mxu0 0
        %3749 = vmatmul.mubr.bf16.gmra.mrb[0].mxu0 %v1481
        %v3750 = vpop.f32.mrb[0].mxu0
        %v3751 = vadd.f32 %v542, %v3750
        %v3752 = vpop.f32.mrb[0].mxu0
        %v3753 = vadd.f32 %v546, %v3752
        %v3754 = vpop.f32.mrb[0].mxu0
        %v3755 = vadd.f32 %v542, %v3754
        %v3756 = vpop.f32.mrb[0].mxu0
        %v3757 = vadd.f32 %v546, %v3756
        %3758 = vmatprep.mubr.bf16.mxu0 0
        %3759 = vmatmul.mubr.bf16.gmra.mrb[0].mxu0 %v1484
        %v3760 = vpop.f32.mrb[0].mxu0
        %v3761 = vadd.f32 %v542, %v3760
        %v3762 = vpop.f32.mrb[0].mxu0
        %v3763 = vadd.f32 %v546, %v3762
        %v3764 = vpop.f32.mrb[0].mxu0
        %v3765 = vadd.f32 %v542, %v3764
        %v3766 = vpop.f32.mrb[0].mxu0
        %v3767 = vadd.f32 %v546, %v3766
        %3768 = vmatprep.mubr.bf16.mxu0 0
        %3769 = vmatmul.mubr.bf16.gmra.mrb[0].mxu0 %v1487
        %v3770 = vpop.f32.mrb[0].mxu0
        %v3771 = vadd.f32 %v542, %v3770
        %v3772 = vpop.f32.mrb[0].mxu0
        %v3773 = vadd.f32 %v546, %v3772
        %v3774 = vpop.f32.mrb[0].mxu0
        %v3775 = vadd.f32 %v542, %v3774
        %v3776 = vpop.f32.mrb[0].mxu0
        %v3777 = vadd.f32 %v546, %v3776
        %3778 = vmatprep.mubr.bf16.mxu0 0
        %3779 = vmatmul.mubr.bf16.gmra.mrb[0].mxu0 %v1490
        %v3780 = vpop.f32.mrb[0].mxu0
        %v3781 = vadd.f32 %v542, %v3780
        %v3782 = vpop.f32.mrb[0].mxu0
        %v3783 = vadd.f32 %v546, %v3782
        %v3784 = vpop.f32.mrb[0].mxu0
        %v3785 = vadd.f32 %v542, %v3784
        %v3786 = vpop.f32.mrb[0].mxu0
        %v3787 = vadd.f32 %v546, %v3786
        %3788 = vmatprep.mubr.bf16.mxu0 0
        %3789 = vmatmul.mubr.bf16.gmra.mrb[0].mxu0 %v1493
        %v3790 = vpop.f32.mrb[0].mxu0
        %v3791 = vadd.f32 %v542, %v3790
        %v3792 = vpop.f32.mrb[0].mxu0
        %v3793 = vadd.f32 %v546, %v3792
        %v3794 = vpop.f32.mrb[0].mxu0
        %v3795 = vadd.f32 %v542, %v3794
        %v3796 = vpop.f32.mrb[0].mxu0
        %v3797 = vadd.f32 %v546, %v3796
        %3798 = vmatprep.mubr.bf16.mxu0 0
        %3799 = vmatmul.mubr.bf16.gmra.mrb[0].mxu0 %v1496
        %v3800 = vpop.f32.mrb[0].mxu0
        %v3801 = vadd.f32 %v542, %v3800
        %v3802 = vpop.f32.mrb[0].mxu0
        %v3803 = vadd.f32 %v546, %v3802
        %v3804 = vpop.f32.mrb[0].mxu0
        %v3805 = vadd.f32 %v542, %v3804
        %v3806 = vpop.f32.mrb[0].mxu0
        %v3807 = vadd.f32 %v546, %v3806
        %3808 = vmatprep.mubr.bf16.mxu0 0
        %3809 = vmatmul.mubr.bf16.gmra.mrb[0].mxu0 %v1499
        %v3810 = vpop.f32.mrb[0].mxu0
        %v3811 = vadd.f32 %v542, %v3810
        %v3812 = vpop.f32.mrb[0].mxu0
        %v3813 = vadd.f32 %v546, %v3812
        %v3814 = vpop.f32.mrb[0].mxu0
        %v3815 = vadd.f32 %v542, %v3814
        %v3816 = vpop.f32.mrb[0].mxu0
        %v3817 = vadd.f32 %v546, %v3816
        %3818 = vmatprep.mubr.bf16.mxu0 0
        %3819 = vmatmul.mubr.bf16.gmra.mrb[0].mxu0 %v1502
        %v3820 = vpop.f32.mrb[0].mxu0
        %v3821 = vadd.f32 %v542, %v3820
        %v3822 = vpop.f32.mrb[0].mxu0
        %v3823 = vadd.f32 %v546, %v3822
        %v3824 = vpop.f32.mrb[0].mxu0
        %v3825 = vadd.f32 %v542, %v3824
        %v3826 = vpop.f32.mrb[0].mxu0
        %v3827 = vadd.f32 %v546, %v3826
        %3828 = vmatprep.mubr.bf16.mxu0 0
        %3829 = vmatmul.mubr.bf16.gmra.mrb[0].mxu0 %v1505
        %v3830 = vpop.f32.mrb[0].mxu0
        %v3831 = vadd.f32 %v542, %v3830
        %v3832 = vpop.f32.mrb[0].mxu0
        %v3833 = vadd.f32 %v546, %v3832
        %v3834 = vpop.f32.mrb[0].mxu0
        %v3835 = vadd.f32 %v542, %v3834
        %v3836 = vpop.f32.mrb[0].mxu0
        %v3837 = vadd.f32 %v546, %v3836
        %3838 = vmatprep.mubr.bf16.mxu0 0
        %3839 = vmatmul.mubr.bf16.gmra.mrb[0].mxu0 %v1508
        %v3840 = vpop.f32.mrb[0].mxu0
        %v3841 = vadd.f32 %v542, %v3840
        %v3842 = vpop.f32.mrb[0].mxu0
        %v3843 = vadd.f32 %v546, %v3842
        %v3844 = vpop.f32.mrb[0].mxu0
        %v3845 = vadd.f32 %v542, %v3844
        %v3846 = vpop.f32.mrb[0].mxu0
        %v3847 = vadd.f32 %v546, %v3846
        %3848 = vmatprep.mubr.bf16.mxu0 0
        %3849 = vmatmul.mubr.bf16.gmra.mrb[0].mxu0 %v1511
        %v3850 = vpop.f32.mrb[0].mxu0
        %v3851 = vadd.f32 %v542, %v3850
        %v3852 = vpop.f32.mrb[0].mxu0
        %v3853 = vadd.f32 %v546, %v3852
        %v3854 = vpop.f32.mrb[0].mxu0
        %v3855 = vadd.f32 %v542, %v3854
        %v3856 = vpop.f32.mrb[0].mxu0
        %v3857 = vadd.f32 %v546, %v3856
        %3858 = vmatprep.mubr.bf16.mxu0 0
        %3859 = vmatmul.mubr.bf16.gmra.mrb[0].mxu0 %v1514
        %v3860 = vpop.f32.mrb[0].mxu0
        %v3861 = vadd.f32 %v542, %v3860
        %v3862 = vpop.f32.mrb[0].mxu0
        %v3863 = vadd.f32 %v546, %v3862
        %v3864 = vpop.f32.mrb[0].mxu0
        %v3865 = vadd.f32 %v542, %v3864
        %v3866 = vpop.f32.mrb[0].mxu0
        %v3867 = vadd.f32 %v546, %v3866
        %3868 = vmatprep.mubr.bf16.mxu0 0
        %3869 = vmatmul.mubr.bf16.gmra.mrb[0].mxu0 %v1517
        %v3870 = vpop.f32.mrb[0].mxu0
        %v3871 = vadd.f32 %v542, %v3870
        %v3872 = vpop.f32.mrb[0].mxu0
        %v3873 = vadd.f32 %v546, %v3872
        %v3874 = vpop.f32.mrb[0].mxu0
        %v3875 = vadd.f32 %v542, %v3874
        %v3876 = vpop.f32.mrb[0].mxu0
        %v3877 = vadd.f32 %v546, %v3876
        %3878 = vmatprep.mubr.bf16.mxu0 0
        %3879 = vmatmul.mubr.bf16.gmra.mrb[0].mxu0 %v1520
        %v3880 = vpop.f32.mrb[0].mxu0
        %v3881 = vadd.f32 %v542, %v3880
        %v3882 = vpop.f32.mrb[0].mxu0
        %v3883 = vadd.f32 %v546, %v3882
        %v3884 = vpop.f32.mrb[0].mxu0
        %v3885 = vadd.f32 %v542, %v3884
        %v3886 = vpop.f32.mrb[0].mxu0
        %v3887 = vadd.f32 %v546, %v3886
        %3888 = vmatprep.mubr.bf16.mxu0 0
        %3889 = vmatmul.mubr.bf16.gmra.mrb[0].mxu0 %v1523
        %v3890 = vpop.f32.mrb[0].mxu0
        %v3891 = vadd.f32 %v542, %v3890
        %v3892 = vpop.f32.mrb[0].mxu0
        %v3893 = vadd.f32 %v546, %v3892
        %v3894 = vpop.f32.mrb[0].mxu0
        %v3895 = vadd.f32 %v542, %v3894
        %v3896 = vpop.f32.mrb[0].mxu0
        %v3897 = vadd.f32 %v546, %v3896
        %3898 = vmatprep.mubr.bf16.mxu0 0
        %3899 = vmatmul.mubr.bf16.gmra.mrb[0].mxu0 %v1526
        %v3900 = vpop.f32.mrb[0].mxu0
        %v3901 = vadd.f32 %v542, %v3900
        %v3902 = vpop.f32.mrb[0].mxu0
        %v3903 = vadd.f32 %v546, %v3902
        %v3904 = vpop.f32.mrb[0].mxu0
        %v3905 = vadd.f32 %v542, %v3904
        %v3906 = vpop.f32.mrb[0].mxu0
        %v3907 = vadd.f32 %v546, %v3906
        %3908 = vmatprep.mubr.bf16.mxu0 0
        %3909 = vmatmul.mubr.bf16.gmra.mrb[0].mxu0 %v1529
        %v3910 = vpop.f32.mrb[0].mxu0
        %v3911 = vadd.f32 %v542, %v3910
        %v3912 = vpop.f32.mrb[0].mxu0
        %v3913 = vadd.f32 %v546, %v3912
        %v3914 = vpop.f32.mrb[0].mxu0
        %v3915 = vadd.f32 %v542, %v3914
        %v3916 = vpop.f32.mrb[0].mxu0
        %v3917 = vadd.f32 %v546, %v3916
        %3918 = vmatprep.mubr.bf16.mxu0 0
        %3919 = vmatmul.mubr.bf16.gmra.mrb[0].mxu0 %v1532
        %v3920 = vpop.f32.mrb[0].mxu0
        %v3921 = vadd.f32 %v542, %v3920
        %v3922 = vpop.f32.mrb[0].mxu0
        %v3923 = vadd.f32 %v546, %v3922
        %v3924 = vpop.f32.mrb[0].mxu0
        %v3925 = vadd.f32 %v542, %v3924
        %v3926 = vpop.f32.mrb[0].mxu0
        %v3927 = vadd.f32 %v546, %v3926
        %3928 = vmatprep.mubr.bf16.mxu0 0
        %3929 = vmatmul.mubr.bf16.gmra.mrb[0].mxu0 %v1535
        %v3930 = vpop.f32.mrb[0].mxu0
        %v3931 = vadd.f32 %v542, %v3930
        %v3932 = vpop.f32.mrb[0].mxu0
        %v3933 = vadd.f32 %v546, %v3932
        %v3934 = vpop.f32.mrb[0].mxu0
        %v3935 = vadd.f32 %v542, %v3934
        %v3936 = vpop.f32.mrb[0].mxu0
        %v3937 = vadd.f32 %v546, %v3936
        %3938 = vmatprep.mubr.bf16.mxu0 0
        %3939 = vmatmul.mubr.bf16.gmra.mrb[0].mxu0 %v1538
        %v3940 = vpop.f32.mrb[0].mxu0
        %v3941 = vadd.f32 %v542, %v3940
        %v3942 = vpop.f32.mrb[0].mxu0
        %v3943 = vadd.f32 %v546, %v3942
        %v3944 = vpop.f32.mrb[0].mxu0
        %v3945 = vadd.f32 %v542, %v3944
        %v3946 = vpop.f32.mrb[0].mxu0
        %v3947 = vadd.f32 %v546, %v3946
        %3948 = vmatprep.mubr.bf16.mxu0 0
        %3949 = vmatmul.mubr.bf16.gmra.mrb[0].mxu0 %v1541
        %v3950 = vpop.f32.mrb[0].mxu0
        %v3951 = vadd.f32 %v542, %v3950
        %v3952 = vpop.f32.mrb[0].mxu0
        %v3953 = vadd.f32 %v546, %v3952
        %v3954 = vpop.f32.mrb[0].mxu0
        %v3955 = vadd.f32 %v542, %v3954
        %v3956 = vpop.f32.mrb[0].mxu0
        %v3957 = vadd.f32 %v546, %v3956
        %3958 = vmatprep.mubr.bf16.mxu0 0
        %3959 = vmatmul.mubr.bf16.gmra.mrb[0].mxu0 %v1544
        %v3960 = vpop.f32.mrb[0].mxu0
        %v3961 = vadd.f32 %v542, %v3960
        %v3962 = vpop.f32.mrb[0].mxu0
        %v3963 = vadd.f32 %v546, %v3962
        %v3964 = vpop.f32.mrb[0].mxu0
        %v3965 = vadd.f32 %v542, %v3964
        %v3966 = vpop.f32.mrb[0].mxu0
        %v3967 = vadd.f32 %v546, %v3966
        %3968 = vmatprep.mubr.bf16.mxu0 0
        %3969 = vmatmul.mubr.bf16.gmra.mrb[0].mxu0 %v1547
        %v3970 = vpop.f32.mrb[0].mxu0
        %v3971 = vadd.f32 %v542, %v3970
        %v3972 = vpop.f32.mrb[0].mxu0
        %v3973 = vadd.f32 %v546, %v3972
        %v3974 = vpop.f32.mrb[0].mxu0
        %v3975 = vadd.f32 %v542, %v3974
        %v3976 = vpop.f32.mrb[0].mxu0
        %v3977 = vadd.f32 %v546, %v3976
        %3978 = vmatprep.mubr.bf16.mxu0 0
        %3979 = vmatmul.mubr.bf16.gmra.mrb[0].mxu0 %v1550
        %v3980 = vpop.f32.mrb[0].mxu0
        %v3981 = vadd.f32 %v542, %v3980
        %v3982 = vpop.f32.mrb[0].mxu0
        %v3983 = vadd.f32 %v546, %v3982
        %v3984 = vpop.f32.mrb[0].mxu0
        %v3985 = vadd.f32 %v542, %v3984
        %v3986 = vpop.f32.mrb[0].mxu0
        %v3987 = vadd.f32 %v546, %v3986
        %3988 = vmatprep.mubr.bf16.mxu0 0
        %3989 = vmatmul.mubr.bf16.gmra.mrb[0].mxu0 %v1553
        %v3990 = vpop.f32.mrb[0].mxu0
        %v3991 = vadd.f32 %v542, %v3990
        %v3992 = vpop.f32.mrb[0].mxu0
        %v3993 = vadd.f32 %v546, %v3992
        %v3994 = vpop.f32.mrb[0].mxu0
        %v3995 = vadd.f32 %v542, %v3994
        %v3996 = vpop.f32.mrb[0].mxu0
        %v3997 = vadd.f32 %v546, %v3996
        %3998 = vmatprep.mubr.bf16.mxu0 0
        %3999 = vmatmul.mubr.bf16.gmra.mrb[0].mxu0 %v1556
        %v4000 = vpop.f32.mrb[0].mxu0
        %v4001 = vadd.f32 %v542, %v4000
        %v4002 = vpop.f32.mrb[0].mxu0
        %v4003 = vadd.f32 %v546, %v4002
        %v4004 = vpop.f32.mrb[0].mxu0
        %v4005 = vadd.f32 %v542, %v4004
        %v4006 = vpop.f32.mrb[0].mxu0
        %v4007 = vadd.f32 %v546, %v4006
        %4008 = vmatprep.mubr.bf16.mxu0 0
        %4009 = vmatmul.mubr.bf16.gmra.mrb[0].mxu0 %v1559
        %v4010 = vpop.f32.mrb[0].mxu0
        %v4011 = vadd.f32 %v542, %v4010
        %v4012 = vpop.f32.mrb[0].mxu0
        %v4013 = vadd.f32 %v546, %v4012
        %v4014 = vpop.f32.mrb[0].mxu0
        %v4015 = vadd.f32 %v542, %v4014
        %v4016 = vpop.f32.mrb[0].mxu0
        %v4017 = vadd.f32 %v546, %v4016
        %4018 = vmatprep.mubr.bf16.mxu0 0
        %4019 = vmatmul.mubr.bf16.gmra.mrb[0].mxu0 %v1562
        %v4020 = vpop.f32.mrb[0].mxu0
        %v4021 = vadd.f32 %v542, %v4020
        %v4022 = vpop.f32.mrb[0].mxu0
        %v4023 = vadd.f32 %v546, %v4022
        %v4024 = vpop.f32.mrb[0].mxu0
        %v4025 = vadd.f32 %v542, %v4024
        %v4026 = vpop.f32.mrb[0].mxu0
        %v4027 = vadd.f32 %v546, %v4026
        %4028 = vmatprep.mubr.bf16.mxu0 0
        %4029 = vmatmul.mubr.bf16.gmra.mrb[0].mxu0 %v1565
        %v4030 = vpop.f32.mrb[0].mxu0
        %v4031 = vadd.f32 %v542, %v4030
        %v4032 = vpop.f32.mrb[0].mxu0
        %v4033 = vadd.f32 %v546, %v4032
        %v4034 = vpop.f32.mrb[0].mxu0
        %v4035 = vadd.f32 %v542, %v4034
        %v4036 = vpop.f32.mrb[0].mxu0
        %v4037 = vadd.f32 %v546, %v4036
        %4038 = vmatprep.mubr.bf16.mxu0 0
        %4039 = vmatmul.mubr.bf16.gmra.mrb[0].mxu0 %v1568
        %v4040 = vpop.f32.mrb[0].mxu0
        %v4041 = vadd.f32 %v542, %v4040
        %v4042 = vpop.f32.mrb[0].mxu0
        %v4043 = vadd.f32 %v546, %v4042
        %v4044 = vpop.f32.mrb[0].mxu0
        %v4045 = vadd.f32 %v542, %v4044
        %v4046 = vpop.f32.mrb[0].mxu0
        %v4047 = vadd.f32 %v546, %v4046
        %4048 = vmatprep.mubr.bf16.mxu0 0
        %4049 = vmatmul.mubr.bf16.gmra.mrb[0].mxu0 %v1571
        %v4050 = vpop.f32.mrb[0].mxu0
        %v4051 = vadd.f32 %v542, %v4050
        %v4052 = vpop.f32.mrb[0].mxu0
        %v4053 = vadd.f32 %v546, %v4052
        %v4054 = vpop.f32.mrb[0].mxu0
        %v4055 = vadd.f32 %v542, %v4054
        %v4056 = vpop.f32.mrb[0].mxu0
        %v4057 = vadd.f32 %v546, %v4056
        %4058 = vmatprep.mubr.bf16.mxu0 0
        %4059 = vmatmul.mubr.bf16.gmra.mrb[0].mxu0 %v1574
        %v4060 = vpop.f32.mrb[0].mxu0
        %v4061 = vadd.f32 %v542, %v4060
        %v4062 = vpop.f32.mrb[0].mxu0
        %v4063 = vadd.f32 %v546, %v4062
        %v4064 = vpop.f32.mrb[0].mxu0
        %v4065 = vadd.f32 %v542, %v4064
        %v4066 = vpop.f32.mrb[0].mxu0
        %v4067 = vadd.f32 %v546, %v4066
        %4068 = vmatprep.mubr.bf16.mxu0 0
        %4069 = vmatmul.mubr.bf16.gmra.mrb[0].mxu0 %v1577
        %v4070 = vpop.f32.mrb[0].mxu0
        %v4071 = vadd.f32 %v542, %v4070
        %v4072 = vpop.f32.mrb[0].mxu0
        %v4073 = vadd.f32 %v546, %v4072
        %v4074 = vpop.f32.mrb[0].mxu0
        %v4075 = vadd.f32 %v542, %v4074
        %v4076 = vpop.f32.mrb[0].mxu0
        %v4077 = vadd.f32 %v546, %v4076
        %4078 = vmatprep.mubr.bf16.mxu0 0
        %4079 = vmatmul.mubr.bf16.gmra.mrb[0].mxu0 %v1580
        %v4080 = vpop.f32.mrb[0].mxu0
        %v4081 = vadd.f32 %v542, %v4080
        %v4082 = vpop.f32.mrb[0].mxu0
        %v4083 = vadd.f32 %v546, %v4082
        %v4084 = vpop.f32.mrb[0].mxu0
        %v4085 = vadd.f32 %v542, %v4084
        %v4086 = vpop.f32.mrb[0].mxu0
        %v4087 = vadd.f32 %v546, %v4086
        %4088 = vmatprep.mubr.bf16.mxu0 0
        %4089 = vmatmul.mubr.bf16.gmra.mrb[0].mxu0 %v1583
        %v4090 = vpop.f32.mrb[0].mxu0
        %v4091 = vadd.f32 %v542, %v4090
        %v4092 = vpop.f32.mrb[0].mxu0
        %v4093 = vadd.f32 %v546, %v4092
        %v4094 = vpop.f32.mrb[0].mxu0
        %v4095 = vadd.f32 %v542, %v4094
        %v4096 = vpop.f32.mrb[0].mxu0
        %v4097 = vadd.f32 %v546, %v4096
        %4098 = vmatprep.mubr.bf16.mxu0 0
        %4099 = vmatmul.mubr.bf16.gmra.mrb[0].mxu0 %v1586
        %v4100 = vpop.f32.mrb[0].mxu0
        %v4101 = vadd.f32 %v542, %v4100
        %v4102 = vpop.f32.mrb[0].mxu0
        %v4103 = vadd.f32 %v546, %v4102
        %v4104 = vpop.f32.mrb[0].mxu0
        %v4105 = vadd.f32 %v542, %v4104
        %v4106 = vpop.f32.mrb[0].mxu0
        %v4107 = vadd.f32 %v546, %v4106
        %4108 = vmatprep.mubr.bf16.mxu0 0
        %4109 = vmatmul.mubr.bf16.gmra.mrb[0].mxu0 %v1589
        %v4110 = vpop.f32.mrb[0].mxu0
        %v4111 = vadd.f32 %v542, %v4110
        %v4112 = vpop.f32.mrb[0].mxu0
        %v4113 = vadd.f32 %v546, %v4112
        %v4114 = vpop.f32.mrb[0].mxu0
        %v4115 = vadd.f32 %v542, %v4114
        %v4116 = vpop.f32.mrb[0].mxu0
        %v4117 = vadd.f32 %v546, %v4116
        %4118 = vmatprep.mubr.bf16.mxu0 0
        %4119 = vmatmul.mubr.bf16.gmra.mrb[0].mxu0 %v1592
        %v4120 = vpop.f32.mrb[0].mxu0
        %v4121 = vadd.f32 %v542, %v4120
        %v4122 = vpop.f32.mrb[0].mxu0
        %v4123 = vadd.f32 %v546, %v4122
        %v4124 = vpop.f32.mrb[0].mxu0
        %v4125 = vadd.f32 %v542, %v4124
        %v4126 = vpop.f32.mrb[0].mxu0
        %v4127 = vadd.f32 %v546, %v4126
        %4128 = vmatprep.mubr.bf16.mxu0 0
        %4129 = vmatmul.mubr.bf16.gmra.mrb[0].mxu0 %v1595
        %v4130 = vpop.f32.mrb[0].mxu0
        %v4131 = vadd.f32 %v542, %v4130
        %v4132 = vpop.f32.mrb[0].mxu0
        %v4133 = vadd.f32 %v546, %v4132
        %v4134 = vpop.f32.mrb[0].mxu0
        %v4135 = vadd.f32 %v542, %v4134
        %v4136 = vpop.f32.mrb[0].mxu0
        %v4137 = vadd.f32 %v546, %v4136
        %4138 = vmatprep.mubr.bf16.mxu0 0
        %4139 = vmatmul.mubr.bf16.gmra.mrb[0].mxu0 %v1598
        %v4140 = vpop.f32.mrb[0].mxu0
        %v4141 = vadd.f32 %v542, %v4140
        %v4142 = vpop.f32.mrb[0].mxu0
        %v4143 = vadd.f32 %v546, %v4142
        %v4144 = vpop.f32.mrb[0].mxu0
        %v4145 = vadd.f32 %v542, %v4144
        %v4146 = vpop.f32.mrb[0].mxu0
        %v4147 = vadd.f32 %v546, %v4146
        %4148 = vmatprep.mubr.bf16.mxu0 0
        %4149 = vmatmul.mubr.bf16.gmra.mrb[0].mxu0 %v1601
        %v4150 = vpop.f32.mrb[0].mxu0
        %v4151 = vadd.f32 %v542, %v4150
        %v4152 = vpop.f32.mrb[0].mxu0
        %v4153 = vadd.f32 %v546, %v4152
        %v4154 = vpop.f32.mrb[0].mxu0
        %v4155 = vadd.f32 %v542, %v4154
        %v4156 = vpop.f32.mrb[0].mxu0
        %v4157 = vadd.f32 %v546, %v4156
        %4158 = vmatprep.mubr.bf16.mxu0 0
        %4159 = vmatmul.mubr.bf16.gmra.mrb[0].mxu0 %v1604
        %v4160 = vpop.f32.mrb[0].mxu0
        %v4161 = vadd.f32 %v542, %v4160
        %v4162 = vpop.f32.mrb[0].mxu0
        %v4163 = vadd.f32 %v546, %v4162
        %v4164 = vpop.f32.mrb[0].mxu0
        %v4165 = vadd.f32 %v542, %v4164
        %v4166 = vpop.f32.mrb[0].mxu0
        %v4167 = vadd.f32 %v546, %v4166
        %4168 = vmatprep.mubr.bf16.mxu0 0
        %4169 = vmatmul.mubr.bf16.gmra.mrb[0].mxu0 %v1607
        %v4170 = vpop.f32.mrb[0].mxu0
        %v4171 = vadd.f32 %v542, %v4170
        %v4172 = vpop.f32.mrb[0].mxu0
        %v4173 = vadd.f32 %v546, %v4172
        %v4174 = vpop.f32.mrb[0].mxu0
        %v4175 = vadd.f32 %v542, %v4174
        %v4176 = vpop.f32.mrb[0].mxu0
        %v4177 = vadd.f32 %v546, %v4176
        %4178 = vmatprep.mubr.bf16.mxu0 0
        %4179 = vmatmul.mubr.bf16.gmra.mrb[0].mxu0 %v1610
        %v4180 = vpop.f32.mrb[0].mxu0
        %v4181 = vadd.f32 %v542, %v4180
        %v4182 = vpop.f32.mrb[0].mxu0
        %v4183 = vadd.f32 %v546, %v4182
        %v4184 = vpop.f32.mrb[0].mxu0
        %v4185 = vadd.f32 %v542, %v4184
        %v4186 = vpop.f32.mrb[0].mxu0
        %v4187 = vadd.f32 %v546, %v4186
        %4188 = vmatprep.mubr.bf16.mxu0 0
        %4189 = vmatmul.mubr.bf16.gmra.mrb[0].mxu0 %v1613
        %v4190 = vpop.f32.mrb[0].mxu0
        %v4191 = vadd.f32 %v542, %v4190
        %v4192 = vpop.f32.mrb[0].mxu0
        %v4193 = vadd.f32 %v546, %v4192
        %v4194 = vpop.f32.mrb[0].mxu0
        %v4195 = vadd.f32 %v542, %v4194
        %v4196 = vpop.f32.mrb[0].mxu0
        %v4197 = vadd.f32 %v546, %v4196
        %4198 = vmatprep.mubr.bf16.mxu0 0
        %4199 = vmatmul.mubr.bf16.gmra.mrb[0].mxu0 %v1616
        %v4200 = vpop.f32.mrb[0].mxu0
        %v4201 = vadd.f32 %v542, %v4200
        %v4202 = vpop.f32.mrb[0].mxu0
        %v4203 = vadd.f32 %v546, %v4202
        %v4204 = vpop.f32.mrb[0].mxu0
        %v4205 = vadd.f32 %v542, %v4204
        %v4206 = vpop.f32.mrb[0].mxu0
        %v4207 = vadd.f32 %v546, %v4206
        %4208 = vmatprep.mubr.bf16.mxu0 0
        %4209 = vmatmul.mubr.bf16.gmra.mrb[0].mxu0 %v1619
        %v4210 = vpop.f32.mrb[0].mxu0
        %v4211 = vadd.f32 %v542, %v4210
        %v4212 = vpop.f32.mrb[0].mxu0
        %v4213 = vadd.f32 %v546, %v4212
        %v4214 = vpop.f32.mrb[0].mxu0
        %v4215 = vadd.f32 %v542, %v4214
        %v4216 = vpop.f32.mrb[0].mxu0
        %v4217 = vadd.f32 %v546, %v4216
        %4218 = vmatprep.mubr.bf16.mxu0 0
        %4219 = vmatmul.mubr.bf16.gmra.mrb[0].mxu0 %v1622
        %v4220 = vpop.f32.mrb[0].mxu0
        %v4221 = vadd.f32 %v542, %v4220
        %v4222 = vpop.f32.mrb[0].mxu0
        %v4223 = vadd.f32 %v546, %v4222
        %v4224 = vpop.f32.mrb[0].mxu0
        %v4225 = vadd.f32 %v542, %v4224
        %v4226 = vpop.f32.mrb[0].mxu0
        %v4227 = vadd.f32 %v546, %v4226
        %4228 = vmatprep.mubr.bf16.mxu0 0
        %4229 = vmatmul.mubr.bf16.gmra.mrb[0].mxu0 %v1625
        %v4230 = vpop.f32.mrb[0].mxu0
        %v4231 = vadd.f32 %v542, %v4230
        %v4232 = vpop.f32.mrb[0].mxu0
        %v4233 = vadd.f32 %v546, %v4232
        %v4234 = vpop.f32.mrb[0].mxu0
        %v4235 = vadd.f32 %v542, %v4234
        %v4236 = vpop.f32.mrb[0].mxu0
        %v4237 = vadd.f32 %v546, %v4236
        %4238 = vmatprep.mubr.bf16.mxu0 0
        %4239 = vmatmul.mubr.bf16.gmra.mrb[0].mxu0 %v1628
        %v4240 = vpop.f32.mrb[0].mxu0
        %v4241 = vadd.f32 %v542, %v4240
        %v4242 = vpop.f32.mrb[0].mxu0
        %v4243 = vadd.f32 %v546, %v4242
        %v4244 = vpop.f32.mrb[0].mxu0
        %v4245 = vadd.f32 %v542, %v4244
        %v4246 = vpop.f32.mrb[0].mxu0
        %v4247 = vadd.f32 %v546, %v4246
        %4248 = vmatprep.mubr.bf16.mxu0 0
        %4249 = vmatmul.mubr.bf16.gmra.mrb[0].mxu0 %v1631
        %v4250 = vpop.f32.mrb[0].mxu0
        %v4251 = vadd.f32 %v542, %v4250
        %v4252 = vpop.f32.mrb[0].mxu0
        %v4253 = vadd.f32 %v546, %v4252
        %v4254 = vpop.f32.mrb[0].mxu0
        %v4255 = vadd.f32 %v542, %v4254
        %v4256 = vpop.f32.mrb[0].mxu0
        %v4257 = vadd.f32 %v546, %v4256
        %4258 = vdwg.mxu0
        %4259 = vmatprep.subr.bf16.mxu0 0
        %4260 = vmatpush1.bf16.msra.mxu0 %v1232
        %4261 = vmatprep.subr.bf16.mxu0 0
        %4262 = vmatpush1.bf16.msra.mxu0 %v1237
        %4263 = vmatprep.subr.bf16.mxu0 0
        %4264 = vmatpush1.bf16.msra.mxu0 0
        %4265 = vmatprep.subr.bf16.mxu0 0
        %4266 = vmatpush1.bf16.msra.mxu0 0
        %4267 = vmatprep.subr.bf16.mxu0 0
        %4268 = vmatpush1.bf16.msra.mxu0 0
        %4269 = vmatprep.subr.bf16.mxu0 0
        %4270 = vmatpush1.bf16.msra.mxu0 0
        %4271 = vmatprep.subr.bf16.mxu0 0
        %4272 = vmatpush1.bf16.msra.mxu0 0
        %4273 = vmatprep.subr.bf16.mxu0 0
        %4274 = vmatpush1.bf16.msra.mxu0 0
        %4275 = vmatprep.subr.bf16.mxu0 0
        %4276 = vmatpush1.bf16.msra.mxu0 0
        %4277 = vmatprep.subr.bf16.mxu0 0
        %4278 = vmatpush1.bf16.msra.mxu0 0
        %4279 = vmatprep.subr.bf16.mxu0 0
        %4280 = vmatpush1.bf16.msra.mxu0 0
        %4281 = vmatprep.subr.bf16.mxu0 0
        %4282 = vmatpush1.bf16.msra.mxu0 0
        %4283 = vmatprep.subr.bf16.mxu0 0
        %4284 = vmatpush1.bf16.msra.mxu0 0
        %4285 = vmatprep.subr.bf16.mxu0 0
        %4286 = vmatpush1.bf16.msra.mxu0 0
        %4287 = vmatprep.subr.bf16.mxu0 0
        %4288 = vmatpush1.bf16.msra.mxu0 0
        %4289 = vmatprep.subr.bf16.mxu0 0
        %4290 = vmatpush1.bf16.msra.mxu0 0
        %4291 = vmatprep.mubr.bf16.mxu0 0
        %4292 = vmatmul.mubr.bf16.gmra.mrb[0].mxu0 %v1250
        %v4293 = vpop.f32.mrb[0].mxu0
        %v4294 = vadd.f32 %v550, %v4293
        %v4295 = vpop.f32.mrb[0].mxu0
        %v4296 = vpop.f32.mrb[0].mxu0
        %v4297 = vadd.f32 %v550, %v4296
        %v4298 = vpop.f32.mrb[0].mxu0
        %4299 = vmatprep.mubr.bf16.mxu0 0
        %4300 = vmatmul.mubr.bf16.gmra.mrb[0].mxu0 %v1253
        %v4301 = vpop.f32.mrb[0].mxu0
        %v4302 = vadd.f32 %v550, %v4301
        %v4303 = vpop.f32.mrb[0].mxu0
        %v4304 = vpop.f32.mrb[0].mxu0
        %v4305 = vadd.f32 %v550, %v4304
        %v4306 = vpop.f32.mrb[0].mxu0
        %4307 = vmatprep.mubr.bf16.mxu0 0
        %4308 = vmatmul.mubr.bf16.gmra.mrb[0].mxu0 %v1256
        %v4309 = vpop.f32.mrb[0].mxu0
        %v4310 = vadd.f32 %v550, %v4309
        %v4311 = vpop.f32.mrb[0].mxu0
        %v4312 = vpop.f32.mrb[0].mxu0
        %v4313 = vadd.f32 %v550, %v4312
        %v4314 = vpop.f32.mrb[0].mxu0
        %4315 = vmatprep.mubr.bf16.mxu0 0
        %4316 = vmatmul.mubr.bf16.gmra.mrb[0].mxu0 %v1259
        %v4317 = vpop.f32.mrb[0].mxu0
        %v4318 = vadd.f32 %v550, %v4317
        %v4319 = vpop.f32.mrb[0].mxu0
        %v4320 = vpop.f32.mrb[0].mxu0
        %v4321 = vadd.f32 %v550, %v4320
        %v4322 = vpop.f32.mrb[0].mxu0
        %4323 = vmatprep.mubr.bf16.mxu0 0
        %4324 = vmatmul.mubr.bf16.gmra.mrb[0].mxu0 %v1262
        %v4325 = vpop.f32.mrb[0].mxu0
        %v4326 = vadd.f32 %v550, %v4325
        %v4327 = vpop.f32.mrb[0].mxu0
        %v4328 = vpop.f32.mrb[0].mxu0
        %v4329 = vadd.f32 %v550, %v4328
        %v4330 = vpop.f32.mrb[0].mxu0
        %4331 = vmatprep.mubr.bf16.mxu0 0
        %4332 = vmatmul.mubr.bf16.gmra.mrb[0].mxu0 %v1265
        %v4333 = vpop.f32.mrb[0].mxu0
        %v4334 = vadd.f32 %v550, %v4333
        %v4335 = vpop.f32.mrb[0].mxu0
        %v4336 = vpop.f32.mrb[0].mxu0
        %v4337 = vadd.f32 %v550, %v4336
        %v4338 = vpop.f32.mrb[0].mxu0
        %4339 = vmatprep.mubr.bf16.mxu0 0
        %4340 = vmatmul.mubr.bf16.gmra.mrb[0].mxu0 %v1268
        %v4341 = vpop.f32.mrb[0].mxu0
        %v4342 = vadd.f32 %v550, %v4341
        %v4343 = vpop.f32.mrb[0].mxu0
        %v4344 = vpop.f32.mrb[0].mxu0
        %v4345 = vadd.f32 %v550, %v4344
        %v4346 = vpop.f32.mrb[0].mxu0
        %4347 = vmatprep.mubr.bf16.mxu0 0
        %4348 = vmatmul.mubr.bf16.gmra.mrb[0].mxu0 %v1271
        %v4349 = vpop.f32.mrb[0].mxu0
        %v4350 = vadd.f32 %v550, %v4349
        %v4351 = vpop.f32.mrb[0].mxu0
        %v4352 = vpop.f32.mrb[0].mxu0
        %v4353 = vadd.f32 %v550, %v4352
        %v4354 = vpop.f32.mrb[0].mxu0
        %4355 = vmatprep.mubr.bf16.mxu0 0
        %4356 = vmatmul.mubr.bf16.gmra.mrb[0].mxu0 %v1274
        %v4357 = vpop.f32.mrb[0].mxu0
        %v4358 = vadd.f32 %v550, %v4357
        %v4359 = vpop.f32.mrb[0].mxu0
        %v4360 = vpop.f32.mrb[0].mxu0
        %v4361 = vadd.f32 %v550, %v4360
        %v4362 = vpop.f32.mrb[0].mxu0
        %4363 = vmatprep.mubr.bf16.mxu0 0
        %4364 = vmatmul.mubr.bf16.gmra.mrb[0].mxu0 %v1277
        %v4365 = vpop.f32.mrb[0].mxu0
        %v4366 = vadd.f32 %v550, %v4365
        %v4367 = vpop.f32.mrb[0].mxu0
        %v4368 = vpop.f32.mrb[0].mxu0
        %v4369 = vadd.f32 %v550, %v4368
        %v4370 = vpop.f32.mrb[0].mxu0
        %4371 = vmatprep.mubr.bf16.mxu0 0
        %4372 = vmatmul.mubr.bf16.gmra.mrb[0].mxu0 %v1280
        %v4373 = vpop.f32.mrb[0].mxu0
        %v4374 = vadd.f32 %v550, %v4373
        %v4375 = vpop.f32.mrb[0].mxu0
        %v4376 = vpop.f32.mrb[0].mxu0
        %v4377 = vadd.f32 %v550, %v4376
        %v4378 = vpop.f32.mrb[0].mxu0
        %4379 = vmatprep.mubr.bf16.mxu0 0
        %4380 = vmatmul.mubr.bf16.gmra.mrb[0].mxu0 %v1283
        %v4381 = vpop.f32.mrb[0].mxu0
        %v4382 = vadd.f32 %v550, %v4381
        %v4383 = vpop.f32.mrb[0].mxu0
        %v4384 = vpop.f32.mrb[0].mxu0
        %v4385 = vadd.f32 %v550, %v4384
        %v4386 = vpop.f32.mrb[0].mxu0
        %4387 = vmatprep.mubr.bf16.mxu0 0
        %4388 = vmatmul.mubr.bf16.gmra.mrb[0].mxu0 %v1286
        %v4389 = vpop.f32.mrb[0].mxu0
        %v4390 = vadd.f32 %v550, %v4389
        %v4391 = vpop.f32.mrb[0].mxu0
        %v4392 = vpop.f32.mrb[0].mxu0
        %v4393 = vadd.f32 %v550, %v4392
        %v4394 = vpop.f32.mrb[0].mxu0
        %4395 = vmatprep.mubr.bf16.mxu0 0
        %4396 = vmatmul.mubr.bf16.gmra.mrb[0].mxu0 %v1289
        %v4397 = vpop.f32.mrb[0].mxu0
        %v4398 = vadd.f32 %v550, %v4397
        %v4399 = vpop.f32.mrb[0].mxu0
        %v4400 = vpop.f32.mrb[0].mxu0
        %v4401 = vadd.f32 %v550, %v4400
        %v4402 = vpop.f32.mrb[0].mxu0
        %4403 = vmatprep.mubr.bf16.mxu0 0
        %4404 = vmatmul.mubr.bf16.gmra.mrb[0].mxu0 %v1292
        %v4405 = vpop.f32.mrb[0].mxu0
        %v4406 = vadd.f32 %v550, %v4405
        %v4407 = vpop.f32.mrb[0].mxu0
        %v4408 = vpop.f32.mrb[0].mxu0
        %v4409 = vadd.f32 %v550, %v4408
        %v4410 = vpop.f32.mrb[0].mxu0
        %4411 = vmatprep.mubr.bf16.mxu0 0
        %4412 = vmatmul.mubr.bf16.gmra.mrb[0].mxu0 %v1295
        %v4413 = vpop.f32.mrb[0].mxu0
        %v4414 = vadd.f32 %v550, %v4413
        %v4415 = vpop.f32.mrb[0].mxu0
        %v4416 = vpop.f32.mrb[0].mxu0
        %v4417 = vadd.f32 %v550, %v4416
        %v4418 = vpop.f32.mrb[0].mxu0
        %4419 = vmatprep.mubr.bf16.mxu0 0
        %4420 = vmatmul.mubr.bf16.gmra.mrb[0].mxu0 %v1298
        %v4421 = vpop.f32.mrb[0].mxu0
        %v4422 = vadd.f32 %v550, %v4421
        %v4423 = vpop.f32.mrb[0].mxu0
        %v4424 = vpop.f32.mrb[0].mxu0
        %v4425 = vadd.f32 %v550, %v4424
        %v4426 = vpop.f32.mrb[0].mxu0
        %4427 = vmatprep.mubr.bf16.mxu0 0
        %4428 = vmatmul.mubr.bf16.gmra.mrb[0].mxu0 %v1301
        %v4429 = vpop.f32.mrb[0].mxu0
        %v4430 = vadd.f32 %v550, %v4429
        %v4431 = vpop.f32.mrb[0].mxu0
        %v4432 = vpop.f32.mrb[0].mxu0
        %v4433 = vadd.f32 %v550, %v4432
        %v4434 = vpop.f32.mrb[0].mxu0
        %4435 = vmatprep.mubr.bf16.mxu0 0
        %4436 = vmatmul.mubr.bf16.gmra.mrb[0].mxu0 %v1304
        %v4437 = vpop.f32.mrb[0].mxu0
        %v4438 = vadd.f32 %v550, %v4437
        %v4439 = vpop.f32.mrb[0].mxu0
        %v4440 = vpop.f32.mrb[0].mxu0
        %v4441 = vadd.f32 %v550, %v4440
        %v4442 = vpop.f32.mrb[0].mxu0
        %4443 = vmatprep.mubr.bf16.mxu0 0
        %4444 = vmatmul.mubr.bf16.gmra.mrb[0].mxu0 %v1307
        %v4445 = vpop.f32.mrb[0].mxu0
        %v4446 = vadd.f32 %v550, %v4445
        %v4447 = vpop.f32.mrb[0].mxu0
        %v4448 = vpop.f32.mrb[0].mxu0
        %v4449 = vadd.f32 %v550, %v4448
        %v4450 = vpop.f32.mrb[0].mxu0
        %4451 = vmatprep.mubr.bf16.mxu0 0
        %4452 = vmatmul.mubr.bf16.gmra.mrb[0].mxu0 %v1310
        %v4453 = vpop.f32.mrb[0].mxu0
        %v4454 = vadd.f32 %v550, %v4453
        %v4455 = vpop.f32.mrb[0].mxu0
        %v4456 = vpop.f32.mrb[0].mxu0
        %v4457 = vadd.f32 %v550, %v4456
        %v4458 = vpop.f32.mrb[0].mxu0
        %4459 = vmatprep.mubr.bf16.mxu0 0
        %4460 = vmatmul.mubr.bf16.gmra.mrb[0].mxu0 %v1313
        %v4461 = vpop.f32.mrb[0].mxu0
        %v4462 = vadd.f32 %v550, %v4461
        %v4463 = vpop.f32.mrb[0].mxu0
        %v4464 = vpop.f32.mrb[0].mxu0
        %v4465 = vadd.f32 %v550, %v4464
        %v4466 = vpop.f32.mrb[0].mxu0
        %4467 = vmatprep.mubr.bf16.mxu0 0
        %4468 = vmatmul.mubr.bf16.gmra.mrb[0].mxu0 %v1316
        %v4469 = vpop.f32.mrb[0].mxu0
        %v4470 = vadd.f32 %v550, %v4469
        %v4471 = vpop.f32.mrb[0].mxu0
        %v4472 = vpop.f32.mrb[0].mxu0
        %v4473 = vadd.f32 %v550, %v4472
        %v4474 = vpop.f32.mrb[0].mxu0
        %4475 = vmatprep.mubr.bf16.mxu0 0
        %4476 = vmatmul.mubr.bf16.gmra.mrb[0].mxu0 %v1319
        %v4477 = vpop.f32.mrb[0].mxu0
        %v4478 = vadd.f32 %v550, %v4477
        %v4479 = vpop.f32.mrb[0].mxu0
        %v4480 = vpop.f32.mrb[0].mxu0
        %v4481 = vadd.f32 %v550, %v4480
        %v4482 = vpop.f32.mrb[0].mxu0
        %4483 = vmatprep.mubr.bf16.mxu0 0
        %4484 = vmatmul.mubr.bf16.gmra.mrb[0].mxu0 %v1322
        %v4485 = vpop.f32.mrb[0].mxu0
        %v4486 = vadd.f32 %v550, %v4485
        %v4487 = vpop.f32.mrb[0].mxu0
        %v4488 = vpop.f32.mrb[0].mxu0
        %v4489 = vadd.f32 %v550, %v4488
        %v4490 = vpop.f32.mrb[0].mxu0
        %4491 = vmatprep.mubr.bf16.mxu0 0
        %4492 = vmatmul.mubr.bf16.gmra.mrb[0].mxu0 %v1325
        %v4493 = vpop.f32.mrb[0].mxu0
        %v4494 = vadd.f32 %v550, %v4493
        %v4495 = vpop.f32.mrb[0].mxu0
        %v4496 = vpop.f32.mrb[0].mxu0
        %v4497 = vadd.f32 %v550, %v4496
        %v4498 = vpop.f32.mrb[0].mxu0
        %4499 = vmatprep.mubr.bf16.mxu0 0
        %4500 = vmatmul.mubr.bf16.gmra.mrb[0].mxu0 %v1328
        %v4501 = vpop.f32.mrb[0].mxu0
        %v4502 = vadd.f32 %v550, %v4501
        %v4503 = vpop.f32.mrb[0].mxu0
        %v4504 = vpop.f32.mrb[0].mxu0
        %v4505 = vadd.f32 %v550, %v4504
        %v4506 = vpop.f32.mrb[0].mxu0
        %4507 = vmatprep.mubr.bf16.mxu0 0
        %4508 = vmatmul.mubr.bf16.gmra.mrb[0].mxu0 %v1331
        %v4509 = vpop.f32.mrb[0].mxu0
        %v4510 = vadd.f32 %v550, %v4509
        %v4511 = vpop.f32.mrb[0].mxu0
        %v4512 = vpop.f32.mrb[0].mxu0
        %v4513 = vadd.f32 %v550, %v4512
        %v4514 = vpop.f32.mrb[0].mxu0
        %4515 = vmatprep.mubr.bf16.mxu0 0
        %4516 = vmatmul.mubr.bf16.gmra.mrb[0].mxu0 %v1334
        %v4517 = vpop.f32.mrb[0].mxu0
        %v4518 = vadd.f32 %v550, %v4517
        %v4519 = vpop.f32.mrb[0].mxu0
        %v4520 = vpop.f32.mrb[0].mxu0
        %v4521 = vadd.f32 %v550, %v4520
        %v4522 = vpop.f32.mrb[0].mxu0
        %4523 = vmatprep.mubr.bf16.mxu0 0
        %4524 = vmatmul.mubr.bf16.gmra.mrb[0].mxu0 %v1337
        %v4525 = vpop.f32.mrb[0].mxu0
        %v4526 = vadd.f32 %v550, %v4525
        %v4527 = vpop.f32.mrb[0].mxu0
        %v4528 = vpop.f32.mrb[0].mxu0
        %v4529 = vadd.f32 %v550, %v4528
        %v4530 = vpop.f32.mrb[0].mxu0
        %4531 = vmatprep.mubr.bf16.mxu0 0
        %4532 = vmatmul.mubr.bf16.gmra.mrb[0].mxu0 %v1340
        %v4533 = vpop.f32.mrb[0].mxu0
        %v4534 = vadd.f32 %v550, %v4533
        %v4535 = vpop.f32.mrb[0].mxu0
        %v4536 = vpop.f32.mrb[0].mxu0
        %v4537 = vadd.f32 %v550, %v4536
        %v4538 = vpop.f32.mrb[0].mxu0
        %4539 = vmatprep.mubr.bf16.mxu0 0
        %4540 = vmatmul.mubr.bf16.gmra.mrb[0].mxu0 %v1343
        %v4541 = vpop.f32.mrb[0].mxu0
        %v4542 = vadd.f32 %v550, %v4541
        %v4543 = vpop.f32.mrb[0].mxu0
        %v4544 = vpop.f32.mrb[0].mxu0
        %v4545 = vadd.f32 %v550, %v4544
        %v4546 = vpop.f32.mrb[0].mxu0
        %4547 = vmatprep.mubr.bf16.mxu0 0
        %4548 = vmatmul.mubr.bf16.gmra.mrb[0].mxu0 %v1346
        %v4549 = vpop.f32.mrb[0].mxu0
        %v4550 = vadd.f32 %v550, %v4549
        %v4551 = vpop.f32.mrb[0].mxu0
        %v4552 = vpop.f32.mrb[0].mxu0
        %v4553 = vadd.f32 %v550, %v4552
        %v4554 = vpop.f32.mrb[0].mxu0
        %4555 = vmatprep.mubr.bf16.mxu0 0
        %4556 = vmatmul.mubr.bf16.gmra.mrb[0].mxu0 %v1349
        %v4557 = vpop.f32.mrb[0].mxu0
        %v4558 = vadd.f32 %v550, %v4557
        %v4559 = vpop.f32.mrb[0].mxu0
        %v4560 = vpop.f32.mrb[0].mxu0
        %v4561 = vadd.f32 %v550, %v4560
        %v4562 = vpop.f32.mrb[0].mxu0
        %4563 = vmatprep.mubr.bf16.mxu0 0
        %4564 = vmatmul.mubr.bf16.gmra.mrb[0].mxu0 %v1352
        %v4565 = vpop.f32.mrb[0].mxu0
        %v4566 = vadd.f32 %v550, %v4565
        %v4567 = vpop.f32.mrb[0].mxu0
        %v4568 = vpop.f32.mrb[0].mxu0
        %v4569 = vadd.f32 %v550, %v4568
        %v4570 = vpop.f32.mrb[0].mxu0
        %4571 = vmatprep.mubr.bf16.mxu0 0
        %4572 = vmatmul.mubr.bf16.gmra.mrb[0].mxu0 %v1355
        %v4573 = vpop.f32.mrb[0].mxu0
        %v4574 = vadd.f32 %v550, %v4573
        %v4575 = vpop.f32.mrb[0].mxu0
        %v4576 = vpop.f32.mrb[0].mxu0
        %v4577 = vadd.f32 %v550, %v4576
        %v4578 = vpop.f32.mrb[0].mxu0
        %4579 = vmatprep.mubr.bf16.mxu0 0
        %4580 = vmatmul.mubr.bf16.gmra.mrb[0].mxu0 %v1358
        %v4581 = vpop.f32.mrb[0].mxu0
        %v4582 = vadd.f32 %v550, %v4581
        %v4583 = vpop.f32.mrb[0].mxu0
        %v4584 = vpop.f32.mrb[0].mxu0
        %v4585 = vadd.f32 %v550, %v4584
        %v4586 = vpop.f32.mrb[0].mxu0
        %4587 = vmatprep.mubr.bf16.mxu0 0
        %4588 = vmatmul.mubr.bf16.gmra.mrb[0].mxu0 %v1361
        %v4589 = vpop.f32.mrb[0].mxu0
        %v4590 = vadd.f32 %v550, %v4589
        %v4591 = vpop.f32.mrb[0].mxu0
        %v4592 = vpop.f32.mrb[0].mxu0
        %v4593 = vadd.f32 %v550, %v4592
        %v4594 = vpop.f32.mrb[0].mxu0
        %4595 = vmatprep.mubr.bf16.mxu0 0
        %4596 = vmatmul.mubr.bf16.gmra.mrb[0].mxu0 %v1364
        %v4597 = vpop.f32.mrb[0].mxu0
        %v4598 = vadd.f32 %v550, %v4597
        %v4599 = vpop.f32.mrb[0].mxu0
        %v4600 = vpop.f32.mrb[0].mxu0
        %v4601 = vadd.f32 %v550, %v4600
        %v4602 = vpop.f32.mrb[0].mxu0
        %4603 = vmatprep.mubr.bf16.mxu0 0
        %4604 = vmatmul.mubr.bf16.gmra.mrb[0].mxu0 %v1367
        %v4605 = vpop.f32.mrb[0].mxu0
        %v4606 = vadd.f32 %v550, %v4605
        %v4607 = vpop.f32.mrb[0].mxu0
        %v4608 = vpop.f32.mrb[0].mxu0
        %v4609 = vadd.f32 %v550, %v4608
        %v4610 = vpop.f32.mrb[0].mxu0
        %4611 = vmatprep.mubr.bf16.mxu0 0
        %4612 = vmatmul.mubr.bf16.gmra.mrb[0].mxu0 %v1370
        %v4613 = vpop.f32.mrb[0].mxu0
        %v4614 = vadd.f32 %v550, %v4613
        %v4615 = vpop.f32.mrb[0].mxu0
        %v4616 = vpop.f32.mrb[0].mxu0
        %v4617 = vadd.f32 %v550, %v4616
        %v4618 = vpop.f32.mrb[0].mxu0
        %4619 = vmatprep.mubr.bf16.mxu0 0
        %4620 = vmatmul.mubr.bf16.gmra.mrb[0].mxu0 %v1373
        %v4621 = vpop.f32.mrb[0].mxu0
        %v4622 = vadd.f32 %v550, %v4621
        %v4623 = vpop.f32.mrb[0].mxu0
        %v4624 = vpop.f32.mrb[0].mxu0
        %v4625 = vadd.f32 %v550, %v4624
        %v4626 = vpop.f32.mrb[0].mxu0
        %4627 = vmatprep.mubr.bf16.mxu0 0
        %4628 = vmatmul.mubr.bf16.gmra.mrb[0].mxu0 %v1376
        %v4629 = vpop.f32.mrb[0].mxu0
        %v4630 = vadd.f32 %v550, %v4629
        %v4631 = vpop.f32.mrb[0].mxu0
        %v4632 = vpop.f32.mrb[0].mxu0
        %v4633 = vadd.f32 %v550, %v4632
        %v4634 = vpop.f32.mrb[0].mxu0
        %4635 = vmatprep.mubr.bf16.mxu0 0
        %4636 = vmatmul.mubr.bf16.gmra.mrb[0].mxu0 %v1379
        %v4637 = vpop.f32.mrb[0].mxu0
        %v4638 = vadd.f32 %v550, %v4637
        %v4639 = vpop.f32.mrb[0].mxu0
        %v4640 = vpop.f32.mrb[0].mxu0
        %v4641 = vadd.f32 %v550, %v4640
        %v4642 = vpop.f32.mrb[0].mxu0
        %4643 = vmatprep.mubr.bf16.mxu0 0
        %4644 = vmatmul.mubr.bf16.gmra.mrb[0].mxu0 %v1382
        %v4645 = vpop.f32.mrb[0].mxu0
        %v4646 = vadd.f32 %v550, %v4645
        %v4647 = vpop.f32.mrb[0].mxu0
        %v4648 = vpop.f32.mrb[0].mxu0
        %v4649 = vadd.f32 %v550, %v4648
        %v4650 = vpop.f32.mrb[0].mxu0
        %4651 = vmatprep.mubr.bf16.mxu0 0
        %4652 = vmatmul.mubr.bf16.gmra.mrb[0].mxu0 %v1385
        %v4653 = vpop.f32.mrb[0].mxu0
        %v4654 = vadd.f32 %v550, %v4653
        %v4655 = vpop.f32.mrb[0].mxu0
        %v4656 = vpop.f32.mrb[0].mxu0
        %v4657 = vadd.f32 %v550, %v4656
        %v4658 = vpop.f32.mrb[0].mxu0
        %4659 = vmatprep.mubr.bf16.mxu0 0
        %4660 = vmatmul.mubr.bf16.gmra.mrb[0].mxu0 %v1388
        %v4661 = vpop.f32.mrb[0].mxu0
        %v4662 = vadd.f32 %v550, %v4661
        %v4663 = vpop.f32.mrb[0].mxu0
        %v4664 = vpop.f32.mrb[0].mxu0
        %v4665 = vadd.f32 %v550, %v4664
        %v4666 = vpop.f32.mrb[0].mxu0
        %4667 = vmatprep.mubr.bf16.mxu0 0
        %4668 = vmatmul.mubr.bf16.gmra.mrb[0].mxu0 %v1391
        %v4669 = vpop.f32.mrb[0].mxu0
        %v4670 = vadd.f32 %v550, %v4669
        %v4671 = vpop.f32.mrb[0].mxu0
        %v4672 = vpop.f32.mrb[0].mxu0
        %v4673 = vadd.f32 %v550, %v4672
        %v4674 = vpop.f32.mrb[0].mxu0
        %4675 = vmatprep.mubr.bf16.mxu0 0
        %4676 = vmatmul.mubr.bf16.gmra.mrb[0].mxu0 %v1394
        %v4677 = vpop.f32.mrb[0].mxu0
        %v4678 = vadd.f32 %v550, %v4677
        %v4679 = vpop.f32.mrb[0].mxu0
        %v4680 = vpop.f32.mrb[0].mxu0
        %v4681 = vadd.f32 %v550, %v4680
        %v4682 = vpop.f32.mrb[0].mxu0
        %4683 = vmatprep.mubr.bf16.mxu0 0
        %4684 = vmatmul.mubr.bf16.gmra.mrb[0].mxu0 %v1397
        %v4685 = vpop.f32.mrb[0].mxu0
        %v4686 = vadd.f32 %v550, %v4685
        %v4687 = vpop.f32.mrb[0].mxu0
        %v4688 = vpop.f32.mrb[0].mxu0
        %v4689 = vadd.f32 %v550, %v4688
        %v4690 = vpop.f32.mrb[0].mxu0
        %4691 = vmatprep.mubr.bf16.mxu0 0
        %4692 = vmatmul.mubr.bf16.gmra.mrb[0].mxu0 %v1400
        %v4693 = vpop.f32.mrb[0].mxu0
        %v4694 = vadd.f32 %v550, %v4693
        %v4695 = vpop.f32.mrb[0].mxu0
        %v4696 = vpop.f32.mrb[0].mxu0
        %v4697 = vadd.f32 %v550, %v4696
        %v4698 = vpop.f32.mrb[0].mxu0
        %4699 = vmatprep.mubr.bf16.mxu0 0
        %4700 = vmatmul.mubr.bf16.gmra.mrb[0].mxu0 %v1403
        %v4701 = vpop.f32.mrb[0].mxu0
        %v4702 = vadd.f32 %v550, %v4701
        %v4703 = vpop.f32.mrb[0].mxu0
        %v4704 = vpop.f32.mrb[0].mxu0
        %v4705 = vadd.f32 %v550, %v4704
        %v4706 = vpop.f32.mrb[0].mxu0
        %4707 = vmatprep.mubr.bf16.mxu0 0
        %4708 = vmatmul.mubr.bf16.gmra.mrb[0].mxu0 %v1406
        %v4709 = vpop.f32.mrb[0].mxu0
        %v4710 = vadd.f32 %v550, %v4709
        %v4711 = vpop.f32.mrb[0].mxu0
        %v4712 = vpop.f32.mrb[0].mxu0
        %v4713 = vadd.f32 %v550, %v4712
        %v4714 = vpop.f32.mrb[0].mxu0
        %4715 = vmatprep.mubr.bf16.mxu0 0
        %4716 = vmatmul.mubr.bf16.gmra.mrb[0].mxu0 %v1409
        %v4717 = vpop.f32.mrb[0].mxu0
        %v4718 = vadd.f32 %v550, %v4717
        %v4719 = vpop.f32.mrb[0].mxu0
        %v4720 = vpop.f32.mrb[0].mxu0
        %v4721 = vadd.f32 %v550, %v4720
        %v4722 = vpop.f32.mrb[0].mxu0
        %4723 = vmatprep.mubr.bf16.mxu0 0
        %4724 = vmatmul.mubr.bf16.gmra.mrb[0].mxu0 %v1412
        %v4725 = vpop.f32.mrb[0].mxu0
        %v4726 = vadd.f32 %v550, %v4725
        %v4727 = vpop.f32.mrb[0].mxu0
        %v4728 = vpop.f32.mrb[0].mxu0
        %v4729 = vadd.f32 %v550, %v4728
        %v4730 = vpop.f32.mrb[0].mxu0
        %4731 = vmatprep.mubr.bf16.mxu0 0
        %4732 = vmatmul.mubr.bf16.gmra.mrb[0].mxu0 %v1415
        %v4733 = vpop.f32.mrb[0].mxu0
        %v4734 = vadd.f32 %v550, %v4733
        %v4735 = vpop.f32.mrb[0].mxu0
        %v4736 = vpop.f32.mrb[0].mxu0
        %v4737 = vadd.f32 %v550, %v4736
        %v4738 = vpop.f32.mrb[0].mxu0
        %4739 = vmatprep.mubr.bf16.mxu0 0
        %4740 = vmatmul.mubr.bf16.gmra.mrb[0].mxu0 %v1418
        %v4741 = vpop.f32.mrb[0].mxu0
        %v4742 = vadd.f32 %v550, %v4741
        %v4743 = vpop.f32.mrb[0].mxu0
        %v4744 = vpop.f32.mrb[0].mxu0
        %v4745 = vadd.f32 %v550, %v4744
        %v4746 = vpop.f32.mrb[0].mxu0
        %4747 = vmatprep.mubr.bf16.mxu0 0
        %4748 = vmatmul.mubr.bf16.gmra.mrb[0].mxu0 %v1421
        %v4749 = vpop.f32.mrb[0].mxu0
        %v4750 = vadd.f32 %v550, %v4749
        %v4751 = vpop.f32.mrb[0].mxu0
        %v4752 = vpop.f32.mrb[0].mxu0
        %v4753 = vadd.f32 %v550, %v4752
        %v4754 = vpop.f32.mrb[0].mxu0
        %4755 = vmatprep.mubr.bf16.mxu0 0
        %4756 = vmatmul.mubr.bf16.gmra.mrb[0].mxu0 %v1424
        %v4757 = vpop.f32.mrb[0].mxu0
        %v4758 = vadd.f32 %v550, %v4757
        %v4759 = vpop.f32.mrb[0].mxu0
        %v4760 = vpop.f32.mrb[0].mxu0
        %v4761 = vadd.f32 %v550, %v4760
        %v4762 = vpop.f32.mrb[0].mxu0
        %4763 = vmatprep.mubr.bf16.mxu0 0
        %4764 = vmatmul.mubr.bf16.gmra.mrb[0].mxu0 %v1427
        %v4765 = vpop.f32.mrb[0].mxu0
        %v4766 = vadd.f32 %v550, %v4765
        %v4767 = vpop.f32.mrb[0].mxu0
        %v4768 = vpop.f32.mrb[0].mxu0
        %v4769 = vadd.f32 %v550, %v4768
        %v4770 = vpop.f32.mrb[0].mxu0
        %4771 = vmatprep.mubr.bf16.mxu0 0
        %4772 = vmatmul.mubr.bf16.gmra.mrb[0].mxu0 %v1430
        %v4773 = vpop.f32.mrb[0].mxu0
        %v4774 = vadd.f32 %v550, %v4773
        %v4775 = vpop.f32.mrb[0].mxu0
        %v4776 = vpop.f32.mrb[0].mxu0
        %v4777 = vadd.f32 %v550, %v4776
        %v4778 = vpop.f32.mrb[0].mxu0
        %4779 = vmatprep.mubr.bf16.mxu0 0
        %4780 = vmatmul.mubr.bf16.gmra.mrb[0].mxu0 %v1433
        %v4781 = vpop.f32.mrb[0].mxu0
        %v4782 = vadd.f32 %v550, %v4781
        %v4783 = vpop.f32.mrb[0].mxu0
        %v4784 = vpop.f32.mrb[0].mxu0
        %v4785 = vadd.f32 %v550, %v4784
        %v4786 = vpop.f32.mrb[0].mxu0
        %4787 = vmatprep.mubr.bf16.mxu0 0
        %4788 = vmatmul.mubr.bf16.gmra.mrb[0].mxu0 %v1436
        %v4789 = vpop.f32.mrb[0].mxu0
        %v4790 = vadd.f32 %v550, %v4789
        %v4791 = vpop.f32.mrb[0].mxu0
        %v4792 = vpop.f32.mrb[0].mxu0
        %v4793 = vadd.f32 %v550, %v4792
        %v4794 = vpop.f32.mrb[0].mxu0
        %4795 = vmatprep.mubr.bf16.mxu0 0
        %4796 = vmatmul.mubr.bf16.gmra.mrb[0].mxu0 %v1439
        %v4797 = vpop.f32.mrb[0].mxu0
        %v4798 = vadd.f32 %v550, %v4797
        %v4799 = vpop.f32.mrb[0].mxu0
        %v4800 = vpop.f32.mrb[0].mxu0
        %v4801 = vadd.f32 %v550, %v4800
        %v4802 = vpop.f32.mrb[0].mxu0
        %4803 = vmatprep.mubr.bf16.mxu0 0
        %4804 = vmatmul.mubr.bf16.gmra.mrb[0].mxu0 %v1442
        %v4805 = vpop.f32.mrb[0].mxu0
        %v4806 = vadd.f32 %v550, %v4805
        %v4807 = vpop.f32.mrb[0].mxu0
        %v4808 = vpop.f32.mrb[0].mxu0
        %v4809 = vadd.f32 %v550, %v4808
        %v4810 = vpop.f32.mrb[0].mxu0
        %4811 = vmatprep.mubr.bf16.mxu0 0
        %4812 = vmatmul.mubr.bf16.gmra.mrb[0].mxu0 %v1445
        %v4813 = vpop.f32.mrb[0].mxu0
        %v4814 = vadd.f32 %v550, %v4813
        %v4815 = vpop.f32.mrb[0].mxu0
        %v4816 = vpop.f32.mrb[0].mxu0
        %v4817 = vadd.f32 %v550, %v4816
        %v4818 = vpop.f32.mrb[0].mxu0
        %4819 = vmatprep.mubr.bf16.mxu0 0
        %4820 = vmatmul.mubr.bf16.gmra.mrb[0].mxu0 %v1448
        %v4821 = vpop.f32.mrb[0].mxu0
        %v4822 = vadd.f32 %v550, %v4821
        %v4823 = vpop.f32.mrb[0].mxu0
        %v4824 = vpop.f32.mrb[0].mxu0
        %v4825 = vadd.f32 %v550, %v4824
        %v4826 = vpop.f32.mrb[0].mxu0
        %4827 = vmatprep.mubr.bf16.mxu0 0
        %4828 = vmatmul.mubr.bf16.gmra.mrb[0].mxu0 %v1451
        %v4829 = vpop.f32.mrb[0].mxu0
        %v4830 = vadd.f32 %v550, %v4829
        %v4831 = vpop.f32.mrb[0].mxu0
        %v4832 = vpop.f32.mrb[0].mxu0
        %v4833 = vadd.f32 %v550, %v4832
        %v4834 = vpop.f32.mrb[0].mxu0
        %4835 = vmatprep.mubr.bf16.mxu0 0
        %4836 = vmatmul.mubr.bf16.gmra.mrb[0].mxu0 %v1454
        %v4837 = vpop.f32.mrb[0].mxu0
        %v4838 = vadd.f32 %v550, %v4837
        %v4839 = vpop.f32.mrb[0].mxu0
        %v4840 = vpop.f32.mrb[0].mxu0
        %v4841 = vadd.f32 %v550, %v4840
        %v4842 = vpop.f32.mrb[0].mxu0
        %4843 = vmatprep.mubr.bf16.mxu0 0
        %4844 = vmatmul.mubr.bf16.gmra.mrb[0].mxu0 %v1457
        %v4845 = vpop.f32.mrb[0].mxu0
        %v4846 = vadd.f32 %v550, %v4845
        %v4847 = vpop.f32.mrb[0].mxu0
        %v4848 = vpop.f32.mrb[0].mxu0
        %v4849 = vadd.f32 %v550, %v4848
        %v4850 = vpop.f32.mrb[0].mxu0
        %4851 = vmatprep.mubr.bf16.mxu0 0
        %4852 = vmatmul.mubr.bf16.gmra.mrb[0].mxu0 %v1460
        %v4853 = vpop.f32.mrb[0].mxu0
        %v4854 = vadd.f32 %v550, %v4853
        %v4855 = vpop.f32.mrb[0].mxu0
        %v4856 = vpop.f32.mrb[0].mxu0
        %v4857 = vadd.f32 %v550, %v4856
        %v4858 = vpop.f32.mrb[0].mxu0
        %4859 = vmatprep.mubr.bf16.mxu0 0
        %4860 = vmatmul.mubr.bf16.gmra.mrb[0].mxu0 %v1463
        %v4861 = vpop.f32.mrb[0].mxu0
        %v4862 = vadd.f32 %v550, %v4861
        %v4863 = vpop.f32.mrb[0].mxu0
        %v4864 = vpop.f32.mrb[0].mxu0
        %v4865 = vadd.f32 %v550, %v4864
        %v4866 = vpop.f32.mrb[0].mxu0
        %4867 = vmatprep.mubr.bf16.mxu0 0
        %4868 = vmatmul.mubr.bf16.gmra.mrb[0].mxu0 %v1466
        %v4869 = vpop.f32.mrb[0].mxu0
        %v4870 = vadd.f32 %v550, %v4869
        %v4871 = vpop.f32.mrb[0].mxu0
        %v4872 = vpop.f32.mrb[0].mxu0
        %v4873 = vadd.f32 %v550, %v4872
        %v4874 = vpop.f32.mrb[0].mxu0
        %4875 = vmatprep.mubr.bf16.mxu0 0
        %4876 = vmatmul.mubr.bf16.gmra.mrb[0].mxu0 %v1469
        %v4877 = vpop.f32.mrb[0].mxu0
        %v4878 = vadd.f32 %v550, %v4877
        %v4879 = vpop.f32.mrb[0].mxu0
        %v4880 = vpop.f32.mrb[0].mxu0
        %v4881 = vadd.f32 %v550, %v4880
        %v4882 = vpop.f32.mrb[0].mxu0
        %4883 = vmatprep.mubr.bf16.mxu0 0
        %4884 = vmatmul.mubr.bf16.gmra.mrb[0].mxu0 %v1472
        %v4885 = vpop.f32.mrb[0].mxu0
        %v4886 = vadd.f32 %v550, %v4885
        %v4887 = vpop.f32.mrb[0].mxu0
        %v4888 = vpop.f32.mrb[0].mxu0
        %v4889 = vadd.f32 %v550, %v4888
        %v4890 = vpop.f32.mrb[0].mxu0
        %4891 = vmatprep.mubr.bf16.mxu0 0
        %4892 = vmatmul.mubr.bf16.gmra.mrb[0].mxu0 %v1475
        %v4893 = vpop.f32.mrb[0].mxu0
        %v4894 = vadd.f32 %v550, %v4893
        %v4895 = vpop.f32.mrb[0].mxu0
        %v4896 = vpop.f32.mrb[0].mxu0
        %v4897 = vadd.f32 %v550, %v4896
        %v4898 = vpop.f32.mrb[0].mxu0
        %4899 = vmatprep.mubr.bf16.mxu0 0
        %4900 = vmatmul.mubr.bf16.gmra.mrb[0].mxu0 %v1478
        %v4901 = vpop.f32.mrb[0].mxu0
        %v4902 = vadd.f32 %v550, %v4901
        %v4903 = vpop.f32.mrb[0].mxu0
        %v4904 = vpop.f32.mrb[0].mxu0
        %v4905 = vadd.f32 %v550, %v4904
        %v4906 = vpop.f32.mrb[0].mxu0
        %4907 = vmatprep.mubr.bf16.mxu0 0
        %4908 = vmatmul.mubr.bf16.gmra.mrb[0].mxu0 %v1481
        %v4909 = vpop.f32.mrb[0].mxu0
        %v4910 = vadd.f32 %v550, %v4909
        %v4911 = vpop.f32.mrb[0].mxu0
        %v4912 = vpop.f32.mrb[0].mxu0
        %v4913 = vadd.f32 %v550, %v4912
        %v4914 = vpop.f32.mrb[0].mxu0
        %4915 = vmatprep.mubr.bf16.mxu0 0
        %4916 = vmatmul.mubr.bf16.gmra.mrb[0].mxu0 %v1484
        %v4917 = vpop.f32.mrb[0].mxu0
        %v4918 = vadd.f32 %v550, %v4917
        %v4919 = vpop.f32.mrb[0].mxu0
        %v4920 = vpop.f32.mrb[0].mxu0
        %v4921 = vadd.f32 %v550, %v4920
        %v4922 = vpop.f32.mrb[0].mxu0
        %4923 = vmatprep.mubr.bf16.mxu0 0
        %4924 = vmatmul.mubr.bf16.gmra.mrb[0].mxu0 %v1487
        %v4925 = vpop.f32.mrb[0].mxu0
        %v4926 = vadd.f32 %v550, %v4925
        %v4927 = vpop.f32.mrb[0].mxu0
        %v4928 = vpop.f32.mrb[0].mxu0
        %v4929 = vadd.f32 %v550, %v4928
        %v4930 = vpop.f32.mrb[0].mxu0
        %4931 = vmatprep.mubr.bf16.mxu0 0
        %4932 = vmatmul.mubr.bf16.gmra.mrb[0].mxu0 %v1490
        %v4933 = vpop.f32.mrb[0].mxu0
        %v4934 = vadd.f32 %v550, %v4933
        %v4935 = vpop.f32.mrb[0].mxu0
        %v4936 = vpop.f32.mrb[0].mxu0
        %v4937 = vadd.f32 %v550, %v4936
        %v4938 = vpop.f32.mrb[0].mxu0
        %4939 = vmatprep.mubr.bf16.mxu0 0
        %4940 = vmatmul.mubr.bf16.gmra.mrb[0].mxu0 %v1493
        %v4941 = vpop.f32.mrb[0].mxu0
        %v4942 = vadd.f32 %v550, %v4941
        %v4943 = vpop.f32.mrb[0].mxu0
        %v4944 = vpop.f32.mrb[0].mxu0
        %v4945 = vadd.f32 %v550, %v4944
        %v4946 = vpop.f32.mrb[0].mxu0
        %4947 = vmatprep.mubr.bf16.mxu0 0
        %4948 = vmatmul.mubr.bf16.gmra.mrb[0].mxu0 %v1496
        %v4949 = vpop.f32.mrb[0].mxu0
        %v4950 = vadd.f32 %v550, %v4949
        %v4951 = vpop.f32.mrb[0].mxu0
        %v4952 = vpop.f32.mrb[0].mxu0
        %v4953 = vadd.f32 %v550, %v4952
        %v4954 = vpop.f32.mrb[0].mxu0
        %4955 = vmatprep.mubr.bf16.mxu0 0
        %4956 = vmatmul.mubr.bf16.gmra.mrb[0].mxu0 %v1499
        %v4957 = vpop.f32.mrb[0].mxu0
        %v4958 = vadd.f32 %v550, %v4957
        %v4959 = vpop.f32.mrb[0].mxu0
        %v4960 = vpop.f32.mrb[0].mxu0
        %v4961 = vadd.f32 %v550, %v4960
        %v4962 = vpop.f32.mrb[0].mxu0
        %4963 = vmatprep.mubr.bf16.mxu0 0
        %4964 = vmatmul.mubr.bf16.gmra.mrb[0].mxu0 %v1502
        %v4965 = vpop.f32.mrb[0].mxu0
        %v4966 = vadd.f32 %v550, %v4965
        %v4967 = vpop.f32.mrb[0].mxu0
        %v4968 = vpop.f32.mrb[0].mxu0
        %v4969 = vadd.f32 %v550, %v4968
        %v4970 = vpop.f32.mrb[0].mxu0
        %4971 = vmatprep.mubr.bf16.mxu0 0
        %4972 = vmatmul.mubr.bf16.gmra.mrb[0].mxu0 %v1505
        %v4973 = vpop.f32.mrb[0].mxu0
        %v4974 = vadd.f32 %v550, %v4973
        %v4975 = vpop.f32.mrb[0].mxu0
        %v4976 = vpop.f32.mrb[0].mxu0
        %v4977 = vadd.f32 %v550, %v4976
        %v4978 = vpop.f32.mrb[0].mxu0
        %4979 = vmatprep.mubr.bf16.mxu0 0
        %4980 = vmatmul.mubr.bf16.gmra.mrb[0].mxu0 %v1508
        %v4981 = vpop.f32.mrb[0].mxu0
        %v4982 = vadd.f32 %v550, %v4981
        %v4983 = vpop.f32.mrb[0].mxu0
        %v4984 = vpop.f32.mrb[0].mxu0
        %v4985 = vadd.f32 %v550, %v4984
        %v4986 = vpop.f32.mrb[0].mxu0
        %4987 = vmatprep.mubr.bf16.mxu0 0
        %4988 = vmatmul.mubr.bf16.gmra.mrb[0].mxu0 %v1511
        %v4989 = vpop.f32.mrb[0].mxu0
        %v4990 = vadd.f32 %v550, %v4989
        %v4991 = vpop.f32.mrb[0].mxu0
        %v4992 = vpop.f32.mrb[0].mxu0
        %v4993 = vadd.f32 %v550, %v4992
        %v4994 = vpop.f32.mrb[0].mxu0
        %4995 = vmatprep.mubr.bf16.mxu0 0
        %4996 = vmatmul.mubr.bf16.gmra.mrb[0].mxu0 %v1514
        %v4997 = vpop.f32.mrb[0].mxu0
        %v4998 = vadd.f32 %v550, %v4997
        %v4999 = vpop.f32.mrb[0].mxu0
        %v5000 = vpop.f32.mrb[0].mxu0
        %v5001 = vadd.f32 %v550, %v5000
        %v5002 = vpop.f32.mrb[0].mxu0
        %5003 = vmatprep.mubr.bf16.mxu0 0
        %5004 = vmatmul.mubr.bf16.gmra.mrb[0].mxu0 %v1517
        %v5005 = vpop.f32.mrb[0].mxu0
        %v5006 = vadd.f32 %v550, %v5005
        %v5007 = vpop.f32.mrb[0].mxu0
        %v5008 = vpop.f32.mrb[0].mxu0
        %v5009 = vadd.f32 %v550, %v5008
        %v5010 = vpop.f32.mrb[0].mxu0
        %5011 = vmatprep.mubr.bf16.mxu0 0
        %5012 = vmatmul.mubr.bf16.gmra.mrb[0].mxu0 %v1520
        %v5013 = vpop.f32.mrb[0].mxu0
        %v5014 = vadd.f32 %v550, %v5013
        %v5015 = vpop.f32.mrb[0].mxu0
        %v5016 = vpop.f32.mrb[0].mxu0
        %v5017 = vadd.f32 %v550, %v5016
        %v5018 = vpop.f32.mrb[0].mxu0
        %5019 = vmatprep.mubr.bf16.mxu0 0
        %5020 = vmatmul.mubr.bf16.gmra.mrb[0].mxu0 %v1523
        %v5021 = vpop.f32.mrb[0].mxu0
        %v5022 = vadd.f32 %v550, %v5021
        %v5023 = vpop.f32.mrb[0].mxu0
        %v5024 = vpop.f32.mrb[0].mxu0
        %v5025 = vadd.f32 %v550, %v5024
        %v5026 = vpop.f32.mrb[0].mxu0
        %5027 = vmatprep.mubr.bf16.mxu0 0
        %5028 = vmatmul.mubr.bf16.gmra.mrb[0].mxu0 %v1526
        %v5029 = vpop.f32.mrb[0].mxu0
        %v5030 = vadd.f32 %v550, %v5029
        %v5031 = vpop.f32.mrb[0].mxu0
        %v5032 = vpop.f32.mrb[0].mxu0
        %v5033 = vadd.f32 %v550, %v5032
        %v5034 = vpop.f32.mrb[0].mxu0
        %5035 = vmatprep.mubr.bf16.mxu0 0
        %5036 = vmatmul.mubr.bf16.gmra.mrb[0].mxu0 %v1529
        %v5037 = vpop.f32.mrb[0].mxu0
        %v5038 = vadd.f32 %v550, %v5037
        %v5039 = vpop.f32.mrb[0].mxu0
        %v5040 = vpop.f32.mrb[0].mxu0
        %v5041 = vadd.f32 %v550, %v5040
        %v5042 = vpop.f32.mrb[0].mxu0
        %5043 = vmatprep.mubr.bf16.mxu0 0
        %5044 = vmatmul.mubr.bf16.gmra.mrb[0].mxu0 %v1532
        %v5045 = vpop.f32.mrb[0].mxu0
        %v5046 = vadd.f32 %v550, %v5045
        %v5047 = vpop.f32.mrb[0].mxu0
        %v5048 = vpop.f32.mrb[0].mxu0
        %v5049 = vadd.f32 %v550, %v5048
        %v5050 = vpop.f32.mrb[0].mxu0
        %5051 = vmatprep.mubr.bf16.mxu0 0
        %5052 = vmatmul.mubr.bf16.gmra.mrb[0].mxu0 %v1535
        %v5053 = vpop.f32.mrb[0].mxu0
        %v5054 = vadd.f32 %v550, %v5053
        %v5055 = vpop.f32.mrb[0].mxu0
        %v5056 = vpop.f32.mrb[0].mxu0
        %v5057 = vadd.f32 %v550, %v5056
        %v5058 = vpop.f32.mrb[0].mxu0
        %5059 = vmatprep.mubr.bf16.mxu0 0
        %5060 = vmatmul.mubr.bf16.gmra.mrb[0].mxu0 %v1538
        %v5061 = vpop.f32.mrb[0].mxu0
        %v5062 = vadd.f32 %v550, %v5061
        %v5063 = vpop.f32.mrb[0].mxu0
        %v5064 = vpop.f32.mrb[0].mxu0
        %v5065 = vadd.f32 %v550, %v5064
        %v5066 = vpop.f32.mrb[0].mxu0
        %5067 = vmatprep.mubr.bf16.mxu0 0
        %5068 = vmatmul.mubr.bf16.gmra.mrb[0].mxu0 %v1541
        %v5069 = vpop.f32.mrb[0].mxu0
        %v5070 = vadd.f32 %v550, %v5069
        %v5071 = vpop.f32.mrb[0].mxu0
        %v5072 = vpop.f32.mrb[0].mxu0
        %v5073 = vadd.f32 %v550, %v5072
        %v5074 = vpop.f32.mrb[0].mxu0
        %5075 = vmatprep.mubr.bf16.mxu0 0
        %5076 = vmatmul.mubr.bf16.gmra.mrb[0].mxu0 %v1544
        %v5077 = vpop.f32.mrb[0].mxu0
        %v5078 = vadd.f32 %v550, %v5077
        %v5079 = vpop.f32.mrb[0].mxu0
        %v5080 = vpop.f32.mrb[0].mxu0
        %v5081 = vadd.f32 %v550, %v5080
        %v5082 = vpop.f32.mrb[0].mxu0
        %5083 = vmatprep.mubr.bf16.mxu0 0
        %5084 = vmatmul.mubr.bf16.gmra.mrb[0].mxu0 %v1547
        %v5085 = vpop.f32.mrb[0].mxu0
        %v5086 = vadd.f32 %v550, %v5085
        %v5087 = vpop.f32.mrb[0].mxu0
        %v5088 = vpop.f32.mrb[0].mxu0
        %v5089 = vadd.f32 %v550, %v5088
        %v5090 = vpop.f32.mrb[0].mxu0
        %5091 = vmatprep.mubr.bf16.mxu0 0
        %5092 = vmatmul.mubr.bf16.gmra.mrb[0].mxu0 %v1550
        %v5093 = vpop.f32.mrb[0].mxu0
        %v5094 = vadd.f32 %v550, %v5093
        %v5095 = vpop.f32.mrb[0].mxu0
        %v5096 = vpop.f32.mrb[0].mxu0
        %v5097 = vadd.f32 %v550, %v5096
        %v5098 = vpop.f32.mrb[0].mxu0
        %5099 = vmatprep.mubr.bf16.mxu0 0
        %5100 = vmatmul.mubr.bf16.gmra.mrb[0].mxu0 %v1553
        %v5101 = vpop.f32.mrb[0].mxu0
        %v5102 = vadd.f32 %v550, %v5101
        %v5103 = vpop.f32.mrb[0].mxu0
        %v5104 = vpop.f32.mrb[0].mxu0
        %v5105 = vadd.f32 %v550, %v5104
        %v5106 = vpop.f32.mrb[0].mxu0
        %5107 = vmatprep.mubr.bf16.mxu0 0
        %5108 = vmatmul.mubr.bf16.gmra.mrb[0].mxu0 %v1556
        %v5109 = vpop.f32.mrb[0].mxu0
        %v5110 = vadd.f32 %v550, %v5109
        %v5111 = vpop.f32.mrb[0].mxu0
        %v5112 = vpop.f32.mrb[0].mxu0
        %v5113 = vadd.f32 %v550, %v5112
        %v5114 = vpop.f32.mrb[0].mxu0
        %5115 = vmatprep.mubr.bf16.mxu0 0
        %5116 = vmatmul.mubr.bf16.gmra.mrb[0].mxu0 %v1559
        %v5117 = vpop.f32.mrb[0].mxu0
        %v5118 = vadd.f32 %v550, %v5117
        %v5119 = vpop.f32.mrb[0].mxu0
        %v5120 = vpop.f32.mrb[0].mxu0
        %v5121 = vadd.f32 %v550, %v5120
        %v5122 = vpop.f32.mrb[0].mxu0
        %5123 = vmatprep.mubr.bf16.mxu0 0
        %5124 = vmatmul.mubr.bf16.gmra.mrb[0].mxu0 %v1562
        %v5125 = vpop.f32.mrb[0].mxu0
        %v5126 = vadd.f32 %v550, %v5125
        %v5127 = vpop.f32.mrb[0].mxu0
        %v5128 = vpop.f32.mrb[0].mxu0
        %v5129 = vadd.f32 %v550, %v5128
        %v5130 = vpop.f32.mrb[0].mxu0
        %5131 = vmatprep.mubr.bf16.mxu0 0
        %5132 = vmatmul.mubr.bf16.gmra.mrb[0].mxu0 %v1565
        %v5133 = vpop.f32.mrb[0].mxu0
        %v5134 = vadd.f32 %v550, %v5133
        %v5135 = vpop.f32.mrb[0].mxu0
        %v5136 = vpop.f32.mrb[0].mxu0
        %v5137 = vadd.f32 %v550, %v5136
        %v5138 = vpop.f32.mrb[0].mxu0
        %5139 = vmatprep.mubr.bf16.mxu0 0
        %5140 = vmatmul.mubr.bf16.gmra.mrb[0].mxu0 %v1568
        %v5141 = vpop.f32.mrb[0].mxu0
        %v5142 = vadd.f32 %v550, %v5141
        %v5143 = vpop.f32.mrb[0].mxu0
        %v5144 = vpop.f32.mrb[0].mxu0
        %v5145 = vadd.f32 %v550, %v5144
        %v5146 = vpop.f32.mrb[0].mxu0
        %5147 = vmatprep.mubr.bf16.mxu0 0
        %5148 = vmatmul.mubr.bf16.gmra.mrb[0].mxu0 %v1571
        %v5149 = vpop.f32.mrb[0].mxu0
        %v5150 = vadd.f32 %v550, %v5149
        %v5151 = vpop.f32.mrb[0].mxu0
        %v5152 = vpop.f32.mrb[0].mxu0
        %v5153 = vadd.f32 %v550, %v5152
        %v5154 = vpop.f32.mrb[0].mxu0
        %5155 = vmatprep.mubr.bf16.mxu0 0
        %5156 = vmatmul.mubr.bf16.gmra.mrb[0].mxu0 %v1574
        %v5157 = vpop.f32.mrb[0].mxu0
        %v5158 = vadd.f32 %v550, %v5157
        %v5159 = vpop.f32.mrb[0].mxu0
        %v5160 = vpop.f32.mrb[0].mxu0
        %v5161 = vadd.f32 %v550, %v5160
        %v5162 = vpop.f32.mrb[0].mxu0
        %5163 = vmatprep.mubr.bf16.mxu0 0
        %5164 = vmatmul.mubr.bf16.gmra.mrb[0].mxu0 %v1577
        %v5165 = vpop.f32.mrb[0].mxu0
        %v5166 = vadd.f32 %v550, %v5165
        %v5167 = vpop.f32.mrb[0].mxu0
        %v5168 = vpop.f32.mrb[0].mxu0
        %v5169 = vadd.f32 %v550, %v5168
        %v5170 = vpop.f32.mrb[0].mxu0
        %5171 = vmatprep.mubr.bf16.mxu0 0
        %5172 = vmatmul.mubr.bf16.gmra.mrb[0].mxu0 %v1580
        %v5173 = vpop.f32.mrb[0].mxu0
        %v5174 = vadd.f32 %v550, %v5173
        %v5175 = vpop.f32.mrb[0].mxu0
        %v5176 = vpop.f32.mrb[0].mxu0
        %v5177 = vadd.f32 %v550, %v5176
        %v5178 = vpop.f32.mrb[0].mxu0
        %5179 = vmatprep.mubr.bf16.mxu0 0
        %5180 = vmatmul.mubr.bf16.gmra.mrb[0].mxu0 %v1583
        %v5181 = vpop.f32.mrb[0].mxu0
        %v5182 = vadd.f32 %v550, %v5181
        %v5183 = vpop.f32.mrb[0].mxu0
        %v5184 = vpop.f32.mrb[0].mxu0
        %v5185 = vadd.f32 %v550, %v5184
        %v5186 = vpop.f32.mrb[0].mxu0
        %5187 = vmatprep.mubr.bf16.mxu0 0
        %5188 = vmatmul.mubr.bf16.gmra.mrb[0].mxu0 %v1586
        %v5189 = vpop.f32.mrb[0].mxu0
        %v5190 = vadd.f32 %v550, %v5189
        %v5191 = vpop.f32.mrb[0].mxu0
        %v5192 = vpop.f32.mrb[0].mxu0
        %v5193 = vadd.f32 %v550, %v5192
        %v5194 = vpop.f32.mrb[0].mxu0
        %5195 = vmatprep.mubr.bf16.mxu0 0
        %5196 = vmatmul.mubr.bf16.gmra.mrb[0].mxu0 %v1589
        %v5197 = vpop.f32.mrb[0].mxu0
        %v5198 = vadd.f32 %v550, %v5197
        %v5199 = vpop.f32.mrb[0].mxu0
        %v5200 = vpop.f32.mrb[0].mxu0
        %v5201 = vadd.f32 %v550, %v5200
        %v5202 = vpop.f32.mrb[0].mxu0
        %5203 = vmatprep.mubr.bf16.mxu0 0
        %5204 = vmatmul.mubr.bf16.gmra.mrb[0].mxu0 %v1592
        %v5205 = vpop.f32.mrb[0].mxu0
        %v5206 = vadd.f32 %v550, %v5205
        %v5207 = vpop.f32.mrb[0].mxu0
        %v5208 = vpop.f32.mrb[0].mxu0
        %v5209 = vadd.f32 %v550, %v5208
        %v5210 = vpop.f32.mrb[0].mxu0
        %5211 = vmatprep.mubr.bf16.mxu0 0
        %5212 = vmatmul.mubr.bf16.gmra.mrb[0].mxu0 %v1595
        %v5213 = vpop.f32.mrb[0].mxu0
        %v5214 = vadd.f32 %v550, %v5213
        %v5215 = vpop.f32.mrb[0].mxu0
        %v5216 = vpop.f32.mrb[0].mxu0
        %v5217 = vadd.f32 %v550, %v5216
        %v5218 = vpop.f32.mrb[0].mxu0
        %5219 = vmatprep.mubr.bf16.mxu0 0
        %5220 = vmatmul.mubr.bf16.gmra.mrb[0].mxu0 %v1598
        %v5221 = vpop.f32.mrb[0].mxu0
        %v5222 = vadd.f32 %v550, %v5221
        %v5223 = vpop.f32.mrb[0].mxu0
        %v5224 = vpop.f32.mrb[0].mxu0
        %v5225 = vadd.f32 %v550, %v5224
        %v5226 = vpop.f32.mrb[0].mxu0
        %5227 = vmatprep.mubr.bf16.mxu0 0
        %5228 = vmatmul.mubr.bf16.gmra.mrb[0].mxu0 %v1601
        %v5229 = vpop.f32.mrb[0].mxu0
        %v5230 = vadd.f32 %v550, %v5229
        %v5231 = vpop.f32.mrb[0].mxu0
        %v5232 = vpop.f32.mrb[0].mxu0
        %v5233 = vadd.f32 %v550, %v5232
        %v5234 = vpop.f32.mrb[0].mxu0
        %5235 = vmatprep.mubr.bf16.mxu0 0
        %5236 = vmatmul.mubr.bf16.gmra.mrb[0].mxu0 %v1604
        %v5237 = vpop.f32.mrb[0].mxu0
        %v5238 = vadd.f32 %v550, %v5237
        %v5239 = vpop.f32.mrb[0].mxu0
        %v5240 = vpop.f32.mrb[0].mxu0
        %v5241 = vadd.f32 %v550, %v5240
        %v5242 = vpop.f32.mrb[0].mxu0
        %5243 = vmatprep.mubr.bf16.mxu0 0
        %5244 = vmatmul.mubr.bf16.gmra.mrb[0].mxu0 %v1607
        %v5245 = vpop.f32.mrb[0].mxu0
        %v5246 = vadd.f32 %v550, %v5245
        %v5247 = vpop.f32.mrb[0].mxu0
        %v5248 = vpop.f32.mrb[0].mxu0
        %v5249 = vadd.f32 %v550, %v5248
        %v5250 = vpop.f32.mrb[0].mxu0
        %5251 = vmatprep.mubr.bf16.mxu0 0
        %5252 = vmatmul.mubr.bf16.gmra.mrb[0].mxu0 %v1610
        %v5253 = vpop.f32.mrb[0].mxu0
        %v5254 = vadd.f32 %v550, %v5253
        %v5255 = vpop.f32.mrb[0].mxu0
        %v5256 = vpop.f32.mrb[0].mxu0
        %v5257 = vadd.f32 %v550, %v5256
        %v5258 = vpop.f32.mrb[0].mxu0
        %5259 = vmatprep.mubr.bf16.mxu0 0
        %5260 = vmatmul.mubr.bf16.gmra.mrb[0].mxu0 %v1613
        %v5261 = vpop.f32.mrb[0].mxu0
        %v5262 = vadd.f32 %v550, %v5261
        %v5263 = vpop.f32.mrb[0].mxu0
        %v5264 = vpop.f32.mrb[0].mxu0
        %v5265 = vadd.f32 %v550, %v5264
        %v5266 = vpop.f32.mrb[0].mxu0
        %5267 = vmatprep.mubr.bf16.mxu0 0
        %5268 = vmatmul.mubr.bf16.gmra.mrb[0].mxu0 %v1616
        %v5269 = vpop.f32.mrb[0].mxu0
        %v5270 = vadd.f32 %v550, %v5269
        %v5271 = vpop.f32.mrb[0].mxu0
        %v5272 = vpop.f32.mrb[0].mxu0
        %v5273 = vadd.f32 %v550, %v5272
        %v5274 = vpop.f32.mrb[0].mxu0
        %5275 = vmatprep.mubr.bf16.mxu0 0
        %5276 = vmatmul.mubr.bf16.gmra.mrb[0].mxu0 %v1619
        %v5277 = vpop.f32.mrb[0].mxu0
        %v5278 = vadd.f32 %v550, %v5277
        %v5279 = vpop.f32.mrb[0].mxu0
        %v5280 = vpop.f32.mrb[0].mxu0
        %v5281 = vadd.f32 %v550, %v5280
        %v5282 = vpop.f32.mrb[0].mxu0
        %5283 = vmatprep.mubr.bf16.mxu0 0
        %5284 = vmatmul.mubr.bf16.gmra.mrb[0].mxu0 %v1622
        %v5285 = vpop.f32.mrb[0].mxu0
        %v5286 = vadd.f32 %v550, %v5285
        %v5287 = vpop.f32.mrb[0].mxu0
        %v5288 = vpop.f32.mrb[0].mxu0
        %v5289 = vadd.f32 %v550, %v5288
        %v5290 = vpop.f32.mrb[0].mxu0
        %5291 = vmatprep.mubr.bf16.mxu0 0
        %5292 = vmatmul.mubr.bf16.gmra.mrb[0].mxu0 %v1625
        %v5293 = vpop.f32.mrb[0].mxu0
        %v5294 = vadd.f32 %v550, %v5293
        %v5295 = vpop.f32.mrb[0].mxu0
        %v5296 = vpop.f32.mrb[0].mxu0
        %v5297 = vadd.f32 %v550, %v5296
        %v5298 = vpop.f32.mrb[0].mxu0
        %5299 = vmatprep.mubr.bf16.mxu0 0
        %5300 = vmatmul.mubr.bf16.gmra.mrb[0].mxu0 %v1628
        %v5301 = vpop.f32.mrb[0].mxu0
        %v5302 = vadd.f32 %v550, %v5301
        %v5303 = vpop.f32.mrb[0].mxu0
        %v5304 = vpop.f32.mrb[0].mxu0
        %v5305 = vadd.f32 %v550, %v5304
        %v5306 = vpop.f32.mrb[0].mxu0
        %5307 = vmatprep.mubr.bf16.mxu0 0
        %5308 = vmatmul.mubr.bf16.gmra.mrb[0].mxu0 %v1631
        %v5309 = vpop.f32.mrb[0].mxu0
        %v5310 = vadd.f32 %v550, %v5309
        %v5311 = vpop.f32.mrb[0].mxu0
        %v5312 = vpop.f32.mrb[0].mxu0
        %v5313 = vadd.f32 %v550, %v5312
        %v5314 = vpop.f32.mrb[0].mxu0
        %5315 = vdwg.mxu0
        %v5316 = vmax.f32 %v1668, 0.0
        %v5317 = vmax.f32 %v1670, 0.0
        %v5318 = vmax.f32 %v2981, 0.0
        %v5319 = vmax.f32 %v2983, 0.0
        %v5320 = vmax.f32 %v4294, 0.0
        %v5321 = vmax.f32 %v1672, 0.0
        %v5322 = vmax.f32 %v1674, 0.0
        %v5323 = vmax.f32 %v2985, 0.0
        %v5324 = vmax.f32 %v2987, 0.0
        %v5325 = vmax.f32 %v4297, 0.0
        %v5326 = vmax.f32 %v1678, 0.0
        %v5327 = vmax.f32 %v1680, 0.0
        %v5328 = vmax.f32 %v2991, 0.0
        %v5329 = vmax.f32 %v2993, 0.0
        %v5330 = vmax.f32 %v4302, 0.0
        %v5331 = vmax.f32 %v1682, 0.0
        %v5332 = vmax.f32 %v1684, 0.0
        %v5333 = vmax.f32 %v2995, 0.0
        %v5334 = vmax.f32 %v2997, 0.0
        %v5335 = vmax.f32 %v4305, 0.0
        %v5336 = vmax.f32 %v1688, 0.0
        %v5337 = vmax.f32 %v1690, 0.0
        %v5338 = vmax.f32 %v3001, 0.0
        %v5339 = vmax.f32 %v3003, 0.0
        %v5340 = vmax.f32 %v4310, 0.0
        %v5341 = vmax.f32 %v1692, 0.0
        %v5342 = vmax.f32 %v1694, 0.0
        %v5343 = vmax.f32 %v3005, 0.0
        %v5344 = vmax.f32 %v3007, 0.0
        %v5345 = vmax.f32 %v4313, 0.0
        %v5346 = vmax.f32 %v1698, 0.0
        %v5347 = vmax.f32 %v1700, 0.0
        %v5348 = vmax.f32 %v3011, 0.0
        %v5349 = vmax.f32 %v3013, 0.0
        %v5350 = vmax.f32 %v4318, 0.0
        %v5351 = vmax.f32 %v1702, 0.0
        %v5352 = vmax.f32 %v1704, 0.0
        %v5353 = vmax.f32 %v3015, 0.0
        %v5354 = vmax.f32 %v3017, 0.0
        %v5355 = vmax.f32 %v4321, 0.0
        %v5356 = vmax.f32 %v1708, 0.0
        %v5357 = vmax.f32 %v1710, 0.0
        %v5358 = vmax.f32 %v3021, 0.0
        %v5359 = vmax.f32 %v3023, 0.0
        %v5360 = vmax.f32 %v4326, 0.0
        %v5361 = vmax.f32 %v1712, 0.0
        %v5362 = vmax.f32 %v1714, 0.0
        %v5363 = vmax.f32 %v3025, 0.0
        %v5364 = vmax.f32 %v3027, 0.0
        %v5365 = vmax.f32 %v4329, 0.0
        %v5366 = vmax.f32 %v1718, 0.0
        %v5367 = vmax.f32 %v1720, 0.0
        %v5368 = vmax.f32 %v3031, 0.0
        %v5369 = vmax.f32 %v3033, 0.0
        %v5370 = vmax.f32 %v4334, 0.0
        %v5371 = vmax.f32 %v1722, 0.0
        %v5372 = vmax.f32 %v1724, 0.0
        %v5373 = vmax.f32 %v3035, 0.0
        %v5374 = vmax.f32 %v3037, 0.0
        %v5375 = vmax.f32 %v4337, 0.0
        %v5376 = vmax.f32 %v1728, 0.0
        %v5377 = vmax.f32 %v1730, 0.0
        %v5378 = vmax.f32 %v3041, 0.0
        %v5379 = vmax.f32 %v3043, 0.0
        %v5380 = vmax.f32 %v4342, 0.0
        %v5381 = vmax.f32 %v1732, 0.0
        %v5382 = vmax.f32 %v1734, 0.0
        %v5383 = vmax.f32 %v3045, 0.0
        %v5384 = vmax.f32 %v3047, 0.0
        %v5385 = vmax.f32 %v4345, 0.0
        %v5386 = vmax.f32 %v1738, 0.0
        %v5387 = vmax.f32 %v1740, 0.0
        %v5388 = vmax.f32 %v3051, 0.0
        %v5389 = vmax.f32 %v3053, 0.0
        %v5390 = vmax.f32 %v4350, 0.0
        %v5391 = vmax.f32 %v1742, 0.0
        %v5392 = vmax.f32 %v1744, 0.0
        %v5393 = vmax.f32 %v3055, 0.0
        %v5394 = vmax.f32 %v3057, 0.0
        %v5395 = vmax.f32 %v4353, 0.0
        %v5396 = vmax.f32 %v1748, 0.0
        %v5397 = vmax.f32 %v1750, 0.0
        %v5398 = vmax.f32 %v3061, 0.0
        %v5399 = vmax.f32 %v3063, 0.0
        %v5400 = vmax.f32 %v4358, 0.0
        %v5401 = vmax.f32 %v1752, 0.0
        %v5402 = vmax.f32 %v1754, 0.0
        %v5403 = vmax.f32 %v3065, 0.0
        %v5404 = vmax.f32 %v3067, 0.0
        %v5405 = vmax.f32 %v4361, 0.0
        %v5406 = vmax.f32 %v1758, 0.0
        %v5407 = vmax.f32 %v1760, 0.0
        %v5408 = vmax.f32 %v3071, 0.0
        %v5409 = vmax.f32 %v3073, 0.0
        %v5410 = vmax.f32 %v4366, 0.0
        %v5411 = vmax.f32 %v1762, 0.0
        %v5412 = vmax.f32 %v1764, 0.0
        %v5413 = vmax.f32 %v3075, 0.0
        %v5414 = vmax.f32 %v3077, 0.0
        %v5415 = vmax.f32 %v4369, 0.0
        %v5416 = vmax.f32 %v1768, 0.0
        %v5417 = vmax.f32 %v1770, 0.0
        %v5418 = vmax.f32 %v3081, 0.0
        %v5419 = vmax.f32 %v3083, 0.0
        %v5420 = vmax.f32 %v4374, 0.0
        %v5421 = vmax.f32 %v1772, 0.0
        %v5422 = vmax.f32 %v1774, 0.0
        %v5423 = vmax.f32 %v3085, 0.0
        %v5424 = vmax.f32 %v3087, 0.0
        %v5425 = vmax.f32 %v4377, 0.0
        %v5426 = vmax.f32 %v1778, 0.0
        %v5427 = vmax.f32 %v1780, 0.0
        %v5428 = vmax.f32 %v3091, 0.0
        %v5429 = vmax.f32 %v3093, 0.0
        %v5430 = vmax.f32 %v4382, 0.0
        %v5431 = vmax.f32 %v1782, 0.0
        %v5432 = vmax.f32 %v1784, 0.0
        %v5433 = vmax.f32 %v3095, 0.0
        %v5434 = vmax.f32 %v3097, 0.0
        %v5435 = vmax.f32 %v4385, 0.0
        %v5436 = vmax.f32 %v1788, 0.0
        %v5437 = vmax.f32 %v1790, 0.0
        %v5438 = vmax.f32 %v3101, 0.0
        %v5439 = vmax.f32 %v3103, 0.0
        %v5440 = vmax.f32 %v4390, 0.0
        %v5441 = vmax.f32 %v1792, 0.0
        %v5442 = vmax.f32 %v1794, 0.0
        %v5443 = vmax.f32 %v3105, 0.0
        %v5444 = vmax.f32 %v3107, 0.0
        %v5445 = vmax.f32 %v4393, 0.0
        %v5446 = vmax.f32 %v1798, 0.0
        %v5447 = vmax.f32 %v1800, 0.0
        %v5448 = vmax.f32 %v3111, 0.0
        %v5449 = vmax.f32 %v3113, 0.0
        %v5450 = vmax.f32 %v4398, 0.0
        %v5451 = vmax.f32 %v1802, 0.0
        %v5452 = vmax.f32 %v1804, 0.0
        %v5453 = vmax.f32 %v3115, 0.0
        %v5454 = vmax.f32 %v3117, 0.0
        %v5455 = vmax.f32 %v4401, 0.0
        %v5456 = vmax.f32 %v1808, 0.0
        %v5457 = vmax.f32 %v1810, 0.0
        %v5458 = vmax.f32 %v3121, 0.0
        %v5459 = vmax.f32 %v3123, 0.0
        %v5460 = vmax.f32 %v4406, 0.0
        %v5461 = vmax.f32 %v1812, 0.0
        %v5462 = vmax.f32 %v1814, 0.0
        %v5463 = vmax.f32 %v3125, 0.0
        %v5464 = vmax.f32 %v3127, 0.0
        %v5465 = vmax.f32 %v4409, 0.0
        %v5466 = vmax.f32 %v1818, 0.0
        %v5467 = vmax.f32 %v1820, 0.0
        %v5468 = vmax.f32 %v3131, 0.0
        %v5469 = vmax.f32 %v3133, 0.0
        %v5470 = vmax.f32 %v4414, 0.0
        %v5471 = vmax.f32 %v1822, 0.0
        %v5472 = vmax.f32 %v1824, 0.0
        %v5473 = vmax.f32 %v3135, 0.0
        %v5474 = vmax.f32 %v3137, 0.0
        %v5475 = vmax.f32 %v4417, 0.0
        %v5476 = vmax.f32 %v1828, 0.0
        %v5477 = vmax.f32 %v1830, 0.0
        %v5478 = vmax.f32 %v3141, 0.0
        %v5479 = vmax.f32 %v3143, 0.0
        %v5480 = vmax.f32 %v4422, 0.0
        %v5481 = vmax.f32 %v1832, 0.0
        %v5482 = vmax.f32 %v1834, 0.0
        %v5483 = vmax.f32 %v3145, 0.0
        %v5484 = vmax.f32 %v3147, 0.0
        %v5485 = vmax.f32 %v4425, 0.0
        %v5486 = vmax.f32 %v1838, 0.0
        %v5487 = vmax.f32 %v1840, 0.0
        %v5488 = vmax.f32 %v3151, 0.0
        %v5489 = vmax.f32 %v3153, 0.0
        %v5490 = vmax.f32 %v4430, 0.0
        %v5491 = vmax.f32 %v1842, 0.0
        %v5492 = vmax.f32 %v1844, 0.0
        %v5493 = vmax.f32 %v3155, 0.0
        %v5494 = vmax.f32 %v3157, 0.0
        %v5495 = vmax.f32 %v4433, 0.0
        %v5496 = vmax.f32 %v1848, 0.0
        %v5497 = vmax.f32 %v1850, 0.0
        %v5498 = vmax.f32 %v3161, 0.0
        %v5499 = vmax.f32 %v3163, 0.0
        %v5500 = vmax.f32 %v4438, 0.0
        %v5501 = vmax.f32 %v1852, 0.0
        %v5502 = vmax.f32 %v1854, 0.0
        %v5503 = vmax.f32 %v3165, 0.0
        %v5504 = vmax.f32 %v3167, 0.0
        %v5505 = vmax.f32 %v4441, 0.0
        %v5506 = vmax.f32 %v1858, 0.0
        %v5507 = vmax.f32 %v1860, 0.0
        %v5508 = vmax.f32 %v3171, 0.0
        %v5509 = vmax.f32 %v3173, 0.0
        %v5510 = vmax.f32 %v4446, 0.0
        %v5511 = vmax.f32 %v1862, 0.0
        %v5512 = vmax.f32 %v1864, 0.0
        %v5513 = vmax.f32 %v3175, 0.0
        %v5514 = vmax.f32 %v3177, 0.0
        %v5515 = vmax.f32 %v4449, 0.0
        %v5516 = vmax.f32 %v1868, 0.0
        %v5517 = vmax.f32 %v1870, 0.0
        %v5518 = vmax.f32 %v3181, 0.0
        %v5519 = vmax.f32 %v3183, 0.0
        %v5520 = vmax.f32 %v4454, 0.0
        %v5521 = vmax.f32 %v1872, 0.0
        %v5522 = vmax.f32 %v1874, 0.0
        %v5523 = vmax.f32 %v3185, 0.0
        %v5524 = vmax.f32 %v3187, 0.0
        %v5525 = vmax.f32 %v4457, 0.0
        %v5526 = vmax.f32 %v1878, 0.0
        %v5527 = vmax.f32 %v1880, 0.0
        %v5528 = vmax.f32 %v3191, 0.0
        %v5529 = vmax.f32 %v3193, 0.0
        %v5530 = vmax.f32 %v4462, 0.0
        %v5531 = vmax.f32 %v1882, 0.0
        %v5532 = vmax.f32 %v1884, 0.0
        %v5533 = vmax.f32 %v3195, 0.0
        %v5534 = vmax.f32 %v3197, 0.0
        %v5535 = vmax.f32 %v4465, 0.0
        %v5536 = vmax.f32 %v1888, 0.0
        %v5537 = vmax.f32 %v1890, 0.0
        %v5538 = vmax.f32 %v3201, 0.0
        %v5539 = vmax.f32 %v3203, 0.0
        %v5540 = vmax.f32 %v4470, 0.0
        %v5541 = vmax.f32 %v1892, 0.0
        %v5542 = vmax.f32 %v1894, 0.0
        %v5543 = vmax.f32 %v3205, 0.0
        %v5544 = vmax.f32 %v3207, 0.0
        %v5545 = vmax.f32 %v4473, 0.0
        %v5546 = vmax.f32 %v1898, 0.0
        %v5547 = vmax.f32 %v1900, 0.0
        %v5548 = vmax.f32 %v3211, 0.0
        %v5549 = vmax.f32 %v3213, 0.0
        %v5550 = vmax.f32 %v4478, 0.0
        %v5551 = vmax.f32 %v1902, 0.0
        %v5552 = vmax.f32 %v1904, 0.0
        %v5553 = vmax.f32 %v3215, 0.0
        %v5554 = vmax.f32 %v3217, 0.0
        %v5555 = vmax.f32 %v4481, 0.0
        %v5556 = vmax.f32 %v1908, 0.0
        %v5557 = vmax.f32 %v1910, 0.0
        %v5558 = vmax.f32 %v3221, 0.0
        %v5559 = vmax.f32 %v3223, 0.0
        %v5560 = vmax.f32 %v4486, 0.0
        %v5561 = vmax.f32 %v1912, 0.0
        %v5562 = vmax.f32 %v1914, 0.0
        %v5563 = vmax.f32 %v3225, 0.0
        %v5564 = vmax.f32 %v3227, 0.0
        %v5565 = vmax.f32 %v4489, 0.0
        %v5566 = vmax.f32 %v1918, 0.0
        %v5567 = vmax.f32 %v1920, 0.0
        %v5568 = vmax.f32 %v3231, 0.0
        %v5569 = vmax.f32 %v3233, 0.0
        %v5570 = vmax.f32 %v4494, 0.0
        %v5571 = vmax.f32 %v1922, 0.0
        %v5572 = vmax.f32 %v1924, 0.0
        %v5573 = vmax.f32 %v3235, 0.0
        %v5574 = vmax.f32 %v3237, 0.0
        %v5575 = vmax.f32 %v4497, 0.0
        %v5576 = vmax.f32 %v1928, 0.0
        %v5577 = vmax.f32 %v1930, 0.0
        %v5578 = vmax.f32 %v3241, 0.0
        %v5579 = vmax.f32 %v3243, 0.0
        %v5580 = vmax.f32 %v4502, 0.0
        %v5581 = vmax.f32 %v1932, 0.0
        %v5582 = vmax.f32 %v1934, 0.0
        %v5583 = vmax.f32 %v3245, 0.0
        %v5584 = vmax.f32 %v3247, 0.0
        %v5585 = vmax.f32 %v4505, 0.0
        %v5586 = vmax.f32 %v1938, 0.0
        %v5587 = vmax.f32 %v1940, 0.0
        %v5588 = vmax.f32 %v3251, 0.0
        %v5589 = vmax.f32 %v3253, 0.0
        %v5590 = vmax.f32 %v4510, 0.0
        %v5591 = vmax.f32 %v1942, 0.0
        %v5592 = vmax.f32 %v1944, 0.0
        %v5593 = vmax.f32 %v3255, 0.0
        %v5594 = vmax.f32 %v3257, 0.0
        %v5595 = vmax.f32 %v4513, 0.0
        %v5596 = vmax.f32 %v1948, 0.0
        %v5597 = vmax.f32 %v1950, 0.0
        %v5598 = vmax.f32 %v3261, 0.0
        %v5599 = vmax.f32 %v3263, 0.0
        %v5600 = vmax.f32 %v4518, 0.0
        %v5601 = vmax.f32 %v1952, 0.0
        %v5602 = vmax.f32 %v1954, 0.0
        %v5603 = vmax.f32 %v3265, 0.0
        %v5604 = vmax.f32 %v3267, 0.0
        %v5605 = vmax.f32 %v4521, 0.0
        %v5606 = vmax.f32 %v1958, 0.0
        %v5607 = vmax.f32 %v1960, 0.0
        %v5608 = vmax.f32 %v3271, 0.0
        %v5609 = vmax.f32 %v3273, 0.0
        %v5610 = vmax.f32 %v4526, 0.0
        %v5611 = vmax.f32 %v1962, 0.0
        %v5612 = vmax.f32 %v1964, 0.0
        %v5613 = vmax.f32 %v3275, 0.0
        %v5614 = vmax.f32 %v3277, 0.0
        %v5615 = vmax.f32 %v4529, 0.0
        %v5616 = vmax.f32 %v1968, 0.0
        %v5617 = vmax.f32 %v1970, 0.0
        %v5618 = vmax.f32 %v3281, 0.0
        %v5619 = vmax.f32 %v3283, 0.0
        %v5620 = vmax.f32 %v4534, 0.0
        %v5621 = vmax.f32 %v1972, 0.0
        %v5622 = vmax.f32 %v1974, 0.0
        %v5623 = vmax.f32 %v3285, 0.0
        %v5624 = vmax.f32 %v3287, 0.0
        %v5625 = vmax.f32 %v4537, 0.0
        %v5626 = vmax.f32 %v1978, 0.0
        %v5627 = vmax.f32 %v1980, 0.0
        %v5628 = vmax.f32 %v3291, 0.0
        %v5629 = vmax.f32 %v3293, 0.0
        %v5630 = vmax.f32 %v4542, 0.0
        %v5631 = vmax.f32 %v1982, 0.0
        %v5632 = vmax.f32 %v1984, 0.0
        %v5633 = vmax.f32 %v3295, 0.0
        %v5634 = vmax.f32 %v3297, 0.0
        %v5635 = vmax.f32 %v4545, 0.0
        %v5636 = vmax.f32 %v1988, 0.0
        %v5637 = vmax.f32 %v1990, 0.0
        %v5638 = vmax.f32 %v3301, 0.0
        %v5639 = vmax.f32 %v3303, 0.0
        %v5640 = vmax.f32 %v4550, 0.0
        %v5641 = vmax.f32 %v1992, 0.0
        %v5642 = vmax.f32 %v1994, 0.0
        %v5643 = vmax.f32 %v3305, 0.0
        %v5644 = vmax.f32 %v3307, 0.0
        %v5645 = vmax.f32 %v4553, 0.0
        %v5646 = vmax.f32 %v1998, 0.0
        %v5647 = vmax.f32 %v2000, 0.0
        %v5648 = vmax.f32 %v3311, 0.0
        %v5649 = vmax.f32 %v3313, 0.0
        %v5650 = vmax.f32 %v4558, 0.0
        %v5651 = vmax.f32 %v2002, 0.0
        %v5652 = vmax.f32 %v2004, 0.0
        %v5653 = vmax.f32 %v3315, 0.0
        %v5654 = vmax.f32 %v3317, 0.0
        %v5655 = vmax.f32 %v4561, 0.0
        %v5656 = vmax.f32 %v2008, 0.0
        %v5657 = vmax.f32 %v2010, 0.0
        %v5658 = vmax.f32 %v3321, 0.0
        %v5659 = vmax.f32 %v3323, 0.0
        %v5660 = vmax.f32 %v4566, 0.0
        %v5661 = vmax.f32 %v2012, 0.0
        %v5662 = vmax.f32 %v2014, 0.0
        %v5663 = vmax.f32 %v3325, 0.0
        %v5664 = vmax.f32 %v3327, 0.0
        %v5665 = vmax.f32 %v4569, 0.0
        %v5666 = vmax.f32 %v2018, 0.0
        %v5667 = vmax.f32 %v2020, 0.0
        %v5668 = vmax.f32 %v3331, 0.0
        %v5669 = vmax.f32 %v3333, 0.0
        %v5670 = vmax.f32 %v4574, 0.0
        %v5671 = vmax.f32 %v2022, 0.0
        %v5672 = vmax.f32 %v2024, 0.0
        %v5673 = vmax.f32 %v3335, 0.0
        %v5674 = vmax.f32 %v3337, 0.0
        %v5675 = vmax.f32 %v4577, 0.0
        %v5676 = vmax.f32 %v2028, 0.0
        %v5677 = vmax.f32 %v2030, 0.0
        %v5678 = vmax.f32 %v3341, 0.0
        %v5679 = vmax.f32 %v3343, 0.0
        %v5680 = vmax.f32 %v4582, 0.0
        %v5681 = vmax.f32 %v2032, 0.0
        %v5682 = vmax.f32 %v2034, 0.0
        %v5683 = vmax.f32 %v3345, 0.0
        %v5684 = vmax.f32 %v3347, 0.0
        %v5685 = vmax.f32 %v4585, 0.0
        %v5686 = vmax.f32 %v2038, 0.0
        %v5687 = vmax.f32 %v2040, 0.0
        %v5688 = vmax.f32 %v3351, 0.0
        %v5689 = vmax.f32 %v3353, 0.0
        %v5690 = vmax.f32 %v4590, 0.0
        %v5691 = vmax.f32 %v2042, 0.0
        %v5692 = vmax.f32 %v2044, 0.0
        %v5693 = vmax.f32 %v3355, 0.0
        %v5694 = vmax.f32 %v3357, 0.0
        %v5695 = vmax.f32 %v4593, 0.0
        %v5696 = vmax.f32 %v2048, 0.0
        %v5697 = vmax.f32 %v2050, 0.0
        %v5698 = vmax.f32 %v3361, 0.0
        %v5699 = vmax.f32 %v3363, 0.0
        %v5700 = vmax.f32 %v4598, 0.0
        %v5701 = vmax.f32 %v2052, 0.0
        %v5702 = vmax.f32 %v2054, 0.0
        %v5703 = vmax.f32 %v3365, 0.0
        %v5704 = vmax.f32 %v3367, 0.0
        %v5705 = vmax.f32 %v4601, 0.0
        %v5706 = vmax.f32 %v2058, 0.0
        %v5707 = vmax.f32 %v2060, 0.0
        %v5708 = vmax.f32 %v3371, 0.0
        %v5709 = vmax.f32 %v3373, 0.0
        %v5710 = vmax.f32 %v4606, 0.0
        %v5711 = vmax.f32 %v2062, 0.0
        %v5712 = vmax.f32 %v2064, 0.0
        %v5713 = vmax.f32 %v3375, 0.0
        %v5714 = vmax.f32 %v3377, 0.0
        %v5715 = vmax.f32 %v4609, 0.0
        %v5716 = vmax.f32 %v2068, 0.0
        %v5717 = vmax.f32 %v2070, 0.0
        %v5718 = vmax.f32 %v3381, 0.0
        %v5719 = vmax.f32 %v3383, 0.0
        %v5720 = vmax.f32 %v4614, 0.0
        %v5721 = vmax.f32 %v2072, 0.0
        %v5722 = vmax.f32 %v2074, 0.0
        %v5723 = vmax.f32 %v3385, 0.0
        %v5724 = vmax.f32 %v3387, 0.0
        %v5725 = vmax.f32 %v4617, 0.0
        %v5726 = vmax.f32 %v2078, 0.0
        %v5727 = vmax.f32 %v2080, 0.0
        %v5728 = vmax.f32 %v3391, 0.0
        %v5729 = vmax.f32 %v3393, 0.0
        %v5730 = vmax.f32 %v4622, 0.0
        %v5731 = vmax.f32 %v2082, 0.0
        %v5732 = vmax.f32 %v2084, 0.0
        %v5733 = vmax.f32 %v3395, 0.0
        %v5734 = vmax.f32 %v3397, 0.0
        %v5735 = vmax.f32 %v4625, 0.0
        %v5736 = vmax.f32 %v2088, 0.0
        %v5737 = vmax.f32 %v2090, 0.0
        %v5738 = vmax.f32 %v3401, 0.0
        %v5739 = vmax.f32 %v3403, 0.0
        %v5740 = vmax.f32 %v4630, 0.0
        %v5741 = vmax.f32 %v2092, 0.0
        %v5742 = vmax.f32 %v2094, 0.0
        %v5743 = vmax.f32 %v3405, 0.0
        %v5744 = vmax.f32 %v3407, 0.0
        %v5745 = vmax.f32 %v4633, 0.0
        %v5746 = vmax.f32 %v2098, 0.0
        %v5747 = vmax.f32 %v2100, 0.0
        %v5748 = vmax.f32 %v3411, 0.0
        %v5749 = vmax.f32 %v3413, 0.0
        %v5750 = vmax.f32 %v4638, 0.0
        %v5751 = vmax.f32 %v2102, 0.0
        %v5752 = vmax.f32 %v2104, 0.0
        %v5753 = vmax.f32 %v3415, 0.0
        %v5754 = vmax.f32 %v3417, 0.0
        %v5755 = vmax.f32 %v4641, 0.0
        %v5756 = vmax.f32 %v2108, 0.0
        %v5757 = vmax.f32 %v2110, 0.0
        %v5758 = vmax.f32 %v3421, 0.0
        %v5759 = vmax.f32 %v3423, 0.0
        %v5760 = vmax.f32 %v4646, 0.0
        %v5761 = vmax.f32 %v2112, 0.0
        %v5762 = vmax.f32 %v2114, 0.0
        %v5763 = vmax.f32 %v3425, 0.0
        %v5764 = vmax.f32 %v3427, 0.0
        %v5765 = vmax.f32 %v4649, 0.0
        %v5766 = vmax.f32 %v2118, 0.0
        %v5767 = vmax.f32 %v2120, 0.0
        %v5768 = vmax.f32 %v3431, 0.0
        %v5769 = vmax.f32 %v3433, 0.0
        %v5770 = vmax.f32 %v4654, 0.0
        %v5771 = vmax.f32 %v2122, 0.0
        %v5772 = vmax.f32 %v2124, 0.0
        %v5773 = vmax.f32 %v3435, 0.0
        %v5774 = vmax.f32 %v3437, 0.0
        %v5775 = vmax.f32 %v4657, 0.0
        %v5776 = vmax.f32 %v2128, 0.0
        %v5777 = vmax.f32 %v2130, 0.0
        %v5778 = vmax.f32 %v3441, 0.0
        %v5779 = vmax.f32 %v3443, 0.0
        %v5780 = vmax.f32 %v4662, 0.0
        %v5781 = vmax.f32 %v2132, 0.0
        %v5782 = vmax.f32 %v2134, 0.0
        %v5783 = vmax.f32 %v3445, 0.0
        %v5784 = vmax.f32 %v3447, 0.0
        %v5785 = vmax.f32 %v4665, 0.0
        %v5786 = vmax.f32 %v2138, 0.0
        %v5787 = vmax.f32 %v2140, 0.0
        %v5788 = vmax.f32 %v3451, 0.0
        %v5789 = vmax.f32 %v3453, 0.0
        %v5790 = vmax.f32 %v4670, 0.0
        %v5791 = vmax.f32 %v2142, 0.0
        %v5792 = vmax.f32 %v2144, 0.0
        %v5793 = vmax.f32 %v3455, 0.0
        %v5794 = vmax.f32 %v3457, 0.0
        %v5795 = vmax.f32 %v4673, 0.0
        %v5796 = vmax.f32 %v2148, 0.0
        %v5797 = vmax.f32 %v2150, 0.0
        %v5798 = vmax.f32 %v3461, 0.0
        %v5799 = vmax.f32 %v3463, 0.0
        %v5800 = vmax.f32 %v4678, 0.0
        %v5801 = vmax.f32 %v2152, 0.0
        %v5802 = vmax.f32 %v2154, 0.0
        %v5803 = vmax.f32 %v3465, 0.0
        %v5804 = vmax.f32 %v3467, 0.0
        %v5805 = vmax.f32 %v4681, 0.0
        %v5806 = vmax.f32 %v2158, 0.0
        %v5807 = vmax.f32 %v2160, 0.0
        %v5808 = vmax.f32 %v3471, 0.0
        %v5809 = vmax.f32 %v3473, 0.0
        %v5810 = vmax.f32 %v4686, 0.0
        %v5811 = vmax.f32 %v2162, 0.0
        %v5812 = vmax.f32 %v2164, 0.0
        %v5813 = vmax.f32 %v3475, 0.0
        %v5814 = vmax.f32 %v3477, 0.0
        %v5815 = vmax.f32 %v4689, 0.0
        %v5816 = vmax.f32 %v2168, 0.0
        %v5817 = vmax.f32 %v2170, 0.0
        %v5818 = vmax.f32 %v3481, 0.0
        %v5819 = vmax.f32 %v3483, 0.0
        %v5820 = vmax.f32 %v4694, 0.0
        %v5821 = vmax.f32 %v2172, 0.0
        %v5822 = vmax.f32 %v2174, 0.0
        %v5823 = vmax.f32 %v3485, 0.0
        %v5824 = vmax.f32 %v3487, 0.0
        %v5825 = vmax.f32 %v4697, 0.0
        %v5826 = vmax.f32 %v2178, 0.0
        %v5827 = vmax.f32 %v2180, 0.0
        %v5828 = vmax.f32 %v3491, 0.0
        %v5829 = vmax.f32 %v3493, 0.0
        %v5830 = vmax.f32 %v4702, 0.0
        %v5831 = vmax.f32 %v2182, 0.0
        %v5832 = vmax.f32 %v2184, 0.0
        %v5833 = vmax.f32 %v3495, 0.0
        %v5834 = vmax.f32 %v3497, 0.0
        %v5835 = vmax.f32 %v4705, 0.0
        %v5836 = vmax.f32 %v2188, 0.0
        %v5837 = vmax.f32 %v2190, 0.0
        %v5838 = vmax.f32 %v3501, 0.0
        %v5839 = vmax.f32 %v3503, 0.0
        %v5840 = vmax.f32 %v4710, 0.0
        %v5841 = vmax.f32 %v2192, 0.0
        %v5842 = vmax.f32 %v2194, 0.0
        %v5843 = vmax.f32 %v3505, 0.0
        %v5844 = vmax.f32 %v3507, 0.0
        %v5845 = vmax.f32 %v4713, 0.0
        %v5846 = vmax.f32 %v2198, 0.0
        %v5847 = vmax.f32 %v2200, 0.0
        %v5848 = vmax.f32 %v3511, 0.0
        %v5849 = vmax.f32 %v3513, 0.0
        %v5850 = vmax.f32 %v4718, 0.0
        %v5851 = vmax.f32 %v2202, 0.0
        %v5852 = vmax.f32 %v2204, 0.0
        %v5853 = vmax.f32 %v3515, 0.0
        %v5854 = vmax.f32 %v3517, 0.0
        %v5855 = vmax.f32 %v4721, 0.0
        %v5856 = vmax.f32 %v2208, 0.0
        %v5857 = vmax.f32 %v2210, 0.0
        %v5858 = vmax.f32 %v3521, 0.0
        %v5859 = vmax.f32 %v3523, 0.0
        %v5860 = vmax.f32 %v4726, 0.0
        %v5861 = vmax.f32 %v2212, 0.0
        %v5862 = vmax.f32 %v2214, 0.0
        %v5863 = vmax.f32 %v3525, 0.0
        %v5864 = vmax.f32 %v3527, 0.0
        %v5865 = vmax.f32 %v4729, 0.0
        %v5866 = vmax.f32 %v2218, 0.0
        %v5867 = vmax.f32 %v2220, 0.0
        %v5868 = vmax.f32 %v3531, 0.0
        %v5869 = vmax.f32 %v3533, 0.0
        %v5870 = vmax.f32 %v4734, 0.0
        %v5871 = vmax.f32 %v2222, 0.0
        %v5872 = vmax.f32 %v2224, 0.0
        %v5873 = vmax.f32 %v3535, 0.0
        %v5874 = vmax.f32 %v3537, 0.0
        %v5875 = vmax.f32 %v4737, 0.0
        %v5876 = vmax.f32 %v2228, 0.0
        %v5877 = vmax.f32 %v2230, 0.0
        %v5878 = vmax.f32 %v3541, 0.0
        %v5879 = vmax.f32 %v3543, 0.0
        %v5880 = vmax.f32 %v4742, 0.0
        %v5881 = vmax.f32 %v2232, 0.0
        %v5882 = vmax.f32 %v2234, 0.0
        %v5883 = vmax.f32 %v3545, 0.0
        %v5884 = vmax.f32 %v3547, 0.0
        %v5885 = vmax.f32 %v4745, 0.0
        %v5886 = vmax.f32 %v2238, 0.0
        %v5887 = vmax.f32 %v2240, 0.0
        %v5888 = vmax.f32 %v3551, 0.0
        %v5889 = vmax.f32 %v3553, 0.0
        %v5890 = vmax.f32 %v4750, 0.0
        %v5891 = vmax.f32 %v2242, 0.0
        %v5892 = vmax.f32 %v2244, 0.0
        %v5893 = vmax.f32 %v3555, 0.0
        %v5894 = vmax.f32 %v3557, 0.0
        %v5895 = vmax.f32 %v4753, 0.0
        %v5896 = vmax.f32 %v2248, 0.0
        %v5897 = vmax.f32 %v2250, 0.0
        %v5898 = vmax.f32 %v3561, 0.0
        %v5899 = vmax.f32 %v3563, 0.0
        %v5900 = vmax.f32 %v4758, 0.0
        %v5901 = vmax.f32 %v2252, 0.0
        %v5902 = vmax.f32 %v2254, 0.0
        %v5903 = vmax.f32 %v3565, 0.0
        %v5904 = vmax.f32 %v3567, 0.0
        %v5905 = vmax.f32 %v4761, 0.0
        %v5906 = vmax.f32 %v2258, 0.0
        %v5907 = vmax.f32 %v2260, 0.0
        %v5908 = vmax.f32 %v3571, 0.0
        %v5909 = vmax.f32 %v3573, 0.0
        %v5910 = vmax.f32 %v4766, 0.0
        %v5911 = vmax.f32 %v2262, 0.0
        %v5912 = vmax.f32 %v2264, 0.0
        %v5913 = vmax.f32 %v3575, 0.0
        %v5914 = vmax.f32 %v3577, 0.0
        %v5915 = vmax.f32 %v4769, 0.0
        %v5916 = vmax.f32 %v2268, 0.0
        %v5917 = vmax.f32 %v2270, 0.0
        %v5918 = vmax.f32 %v3581, 0.0
        %v5919 = vmax.f32 %v3583, 0.0
        %v5920 = vmax.f32 %v4774, 0.0
        %v5921 = vmax.f32 %v2272, 0.0
        %v5922 = vmax.f32 %v2274, 0.0
        %v5923 = vmax.f32 %v3585, 0.0
        %v5924 = vmax.f32 %v3587, 0.0
        %v5925 = vmax.f32 %v4777, 0.0
        %v5926 = vmax.f32 %v2278, 0.0
        %v5927 = vmax.f32 %v2280, 0.0
        %v5928 = vmax.f32 %v3591, 0.0
        %v5929 = vmax.f32 %v3593, 0.0
        %v5930 = vmax.f32 %v4782, 0.0
        %v5931 = vmax.f32 %v2282, 0.0
        %v5932 = vmax.f32 %v2284, 0.0
        %v5933 = vmax.f32 %v3595, 0.0
        %v5934 = vmax.f32 %v3597, 0.0
        %v5935 = vmax.f32 %v4785, 0.0
        %v5936 = vmax.f32 %v2288, 0.0
        %v5937 = vmax.f32 %v2290, 0.0
        %v5938 = vmax.f32 %v3601, 0.0
        %v5939 = vmax.f32 %v3603, 0.0
        %v5940 = vmax.f32 %v4790, 0.0
        %v5941 = vmax.f32 %v2292, 0.0
        %v5942 = vmax.f32 %v2294, 0.0
        %v5943 = vmax.f32 %v3605, 0.0
        %v5944 = vmax.f32 %v3607, 0.0
        %v5945 = vmax.f32 %v4793, 0.0
        %v5946 = vmax.f32 %v2298, 0.0
        %v5947 = vmax.f32 %v2300, 0.0
        %v5948 = vmax.f32 %v3611, 0.0
        %v5949 = vmax.f32 %v3613, 0.0
        %v5950 = vmax.f32 %v4798, 0.0
        %v5951 = vmax.f32 %v2302, 0.0
        %v5952 = vmax.f32 %v2304, 0.0
        %v5953 = vmax.f32 %v3615, 0.0
        %v5954 = vmax.f32 %v3617, 0.0
        %v5955 = vmax.f32 %v4801, 0.0
        %v5956 = vmax.f32 %v2308, 0.0
        %v5957 = vmax.f32 %v2310, 0.0
        %v5958 = vmax.f32 %v3621, 0.0
        %v5959 = vmax.f32 %v3623, 0.0
        %v5960 = vmax.f32 %v4806, 0.0
        %v5961 = vmax.f32 %v2312, 0.0
        %v5962 = vmax.f32 %v2314, 0.0
        %v5963 = vmax.f32 %v3625, 0.0
        %v5964 = vmax.f32 %v3627, 0.0
        %v5965 = vmax.f32 %v4809, 0.0
        %v5966 = vmax.f32 %v2318, 0.0
        %v5967 = vmax.f32 %v2320, 0.0
        %v5968 = vmax.f32 %v3631, 0.0
        %v5969 = vmax.f32 %v3633, 0.0
        %v5970 = vmax.f32 %v4814, 0.0
        %v5971 = vmax.f32 %v2322, 0.0
        %v5972 = vmax.f32 %v2324, 0.0
        %v5973 = vmax.f32 %v3635, 0.0
        %v5974 = vmax.f32 %v3637, 0.0
        %v5975 = vmax.f32 %v4817, 0.0
        %v5976 = vmax.f32 %v2328, 0.0
        %v5977 = vmax.f32 %v2330, 0.0
        %v5978 = vmax.f32 %v3641, 0.0
        %v5979 = vmax.f32 %v3643, 0.0
        %v5980 = vmax.f32 %v4822, 0.0
        %v5981 = vmax.f32 %v2332, 0.0
        %v5982 = vmax.f32 %v2334, 0.0
        %v5983 = vmax.f32 %v3645, 0.0
        %v5984 = vmax.f32 %v3647, 0.0
        %v5985 = vmax.f32 %v4825, 0.0
        %v5986 = vmax.f32 %v2338, 0.0
        %v5987 = vmax.f32 %v2340, 0.0
        %v5988 = vmax.f32 %v3651, 0.0
        %v5989 = vmax.f32 %v3653, 0.0
        %v5990 = vmax.f32 %v4830, 0.0
        %v5991 = vmax.f32 %v2342, 0.0
        %v5992 = vmax.f32 %v2344, 0.0
        %v5993 = vmax.f32 %v3655, 0.0
        %v5994 = vmax.f32 %v3657, 0.0
        %v5995 = vmax.f32 %v4833, 0.0
        %v5996 = vmax.f32 %v2348, 0.0
        %v5997 = vmax.f32 %v2350, 0.0
        %v5998 = vmax.f32 %v3661, 0.0
        %v5999 = vmax.f32 %v3663, 0.0
        %v6000 = vmax.f32 %v4838, 0.0
        %v6001 = vmax.f32 %v2352, 0.0
        %v6002 = vmax.f32 %v2354, 0.0
        %v6003 = vmax.f32 %v3665, 0.0
        %v6004 = vmax.f32 %v3667, 0.0
        %v6005 = vmax.f32 %v4841, 0.0
        %v6006 = vmax.f32 %v2358, 0.0
        %v6007 = vmax.f32 %v2360, 0.0
        %v6008 = vmax.f32 %v3671, 0.0
        %v6009 = vmax.f32 %v3673, 0.0
        %v6010 = vmax.f32 %v4846, 0.0
        %v6011 = vmax.f32 %v2362, 0.0
        %v6012 = vmax.f32 %v2364, 0.0
        %v6013 = vmax.f32 %v3675, 0.0
        %v6014 = vmax.f32 %v3677, 0.0
        %v6015 = vmax.f32 %v4849, 0.0
        %v6016 = vmax.f32 %v2368, 0.0
        %v6017 = vmax.f32 %v2370, 0.0
        %v6018 = vmax.f32 %v3681, 0.0
        %v6019 = vmax.f32 %v3683, 0.0
        %v6020 = vmax.f32 %v4854, 0.0
        %v6021 = vmax.f32 %v2372, 0.0
        %v6022 = vmax.f32 %v2374, 0.0
        %v6023 = vmax.f32 %v3685, 0.0
        %v6024 = vmax.f32 %v3687, 0.0
        %v6025 = vmax.f32 %v4857, 0.0
        %v6026 = vmax.f32 %v2378, 0.0
        %v6027 = vmax.f32 %v2380, 0.0
        %v6028 = vmax.f32 %v3691, 0.0
        %v6029 = vmax.f32 %v3693, 0.0
        %v6030 = vmax.f32 %v4862, 0.0
        %v6031 = vmax.f32 %v2382, 0.0
        %v6032 = vmax.f32 %v2384, 0.0
        %v6033 = vmax.f32 %v3695, 0.0
        %v6034 = vmax.f32 %v3697, 0.0
        %v6035 = vmax.f32 %v4865, 0.0
        %v6036 = vmax.f32 %v2388, 0.0
        %v6037 = vmax.f32 %v2390, 0.0
        %v6038 = vmax.f32 %v3701, 0.0
        %v6039 = vmax.f32 %v3703, 0.0
        %v6040 = vmax.f32 %v4870, 0.0
        %v6041 = vmax.f32 %v2392, 0.0
        %v6042 = vmax.f32 %v2394, 0.0
        %v6043 = vmax.f32 %v3705, 0.0
        %v6044 = vmax.f32 %v3707, 0.0
        %v6045 = vmax.f32 %v4873, 0.0
        %v6046 = vmax.f32 %v2398, 0.0
        %v6047 = vmax.f32 %v2400, 0.0
        %v6048 = vmax.f32 %v3711, 0.0
        %v6049 = vmax.f32 %v3713, 0.0
        %v6050 = vmax.f32 %v4878, 0.0
        %v6051 = vmax.f32 %v2402, 0.0
        %v6052 = vmax.f32 %v2404, 0.0
        %v6053 = vmax.f32 %v3715, 0.0
        %v6054 = vmax.f32 %v3717, 0.0
        %v6055 = vmax.f32 %v4881, 0.0
        %v6056 = vmax.f32 %v2408, 0.0
        %v6057 = vmax.f32 %v2410, 0.0
        %v6058 = vmax.f32 %v3721, 0.0
        %v6059 = vmax.f32 %v3723, 0.0
        %v6060 = vmax.f32 %v4886, 0.0
        %v6061 = vmax.f32 %v2412, 0.0
        %v6062 = vmax.f32 %v2414, 0.0
        %v6063 = vmax.f32 %v3725, 0.0
        %v6064 = vmax.f32 %v3727, 0.0
        %v6065 = vmax.f32 %v4889, 0.0
        %v6066 = vmax.f32 %v2418, 0.0
        %v6067 = vmax.f32 %v2420, 0.0
        %v6068 = vmax.f32 %v3731, 0.0
        %v6069 = vmax.f32 %v3733, 0.0
        %v6070 = vmax.f32 %v4894, 0.0
        %v6071 = vmax.f32 %v2422, 0.0
        %v6072 = vmax.f32 %v2424, 0.0
        %v6073 = vmax.f32 %v3735, 0.0
        %v6074 = vmax.f32 %v3737, 0.0
        %v6075 = vmax.f32 %v4897, 0.0
        %v6076 = vmax.f32 %v2428, 0.0
        %v6077 = vmax.f32 %v2430, 0.0
        %v6078 = vmax.f32 %v3741, 0.0
        %v6079 = vmax.f32 %v3743, 0.0
        %v6080 = vmax.f32 %v4902, 0.0
        %v6081 = vmax.f32 %v2432, 0.0
        %v6082 = vmax.f32 %v2434, 0.0
        %v6083 = vmax.f32 %v3745, 0.0
        %v6084 = vmax.f32 %v3747, 0.0
        %v6085 = vmax.f32 %v4905, 0.0
        %v6086 = vmax.f32 %v2438, 0.0
        %v6087 = vmax.f32 %v2440, 0.0
        %v6088 = vmax.f32 %v3751, 0.0
        %v6089 = vmax.f32 %v3753, 0.0
        %v6090 = vmax.f32 %v4910, 0.0
        %v6091 = vmax.f32 %v2442, 0.0
        %v6092 = vmax.f32 %v2444, 0.0
        %v6093 = vmax.f32 %v3755, 0.0
        %v6094 = vmax.f32 %v3757, 0.0
        %v6095 = vmax.f32 %v4913, 0.0
        %v6096 = vmax.f32 %v2448, 0.0
        %v6097 = vmax.f32 %v2450, 0.0
        %v6098 = vmax.f32 %v3761, 0.0
        %v6099 = vmax.f32 %v3763, 0.0
        %v6100 = vmax.f32 %v4918, 0.0
        %v6101 = vmax.f32 %v2452, 0.0
        %v6102 = vmax.f32 %v2454, 0.0
        %v6103 = vmax.f32 %v3765, 0.0
        %v6104 = vmax.f32 %v3767, 0.0
        %v6105 = vmax.f32 %v4921, 0.0
        %v6106 = vmax.f32 %v2458, 0.0
        %v6107 = vmax.f32 %v2460, 0.0
        %v6108 = vmax.f32 %v3771, 0.0
        %v6109 = vmax.f32 %v3773, 0.0
        %v6110 = vmax.f32 %v4926, 0.0
        %v6111 = vmax.f32 %v2462, 0.0
        %v6112 = vmax.f32 %v2464, 0.0
        %v6113 = vmax.f32 %v3775, 0.0
        %v6114 = vmax.f32 %v3777, 0.0
        %v6115 = vmax.f32 %v4929, 0.0
        %v6116 = vmax.f32 %v2468, 0.0
        %v6117 = vmax.f32 %v2470, 0.0
        %v6118 = vmax.f32 %v3781, 0.0
        %v6119 = vmax.f32 %v3783, 0.0
        %v6120 = vmax.f32 %v4934, 0.0
        %v6121 = vmax.f32 %v2472, 0.0
        %v6122 = vmax.f32 %v2474, 0.0
        %v6123 = vmax.f32 %v3785, 0.0
        %v6124 = vmax.f32 %v3787, 0.0
        %v6125 = vmax.f32 %v4937, 0.0
        %v6126 = vmax.f32 %v2478, 0.0
        %v6127 = vmax.f32 %v2480, 0.0
        %v6128 = vmax.f32 %v3791, 0.0
        %v6129 = vmax.f32 %v3793, 0.0
        %v6130 = vmax.f32 %v4942, 0.0
        %v6131 = vmax.f32 %v2482, 0.0
        %v6132 = vmax.f32 %v2484, 0.0
        %v6133 = vmax.f32 %v3795, 0.0
        %v6134 = vmax.f32 %v3797, 0.0
        %v6135 = vmax.f32 %v4945, 0.0
        %v6136 = vmax.f32 %v2488, 0.0
        %v6137 = vmax.f32 %v2490, 0.0
        %v6138 = vmax.f32 %v3801, 0.0
        %v6139 = vmax.f32 %v3803, 0.0
        %v6140 = vmax.f32 %v4950, 0.0
        %v6141 = vmax.f32 %v2492, 0.0
        %v6142 = vmax.f32 %v2494, 0.0
        %v6143 = vmax.f32 %v3805, 0.0
        %v6144 = vmax.f32 %v3807, 0.0
        %v6145 = vmax.f32 %v4953, 0.0
        %v6146 = vmax.f32 %v2498, 0.0
        %v6147 = vmax.f32 %v2500, 0.0
        %v6148 = vmax.f32 %v3811, 0.0
        %v6149 = vmax.f32 %v3813, 0.0
        %v6150 = vmax.f32 %v4958, 0.0
        %v6151 = vmax.f32 %v2502, 0.0
        %v6152 = vmax.f32 %v2504, 0.0
        %v6153 = vmax.f32 %v3815, 0.0
        %v6154 = vmax.f32 %v3817, 0.0
        %v6155 = vmax.f32 %v4961, 0.0
        %v6156 = vmax.f32 %v2508, 0.0
        %v6157 = vmax.f32 %v2510, 0.0
        %v6158 = vmax.f32 %v3821, 0.0
        %v6159 = vmax.f32 %v3823, 0.0
        %v6160 = vmax.f32 %v4966, 0.0
        %v6161 = vmax.f32 %v2512, 0.0
        %v6162 = vmax.f32 %v2514, 0.0
        %v6163 = vmax.f32 %v3825, 0.0
        %v6164 = vmax.f32 %v3827, 0.0
        %v6165 = vmax.f32 %v4969, 0.0
        %v6166 = vmax.f32 %v2518, 0.0
        %v6167 = vmax.f32 %v2520, 0.0
        %v6168 = vmax.f32 %v3831, 0.0
        %v6169 = vmax.f32 %v3833, 0.0
        %v6170 = vmax.f32 %v4974, 0.0
        %v6171 = vmax.f32 %v2522, 0.0
        %v6172 = vmax.f32 %v2524, 0.0
        %v6173 = vmax.f32 %v3835, 0.0
        %v6174 = vmax.f32 %v3837, 0.0
        %v6175 = vmax.f32 %v4977, 0.0
        %v6176 = vmax.f32 %v2528, 0.0
        %v6177 = vmax.f32 %v2530, 0.0
        %v6178 = vmax.f32 %v3841, 0.0
        %v6179 = vmax.f32 %v3843, 0.0
        %v6180 = vmax.f32 %v4982, 0.0
        %v6181 = vmax.f32 %v2532, 0.0
        %v6182 = vmax.f32 %v2534, 0.0
        %v6183 = vmax.f32 %v3845, 0.0
        %v6184 = vmax.f32 %v3847, 0.0
        %v6185 = vmax.f32 %v4985, 0.0
        %v6186 = vmax.f32 %v2538, 0.0
        %v6187 = vmax.f32 %v2540, 0.0
        %v6188 = vmax.f32 %v3851, 0.0
        %v6189 = vmax.f32 %v3853, 0.0
        %v6190 = vmax.f32 %v4990, 0.0
        %v6191 = vmax.f32 %v2542, 0.0
        %v6192 = vmax.f32 %v2544, 0.0
        %v6193 = vmax.f32 %v3855, 0.0
        %v6194 = vmax.f32 %v3857, 0.0
        %v6195 = vmax.f32 %v4993, 0.0
        %v6196 = vmax.f32 %v2548, 0.0
        %v6197 = vmax.f32 %v2550, 0.0
        %v6198 = vmax.f32 %v3861, 0.0
        %v6199 = vmax.f32 %v3863, 0.0
        %v6200 = vmax.f32 %v4998, 0.0
        %v6201 = vmax.f32 %v2552, 0.0
        %v6202 = vmax.f32 %v2554, 0.0
        %v6203 = vmax.f32 %v3865, 0.0
        %v6204 = vmax.f32 %v3867, 0.0
        %v6205 = vmax.f32 %v5001, 0.0
        %v6206 = vmax.f32 %v2558, 0.0
        %v6207 = vmax.f32 %v2560, 0.0
        %v6208 = vmax.f32 %v3871, 0.0
        %v6209 = vmax.f32 %v3873, 0.0
        %v6210 = vmax.f32 %v5006, 0.0
        %v6211 = vmax.f32 %v2562, 0.0
        %v6212 = vmax.f32 %v2564, 0.0
        %v6213 = vmax.f32 %v3875, 0.0
        %v6214 = vmax.f32 %v3877, 0.0
        %v6215 = vmax.f32 %v5009, 0.0
        %v6216 = vmax.f32 %v2568, 0.0
        %v6217 = vmax.f32 %v2570, 0.0
        %v6218 = vmax.f32 %v3881, 0.0
        %v6219 = vmax.f32 %v3883, 0.0
        %v6220 = vmax.f32 %v5014, 0.0
        %v6221 = vmax.f32 %v2572, 0.0
        %v6222 = vmax.f32 %v2574, 0.0
        %v6223 = vmax.f32 %v3885, 0.0
        %v6224 = vmax.f32 %v3887, 0.0
        %v6225 = vmax.f32 %v5017, 0.0
        %v6226 = vmax.f32 %v2578, 0.0
        %v6227 = vmax.f32 %v2580, 0.0
        %v6228 = vmax.f32 %v3891, 0.0
        %v6229 = vmax.f32 %v3893, 0.0
        %v6230 = vmax.f32 %v5022, 0.0
        %v6231 = vmax.f32 %v2582, 0.0
        %v6232 = vmax.f32 %v2584, 0.0
        %v6233 = vmax.f32 %v3895, 0.0
        %v6234 = vmax.f32 %v3897, 0.0
        %v6235 = vmax.f32 %v5025, 0.0
        %v6236 = vmax.f32 %v2588, 0.0
        %v6237 = vmax.f32 %v2590, 0.0
        %v6238 = vmax.f32 %v3901, 0.0
        %v6239 = vmax.f32 %v3903, 0.0
        %v6240 = vmax.f32 %v5030, 0.0
        %v6241 = vmax.f32 %v2592, 0.0
        %v6242 = vmax.f32 %v2594, 0.0
        %v6243 = vmax.f32 %v3905, 0.0
        %v6244 = vmax.f32 %v3907, 0.0
        %v6245 = vmax.f32 %v5033, 0.0
        %v6246 = vmax.f32 %v2598, 0.0
        %v6247 = vmax.f32 %v2600, 0.0
        %v6248 = vmax.f32 %v3911, 0.0
        %v6249 = vmax.f32 %v3913, 0.0
        %v6250 = vmax.f32 %v5038, 0.0
        %v6251 = vmax.f32 %v2602, 0.0
        %v6252 = vmax.f32 %v2604, 0.0
        %v6253 = vmax.f32 %v3915, 0.0
        %v6254 = vmax.f32 %v3917, 0.0
        %v6255 = vmax.f32 %v5041, 0.0
        %v6256 = vmax.f32 %v2608, 0.0
        %v6257 = vmax.f32 %v2610, 0.0
        %v6258 = vmax.f32 %v3921, 0.0
        %v6259 = vmax.f32 %v3923, 0.0
        %v6260 = vmax.f32 %v5046, 0.0
        %v6261 = vmax.f32 %v2612, 0.0
        %v6262 = vmax.f32 %v2614, 0.0
        %v6263 = vmax.f32 %v3925, 0.0
        %v6264 = vmax.f32 %v3927, 0.0
        %v6265 = vmax.f32 %v5049, 0.0
        %v6266 = vmax.f32 %v2618, 0.0
        %v6267 = vmax.f32 %v2620, 0.0
        %v6268 = vmax.f32 %v3931, 0.0
        %v6269 = vmax.f32 %v3933, 0.0
        %v6270 = vmax.f32 %v5054, 0.0
        %v6271 = vmax.f32 %v2622, 0.0
        %v6272 = vmax.f32 %v2624, 0.0
        %v6273 = vmax.f32 %v3935, 0.0
        %v6274 = vmax.f32 %v3937, 0.0
        %v6275 = vmax.f32 %v5057, 0.0
        %v6276 = vmax.f32 %v2628, 0.0
        %v6277 = vmax.f32 %v2630, 0.0
        %v6278 = vmax.f32 %v3941, 0.0
        %v6279 = vmax.f32 %v3943, 0.0
        %v6280 = vmax.f32 %v5062, 0.0
        %v6281 = vmax.f32 %v2632, 0.0
        %v6282 = vmax.f32 %v2634, 0.0
        %v6283 = vmax.f32 %v3945, 0.0
        %v6284 = vmax.f32 %v3947, 0.0
        %v6285 = vmax.f32 %v5065, 0.0
        %v6286 = vmax.f32 %v2638, 0.0
        %v6287 = vmax.f32 %v2640, 0.0
        %v6288 = vmax.f32 %v3951, 0.0
        %v6289 = vmax.f32 %v3953, 0.0
        %v6290 = vmax.f32 %v5070, 0.0
        %v6291 = vmax.f32 %v2642, 0.0
        %v6292 = vmax.f32 %v2644, 0.0
        %v6293 = vmax.f32 %v3955, 0.0
        %v6294 = vmax.f32 %v3957, 0.0
        %v6295 = vmax.f32 %v5073, 0.0
        %v6296 = vmax.f32 %v2648, 0.0
        %v6297 = vmax.f32 %v2650, 0.0
        %v6298 = vmax.f32 %v3961, 0.0
        %v6299 = vmax.f32 %v3963, 0.0
        %v6300 = vmax.f32 %v5078, 0.0
        %v6301 = vmax.f32 %v2652, 0.0
        %v6302 = vmax.f32 %v2654, 0.0
        %v6303 = vmax.f32 %v3965, 0.0
        %v6304 = vmax.f32 %v3967, 0.0
        %v6305 = vmax.f32 %v5081, 0.0
        %v6306 = vmax.f32 %v2658, 0.0
        %v6307 = vmax.f32 %v2660, 0.0
        %v6308 = vmax.f32 %v3971, 0.0
        %v6309 = vmax.f32 %v3973, 0.0
        %v6310 = vmax.f32 %v5086, 0.0
        %v6311 = vmax.f32 %v2662, 0.0
        %v6312 = vmax.f32 %v2664, 0.0
        %v6313 = vmax.f32 %v3975, 0.0
        %v6314 = vmax.f32 %v3977, 0.0
        %v6315 = vmax.f32 %v5089, 0.0
        %v6316 = vmax.f32 %v2668, 0.0
        %v6317 = vmax.f32 %v2670, 0.0
        %v6318 = vmax.f32 %v3981, 0.0
        %v6319 = vmax.f32 %v3983, 0.0
        %v6320 = vmax.f32 %v5094, 0.0
        %v6321 = vmax.f32 %v2672, 0.0
        %v6322 = vmax.f32 %v2674, 0.0
        %v6323 = vmax.f32 %v3985, 0.0
        %v6324 = vmax.f32 %v3987, 0.0
        %v6325 = vmax.f32 %v5097, 0.0
        %v6326 = vmax.f32 %v2678, 0.0
        %v6327 = vmax.f32 %v2680, 0.0
        %v6328 = vmax.f32 %v3991, 0.0
        %v6329 = vmax.f32 %v3993, 0.0
        %v6330 = vmax.f32 %v5102, 0.0
        %v6331 = vmax.f32 %v2682, 0.0
        %v6332 = vmax.f32 %v2684, 0.0
        %v6333 = vmax.f32 %v3995, 0.0
        %v6334 = vmax.f32 %v3997, 0.0
        %v6335 = vmax.f32 %v5105, 0.0
        %v6336 = vmax.f32 %v2688, 0.0
        %v6337 = vmax.f32 %v2690, 0.0
        %v6338 = vmax.f32 %v4001, 0.0
        %v6339 = vmax.f32 %v4003, 0.0
        %v6340 = vmax.f32 %v5110, 0.0
        %v6341 = vmax.f32 %v2692, 0.0
        %v6342 = vmax.f32 %v2694, 0.0
        %v6343 = vmax.f32 %v4005, 0.0
        %v6344 = vmax.f32 %v4007, 0.0
        %v6345 = vmax.f32 %v5113, 0.0
        %v6346 = vmax.f32 %v2698, 0.0
        %v6347 = vmax.f32 %v2700, 0.0
        %v6348 = vmax.f32 %v4011, 0.0
        %v6349 = vmax.f32 %v4013, 0.0
        %v6350 = vmax.f32 %v5118, 0.0
        %v6351 = vmax.f32 %v2702, 0.0
        %v6352 = vmax.f32 %v2704, 0.0
        %v6353 = vmax.f32 %v4015, 0.0
        %v6354 = vmax.f32 %v4017, 0.0
        %v6355 = vmax.f32 %v5121, 0.0
        %v6356 = vmax.f32 %v2708, 0.0
        %v6357 = vmax.f32 %v2710, 0.0
        %v6358 = vmax.f32 %v4021, 0.0
        %v6359 = vmax.f32 %v4023, 0.0
        %v6360 = vmax.f32 %v5126, 0.0
        %v6361 = vmax.f32 %v2712, 0.0
        %v6362 = vmax.f32 %v2714, 0.0
        %v6363 = vmax.f32 %v4025, 0.0
        %v6364 = vmax.f32 %v4027, 0.0
        %v6365 = vmax.f32 %v5129, 0.0
        %v6366 = vmax.f32 %v2718, 0.0
        %v6367 = vmax.f32 %v2720, 0.0
        %v6368 = vmax.f32 %v4031, 0.0
        %v6369 = vmax.f32 %v4033, 0.0
        %v6370 = vmax.f32 %v5134, 0.0
        %v6371 = vmax.f32 %v2722, 0.0
        %v6372 = vmax.f32 %v2724, 0.0
        %v6373 = vmax.f32 %v4035, 0.0
        %v6374 = vmax.f32 %v4037, 0.0
        %v6375 = vmax.f32 %v5137, 0.0
        %v6376 = vmax.f32 %v2728, 0.0
        %v6377 = vmax.f32 %v2730, 0.0
        %v6378 = vmax.f32 %v4041, 0.0
        %v6379 = vmax.f32 %v4043, 0.0
        %v6380 = vmax.f32 %v5142, 0.0
        %v6381 = vmax.f32 %v2732, 0.0
        %v6382 = vmax.f32 %v2734, 0.0
        %v6383 = vmax.f32 %v4045, 0.0
        %v6384 = vmax.f32 %v4047, 0.0
        %v6385 = vmax.f32 %v5145, 0.0
        %v6386 = vmax.f32 %v2738, 0.0
        %v6387 = vmax.f32 %v2740, 0.0
        %v6388 = vmax.f32 %v4051, 0.0
        %v6389 = vmax.f32 %v4053, 0.0
        %v6390 = vmax.f32 %v5150, 0.0
        %v6391 = vmax.f32 %v2742, 0.0
        %v6392 = vmax.f32 %v2744, 0.0
        %v6393 = vmax.f32 %v4055, 0.0
        %v6394 = vmax.f32 %v4057, 0.0
        %v6395 = vmax.f32 %v5153, 0.0
        %v6396 = vmax.f32 %v2748, 0.0
        %v6397 = vmax.f32 %v2750, 0.0
        %v6398 = vmax.f32 %v4061, 0.0
        %v6399 = vmax.f32 %v4063, 0.0
        %v6400 = vmax.f32 %v5158, 0.0
        %v6401 = vmax.f32 %v2752, 0.0
        %v6402 = vmax.f32 %v2754, 0.0
        %v6403 = vmax.f32 %v4065, 0.0
        %v6404 = vmax.f32 %v4067, 0.0
        %v6405 = vmax.f32 %v5161, 0.0
        %v6406 = vmax.f32 %v2758, 0.0
        %v6407 = vmax.f32 %v2760, 0.0
        %v6408 = vmax.f32 %v4071, 0.0
        %v6409 = vmax.f32 %v4073, 0.0
        %v6410 = vmax.f32 %v5166, 0.0
        %v6411 = vmax.f32 %v2762, 0.0
        %v6412 = vmax.f32 %v2764, 0.0
        %v6413 = vmax.f32 %v4075, 0.0
        %v6414 = vmax.f32 %v4077, 0.0
        %v6415 = vmax.f32 %v5169, 0.0
        %v6416 = vmax.f32 %v2768, 0.0
        %v6417 = vmax.f32 %v2770, 0.0
        %v6418 = vmax.f32 %v4081, 0.0
        %v6419 = vmax.f32 %v4083, 0.0
        %v6420 = vmax.f32 %v5174, 0.0
        %v6421 = vmax.f32 %v2772, 0.0
        %v6422 = vmax.f32 %v2774, 0.0
        %v6423 = vmax.f32 %v4085, 0.0
        %v6424 = vmax.f32 %v4087, 0.0
        %v6425 = vmax.f32 %v5177, 0.0
        %v6426 = vmax.f32 %v2778, 0.0
        %v6427 = vmax.f32 %v2780, 0.0
        %v6428 = vmax.f32 %v4091, 0.0
        %v6429 = vmax.f32 %v4093, 0.0
        %v6430 = vmax.f32 %v5182, 0.0
        %v6431 = vmax.f32 %v2782, 0.0
        %v6432 = vmax.f32 %v2784, 0.0
        %v6433 = vmax.f32 %v4095, 0.0
        %v6434 = vmax.f32 %v4097, 0.0
        %v6435 = vmax.f32 %v5185, 0.0
        %v6436 = vmax.f32 %v2788, 0.0
        %v6437 = vmax.f32 %v2790, 0.0
        %v6438 = vmax.f32 %v4101, 0.0
        %v6439 = vmax.f32 %v4103, 0.0
        %v6440 = vmax.f32 %v5190, 0.0
        %v6441 = vmax.f32 %v2792, 0.0
        %v6442 = vmax.f32 %v2794, 0.0
        %v6443 = vmax.f32 %v4105, 0.0
        %v6444 = vmax.f32 %v4107, 0.0
        %v6445 = vmax.f32 %v5193, 0.0
        %v6446 = vmax.f32 %v2798, 0.0
        %v6447 = vmax.f32 %v2800, 0.0
        %v6448 = vmax.f32 %v4111, 0.0
        %v6449 = vmax.f32 %v4113, 0.0
        %v6450 = vmax.f32 %v5198, 0.0
        %v6451 = vmax.f32 %v2802, 0.0
        %v6452 = vmax.f32 %v2804, 0.0
        %v6453 = vmax.f32 %v4115, 0.0
        %v6454 = vmax.f32 %v4117, 0.0
        %v6455 = vmax.f32 %v5201, 0.0
        %v6456 = vmax.f32 %v2808, 0.0
        %v6457 = vmax.f32 %v2810, 0.0
        %v6458 = vmax.f32 %v4121, 0.0
        %v6459 = vmax.f32 %v4123, 0.0
        %v6460 = vmax.f32 %v5206, 0.0
        %v6461 = vmax.f32 %v2812, 0.0
        %v6462 = vmax.f32 %v2814, 0.0
        %v6463 = vmax.f32 %v4125, 0.0
        %v6464 = vmax.f32 %v4127, 0.0
        %v6465 = vmax.f32 %v5209, 0.0
        %v6466 = vmax.f32 %v2818, 0.0
        %v6467 = vmax.f32 %v2820, 0.0
        %v6468 = vmax.f32 %v4131, 0.0
        %v6469 = vmax.f32 %v4133, 0.0
        %v6470 = vmax.f32 %v5214, 0.0
        %v6471 = vmax.f32 %v2822, 0.0
        %v6472 = vmax.f32 %v2824, 0.0
        %v6473 = vmax.f32 %v4135, 0.0
        %v6474 = vmax.f32 %v4137, 0.0
        %v6475 = vmax.f32 %v5217, 0.0
        %v6476 = vmax.f32 %v2828, 0.0
        %v6477 = vmax.f32 %v2830, 0.0
        %v6478 = vmax.f32 %v4141, 0.0
        %v6479 = vmax.f32 %v4143, 0.0
        %v6480 = vmax.f32 %v5222, 0.0
        %v6481 = vmax.f32 %v2832, 0.0
        %v6482 = vmax.f32 %v2834, 0.0
        %v6483 = vmax.f32 %v4145, 0.0
        %v6484 = vmax.f32 %v4147, 0.0
        %v6485 = vmax.f32 %v5225, 0.0
        %v6486 = vmax.f32 %v2838, 0.0
        %v6487 = vmax.f32 %v2840, 0.0
        %v6488 = vmax.f32 %v4151, 0.0
        %v6489 = vmax.f32 %v4153, 0.0
        %v6490 = vmax.f32 %v5230, 0.0
        %v6491 = vmax.f32 %v2842, 0.0
        %v6492 = vmax.f32 %v2844, 0.0
        %v6493 = vmax.f32 %v4155, 0.0
        %v6494 = vmax.f32 %v4157, 0.0
        %v6495 = vmax.f32 %v5233, 0.0
        %v6496 = vmax.f32 %v2848, 0.0
        %v6497 = vmax.f32 %v2850, 0.0
        %v6498 = vmax.f32 %v4161, 0.0
        %v6499 = vmax.f32 %v4163, 0.0
        %v6500 = vmax.f32 %v5238, 0.0
        %v6501 = vmax.f32 %v2852, 0.0
        %v6502 = vmax.f32 %v2854, 0.0
        %v6503 = vmax.f32 %v4165, 0.0
        %v6504 = vmax.f32 %v4167, 0.0
        %v6505 = vmax.f32 %v5241, 0.0
        %v6506 = vmax.f32 %v2858, 0.0
        %v6507 = vmax.f32 %v2860, 0.0
        %v6508 = vmax.f32 %v4171, 0.0
        %v6509 = vmax.f32 %v4173, 0.0
        %v6510 = vmax.f32 %v5246, 0.0
        %v6511 = vmax.f32 %v2862, 0.0
        %v6512 = vmax.f32 %v2864, 0.0
        %v6513 = vmax.f32 %v4175, 0.0
        %v6514 = vmax.f32 %v4177, 0.0
        %v6515 = vmax.f32 %v5249, 0.0
        %v6516 = vmax.f32 %v2868, 0.0
        %v6517 = vmax.f32 %v2870, 0.0
        %v6518 = vmax.f32 %v4181, 0.0
        %v6519 = vmax.f32 %v4183, 0.0
        %v6520 = vmax.f32 %v5254, 0.0
        %v6521 = vmax.f32 %v2872, 0.0
        %v6522 = vmax.f32 %v2874, 0.0
        %v6523 = vmax.f32 %v4185, 0.0
        %v6524 = vmax.f32 %v4187, 0.0
        %v6525 = vmax.f32 %v5257, 0.0
        %v6526 = vmax.f32 %v2878, 0.0
        %v6527 = vmax.f32 %v2880, 0.0
        %v6528 = vmax.f32 %v4191, 0.0
        %v6529 = vmax.f32 %v4193, 0.0
        %v6530 = vmax.f32 %v5262, 0.0
        %v6531 = vmax.f32 %v2882, 0.0
        %v6532 = vmax.f32 %v2884, 0.0
        %v6533 = vmax.f32 %v4195, 0.0
        %v6534 = vmax.f32 %v4197, 0.0
        %v6535 = vmax.f32 %v5265, 0.0
        %v6536 = vmax.f32 %v2888, 0.0
        %v6537 = vmax.f32 %v2890, 0.0
        %v6538 = vmax.f32 %v4201, 0.0
        %v6539 = vmax.f32 %v4203, 0.0
        %v6540 = vmax.f32 %v5270, 0.0
        %v6541 = vmax.f32 %v2892, 0.0
        %v6542 = vmax.f32 %v2894, 0.0
        %v6543 = vmax.f32 %v4205, 0.0
        %v6544 = vmax.f32 %v4207, 0.0
        %v6545 = vmax.f32 %v5273, 0.0
        %v6546 = vmax.f32 %v2898, 0.0
        %v6547 = vmax.f32 %v2900, 0.0
        %v6548 = vmax.f32 %v4211, 0.0
        %v6549 = vmax.f32 %v4213, 0.0
        %v6550 = vmax.f32 %v5278, 0.0
        %v6551 = vmax.f32 %v2902, 0.0
        %v6552 = vmax.f32 %v2904, 0.0
        %v6553 = vmax.f32 %v4215, 0.0
        %v6554 = vmax.f32 %v4217, 0.0
        %v6555 = vmax.f32 %v5281, 0.0
        %v6556 = vmax.f32 %v2908, 0.0
        %v6557 = vmax.f32 %v2910, 0.0
        %v6558 = vmax.f32 %v4221, 0.0
        %v6559 = vmax.f32 %v4223, 0.0
        %v6560 = vmax.f32 %v5286, 0.0
        %v6561 = vmax.f32 %v2912, 0.0
        %v6562 = vmax.f32 %v2914, 0.0
        %v6563 = vmax.f32 %v4225, 0.0
        %v6564 = vmax.f32 %v4227, 0.0
        %v6565 = vmax.f32 %v5289, 0.0
        %v6566 = vmax.f32 %v2918, 0.0
        %v6567 = vmax.f32 %v2920, 0.0
        %v6568 = vmax.f32 %v4231, 0.0
        %v6569 = vmax.f32 %v4233, 0.0
        %v6570 = vmax.f32 %v5294, 0.0
        %v6571 = vmax.f32 %v2922, 0.0
        %v6572 = vmax.f32 %v2924, 0.0
        %v6573 = vmax.f32 %v4235, 0.0
        %v6574 = vmax.f32 %v4237, 0.0
        %v6575 = vmax.f32 %v5297, 0.0
        %v6576 = vmax.f32 %v2928, 0.0
        %v6577 = vmax.f32 %v2930, 0.0
        %v6578 = vmax.f32 %v4241, 0.0
        %v6579 = vmax.f32 %v4243, 0.0
        %v6580 = vmax.f32 %v5302, 0.0
        %v6581 = vmax.f32 %v2932, 0.0
        %v6582 = vmax.f32 %v2934, 0.0
        %v6583 = vmax.f32 %v4245, 0.0
        %v6584 = vmax.f32 %v4247, 0.0
        %v6585 = vmax.f32 %v5305, 0.0
        %v6586 = vmax.f32 %v2938, 0.0
        %v6587 = vmax.f32 %v2940, 0.0
        %v6588 = vmax.f32 %v4251, 0.0
        %v6589 = vmax.f32 %v4253, 0.0
        %v6590 = vmax.f32 %v5310, 0.0
        %v6591 = vmax.f32 %v2942, 0.0
        %v6592 = vmax.f32 %v2944, 0.0
        %v6593 = vmax.f32 %v4255, 0.0
        %v6594 = vmax.f32 %v4257, 0.0
        %v6595 = vmax.f32 %v5313, 0.0
        %v6596 = vld [vmem:[#allocation2] sm:$0xff]
        %v6597 = vld [vmem:[#allocation2 + $0x8] sm:$0xff]
        %v6598 = vld [vmem:[#allocation2 + $0x10] sm:$0xff]
        %v6599 = vld [vmem:[#allocation2 + $0x18] sm:$0xff]
        %v6600 = vld [vmem:[#allocation2 + $0x20] sm:$0xff]
        %v6601 = vadd.f32 %v5316, %v5321
        %v6602 = vadd.f32 %v6601, %v5326
        %v6603 = vadd.f32 %v6602, %v5331
        %v6604 = vadd.f32 %v6603, %v5336
        %v6605 = vadd.f32 %v6604, %v5341
        %v6606 = vadd.f32 %v6605, %v5346
        %v6607 = vadd.f32 %v6606, %v5351
        %v6608 = vadd.f32 %v6607, %v5356
        %v6609 = vadd.f32 %v6608, %v5361
        %v6610 = vadd.f32 %v6609, %v5366
        %v6611 = vadd.f32 %v6610, %v5371
        %v6612 = vadd.f32 %v6611, %v5376
        %v6613 = vadd.f32 %v6612, %v5381
        %v6614 = vadd.f32 %v6613, %v5386
        %v6615 = vadd.f32 %v6614, %v5391
        %v6616 = vadd.f32 %v6615, %v5396
        %v6617 = vadd.f32 %v6616, %v5401
        %v6618 = vadd.f32 %v6617, %v5406
        %v6619 = vadd.f32 %v6618, %v5411
        %v6620 = vadd.f32 %v6619, %v5416
        %v6621 = vadd.f32 %v6620, %v5421
        %v6622 = vadd.f32 %v6621, %v5426
        %v6623 = vadd.f32 %v6622, %v5431
        %v6624 = vadd.f32 %v6623, %v5436
        %v6625 = vadd.f32 %v6624, %v5441
        %v6626 = vadd.f32 %v6625, %v5446
        %v6627 = vadd.f32 %v6626, %v5451
        %v6628 = vadd.f32 %v6627, %v5456
        %v6629 = vadd.f32 %v6628, %v5461
        %v6630 = vadd.f32 %v6629, %v5466
        %v6631 = vadd.f32 %v6630, %v5471
        %v6632 = vrot.slane %v6631, 4
        %v6633 = vadd.f32 %v6631, %v6632
        %v6634 = vrot.slane %v6633, 2
        %v6635 = vadd.f32 %v6633, %v6634
        %v6636 = vrot.slane %v6635, 1
        %v6637 = vadd.f32 %v6635, %v6636
        %v6638 = vadd.f32 %v5317, %v5322
        %v6639 = vadd.f32 %v6638, %v5327
        %v6640 = vadd.f32 %v6639, %v5332
        %v6641 = vadd.f32 %v6640, %v5337
        %v6642 = vadd.f32 %v6641, %v5342
        %v6643 = vadd.f32 %v6642, %v5347
        %v6644 = vadd.f32 %v6643, %v5352
        %v6645 = vadd.f32 %v6644, %v5357
        %v6646 = vadd.f32 %v6645, %v5362
        %v6647 = vadd.f32 %v6646, %v5367
        %v6648 = vadd.f32 %v6647, %v5372
        %v6649 = vadd.f32 %v6648, %v5377
        %v6650 = vadd.f32 %v6649, %v5382
        %v6651 = vadd.f32 %v6650, %v5387
        %v6652 = vadd.f32 %v6651, %v5392
        %v6653 = vadd.f32 %v6652, %v5397
        %v6654 = vadd.f32 %v6653, %v5402
        %v6655 = vadd.f32 %v6654, %v5407
        %v6656 = vadd.f32 %v6655, %v5412
        %v6657 = vadd.f32 %v6656, %v5417
        %v6658 = vadd.f32 %v6657, %v5422
        %v6659 = vadd.f32 %v6658, %v5427
        %v6660 = vadd.f32 %v6659, %v5432
        %v6661 = vadd.f32 %v6660, %v5437
        %v6662 = vadd.f32 %v6661, %v5442
        %v6663 = vadd.f32 %v6662, %v5447
        %v6664 = vadd.f32 %v6663, %v5452
        %v6665 = vadd.f32 %v6664, %v5457
        %v6666 = vadd.f32 %v6665, %v5462
        %v6667 = vadd.f32 %v6666, %v5467
        %v6668 = vadd.f32 %v6667, %v5472
        %v6669 = vrot.slane %v6668, 4
        %v6670 = vadd.f32 %v6668, %v6669
        %v6671 = vrot.slane %v6670, 2
        %v6672 = vadd.f32 %v6670, %v6671
        %v6673 = vrot.slane %v6672, 1
        %v6674 = vadd.f32 %v6672, %v6673
        %v6675 = vadd.f32 %v5318, %v5323
        %v6676 = vadd.f32 %v6675, %v5328
        %v6677 = vadd.f32 %v6676, %v5333
        %v6678 = vadd.f32 %v6677, %v5338
        %v6679 = vadd.f32 %v6678, %v5343
        %v6680 = vadd.f32 %v6679, %v5348
        %v6681 = vadd.f32 %v6680, %v5353
        %v6682 = vadd.f32 %v6681, %v5358
        %v6683 = vadd.f32 %v6682, %v5363
        %v6684 = vadd.f32 %v6683, %v5368
        %v6685 = vadd.f32 %v6684, %v5373
        %v6686 = vadd.f32 %v6685, %v5378
        %v6687 = vadd.f32 %v6686, %v5383
        %v6688 = vadd.f32 %v6687, %v5388
        %v6689 = vadd.f32 %v6688, %v5393
        %v6690 = vadd.f32 %v6689, %v5398
        %v6691 = vadd.f32 %v6690, %v5403
        %v6692 = vadd.f32 %v6691, %v5408
        %v6693 = vadd.f32 %v6692, %v5413
        %v6694 = vadd.f32 %v6693, %v5418
        %v6695 = vadd.f32 %v6694, %v5423
        %v6696 = vadd.f32 %v6695, %v5428
        %v6697 = vadd.f32 %v6696, %v5433
        %v6698 = vadd.f32 %v6697, %v5438
        %v6699 = vadd.f32 %v6698, %v5443
        %v6700 = vadd.f32 %v6699, %v5448
        %v6701 = vadd.f32 %v6700, %v5453
        %v6702 = vadd.f32 %v6701, %v5458
        %v6703 = vadd.f32 %v6702, %v5463
        %v6704 = vadd.f32 %v6703, %v5468
        %v6705 = vadd.f32 %v6704, %v5473
        %v6706 = vrot.slane %v6705, 4
        %v6707 = vadd.f32 %v6705, %v6706
        %v6708 = vrot.slane %v6707, 2
        %v6709 = vadd.f32 %v6707, %v6708
        %v6710 = vrot.slane %v6709, 1
        %v6711 = vadd.f32 %v6709, %v6710
        %v6712 = vadd.f32 %v5319, %v5324
        %v6713 = vadd.f32 %v6712, %v5329
        %v6714 = vadd.f32 %v6713, %v5334
        %v6715 = vadd.f32 %v6714, %v5339
        %v6716 = vadd.f32 %v6715, %v5344
        %v6717 = vadd.f32 %v6716, %v5349
        %v6718 = vadd.f32 %v6717, %v5354
        %v6719 = vadd.f32 %v6718, %v5359
        %v6720 = vadd.f32 %v6719, %v5364
        %v6721 = vadd.f32 %v6720, %v5369
        %v6722 = vadd.f32 %v6721, %v5374
        %v6723 = vadd.f32 %v6722, %v5379
        %v6724 = vadd.f32 %v6723, %v5384
        %v6725 = vadd.f32 %v6724, %v5389
        %v6726 = vadd.f32 %v6725, %v5394
        %v6727 = vadd.f32 %v6726, %v5399
        %v6728 = vadd.f32 %v6727, %v5404
        %v6729 = vadd.f32 %v6728, %v5409
        %v6730 = vadd.f32 %v6729, %v5414
        %v6731 = vadd.f32 %v6730, %v5419
        %v6732 = vadd.f32 %v6731, %v5424
        %v6733 = vadd.f32 %v6732, %v5429
        %v6734 = vadd.f32 %v6733, %v5434
        %v6735 = vadd.f32 %v6734, %v5439
        %v6736 = vadd.f32 %v6735, %v5444
        %v6737 = vadd.f32 %v6736, %v5449
        %v6738 = vadd.f32 %v6737, %v5454
        %v6739 = vadd.f32 %v6738, %v5459
        %v6740 = vadd.f32 %v6739, %v5464
        %v6741 = vadd.f32 %v6740, %v5469
        %v6742 = vadd.f32 %v6741, %v5474
        %v6743 = vrot.slane %v6742, 4
        %v6744 = vadd.f32 %v6742, %v6743
        %v6745 = vrot.slane %v6744, 2
        %v6746 = vadd.f32 %v6744, %v6745
        %v6747 = vrot.slane %v6746, 1
        %v6748 = vadd.f32 %v6746, %v6747
        %v6749 = vadd.f32 %v5320, %v5325
        %v6750 = vadd.f32 %v6749, %v5330
        %v6751 = vadd.f32 %v6750, %v5335
        %v6752 = vadd.f32 %v6751, %v5340
        %v6753 = vadd.f32 %v6752, %v5345
        %v6754 = vadd.f32 %v6753, %v5350
        %v6755 = vadd.f32 %v6754, %v5355
        %v6756 = vadd.f32 %v6755, %v5360
        %v6757 = vadd.f32 %v6756, %v5365
        %v6758 = vadd.f32 %v6757, %v5370
        %v6759 = vadd.f32 %v6758, %v5375
        %v6760 = vadd.f32 %v6759, %v5380
        %v6761 = vadd.f32 %v6760, %v5385
        %v6762 = vadd.f32 %v6761, %v5390
        %v6763 = vadd.f32 %v6762, %v5395
        %v6764 = vadd.f32 %v6763, %v5400
        %v6765 = vadd.f32 %v6764, %v5405
        %v6766 = vadd.f32 %v6765, %v5410
        %v6767 = vadd.f32 %v6766, %v5415
        %v6768 = vadd.f32 %v6767, %v5420
        %v6769 = vadd.f32 %v6768, %v5425
        %v6770 = vadd.f32 %v6769, %v5430
        %v6771 = vadd.f32 %v6770, %v5435
        %v6772 = vadd.f32 %v6771, %v5440
        %v6773 = vadd.f32 %v6772, %v5445
        %v6774 = vadd.f32 %v6773, %v5450
        %v6775 = vadd.f32 %v6774, %v5455
        %v6776 = vadd.f32 %v6775, %v5460
        %v6777 = vadd.f32 %v6776, %v5465
        %v6778 = vadd.f32 %v6777, %v5470
        %v6779 = vadd.f32 %v6778, %v5475
        %v6780 = vrot.slane %v6779, 4
        %v6781 = vadd.f32 %v6779, %v6780
        %v6782 = vrot.slane %v6781, 2
        %v6783 = vadd.f32 %v6781, %v6782
        %v6784 = vrot.slane %v6783, 1
        %v6785 = vadd.f32 %v6783, %v6784
        %v6786 = vadd.f32 %v5476, %v5481
        %v6787 = vadd.f32 %v6786, %v5486
        %v6788 = vadd.f32 %v6787, %v5491
        %v6789 = vadd.f32 %v6788, %v5496
        %v6790 = vadd.f32 %v6789, %v5501
        %v6791 = vadd.f32 %v6790, %v5506
        %v6792 = vadd.f32 %v6791, %v5511
        %v6793 = vadd.f32 %v6792, %v5516
        %v6794 = vadd.f32 %v6793, %v5521
        %v6795 = vadd.f32 %v6794, %v5526
        %v6796 = vadd.f32 %v6795, %v5531
        %v6797 = vadd.f32 %v6796, %v5536
        %v6798 = vadd.f32 %v6797, %v5541
        %v6799 = vadd.f32 %v6798, %v5546
        %v6800 = vadd.f32 %v6799, %v5551
        %v6801 = vadd.f32 %v6800, %v5556
        %v6802 = vadd.f32 %v6801, %v5561
        %v6803 = vadd.f32 %v6802, %v5566
        %v6804 = vadd.f32 %v6803, %v5571
        %v6805 = vadd.f32 %v6804, %v5576
        %v6806 = vadd.f32 %v6805, %v5581
        %v6807 = vadd.f32 %v6806, %v5586
        %v6808 = vadd.f32 %v6807, %v5591
        %v6809 = vadd.f32 %v6808, %v5596
        %v6810 = vadd.f32 %v6809, %v5601
        %v6811 = vadd.f32 %v6810, %v5606
        %v6812 = vadd.f32 %v6811, %v5611
        %v6813 = vadd.f32 %v6812, %v5616
        %v6814 = vadd.f32 %v6813, %v5621
        %v6815 = vadd.f32 %v6814, %v5626
        %v6816 = vadd.f32 %v6815, %v5631
        %v6817 = vrot.slane %v6816, 4
        %v6818 = vadd.f32 %v6816, %v6817
        %v6819 = vrot.slane %v6818, 2
        %v6820 = vadd.f32 %v6818, %v6819
        %v6821 = vrot.slane %v6820, 1
        %v6822 = vadd.f32 %v6820, %v6821
        %v6823 = vadd.f32 %v5477, %v5482
        %v6824 = vadd.f32 %v6823, %v5487
        %v6825 = vadd.f32 %v6824, %v5492
        %v6826 = vadd.f32 %v6825, %v5497
        %v6827 = vadd.f32 %v6826, %v5502
        %v6828 = vadd.f32 %v6827, %v5507
        %v6829 = vadd.f32 %v6828, %v5512
        %v6830 = vadd.f32 %v6829, %v5517
        %v6831 = vadd.f32 %v6830, %v5522
        %v6832 = vadd.f32 %v6831, %v5527
        %v6833 = vadd.f32 %v6832, %v5532
        %v6834 = vadd.f32 %v6833, %v5537
        %v6835 = vadd.f32 %v6834, %v5542
        %v6836 = vadd.f32 %v6835, %v5547
        %v6837 = vadd.f32 %v6836, %v5552
        %v6838 = vadd.f32 %v6837, %v5557
        %v6839 = vadd.f32 %v6838, %v5562
        %v6840 = vadd.f32 %v6839, %v5567
        %v6841 = vadd.f32 %v6840, %v5572
        %v6842 = vadd.f32 %v6841, %v5577
        %v6843 = vadd.f32 %v6842, %v5582
        %v6844 = vadd.f32 %v6843, %v5587
        %v6845 = vadd.f32 %v6844, %v5592
        %v6846 = vadd.f32 %v6845, %v5597
        %v6847 = vadd.f32 %v6846, %v5602
        %v6848 = vadd.f32 %v6847, %v5607
        %v6849 = vadd.f32 %v6848, %v5612
        %v6850 = vadd.f32 %v6849, %v5617
        %v6851 = vadd.f32 %v6850, %v5622
        %v6852 = vadd.f32 %v6851, %v5627
        %v6853 = vadd.f32 %v6852, %v5632
        %v6854 = vrot.slane %v6853, 4
        %v6855 = vadd.f32 %v6853, %v6854
        %v6856 = vrot.slane %v6855, 2
        %v6857 = vadd.f32 %v6855, %v6856
        %v6858 = vrot.slane %v6857, 1
        %v6859 = vadd.f32 %v6857, %v6858
        %v6860 = vadd.f32 %v5478, %v5483
        %v6861 = vadd.f32 %v6860, %v5488
        %v6862 = vadd.f32 %v6861, %v5493
        %v6863 = vadd.f32 %v6862, %v5498
        %v6864 = vadd.f32 %v6863, %v5503
        %v6865 = vadd.f32 %v6864, %v5508
        %v6866 = vadd.f32 %v6865, %v5513
        %v6867 = vadd.f32 %v6866, %v5518
        %v6868 = vadd.f32 %v6867, %v5523
        %v6869 = vadd.f32 %v6868, %v5528
        %v6870 = vadd.f32 %v6869, %v5533
        %v6871 = vadd.f32 %v6870, %v5538
        %v6872 = vadd.f32 %v6871, %v5543
        %v6873 = vadd.f32 %v6872, %v5548
        %v6874 = vadd.f32 %v6873, %v5553
        %v6875 = vadd.f32 %v6874, %v5558
        %v6876 = vadd.f32 %v6875, %v5563
        %v6877 = vadd.f32 %v6876, %v5568
        %v6878 = vadd.f32 %v6877, %v5573
        %v6879 = vadd.f32 %v6878, %v5578
        %v6880 = vadd.f32 %v6879, %v5583
        %v6881 = vadd.f32 %v6880, %v5588
        %v6882 = vadd.f32 %v6881, %v5593
        %v6883 = vadd.f32 %v6882, %v5598
        %v6884 = vadd.f32 %v6883, %v5603
        %v6885 = vadd.f32 %v6884, %v5608
        %v6886 = vadd.f32 %v6885, %v5613
        %v6887 = vadd.f32 %v6886, %v5618
        %v6888 = vadd.f32 %v6887, %v5623
        %v6889 = vadd.f32 %v6888, %v5628
        %v6890 = vadd.f32 %v6889, %v5633
        %v6891 = vrot.slane %v6890, 4
        %v6892 = vadd.f32 %v6890, %v6891
        %v6893 = vrot.slane %v6892, 2
        %v6894 = vadd.f32 %v6892, %v6893
        %v6895 = vrot.slane %v6894, 1
        %v6896 = vadd.f32 %v6894, %v6895
        %v6897 = vadd.f32 %v5479, %v5484
        %v6898 = vadd.f32 %v6897, %v5489
        %v6899 = vadd.f32 %v6898, %v5494
        %v6900 = vadd.f32 %v6899, %v5499
        %v6901 = vadd.f32 %v6900, %v5504
        %v6902 = vadd.f32 %v6901, %v5509
        %v6903 = vadd.f32 %v6902, %v5514
        %v6904 = vadd.f32 %v6903, %v5519
        %v6905 = vadd.f32 %v6904, %v5524
        %v6906 = vadd.f32 %v6905, %v5529
        %v6907 = vadd.f32 %v6906, %v5534
        %v6908 = vadd.f32 %v6907, %v5539
        %v6909 = vadd.f32 %v6908, %v5544
        %v6910 = vadd.f32 %v6909, %v5549
        %v6911 = vadd.f32 %v6910, %v5554
        %v6912 = vadd.f32 %v6911, %v5559
        %v6913 = vadd.f32 %v6912, %v5564
        %v6914 = vadd.f32 %v6913, %v5569
        %v6915 = vadd.f32 %v6914, %v5574
        %v6916 = vadd.f32 %v6915, %v5579
        %v6917 = vadd.f32 %v6916, %v5584
        %v6918 = vadd.f32 %v6917, %v5589
        %v6919 = vadd.f32 %v6918, %v5594
        %v6920 = vadd.f32 %v6919, %v5599
        %v6921 = vadd.f32 %v6920, %v5604
        %v6922 = vadd.f32 %v6921, %v5609
        %v6923 = vadd.f32 %v6922, %v5614
        %v6924 = vadd.f32 %v6923, %v5619
        %v6925 = vadd.f32 %v6924, %v5624
        %v6926 = vadd.f32 %v6925, %v5629
        %v6927 = vadd.f32 %v6926, %v5634
        %v6928 = vrot.slane %v6927, 4
        %v6929 = vadd.f32 %v6927, %v6928
        %v6930 = vrot.slane %v6929, 2
        %v6931 = vadd.f32 %v6929, %v6930
        %v6932 = vrot.slane %v6931, 1
        %v6933 = vadd.f32 %v6931, %v6932
        %v6934 = vadd.f32 %v5480, %v5485
        %v6935 = vadd.f32 %v6934, %v5490
        %v6936 = vadd.f32 %v6935, %v5495
        %v6937 = vadd.f32 %v6936, %v5500
        %v6938 = vadd.f32 %v6937, %v5505
        %v6939 = vadd.f32 %v6938, %v5510
        %v6940 = vadd.f32 %v6939, %v5515
        %v6941 = vadd.f32 %v6940, %v5520
        %v6942 = vadd.f32 %v6941, %v5525
        %v6943 = vadd.f32 %v6942, %v5530
        %v6944 = vadd.f32 %v6943, %v5535
        %v6945 = vadd.f32 %v6944, %v5540
        %v6946 = vadd.f32 %v6945, %v5545
        %v6947 = vadd.f32 %v6946, %v5550
        %v6948 = vadd.f32 %v6947, %v5555
        %v6949 = vadd.f32 %v6948, %v5560
        %v6950 = vadd.f32 %v6949, %v5565
        %v6951 = vadd.f32 %v6950, %v5570
        %v6952 = vadd.f32 %v6951, %v5575
        %v6953 = vadd.f32 %v6952, %v5580
        %v6954 = vadd.f32 %v6953, %v5585
        %v6955 = vadd.f32 %v6954, %v5590
        %v6956 = vadd.f32 %v6955, %v5595
        %v6957 = vadd.f32 %v6956, %v5600
        %v6958 = vadd.f32 %v6957, %v5605
        %v6959 = vadd.f32 %v6958, %v5610
        %v6960 = vadd.f32 %v6959, %v5615
        %v6961 = vadd.f32 %v6960, %v5620
        %v6962 = vadd.f32 %v6961, %v5625
        %v6963 = vadd.f32 %v6962, %v5630
        %v6964 = vadd.f32 %v6963, %v5635
        %v6965 = vrot.slane %v6964, 4
        %v6966 = vadd.f32 %v6964, %v6965
        %v6967 = vrot.slane %v6966, 2
        %v6968 = vadd.f32 %v6966, %v6967
        %v6969 = vrot.slane %v6968, 1
        %v6970 = vadd.f32 %v6968, %v6969
        %v6971 = vadd.f32 %v5636, %v5641
        %v6972 = vadd.f32 %v6971, %v5646
        %v6973 = vadd.f32 %v6972, %v5651
        %v6974 = vadd.f32 %v6973, %v5656
        %v6975 = vadd.f32 %v6974, %v5661
        %v6976 = vadd.f32 %v6975, %v5666
        %v6977 = vadd.f32 %v6976, %v5671
        %v6978 = vadd.f32 %v6977, %v5676
        %v6979 = vadd.f32 %v6978, %v5681
        %v6980 = vadd.f32 %v6979, %v5686
        %v6981 = vadd.f32 %v6980, %v5691
        %v6982 = vadd.f32 %v6981, %v5696
        %v6983 = vadd.f32 %v6982, %v5701
        %v6984 = vadd.f32 %v6983, %v5706
        %v6985 = vadd.f32 %v6984, %v5711
        %v6986 = vadd.f32 %v6985, %v5716
        %v6987 = vadd.f32 %v6986, %v5721
        %v6988 = vadd.f32 %v6987, %v5726
        %v6989 = vadd.f32 %v6988, %v5731
        %v6990 = vadd.f32 %v6989, %v5736
        %v6991 = vadd.f32 %v6990, %v5741
        %v6992 = vadd.f32 %v6991, %v5746
        %v6993 = vadd.f32 %v6992, %v5751
        %v6994 = vadd.f32 %v6993, %v5756
        %v6995 = vadd.f32 %v6994, %v5761
        %v6996 = vadd.f32 %v6995, %v5766
        %v6997 = vadd.f32 %v6996, %v5771
        %v6998 = vadd.f32 %v6997, %v5776
        %v6999 = vadd.f32 %v6998, %v5781
        %v7000 = vadd.f32 %v6999, %v5786
        %v7001 = vadd.f32 %v7000, %v5791
        %v7002 = vrot.slane %v7001, 4
        %v7003 = vadd.f32 %v7001, %v7002
        %v7004 = vrot.slane %v7003, 2
        %v7005 = vadd.f32 %v7003, %v7004
        %v7006 = vrot.slane %v7005, 1
        %v7007 = vadd.f32 %v7005, %v7006
        %v7008 = vadd.f32 %v5637, %v5642
        %v7009 = vadd.f32 %v7008, %v5647
        %v7010 = vadd.f32 %v7009, %v5652
        %v7011 = vadd.f32 %v7010, %v5657
        %v7012 = vadd.f32 %v7011, %v5662
        %v7013 = vadd.f32 %v7012, %v5667
        %v7014 = vadd.f32 %v7013, %v5672
        %v7015 = vadd.f32 %v7014, %v5677
        %v7016 = vadd.f32 %v7015, %v5682
        %v7017 = vadd.f32 %v7016, %v5687
        %v7018 = vadd.f32 %v7017, %v5692
        %v7019 = vadd.f32 %v7018, %v5697
        %v7020 = vadd.f32 %v7019, %v5702
        %v7021 = vadd.f32 %v7020, %v5707
        %v7022 = vadd.f32 %v7021, %v5712
        %v7023 = vadd.f32 %v7022, %v5717
        %v7024 = vadd.f32 %v7023, %v5722
        %v7025 = vadd.f32 %v7024, %v5727
        %v7026 = vadd.f32 %v7025, %v5732
        %v7027 = vadd.f32 %v7026, %v5737
        %v7028 = vadd.f32 %v7027, %v5742
        %v7029 = vadd.f32 %v7028, %v5747
        %v7030 = vadd.f32 %v7029, %v5752
        %v7031 = vadd.f32 %v7030, %v5757
        %v7032 = vadd.f32 %v7031, %v5762
        %v7033 = vadd.f32 %v7032, %v5767
        %v7034 = vadd.f32 %v7033, %v5772
        %v7035 = vadd.f32 %v7034, %v5777
        %v7036 = vadd.f32 %v7035, %v5782
        %v7037 = vadd.f32 %v7036, %v5787
        %v7038 = vadd.f32 %v7037, %v5792
        %v7039 = vrot.slane %v7038, 4
        %v7040 = vadd.f32 %v7038, %v7039
        %v7041 = vrot.slane %v7040, 2
        %v7042 = vadd.f32 %v7040, %v7041
        %v7043 = vrot.slane %v7042, 1
        %v7044 = vadd.f32 %v7042, %v7043
        %v7045 = vadd.f32 %v5638, %v5643
        %v7046 = vadd.f32 %v7045, %v5648
        %v7047 = vadd.f32 %v7046, %v5653
        %v7048 = vadd.f32 %v7047, %v5658
        %v7049 = vadd.f32 %v7048, %v5663
        %v7050 = vadd.f32 %v7049, %v5668
        %v7051 = vadd.f32 %v7050, %v5673
        %v7052 = vadd.f32 %v7051, %v5678
        %v7053 = vadd.f32 %v7052, %v5683
        %v7054 = vadd.f32 %v7053, %v5688
        %v7055 = vadd.f32 %v7054, %v5693
        %v7056 = vadd.f32 %v7055, %v5698
        %v7057 = vadd.f32 %v7056, %v5703
        %v7058 = vadd.f32 %v7057, %v5708
        %v7059 = vadd.f32 %v7058, %v5713
        %v7060 = vadd.f32 %v7059, %v5718
        %v7061 = vadd.f32 %v7060, %v5723
        %v7062 = vadd.f32 %v7061, %v5728
        %v7063 = vadd.f32 %v7062, %v5733
        %v7064 = vadd.f32 %v7063, %v5738
        %v7065 = vadd.f32 %v7064, %v5743
        %v7066 = vadd.f32 %v7065, %v5748
        %v7067 = vadd.f32 %v7066, %v5753
        %v7068 = vadd.f32 %v7067, %v5758
        %v7069 = vadd.f32 %v7068, %v5763
        %v7070 = vadd.f32 %v7069, %v5768
        %v7071 = vadd.f32 %v7070, %v5773
        %v7072 = vadd.f32 %v7071, %v5778
        %v7073 = vadd.f32 %v7072, %v5783
        %v7074 = vadd.f32 %v7073, %v5788
        %v7075 = vadd.f32 %v7074, %v5793
        %v7076 = vrot.slane %v7075, 4
        %v7077 = vadd.f32 %v7075, %v7076
        %v7078 = vrot.slane %v7077, 2
        %v7079 = vadd.f32 %v7077, %v7078
        %v7080 = vrot.slane %v7079, 1
        %v7081 = vadd.f32 %v7079, %v7080
        %v7082 = vadd.f32 %v5639, %v5644
        %v7083 = vadd.f32 %v7082, %v5649
        %v7084 = vadd.f32 %v7083, %v5654
        %v7085 = vadd.f32 %v7084, %v5659
        %v7086 = vadd.f32 %v7085, %v5664
        %v7087 = vadd.f32 %v7086, %v5669
        %v7088 = vadd.f32 %v7087, %v5674
        %v7089 = vadd.f32 %v7088, %v5679
        %v7090 = vadd.f32 %v7089, %v5684
        %v7091 = vadd.f32 %v7090, %v5689
        %v7092 = vadd.f32 %v7091, %v5694
        %v7093 = vadd.f32 %v7092, %v5699
        %v7094 = vadd.f32 %v7093, %v5704
        %v7095 = vadd.f32 %v7094, %v5709
        %v7096 = vadd.f32 %v7095, %v5714
        %v7097 = vadd.f32 %v7096, %v5719
        %v7098 = vadd.f32 %v7097, %v5724
        %v7099 = vadd.f32 %v7098, %v5729
        %v7100 = vadd.f32 %v7099, %v5734
        %v7101 = vadd.f32 %v7100, %v5739
        %v7102 = vadd.f32 %v7101, %v5744
        %v7103 = vadd.f32 %v7102, %v5749
        %v7104 = vadd.f32 %v7103, %v5754
        %v7105 = vadd.f32 %v7104, %v5759
        %v7106 = vadd.f32 %v7105, %v5764
        %v7107 = vadd.f32 %v7106, %v5769
        %v7108 = vadd.f32 %v7107, %v5774
        %v7109 = vadd.f32 %v7108, %v5779
        %v7110 = vadd.f32 %v7109, %v5784
        %v7111 = vadd.f32 %v7110, %v5789
        %v7112 = vadd.f32 %v7111, %v5794
        %v7113 = vrot.slane %v7112, 4
        %v7114 = vadd.f32 %v7112, %v7113
        %v7115 = vrot.slane %v7114, 2
        %v7116 = vadd.f32 %v7114, %v7115
        %v7117 = vrot.slane %v7116, 1
        %v7118 = vadd.f32 %v7116, %v7117
        %v7119 = vadd.f32 %v5640, %v5645
        %v7120 = vadd.f32 %v7119, %v5650
        %v7121 = vadd.f32 %v7120, %v5655
        %v7122 = vadd.f32 %v7121, %v5660
        %v7123 = vadd.f32 %v7122, %v5665
        %v7124 = vadd.f32 %v7123, %v5670
        %v7125 = vadd.f32 %v7124, %v5675
        %v7126 = vadd.f32 %v7125, %v5680
        %v7127 = vadd.f32 %v7126, %v5685
        %v7128 = vadd.f32 %v7127, %v5690
        %v7129 = vadd.f32 %v7128, %v5695
        %v7130 = vadd.f32 %v7129, %v5700
        %v7131 = vadd.f32 %v7130, %v5705
        %v7132 = vadd.f32 %v7131, %v5710
        %v7133 = vadd.f32 %v7132, %v5715
        %v7134 = vadd.f32 %v7133, %v5720
        %v7135 = vadd.f32 %v7134, %v5725
        %v7136 = vadd.f32 %v7135, %v5730
        %v7137 = vadd.f32 %v7136, %v5735
        %v7138 = vadd.f32 %v7137, %v5740
        %v7139 = vadd.f32 %v7138, %v5745
        %v7140 = vadd.f32 %v7139, %v5750
        %v7141 = vadd.f32 %v7140, %v5755
        %v7142 = vadd.f32 %v7141, %v5760
        %v7143 = vadd.f32 %v7142, %v5765
        %v7144 = vadd.f32 %v7143, %v5770
        %v7145 = vadd.f32 %v7144, %v5775
        %v7146 = vadd.f32 %v7145, %v5780
        %v7147 = vadd.f32 %v7146, %v5785
        %v7148 = vadd.f32 %v7147, %v5790
        %v7149 = vadd.f32 %v7148, %v5795
        %v7150 = vrot.slane %v7149, 4
        %v7151 = vadd.f32 %v7149, %v7150
        %v7152 = vrot.slane %v7151, 2
        %v7153 = vadd.f32 %v7151, %v7152
        %v7154 = vrot.slane %v7153, 1
        %v7155 = vadd.f32 %v7153, %v7154
        %v7156 = vadd.f32 %v5796, %v5801
        %v7157 = vadd.f32 %v7156, %v5806
        %v7158 = vadd.f32 %v7157, %v5811
        %v7159 = vadd.f32 %v7158, %v5816
        %v7160 = vadd.f32 %v7159, %v5821
        %v7161 = vadd.f32 %v7160, %v5826
        %v7162 = vadd.f32 %v7161, %v5831
        %v7163 = vadd.f32 %v7162, %v5836
        %v7164 = vadd.f32 %v7163, %v5841
        %v7165 = vadd.f32 %v7164, %v5846
        %v7166 = vadd.f32 %v7165, %v5851
        %v7167 = vadd.f32 %v7166, %v5856
        %v7168 = vadd.f32 %v7167, %v5861
        %v7169 = vadd.f32 %v7168, %v5866
        %v7170 = vadd.f32 %v7169, %v5871
        %v7171 = vadd.f32 %v7170, %v5876
        %v7172 = vadd.f32 %v7171, %v5881
        %v7173 = vadd.f32 %v7172, %v5886
        %v7174 = vadd.f32 %v7173, %v5891
        %v7175 = vadd.f32 %v7174, %v5896
        %v7176 = vadd.f32 %v7175, %v5901
        %v7177 = vadd.f32 %v7176, %v5906
        %v7178 = vadd.f32 %v7177, %v5911
        %v7179 = vadd.f32 %v7178, %v5916
        %v7180 = vadd.f32 %v7179, %v5921
        %v7181 = vadd.f32 %v7180, %v5926
        %v7182 = vadd.f32 %v7181, %v5931
        %v7183 = vadd.f32 %v7182, %v5936
        %v7184 = vadd.f32 %v7183, %v5941
        %v7185 = vadd.f32 %v7184, %v5946
        %v7186 = vadd.f32 %v7185, %v5951
        %v7187 = vrot.slane %v7186, 4
        %v7188 = vadd.f32 %v7186, %v7187
        %v7189 = vrot.slane %v7188, 2
        %v7190 = vadd.f32 %v7188, %v7189
        %v7191 = vrot.slane %v7190, 1
        %v7192 = vadd.f32 %v7190, %v7191
        %v7193 = vadd.f32 %v5797, %v5802
        %v7194 = vadd.f32 %v7193, %v5807
        %v7195 = vadd.f32 %v7194, %v5812
        %v7196 = vadd.f32 %v7195, %v5817
        %v7197 = vadd.f32 %v7196, %v5822
        %v7198 = vadd.f32 %v7197, %v5827
        %v7199 = vadd.f32 %v7198, %v5832
        %v7200 = vadd.f32 %v7199, %v5837
        %v7201 = vadd.f32 %v7200, %v5842
        %v7202 = vadd.f32 %v7201, %v5847
        %v7203 = vadd.f32 %v7202, %v5852
        %v7204 = vadd.f32 %v7203, %v5857
        %v7205 = vadd.f32 %v7204, %v5862
        %v7206 = vadd.f32 %v7205, %v5867
        %v7207 = vadd.f32 %v7206, %v5872
        %v7208 = vadd.f32 %v7207, %v5877
        %v7209 = vadd.f32 %v7208, %v5882
        %v7210 = vadd.f32 %v7209, %v5887
        %v7211 = vadd.f32 %v7210, %v5892
        %v7212 = vadd.f32 %v7211, %v5897
        %v7213 = vadd.f32 %v7212, %v5902
        %v7214 = vadd.f32 %v7213, %v5907
        %v7215 = vadd.f32 %v7214, %v5912
        %v7216 = vadd.f32 %v7215, %v5917
        %v7217 = vadd.f32 %v7216, %v5922
        %v7218 = vadd.f32 %v7217, %v5927
        %v7219 = vadd.f32 %v7218, %v5932
        %v7220 = vadd.f32 %v7219, %v5937
        %v7221 = vadd.f32 %v7220, %v5942
        %v7222 = vadd.f32 %v7221, %v5947
        %v7223 = vadd.f32 %v7222, %v5952
        %v7224 = vrot.slane %v7223, 4
        %v7225 = vadd.f32 %v7223, %v7224
        %v7226 = vrot.slane %v7225, 2
        %v7227 = vadd.f32 %v7225, %v7226
        %v7228 = vrot.slane %v7227, 1
        %v7229 = vadd.f32 %v7227, %v7228
        %v7230 = vadd.f32 %v5798, %v5803
        %v7231 = vadd.f32 %v7230, %v5808
        %v7232 = vadd.f32 %v7231, %v5813
        %v7233 = vadd.f32 %v7232, %v5818
        %v7234 = vadd.f32 %v7233, %v5823
        %v7235 = vadd.f32 %v7234, %v5828
        %v7236 = vadd.f32 %v7235, %v5833
        %v7237 = vadd.f32 %v7236, %v5838
        %v7238 = vadd.f32 %v7237, %v5843
        %v7239 = vadd.f32 %v7238, %v5848
        %v7240 = vadd.f32 %v7239, %v5853
        %v7241 = vadd.f32 %v7240, %v5858
        %v7242 = vadd.f32 %v7241, %v5863
        %v7243 = vadd.f32 %v7242, %v5868
        %v7244 = vadd.f32 %v7243, %v5873
        %v7245 = vadd.f32 %v7244, %v5878
        %v7246 = vadd.f32 %v7245, %v5883
        %v7247 = vadd.f32 %v7246, %v5888
        %v7248 = vadd.f32 %v7247, %v5893
        %v7249 = vadd.f32 %v7248, %v5898
        %v7250 = vadd.f32 %v7249, %v5903
        %v7251 = vadd.f32 %v7250, %v5908
        %v7252 = vadd.f32 %v7251, %v5913
        %v7253 = vadd.f32 %v7252, %v5918
        %v7254 = vadd.f32 %v7253, %v5923
        %v7255 = vadd.f32 %v7254, %v5928
        %v7256 = vadd.f32 %v7255, %v5933
        %v7257 = vadd.f32 %v7256, %v5938
        %v7258 = vadd.f32 %v7257, %v5943
        %v7259 = vadd.f32 %v7258, %v5948
        %v7260 = vadd.f32 %v7259, %v5953
        %v7261 = vrot.slane %v7260, 4
        %v7262 = vadd.f32 %v7260, %v7261
        %v7263 = vrot.slane %v7262, 2
        %v7264 = vadd.f32 %v7262, %v7263
        %v7265 = vrot.slane %v7264, 1
        %v7266 = vadd.f32 %v7264, %v7265
        %v7267 = vadd.f32 %v5799, %v5804
        %v7268 = vadd.f32 %v7267, %v5809
        %v7269 = vadd.f32 %v7268, %v5814
        %v7270 = vadd.f32 %v7269, %v5819
        %v7271 = vadd.f32 %v7270, %v5824
        %v7272 = vadd.f32 %v7271, %v5829
        %v7273 = vadd.f32 %v7272, %v5834
        %v7274 = vadd.f32 %v7273, %v5839
        %v7275 = vadd.f32 %v7274, %v5844
        %v7276 = vadd.f32 %v7275, %v5849
        %v7277 = vadd.f32 %v7276, %v5854
        %v7278 = vadd.f32 %v7277, %v5859
        %v7279 = vadd.f32 %v7278, %v5864
        %v7280 = vadd.f32 %v7279, %v5869
        %v7281 = vadd.f32 %v7280, %v5874
        %v7282 = vadd.f32 %v7281, %v5879
        %v7283 = vadd.f32 %v7282, %v5884
        %v7284 = vadd.f32 %v7283, %v5889
        %v7285 = vadd.f32 %v7284, %v5894
        %v7286 = vadd.f32 %v7285, %v5899
        %v7287 = vadd.f32 %v7286, %v5904
        %v7288 = vadd.f32 %v7287, %v5909
        %v7289 = vadd.f32 %v7288, %v5914
        %v7290 = vadd.f32 %v7289, %v5919
        %v7291 = vadd.f32 %v7290, %v5924
        %v7292 = vadd.f32 %v7291, %v5929
        %v7293 = vadd.f32 %v7292, %v5934
        %v7294 = vadd.f32 %v7293, %v5939
        %v7295 = vadd.f32 %v7294, %v5944
        %v7296 = vadd.f32 %v7295, %v5949
        %v7297 = vadd.f32 %v7296, %v5954
        %v7298 = vrot.slane %v7297, 4
        %v7299 = vadd.f32 %v7297, %v7298
        %v7300 = vrot.slane %v7299, 2
        %v7301 = vadd.f32 %v7299, %v7300
        %v7302 = vrot.slane %v7301, 1
        %v7303 = vadd.f32 %v7301, %v7302
        %v7304 = vadd.f32 %v5800, %v5805
        %v7305 = vadd.f32 %v7304, %v5810
        %v7306 = vadd.f32 %v7305, %v5815
        %v7307 = vadd.f32 %v7306, %v5820
        %v7308 = vadd.f32 %v7307, %v5825
        %v7309 = vadd.f32 %v7308, %v5830
        %v7310 = vadd.f32 %v7309, %v5835
        %v7311 = vadd.f32 %v7310, %v5840
        %v7312 = vadd.f32 %v7311, %v5845
        %v7313 = vadd.f32 %v7312, %v5850
        %v7314 = vadd.f32 %v7313, %v5855
        %v7315 = vadd.f32 %v7314, %v5860
        %v7316 = vadd.f32 %v7315, %v5865
        %v7317 = vadd.f32 %v7316, %v5870
        %v7318 = vadd.f32 %v7317, %v5875
        %v7319 = vadd.f32 %v7318, %v5880
        %v7320 = vadd.f32 %v7319, %v5885
        %v7321 = vadd.f32 %v7320, %v5890
        %v7322 = vadd.f32 %v7321, %v5895
        %v7323 = vadd.f32 %v7322, %v5900
        %v7324 = vadd.f32 %v7323, %v5905
        %v7325 = vadd.f32 %v7324, %v5910
        %v7326 = vadd.f32 %v7325, %v5915
        %v7327 = vadd.f32 %v7326, %v5920
        %v7328 = vadd.f32 %v7327, %v5925
        %v7329 = vadd.f32 %v7328, %v5930
        %v7330 = vadd.f32 %v7329, %v5935
        %v7331 = vadd.f32 %v7330, %v5940
        %v7332 = vadd.f32 %v7331, %v5945
        %v7333 = vadd.f32 %v7332, %v5950
        %v7334 = vadd.f32 %v7333, %v5955
        %v7335 = vrot.slane %v7334, 4
        %v7336 = vadd.f32 %v7334, %v7335
        %v7337 = vrot.slane %v7336, 2
        %v7338 = vadd.f32 %v7336, %v7337
        %v7339 = vrot.slane %v7338, 1
        %v7340 = vadd.f32 %v7338, %v7339
        %v7341 = vadd.f32 %v5956, %v5961
        %v7342 = vadd.f32 %v7341, %v5966
        %v7343 = vadd.f32 %v7342, %v5971
        %v7344 = vadd.f32 %v7343, %v5976
        %v7345 = vadd.f32 %v7344, %v5981
        %v7346 = vadd.f32 %v7345, %v5986
        %v7347 = vadd.f32 %v7346, %v5991
        %v7348 = vadd.f32 %v7347, %v5996
        %v7349 = vadd.f32 %v7348, %v6001
        %v7350 = vadd.f32 %v7349, %v6006
        %v7351 = vadd.f32 %v7350, %v6011
        %v7352 = vadd.f32 %v7351, %v6016
        %v7353 = vadd.f32 %v7352, %v6021
        %v7354 = vadd.f32 %v7353, %v6026
        %v7355 = vadd.f32 %v7354, %v6031
        %v7356 = vadd.f32 %v7355, %v6036
        %v7357 = vadd.f32 %v7356, %v6041
        %v7358 = vadd.f32 %v7357, %v6046
        %v7359 = vadd.f32 %v7358, %v6051
        %v7360 = vadd.f32 %v7359, %v6056
        %v7361 = vadd.f32 %v7360, %v6061
        %v7362 = vadd.f32 %v7361, %v6066
        %v7363 = vadd.f32 %v7362, %v6071
        %v7364 = vadd.f32 %v7363, %v6076
        %v7365 = vadd.f32 %v7364, %v6081
        %v7366 = vadd.f32 %v7365, %v6086
        %v7367 = vadd.f32 %v7366, %v6091
        %v7368 = vadd.f32 %v7367, %v6096
        %v7369 = vadd.f32 %v7368, %v6101
        %v7370 = vadd.f32 %v7369, %v6106
        %v7371 = vadd.f32 %v7370, %v6111
        %v7372 = vrot.slane %v7371, 4
        %v7373 = vadd.f32 %v7371, %v7372
        %v7374 = vrot.slane %v7373, 2
        %v7375 = vadd.f32 %v7373, %v7374
        %v7376 = vrot.slane %v7375, 1
        %v7377 = vadd.f32 %v7375, %v7376
        %v7378 = vadd.f32 %v5957, %v5962
        %v7379 = vadd.f32 %v7378, %v5967
        %v7380 = vadd.f32 %v7379, %v5972
        %v7381 = vadd.f32 %v7380, %v5977
        %v7382 = vadd.f32 %v7381, %v5982
        %v7383 = vadd.f32 %v7382, %v5987
        %v7384 = vadd.f32 %v7383, %v5992
        %v7385 = vadd.f32 %v7384, %v5997
        %v7386 = vadd.f32 %v7385, %v6002
        %v7387 = vadd.f32 %v7386, %v6007
        %v7388 = vadd.f32 %v7387, %v6012
        %v7389 = vadd.f32 %v7388, %v6017
        %v7390 = vadd.f32 %v7389, %v6022
        %v7391 = vadd.f32 %v7390, %v6027
        %v7392 = vadd.f32 %v7391, %v6032
        %v7393 = vadd.f32 %v7392, %v6037
        %v7394 = vadd.f32 %v7393, %v6042
        %v7395 = vadd.f32 %v7394, %v6047
        %v7396 = vadd.f32 %v7395, %v6052
        %v7397 = vadd.f32 %v7396, %v6057
        %v7398 = vadd.f32 %v7397, %v6062
        %v7399 = vadd.f32 %v7398, %v6067
        %v7400 = vadd.f32 %v7399, %v6072
        %v7401 = vadd.f32 %v7400, %v6077
        %v7402 = vadd.f32 %v7401, %v6082
        %v7403 = vadd.f32 %v7402, %v6087
        %v7404 = vadd.f32 %v7403, %v6092
        %v7405 = vadd.f32 %v7404, %v6097
        %v7406 = vadd.f32 %v7405, %v6102
        %v7407 = vadd.f32 %v7406, %v6107
        %v7408 = vadd.f32 %v7407, %v6112
        %v7409 = vrot.slane %v7408, 4
        %v7410 = vadd.f32 %v7408, %v7409
        %v7411 = vrot.slane %v7410, 2
        %v7412 = vadd.f32 %v7410, %v7411
        %v7413 = vrot.slane %v7412, 1
        %v7414 = vadd.f32 %v7412, %v7413
        %v7415 = vadd.f32 %v5958, %v5963
        %v7416 = vadd.f32 %v7415, %v5968
        %v7417 = vadd.f32 %v7416, %v5973
        %v7418 = vadd.f32 %v7417, %v5978
        %v7419 = vadd.f32 %v7418, %v5983
        %v7420 = vadd.f32 %v7419, %v5988
        %v7421 = vadd.f32 %v7420, %v5993
        %v7422 = vadd.f32 %v7421, %v5998
        %v7423 = vadd.f32 %v7422, %v6003
        %v7424 = vadd.f32 %v7423, %v6008
        %v7425 = vadd.f32 %v7424, %v6013
        %v7426 = vadd.f32 %v7425, %v6018
        %v7427 = vadd.f32 %v7426, %v6023
        %v7428 = vadd.f32 %v7427, %v6028
        %v7429 = vadd.f32 %v7428, %v6033
        %v7430 = vadd.f32 %v7429, %v6038
        %v7431 = vadd.f32 %v7430, %v6043
        %v7432 = vadd.f32 %v7431, %v6048
        %v7433 = vadd.f32 %v7432, %v6053
        %v7434 = vadd.f32 %v7433, %v6058
        %v7435 = vadd.f32 %v7434, %v6063
        %v7436 = vadd.f32 %v7435, %v6068
        %v7437 = vadd.f32 %v7436, %v6073
        %v7438 = vadd.f32 %v7437, %v6078
        %v7439 = vadd.f32 %v7438, %v6083
        %v7440 = vadd.f32 %v7439, %v6088
        %v7441 = vadd.f32 %v7440, %v6093
        %v7442 = vadd.f32 %v7441, %v6098
        %v7443 = vadd.f32 %v7442, %v6103
        %v7444 = vadd.f32 %v7443, %v6108
        %v7445 = vadd.f32 %v7444, %v6113
        %v7446 = vrot.slane %v7445, 4
        %v7447 = vadd.f32 %v7445, %v7446
        %v7448 = vrot.slane %v7447, 2
        %v7449 = vadd.f32 %v7447, %v7448
        %v7450 = vrot.slane %v7449, 1
        %v7451 = vadd.f32 %v7449, %v7450
        %v7452 = vadd.f32 %v5959, %v5964
        %v7453 = vadd.f32 %v7452, %v5969
        %v7454 = vadd.f32 %v7453, %v5974
        %v7455 = vadd.f32 %v7454, %v5979
        %v7456 = vadd.f32 %v7455, %v5984
        %v7457 = vadd.f32 %v7456, %v5989
        %v7458 = vadd.f32 %v7457, %v5994
        %v7459 = vadd.f32 %v7458, %v5999
        %v7460 = vadd.f32 %v7459, %v6004
        %v7461 = vadd.f32 %v7460, %v6009
        %v7462 = vadd.f32 %v7461, %v6014
        %v7463 = vadd.f32 %v7462, %v6019
        %v7464 = vadd.f32 %v7463, %v6024
        %v7465 = vadd.f32 %v7464, %v6029
        %v7466 = vadd.f32 %v7465, %v6034
        %v7467 = vadd.f32 %v7466, %v6039
        %v7468 = vadd.f32 %v7467, %v6044
        %v7469 = vadd.f32 %v7468, %v6049
        %v7470 = vadd.f32 %v7469, %v6054
        %v7471 = vadd.f32 %v7470, %v6059
        %v7472 = vadd.f32 %v7471, %v6064
        %v7473 = vadd.f32 %v7472, %v6069
        %v7474 = vadd.f32 %v7473, %v6074
        %v7475 = vadd.f32 %v7474, %v6079
        %v7476 = vadd.f32 %v7475, %v6084
        %v7477 = vadd.f32 %v7476, %v6089
        %v7478 = vadd.f32 %v7477, %v6094
        %v7479 = vadd.f32 %v7478, %v6099
        %v7480 = vadd.f32 %v7479, %v6104
        %v7481 = vadd.f32 %v7480, %v6109
        %v7482 = vadd.f32 %v7481, %v6114
        %v7483 = vrot.slane %v7482, 4
        %v7484 = vadd.f32 %v7482, %v7483
        %v7485 = vrot.slane %v7484, 2
        %v7486 = vadd.f32 %v7484, %v7485
        %v7487 = vrot.slane %v7486, 1
        %v7488 = vadd.f32 %v7486, %v7487
        %v7489 = vadd.f32 %v5960, %v5965
        %v7490 = vadd.f32 %v7489, %v5970
        %v7491 = vadd.f32 %v7490, %v5975
        %v7492 = vadd.f32 %v7491, %v5980
        %v7493 = vadd.f32 %v7492, %v5985
        %v7494 = vadd.f32 %v7493, %v5990
        %v7495 = vadd.f32 %v7494, %v5995
        %v7496 = vadd.f32 %v7495, %v6000
        %v7497 = vadd.f32 %v7496, %v6005
        %v7498 = vadd.f32 %v7497, %v6010
        %v7499 = vadd.f32 %v7498, %v6015
        %v7500 = vadd.f32 %v7499, %v6020
        %v7501 = vadd.f32 %v7500, %v6025
        %v7502 = vadd.f32 %v7501, %v6030
        %v7503 = vadd.f32 %v7502, %v6035
        %v7504 = vadd.f32 %v7503, %v6040
        %v7505 = vadd.f32 %v7504, %v6045
        %v7506 = vadd.f32 %v7505, %v6050
        %v7507 = vadd.f32 %v7506, %v6055
        %v7508 = vadd.f32 %v7507, %v6060
        %v7509 = vadd.f32 %v7508, %v6065
        %v7510 = vadd.f32 %v7509, %v6070
        %v7511 = vadd.f32 %v7510, %v6075
        %v7512 = vadd.f32 %v7511, %v6080
        %v7513 = vadd.f32 %v7512, %v6085
        %v7514 = vadd.f32 %v7513, %v6090
        %v7515 = vadd.f32 %v7514, %v6095
        %v7516 = vadd.f32 %v7515, %v6100
        %v7517 = vadd.f32 %v7516, %v6105
        %v7518 = vadd.f32 %v7517, %v6110
        %v7519 = vadd.f32 %v7518, %v6115
        %v7520 = vrot.slane %v7519, 4
        %v7521 = vadd.f32 %v7519, %v7520
        %v7522 = vrot.slane %v7521, 2
        %v7523 = vadd.f32 %v7521, %v7522
        %v7524 = vrot.slane %v7523, 1
        %v7525 = vadd.f32 %v7523, %v7524
        %v7526 = vadd.f32 %v6116, %v6121
        %v7527 = vadd.f32 %v7526, %v6126
        %v7528 = vadd.f32 %v7527, %v6131
        %v7529 = vadd.f32 %v7528, %v6136
        %v7530 = vadd.f32 %v7529, %v6141
        %v7531 = vadd.f32 %v7530, %v6146
        %v7532 = vadd.f32 %v7531, %v6151
        %v7533 = vadd.f32 %v7532, %v6156
        %v7534 = vadd.f32 %v7533, %v6161
        %v7535 = vadd.f32 %v7534, %v6166
        %v7536 = vadd.f32 %v7535, %v6171
        %v7537 = vadd.f32 %v7536, %v6176
        %v7538 = vadd.f32 %v7537, %v6181
        %v7539 = vadd.f32 %v7538, %v6186
        %v7540 = vadd.f32 %v7539, %v6191
        %v7541 = vadd.f32 %v7540, %v6196
        %v7542 = vadd.f32 %v7541, %v6201
        %v7543 = vadd.f32 %v7542, %v6206
        %v7544 = vadd.f32 %v7543, %v6211
        %v7545 = vadd.f32 %v7544, %v6216
        %v7546 = vadd.f32 %v7545, %v6221
        %v7547 = vadd.f32 %v7546, %v6226
        %v7548 = vadd.f32 %v7547, %v6231
        %v7549 = vadd.f32 %v7548, %v6236
        %v7550 = vadd.f32 %v7549, %v6241
        %v7551 = vadd.f32 %v7550, %v6246
        %v7552 = vadd.f32 %v7551, %v6251
        %v7553 = vadd.f32 %v7552, %v6256
        %v7554 = vadd.f32 %v7553, %v6261
        %v7555 = vadd.f32 %v7554, %v6266
        %v7556 = vadd.f32 %v7555, %v6271
        %v7557 = vrot.slane %v7556, 4
        %v7558 = vadd.f32 %v7556, %v7557
        %v7559 = vrot.slane %v7558, 2
        %v7560 = vadd.f32 %v7558, %v7559
        %v7561 = vrot.slane %v7560, 1
        %v7562 = vadd.f32 %v7560, %v7561
        %v7563 = vadd.f32 %v6117, %v6122
        %v7564 = vadd.f32 %v7563, %v6127
        %v7565 = vadd.f32 %v7564, %v6132
        %v7566 = vadd.f32 %v7565, %v6137
        %v7567 = vadd.f32 %v7566, %v6142
        %v7568 = vadd.f32 %v7567, %v6147
        %v7569 = vadd.f32 %v7568, %v6152
        %v7570 = vadd.f32 %v7569, %v6157
        %v7571 = vadd.f32 %v7570, %v6162
        %v7572 = vadd.f32 %v7571, %v6167
        %v7573 = vadd.f32 %v7572, %v6172
        %v7574 = vadd.f32 %v7573, %v6177
        %v7575 = vadd.f32 %v7574, %v6182
        %v7576 = vadd.f32 %v7575, %v6187
        %v7577 = vadd.f32 %v7576, %v6192
        %v7578 = vadd.f32 %v7577, %v6197
        %v7579 = vadd.f32 %v7578, %v6202
        %v7580 = vadd.f32 %v7579, %v6207
        %v7581 = vadd.f32 %v7580, %v6212
        %v7582 = vadd.f32 %v7581, %v6217
        %v7583 = vadd.f32 %v7582, %v6222
        %v7584 = vadd.f32 %v7583, %v6227
        %v7585 = vadd.f32 %v7584, %v6232
        %v7586 = vadd.f32 %v7585, %v6237
        %v7587 = vadd.f32 %v7586, %v6242
        %v7588 = vadd.f32 %v7587, %v6247
        %v7589 = vadd.f32 %v7588, %v6252
        %v7590 = vadd.f32 %v7589, %v6257
        %v7591 = vadd.f32 %v7590, %v6262
        %v7592 = vadd.f32 %v7591, %v6267
        %v7593 = vadd.f32 %v7592, %v6272
        %v7594 = vrot.slane %v7593, 4
        %v7595 = vadd.f32 %v7593, %v7594
        %v7596 = vrot.slane %v7595, 2
        %v7597 = vadd.f32 %v7595, %v7596
        %v7598 = vrot.slane %v7597, 1
        %v7599 = vadd.f32 %v7597, %v7598
        %v7600 = vadd.f32 %v6118, %v6123
        %v7601 = vadd.f32 %v7600, %v6128
        %v7602 = vadd.f32 %v7601, %v6133
        %v7603 = vadd.f32 %v7602, %v6138
        %v7604 = vadd.f32 %v7603, %v6143
        %v7605 = vadd.f32 %v7604, %v6148
        %v7606 = vadd.f32 %v7605, %v6153
        %v7607 = vadd.f32 %v7606, %v6158
        %v7608 = vadd.f32 %v7607, %v6163
        %v7609 = vadd.f32 %v7608, %v6168
        %v7610 = vadd.f32 %v7609, %v6173
        %v7611 = vadd.f32 %v7610, %v6178
        %v7612 = vadd.f32 %v7611, %v6183
        %v7613 = vadd.f32 %v7612, %v6188
        %v7614 = vadd.f32 %v7613, %v6193
        %v7615 = vadd.f32 %v7614, %v6198
        %v7616 = vadd.f32 %v7615, %v6203
        %v7617 = vadd.f32 %v7616, %v6208
        %v7618 = vadd.f32 %v7617, %v6213
        %v7619 = vadd.f32 %v7618, %v6218
        %v7620 = vadd.f32 %v7619, %v6223
        %v7621 = vadd.f32 %v7620, %v6228
        %v7622 = vadd.f32 %v7621, %v6233
        %v7623 = vadd.f32 %v7622, %v6238
        %v7624 = vadd.f32 %v7623, %v6243
        %v7625 = vadd.f32 %v7624, %v6248
        %v7626 = vadd.f32 %v7625, %v6253
        %v7627 = vadd.f32 %v7626, %v6258
        %v7628 = vadd.f32 %v7627, %v6263
        %v7629 = vadd.f32 %v7628, %v6268
        %v7630 = vadd.f32 %v7629, %v6273
        %v7631 = vrot.slane %v7630, 4
        %v7632 = vadd.f32 %v7630, %v7631
        %v7633 = vrot.slane %v7632, 2
        %v7634 = vadd.f32 %v7632, %v7633
        %v7635 = vrot.slane %v7634, 1
        %v7636 = vadd.f32 %v7634, %v7635
        %v7637 = vadd.f32 %v6119, %v6124
        %v7638 = vadd.f32 %v7637, %v6129
        %v7639 = vadd.f32 %v7638, %v6134
        %v7640 = vadd.f32 %v7639, %v6139
        %v7641 = vadd.f32 %v7640, %v6144
        %v7642 = vadd.f32 %v7641, %v6149
        %v7643 = vadd.f32 %v7642, %v6154
        %v7644 = vadd.f32 %v7643, %v6159
        %v7645 = vadd.f32 %v7644, %v6164
        %v7646 = vadd.f32 %v7645, %v6169
        %v7647 = vadd.f32 %v7646, %v6174
        %v7648 = vadd.f32 %v7647, %v6179
        %v7649 = vadd.f32 %v7648, %v6184
        %v7650 = vadd.f32 %v7649, %v6189
        %v7651 = vadd.f32 %v7650, %v6194
        %v7652 = vadd.f32 %v7651, %v6199
        %v7653 = vadd.f32 %v7652, %v6204
        %v7654 = vadd.f32 %v7653, %v6209
        %v7655 = vadd.f32 %v7654, %v6214
        %v7656 = vadd.f32 %v7655, %v6219
        %v7657 = vadd.f32 %v7656, %v6224
        %v7658 = vadd.f32 %v7657, %v6229
        %v7659 = vadd.f32 %v7658, %v6234
        %v7660 = vadd.f32 %v7659, %v6239
        %v7661 = vadd.f32 %v7660, %v6244
        %v7662 = vadd.f32 %v7661, %v6249
        %v7663 = vadd.f32 %v7662, %v6254
        %v7664 = vadd.f32 %v7663, %v6259
        %v7665 = vadd.f32 %v7664, %v6264
        %v7666 = vadd.f32 %v7665, %v6269
        %v7667 = vadd.f32 %v7666, %v6274
        %v7668 = vrot.slane %v7667, 4
        %v7669 = vadd.f32 %v7667, %v7668
        %v7670 = vrot.slane %v7669, 2
        %v7671 = vadd.f32 %v7669, %v7670
        %v7672 = vrot.slane %v7671, 1
        %v7673 = vadd.f32 %v7671, %v7672
        %v7674 = vadd.f32 %v6120, %v6125
        %v7675 = vadd.f32 %v7674, %v6130
        %v7676 = vadd.f32 %v7675, %v6135
        %v7677 = vadd.f32 %v7676, %v6140
        %v7678 = vadd.f32 %v7677, %v6145
        %v7679 = vadd.f32 %v7678, %v6150
        %v7680 = vadd.f32 %v7679, %v6155
        %v7681 = vadd.f32 %v7680, %v6160
        %v7682 = vadd.f32 %v7681, %v6165
        %v7683 = vadd.f32 %v7682, %v6170
        %v7684 = vadd.f32 %v7683, %v6175
        %v7685 = vadd.f32 %v7684, %v6180
        %v7686 = vadd.f32 %v7685, %v6185
        %v7687 = vadd.f32 %v7686, %v6190
        %v7688 = vadd.f32 %v7687, %v6195
        %v7689 = vadd.f32 %v7688, %v6200
        %v7690 = vadd.f32 %v7689, %v6205
        %v7691 = vadd.f32 %v7690, %v6210
        %v7692 = vadd.f32 %v7691, %v6215
        %v7693 = vadd.f32 %v7692, %v6220
        %v7694 = vadd.f32 %v7693, %v6225
        %v7695 = vadd.f32 %v7694, %v6230
        %v7696 = vadd.f32 %v7695, %v6235
        %v7697 = vadd.f32 %v7696, %v6240
        %v7698 = vadd.f32 %v7697, %v6245
        %v7699 = vadd.f32 %v7698, %v6250
        %v7700 = vadd.f32 %v7699, %v6255
        %v7701 = vadd.f32 %v7700, %v6260
        %v7702 = vadd.f32 %v7701, %v6265
        %v7703 = vadd.f32 %v7702, %v6270
        %v7704 = vadd.f32 %v7703, %v6275
        %v7705 = vrot.slane %v7704, 4
        %v7706 = vadd.f32 %v7704, %v7705
        %v7707 = vrot.slane %v7706, 2
        %v7708 = vadd.f32 %v7706, %v7707
        %v7709 = vrot.slane %v7708, 1
        %v7710 = vadd.f32 %v7708, %v7709
        %v7711 = vadd.f32 %v6276, %v6281
        %v7712 = vadd.f32 %v7711, %v6286
        %v7713 = vadd.f32 %v7712, %v6291
        %v7714 = vadd.f32 %v7713, %v6296
        %v7715 = vadd.f32 %v7714, %v6301
        %v7716 = vadd.f32 %v7715, %v6306
        %v7717 = vadd.f32 %v7716, %v6311
        %v7718 = vadd.f32 %v7717, %v6316
        %v7719 = vadd.f32 %v7718, %v6321
        %v7720 = vadd.f32 %v7719, %v6326
        %v7721 = vadd.f32 %v7720, %v6331
        %v7722 = vadd.f32 %v7721, %v6336
        %v7723 = vadd.f32 %v7722, %v6341
        %v7724 = vadd.f32 %v7723, %v6346
        %v7725 = vadd.f32 %v7724, %v6351
        %v7726 = vadd.f32 %v7725, %v6356
        %v7727 = vadd.f32 %v7726, %v6361
        %v7728 = vadd.f32 %v7727, %v6366
        %v7729 = vadd.f32 %v7728, %v6371
        %v7730 = vadd.f32 %v7729, %v6376
        %v7731 = vadd.f32 %v7730, %v6381
        %v7732 = vadd.f32 %v7731, %v6386
        %v7733 = vadd.f32 %v7732, %v6391
        %v7734 = vadd.f32 %v7733, %v6396
        %v7735 = vadd.f32 %v7734, %v6401
        %v7736 = vadd.f32 %v7735, %v6406
        %v7737 = vadd.f32 %v7736, %v6411
        %v7738 = vadd.f32 %v7737, %v6416
        %v7739 = vadd.f32 %v7738, %v6421
        %v7740 = vadd.f32 %v7739, %v6426
        %v7741 = vadd.f32 %v7740, %v6431
        %v7742 = vrot.slane %v7741, 4
        %v7743 = vadd.f32 %v7741, %v7742
        %v7744 = vrot.slane %v7743, 2
        %v7745 = vadd.f32 %v7743, %v7744
        %v7746 = vrot.slane %v7745, 1
        %v7747 = vadd.f32 %v7745, %v7746
        %v7748 = vadd.f32 %v6277, %v6282
        %v7749 = vadd.f32 %v7748, %v6287
        %v7750 = vadd.f32 %v7749, %v6292
        %v7751 = vadd.f32 %v7750, %v6297
        %v7752 = vadd.f32 %v7751, %v6302
        %v7753 = vadd.f32 %v7752, %v6307
        %v7754 = vadd.f32 %v7753, %v6312
        %v7755 = vadd.f32 %v7754, %v6317
        %v7756 = vadd.f32 %v7755, %v6322
        %v7757 = vadd.f32 %v7756, %v6327
        %v7758 = vadd.f32 %v7757, %v6332
        %v7759 = vadd.f32 %v7758, %v6337
        %v7760 = vadd.f32 %v7759, %v6342
        %v7761 = vadd.f32 %v7760, %v6347
        %v7762 = vadd.f32 %v7761, %v6352
        %v7763 = vadd.f32 %v7762, %v6357
        %v7764 = vadd.f32 %v7763, %v6362
        %v7765 = vadd.f32 %v7764, %v6367
        %v7766 = vadd.f32 %v7765, %v6372
        %v7767 = vadd.f32 %v7766, %v6377
        %v7768 = vadd.f32 %v7767, %v6382
        %v7769 = vadd.f32 %v7768, %v6387
        %v7770 = vadd.f32 %v7769, %v6392
        %v7771 = vadd.f32 %v7770, %v6397
        %v7772 = vadd.f32 %v7771, %v6402
        %v7773 = vadd.f32 %v7772, %v6407
        %v7774 = vadd.f32 %v7773, %v6412
        %v7775 = vadd.f32 %v7774, %v6417
        %v7776 = vadd.f32 %v7775, %v6422
        %v7777 = vadd.f32 %v7776, %v6427
        %v7778 = vadd.f32 %v7777, %v6432
        %v7779 = vrot.slane %v7778, 4
        %v7780 = vadd.f32 %v7778, %v7779
        %v7781 = vrot.slane %v7780, 2
        %v7782 = vadd.f32 %v7780, %v7781
        %v7783 = vrot.slane %v7782, 1
        %v7784 = vadd.f32 %v7782, %v7783
        %v7785 = vadd.f32 %v6278, %v6283
        %v7786 = vadd.f32 %v7785, %v6288
        %v7787 = vadd.f32 %v7786, %v6293
        %v7788 = vadd.f32 %v7787, %v6298
        %v7789 = vadd.f32 %v7788, %v6303
        %v7790 = vadd.f32 %v7789, %v6308
        %v7791 = vadd.f32 %v7790, %v6313
        %v7792 = vadd.f32 %v7791, %v6318
        %v7793 = vadd.f32 %v7792, %v6323
        %v7794 = vadd.f32 %v7793, %v6328
        %v7795 = vadd.f32 %v7794, %v6333
        %v7796 = vadd.f32 %v7795, %v6338
        %v7797 = vadd.f32 %v7796, %v6343
        %v7798 = vadd.f32 %v7797, %v6348
        %v7799 = vadd.f32 %v7798, %v6353
        %v7800 = vadd.f32 %v7799, %v6358
        %v7801 = vadd.f32 %v7800, %v6363
        %v7802 = vadd.f32 %v7801, %v6368
        %v7803 = vadd.f32 %v7802, %v6373
        %v7804 = vadd.f32 %v7803, %v6378
        %v7805 = vadd.f32 %v7804, %v6383
        %v7806 = vadd.f32 %v7805, %v6388
        %v7807 = vadd.f32 %v7806, %v6393
        %v7808 = vadd.f32 %v7807, %v6398
        %v7809 = vadd.f32 %v7808, %v6403
        %v7810 = vadd.f32 %v7809, %v6408
        %v7811 = vadd.f32 %v7810, %v6413
        %v7812 = vadd.f32 %v7811, %v6418
        %v7813 = vadd.f32 %v7812, %v6423
        %v7814 = vadd.f32 %v7813, %v6428
        %v7815 = vadd.f32 %v7814, %v6433
        %v7816 = vrot.slane %v7815, 4
        %v7817 = vadd.f32 %v7815, %v7816
        %v7818 = vrot.slane %v7817, 2
        %v7819 = vadd.f32 %v7817, %v7818
        %v7820 = vrot.slane %v7819, 1
        %v7821 = vadd.f32 %v7819, %v7820
        %v7822 = vadd.f32 %v6279, %v6284
        %v7823 = vadd.f32 %v7822, %v6289
        %v7824 = vadd.f32 %v7823, %v6294
        %v7825 = vadd.f32 %v7824, %v6299
        %v7826 = vadd.f32 %v7825, %v6304
        %v7827 = vadd.f32 %v7826, %v6309
        %v7828 = vadd.f32 %v7827, %v6314
        %v7829 = vadd.f32 %v7828, %v6319
        %v7830 = vadd.f32 %v7829, %v6324
        %v7831 = vadd.f32 %v7830, %v6329
        %v7832 = vadd.f32 %v7831, %v6334
        %v7833 = vadd.f32 %v7832, %v6339
        %v7834 = vadd.f32 %v7833, %v6344
        %v7835 = vadd.f32 %v7834, %v6349
        %v7836 = vadd.f32 %v7835, %v6354
        %v7837 = vadd.f32 %v7836, %v6359
        %v7838 = vadd.f32 %v7837, %v6364
        %v7839 = vadd.f32 %v7838, %v6369
        %v7840 = vadd.f32 %v7839, %v6374
        %v7841 = vadd.f32 %v7840, %v6379
        %v7842 = vadd.f32 %v7841, %v6384
        %v7843 = vadd.f32 %v7842, %v6389
        %v7844 = vadd.f32 %v7843, %v6394
        %v7845 = vadd.f32 %v7844, %v6399
        %v7846 = vadd.f32 %v7845, %v6404
        %v7847 = vadd.f32 %v7846, %v6409
        %v7848 = vadd.f32 %v7847, %v6414
        %v7849 = vadd.f32 %v7848, %v6419
        %v7850 = vadd.f32 %v7849, %v6424
        %v7851 = vadd.f32 %v7850, %v6429
        %v7852 = vadd.f32 %v7851, %v6434
        %v7853 = vrot.slane %v7852, 4
        %v7854 = vadd.f32 %v7852, %v7853
        %v7855 = vrot.slane %v7854, 2
        %v7856 = vadd.f32 %v7854, %v7855
        %v7857 = vrot.slane %v7856, 1
        %v7858 = vadd.f32 %v7856, %v7857
        %v7859 = vadd.f32 %v6280, %v6285
        %v7860 = vadd.f32 %v7859, %v6290
        %v7861 = vadd.f32 %v7860, %v6295
        %v7862 = vadd.f32 %v7861, %v6300
        %v7863 = vadd.f32 %v7862, %v6305
        %v7864 = vadd.f32 %v7863, %v6310
        %v7865 = vadd.f32 %v7864, %v6315
        %v7866 = vadd.f32 %v7865, %v6320
        %v7867 = vadd.f32 %v7866, %v6325
        %v7868 = vadd.f32 %v7867, %v6330
        %v7869 = vadd.f32 %v7868, %v6335
        %v7870 = vadd.f32 %v7869, %v6340
        %v7871 = vadd.f32 %v7870, %v6345
        %v7872 = vadd.f32 %v7871, %v6350
        %v7873 = vadd.f32 %v7872, %v6355
        %v7874 = vadd.f32 %v7873, %v6360
        %v7875 = vadd.f32 %v7874, %v6365
        %v7876 = vadd.f32 %v7875, %v6370
        %v7877 = vadd.f32 %v7876, %v6375
        %v7878 = vadd.f32 %v7877, %v6380
        %v7879 = vadd.f32 %v7878, %v6385
        %v7880 = vadd.f32 %v7879, %v6390
        %v7881 = vadd.f32 %v7880, %v6395
        %v7882 = vadd.f32 %v7881, %v6400
        %v7883 = vadd.f32 %v7882, %v6405
        %v7884 = vadd.f32 %v7883, %v6410
        %v7885 = vadd.f32 %v7884, %v6415
        %v7886 = vadd.f32 %v7885, %v6420
        %v7887 = vadd.f32 %v7886, %v6425
        %v7888 = vadd.f32 %v7887, %v6430
        %v7889 = vadd.f32 %v7888, %v6435
        %v7890 = vrot.slane %v7889, 4
        %v7891 = vadd.f32 %v7889, %v7890
        %v7892 = vrot.slane %v7891, 2
        %v7893 = vadd.f32 %v7891, %v7892
        %v7894 = vrot.slane %v7893, 1
        %v7895 = vadd.f32 %v7893, %v7894
        %v7896 = vadd.f32 %v6436, %v6441
        %v7897 = vadd.f32 %v7896, %v6446
        %v7898 = vadd.f32 %v7897, %v6451
        %v7899 = vadd.f32 %v7898, %v6456
        %v7900 = vadd.f32 %v7899, %v6461
        %v7901 = vadd.f32 %v7900, %v6466
        %v7902 = vadd.f32 %v7901, %v6471
        %v7903 = vadd.f32 %v7902, %v6476
        %v7904 = vadd.f32 %v7903, %v6481
        %v7905 = vadd.f32 %v7904, %v6486
        %v7906 = vadd.f32 %v7905, %v6491
        %v7907 = vadd.f32 %v7906, %v6496
        %v7908 = vadd.f32 %v7907, %v6501
        %v7909 = vadd.f32 %v7908, %v6506
        %v7910 = vadd.f32 %v7909, %v6511
        %v7911 = vadd.f32 %v7910, %v6516
        %v7912 = vadd.f32 %v7911, %v6521
        %v7913 = vadd.f32 %v7912, %v6526
        %v7914 = vadd.f32 %v7913, %v6531
        %v7915 = vadd.f32 %v7914, %v6536
        %v7916 = vadd.f32 %v7915, %v6541
        %v7917 = vadd.f32 %v7916, %v6546
        %v7918 = vadd.f32 %v7917, %v6551
        %v7919 = vadd.f32 %v7918, %v6556
        %v7920 = vadd.f32 %v7919, %v6561
        %v7921 = vadd.f32 %v7920, %v6566
        %v7922 = vadd.f32 %v7921, %v6571
        %v7923 = vadd.f32 %v7922, %v6576
        %v7924 = vadd.f32 %v7923, %v6581
        %v7925 = vadd.f32 %v7924, %v6586
        %v7926 = vadd.f32 %v7925, %v6591
        %v7927 = vrot.slane %v7926, 4
        %v7928 = vadd.f32 %v7926, %v7927
        %v7929 = vrot.slane %v7928, 2
        %v7930 = vadd.f32 %v7928, %v7929
        %v7931 = vrot.slane %v7930, 1
        %v7932 = vadd.f32 %v7930, %v7931
        %v7933 = vadd.f32 %v6437, %v6442
        %v7934 = vadd.f32 %v7933, %v6447
        %v7935 = vadd.f32 %v7934, %v6452
        %v7936 = vadd.f32 %v7935, %v6457
        %v7937 = vadd.f32 %v7936, %v6462
        %v7938 = vadd.f32 %v7937, %v6467
        %v7939 = vadd.f32 %v7938, %v6472
        %v7940 = vadd.f32 %v7939, %v6477
        %v7941 = vadd.f32 %v7940, %v6482
        %v7942 = vadd.f32 %v7941, %v6487
        %v7943 = vadd.f32 %v7942, %v6492
        %v7944 = vadd.f32 %v7943, %v6497
        %v7945 = vadd.f32 %v7944, %v6502
        %v7946 = vadd.f32 %v7945, %v6507
        %v7947 = vadd.f32 %v7946, %v6512
        %v7948 = vadd.f32 %v7947, %v6517
        %v7949 = vadd.f32 %v7948, %v6522
        %v7950 = vadd.f32 %v7949, %v6527
        %v7951 = vadd.f32 %v7950, %v6532
        %v7952 = vadd.f32 %v7951, %v6537
        %v7953 = vadd.f32 %v7952, %v6542
        %v7954 = vadd.f32 %v7953, %v6547
        %v7955 = vadd.f32 %v7954, %v6552
        %v7956 = vadd.f32 %v7955, %v6557
        %v7957 = vadd.f32 %v7956, %v6562
        %v7958 = vadd.f32 %v7957, %v6567
        %v7959 = vadd.f32 %v7958, %v6572
        %v7960 = vadd.f32 %v7959, %v6577
        %v7961 = vadd.f32 %v7960, %v6582
        %v7962 = vadd.f32 %v7961, %v6587
        %v7963 = vadd.f32 %v7962, %v6592
        %v7964 = vrot.slane %v7963, 4
        %v7965 = vadd.f32 %v7963, %v7964
        %v7966 = vrot.slane %v7965, 2
        %v7967 = vadd.f32 %v7965, %v7966
        %v7968 = vrot.slane %v7967, 1
        %v7969 = vadd.f32 %v7967, %v7968
        %v7970 = vadd.f32 %v6438, %v6443
        %v7971 = vadd.f32 %v7970, %v6448
        %v7972 = vadd.f32 %v7971, %v6453
        %v7973 = vadd.f32 %v7972, %v6458
        %v7974 = vadd.f32 %v7973, %v6463
        %v7975 = vadd.f32 %v7974, %v6468
        %v7976 = vadd.f32 %v7975, %v6473
        %v7977 = vadd.f32 %v7976, %v6478
        %v7978 = vadd.f32 %v7977, %v6483
        %v7979 = vadd.f32 %v7978, %v6488
        %v7980 = vadd.f32 %v7979, %v6493
        %v7981 = vadd.f32 %v7980, %v6498
        %v7982 = vadd.f32 %v7981, %v6503
        %v7983 = vadd.f32 %v7982, %v6508
        %v7984 = vadd.f32 %v7983, %v6513
        %v7985 = vadd.f32 %v7984, %v6518
        %v7986 = vadd.f32 %v7985, %v6523
        %v7987 = vadd.f32 %v7986, %v6528
        %v7988 = vadd.f32 %v7987, %v6533
        %v7989 = vadd.f32 %v7988, %v6538
        %v7990 = vadd.f32 %v7989, %v6543
        %v7991 = vadd.f32 %v7990, %v6548
        %v7992 = vadd.f32 %v7991, %v6553
        %v7993 = vadd.f32 %v7992, %v6558
        %v7994 = vadd.f32 %v7993, %v6563
        %v7995 = vadd.f32 %v7994, %v6568
        %v7996 = vadd.f32 %v7995, %v6573
        %v7997 = vadd.f32 %v7996, %v6578
        %v7998 = vadd.f32 %v7997, %v6583
        %v7999 = vadd.f32 %v7998, %v6588
        %v8000 = vadd.f32 %v7999, %v6593
        %v8001 = vrot.slane %v8000, 4
        %v8002 = vadd.f32 %v8000, %v8001
        %v8003 = vrot.slane %v8002, 2
        %v8004 = vadd.f32 %v8002, %v8003
        %v8005 = vrot.slane %v8004, 1
        %v8006 = vadd.f32 %v8004, %v8005
        %v8007 = vadd.f32 %v6439, %v6444
        %v8008 = vadd.f32 %v8007, %v6449
        %v8009 = vadd.f32 %v8008, %v6454
        %v8010 = vadd.f32 %v8009, %v6459
        %v8011 = vadd.f32 %v8010, %v6464
        %v8012 = vadd.f32 %v8011, %v6469
        %v8013 = vadd.f32 %v8012, %v6474
        %v8014 = vadd.f32 %v8013, %v6479
        %v8015 = vadd.f32 %v8014, %v6484
        %v8016 = vadd.f32 %v8015, %v6489
        %v8017 = vadd.f32 %v8016, %v6494
        %v8018 = vadd.f32 %v8017, %v6499
        %v8019 = vadd.f32 %v8018, %v6504
        %v8020 = vadd.f32 %v8019, %v6509
        %v8021 = vadd.f32 %v8020, %v6514
        %v8022 = vadd.f32 %v8021, %v6519
        %v8023 = vadd.f32 %v8022, %v6524
        %v8024 = vadd.f32 %v8023, %v6529
        %v8025 = vadd.f32 %v8024, %v6534
        %v8026 = vadd.f32 %v8025, %v6539
        %v8027 = vadd.f32 %v8026, %v6544
        %v8028 = vadd.f32 %v8027, %v6549
        %v8029 = vadd.f32 %v8028, %v6554
        %v8030 = vadd.f32 %v8029, %v6559
        %v8031 = vadd.f32 %v8030, %v6564
        %v8032 = vadd.f32 %v8031, %v6569
        %v8033 = vadd.f32 %v8032, %v6574
        %v8034 = vadd.f32 %v8033, %v6579
        %v8035 = vadd.f32 %v8034, %v6584
        %v8036 = vadd.f32 %v8035, %v6589
        %v8037 = vadd.f32 %v8036, %v6594
        %v8038 = vrot.slane %v8037, 4
        %v8039 = vadd.f32 %v8037, %v8038
        %v8040 = vrot.slane %v8039, 2
        %v8041 = vadd.f32 %v8039, %v8040
        %v8042 = vrot.slane %v8041, 1
        %v8043 = vadd.f32 %v8041, %v8042
        %v8044 = vadd.f32 %v6440, %v6445
        %v8045 = vadd.f32 %v8044, %v6450
        %v8046 = vadd.f32 %v8045, %v6455
        %v8047 = vadd.f32 %v8046, %v6460
        %v8048 = vadd.f32 %v8047, %v6465
        %v8049 = vadd.f32 %v8048, %v6470
        %v8050 = vadd.f32 %v8049, %v6475
        %v8051 = vadd.f32 %v8050, %v6480
        %v8052 = vadd.f32 %v8051, %v6485
        %v8053 = vadd.f32 %v8052, %v6490
        %v8054 = vadd.f32 %v8053, %v6495
        %v8055 = vadd.f32 %v8054, %v6500
        %v8056 = vadd.f32 %v8055, %v6505
        %v8057 = vadd.f32 %v8056, %v6510
        %v8058 = vadd.f32 %v8057, %v6515
        %v8059 = vadd.f32 %v8058, %v6520
        %v8060 = vadd.f32 %v8059, %v6525
        %v8061 = vadd.f32 %v8060, %v6530
        %v8062 = vadd.f32 %v8061, %v6535
        %v8063 = vadd.f32 %v8062, %v6540
        %v8064 = vadd.f32 %v8063, %v6545
        %v8065 = vadd.f32 %v8064, %v6550
        %v8066 = vadd.f32 %v8065, %v6555
        %v8067 = vadd.f32 %v8066, %v6560
        %v8068 = vadd.f32 %v8067, %v6565
        %v8069 = vadd.f32 %v8068, %v6570
        %v8070 = vadd.f32 %v8069, %v6575
        %v8071 = vadd.f32 %v8070, %v6580
        %v8072 = vadd.f32 %v8071, %v6585
        %v8073 = vadd.f32 %v8072, %v6590
        %v8074 = vadd.f32 %v8073, %v6595
        %v8075 = vrot.slane %v8074, 4
        %v8076 = vadd.f32 %v8074, %v8075
        %v8077 = vrot.slane %v8076, 2
        %v8078 = vadd.f32 %v8076, %v8077
        %v8079 = vrot.slane %v8078, 1
        %v8080 = vadd.f32 %v8078, %v8079
        %vm8121 = vcmask 1041409
        %v8122 = vsel %vm8121, %v6822, %v6637
        %vm8123 = vcmask 1042434
        %v8124 = vsel %vm8123, %v7007, %v8122
        %vm8125 = vcmask 1043459
        %v8126 = vsel %vm8125, %v7192, %v8124
        %vm8127 = vcmask 1044484
        %v8128 = vsel %vm8127, %v7377, %v8126
        %vm8129 = vcmask 1045509
        %v8130 = vsel %vm8129, %v7562, %v8128
        %vm8131 = vcmask 1046534
        %v8132 = vsel %vm8131, %v7747, %v8130
        %vm8133 = vcmask 1047559
        %v8134 = vsel %vm8133, %v7932, %v8132
        %v8135 = vsel %vm8121, %v6859, %v6674
        %v8136 = vsel %vm8123, %v7044, %v8135
        %v8137 = vsel %vm8125, %v7229, %v8136
        %v8138 = vsel %vm8127, %v7414, %v8137
        %v8139 = vsel %vm8129, %v7599, %v8138
        %v8140 = vsel %vm8131, %v7784, %v8139
        %v8141 = vsel %vm8133, %v7969, %v8140
        %v8142 = vsel %vm8121, %v6896, %v6711
        %v8143 = vsel %vm8123, %v7081, %v8142
        %v8144 = vsel %vm8125, %v7266, %v8143
        %v8145 = vsel %vm8127, %v7451, %v8144
        %v8146 = vsel %vm8129, %v7636, %v8145
        %v8147 = vsel %vm8131, %v7821, %v8146
        %v8148 = vsel %vm8133, %v8006, %v8147
        %v8149 = vsel %vm8121, %v6933, %v6748
        %v8150 = vsel %vm8123, %v7118, %v8149
        %v8151 = vsel %vm8125, %v7303, %v8150
        %v8152 = vsel %vm8127, %v7488, %v8151
        %v8153 = vsel %vm8129, %v7673, %v8152
        %v8154 = vsel %vm8131, %v7858, %v8153
        %v8155 = vsel %vm8133, %v8043, %v8154
        %v8156 = vsel %vm8121, %v6970, %v6785
        %v8157 = vsel %vm8123, %v7155, %v8156
        %v8158 = vsel %vm8125, %v7340, %v8157
        %v8159 = vsel %vm8127, %v7525, %v8158
        %v8160 = vsel %vm8129, %v7710, %v8159
        %v8161 = vsel %vm8131, %v7895, %v8160
        %v8162 = vsel %vm8133, %v8080, %v8161
        %v8168 = vadd.f32 %v6596, %v8134
        %v8169 = vadd.f32 %v6597, %v8141
        %v8170 = vadd.f32 %v6598, %v8148
        %v8171 = vadd.f32 %v6599, %v8155
        %v8172 = vadd.f32 %v6600, %v8162
        %8173 = vst [vmem:[#allocation2] sm:$0xff] %v8168
        %8174 = vst [vmem:[#allocation2 + $0x8] sm:$0xff] %v8169
        %8175 = vst [vmem:[#allocation2 + $0x10] sm:$0xff] %v8170
        %8176 = vst [vmem:[#allocation2 + $0x18] sm:$0xff] %v8171
        %8177 = vst [vmem:[#allocation2 + $0x20] sm:$0xff] %v8172
        // Predicated region
        $region45: #{encoder_linear_forward.1} parent=39 // pred_check
          %p8178 = pneg %p252
        $region46: #{encoder_linear_forward.1} parent=39 // pred_check_branch
          %8180 = sbr.rel (%p8178) target = $region48
        $region47: #{encoder_linear_forward.1} parent=39 // pred_region
          %v8181 = vld [vmem:[#allocation2] sm:$0xff]
          %v8182 = vld [vmem:[#allocation2 + $0x8] sm:$0xff]
          %v8183 = vld [vmem:[#allocation2 + $0x10] sm:$0xff]
          %v8184 = vld [vmem:[#allocation2 + $0x18] sm:$0xff]
          %v8185 = vld [vmem:[#allocation2 + $0x20] sm:$0xff]
          %v8186 = vmul.f32 %v8181, 0.00390625
          %v8187 = vmul.f32 %v8182, 0.00390625
          %v8188 = vmul.f32 %v8183, 0.00390625
          %v8189 = vmul.f32 %v8184, 0.00390625
          %v8190 = vmul.f32 %v8185, 0.00390625
          %v8191 = vld [vmem:[%s3] sm:$0xff]
          %v8192 = vld [vmem:[%s3 + $0x8] sm:$0xff]
          %v8193 = vld [vmem:[%s3 + $0x10] sm:$0xff]
          %v8194 = vld [vmem:[%s3 + $0x18] sm:$0xff]
          %v8195 = vld [vmem:[%s3 + $0x20] sm:$0xff]
          %v8196 = vld [vmem:[%s3 + $0x28] sm:$0xff]
          %v8197 = vld [vmem:[%s3 + $0x30] sm:$0xff]
          %v8198 = vld [vmem:[%s3 + $0x38] sm:$0xff]
          %v8199 = vld [vmem:[%s3 + $0x40] sm:$0xff]
          %v8200 = vld [vmem:[%s3 + $0x48] sm:$0xff]
          %v8201 = vld [vmem:[%s3 + $0x50] sm:$0xff]
          %v8202 = vld [vmem:[%s3 + $0x58] sm:$0xff]
          %v8203 = vld [vmem:[%s3 + $0x60] sm:$0xff]
          %v8204 = vld [vmem:[%s3 + $0x68] sm:$0xff]
          %v8205 = vld [vmem:[%s3 + $0x70] sm:$0xff]
          %v8206 = vld [vmem:[%s3 + $0x78] sm:$0xff]
          %v8207 = vld [vmem:[%s3 + $0x80] sm:$0xff]
          %v8208 = vld [vmem:[%s3 + $0x88] sm:$0xff]
          %v8209 = vld [vmem:[%s3 + $0x90] sm:$0xff]
          %v8210 = vld [vmem:[%s3 + $0x98] sm:$0xff]
          %v8211 = vld [vmem:[%s3 + $0xa0] sm:$0xff]
          %v8212 = vld [vmem:[%s3 + $0xa8] sm:$0xff]
          %v8213 = vld [vmem:[%s3 + $0xb0] sm:$0xff]
          %v8214 = vld [vmem:[%s3 + $0xb8] sm:$0xff]
          %v8215 = vld [vmem:[%s3 + $0xc0] sm:$0xff]
          %v8216 = vld [vmem:[%s3 + $0xc8] sm:$0xff]
          %v8217 = vld [vmem:[%s3 + $0xd0] sm:$0xff]
          %v8218 = vld [vmem:[%s3 + $0xd8] sm:$0xff]
          %v8219 = vld [vmem:[%s3 + $0xe0] sm:$0xff]
          %v8220 = vld [vmem:[%s3 + $0xe8] sm:$0xff]
          %v8221 = vld [vmem:[%s3 + $0xf0] sm:$0xff]
          %v8222 = vld [vmem:[%s3 + $0xf8] sm:$0xff]
          %v8223 = vld [vmem:[%s3 + $0x100] sm:$0xff]
          %v8224 = vld [vmem:[%s3 + $0x108] sm:$0xff]
          %v8225 = vld [vmem:[%s3 + $0x110] sm:$0xff]
          %v8226 = vld [vmem:[%s3 + $0x118] sm:$0xff]
          %v8227 = vld [vmem:[%s3 + $0x120] sm:$0xff]
          %v8228 = vld [vmem:[%s3 + $0x128] sm:$0xff]
          %v8229 = vld [vmem:[%s3 + $0x130] sm:$0xff]
          %v8230 = vld [vmem:[%s3 + $0x138] sm:$0xff]
          %v8231 = vld [vmem:[%s3 + $0x140] sm:$0xff]
          %v8232 = vld [vmem:[%s3 + $0x148] sm:$0xff]
          %v8233 = vld [vmem:[%s3 + $0x150] sm:$0xff]
          %v8234 = vld [vmem:[%s3 + $0x158] sm:$0xff]
          %v8235 = vld [vmem:[%s3 + $0x160] sm:$0xff]
          %v8236 = vld [vmem:[%s3 + $0x168] sm:$0xff]
          %v8237 = vld [vmem:[%s3 + $0x170] sm:$0xff]
          %v8238 = vld [vmem:[%s3 + $0x178] sm:$0xff]
          %v8239 = vld [vmem:[%s3 + $0x180] sm:$0xff]
          %v8240 = vld [vmem:[%s3 + $0x188] sm:$0xff]
          %v8241 = vld [vmem:[%s3 + $0x190] sm:$0xff]
          %v8242 = vld [vmem:[%s3 + $0x198] sm:$0xff]
          %v8243 = vld [vmem:[%s3 + $0x1a0] sm:$0xff]
          %v8244 = vld [vmem:[%s3 + $0x1a8] sm:$0xff]
          %v8245 = vld [vmem:[%s3 + $0x1b0] sm:$0xff]
          %v8246 = vld [vmem:[%s3 + $0x1b8] sm:$0xff]
          %v8247 = vld [vmem:[%s3 + $0x1c0] sm:$0xff]
          %v8248 = vld [vmem:[%s3 + $0x1c8] sm:$0xff]
          %v8249 = vld [vmem:[%s3 + $0x1d0] sm:$0xff]
          %v8250 = vld [vmem:[%s3 + $0x1d8] sm:$0xff]
          %v8251 = vld [vmem:[%s3 + $0x1e0] sm:$0xff]
          %v8252 = vld [vmem:[%s3 + $0x1e8] sm:$0xff]
          %v8253 = vld [vmem:[%s3 + $0x1f0] sm:$0xff]
          %v8254 = vld [vmem:[%s3 + $0x1f8] sm:$0xff]
          %v8255 = vld [vmem:[%s3 + $0x200] sm:$0xff]
          %v8256 = vld [vmem:[%s3 + $0x208] sm:$0xff]
          %v8257 = vld [vmem:[%s3 + $0x210] sm:$0xff]
          %v8258 = vld [vmem:[%s3 + $0x218] sm:$0xff]
          %v8259 = vld [vmem:[%s3 + $0x220] sm:$0xff]
          %v8260 = vld [vmem:[%s3 + $0x228] sm:$0xff]
          %v8261 = vld [vmem:[%s3 + $0x230] sm:$0xff]
          %v8262 = vld [vmem:[%s3 + $0x238] sm:$0xff]
          %v8263 = vld [vmem:[%s3 + $0x240] sm:$0xff]
          %v8264 = vld [vmem:[%s3 + $0x248] sm:$0xff]
          %v8265 = vld [vmem:[%s3 + $0x250] sm:$0xff]
          %v8266 = vld [vmem:[%s3 + $0x258] sm:$0xff]
          %v8267 = vld [vmem:[%s3 + $0x260] sm:$0xff]
          %v8268 = vld [vmem:[%s3 + $0x268] sm:$0xff]
          %v8269 = vld [vmem:[%s3 + $0x270] sm:$0xff]
          %v8270 = vld [vmem:[%s3 + $0x278] sm:$0xff]
          %v8271 = vld [vmem:[%s4] sm:$0x1]
          %v8273 = vlaneseq
          %v8274 = vshrl.u32 %v8273, 7
          %v8275 = vsub.s32 0, %v8274
          %v8276 = vrot.slane %v8271, %v8275
          %8278 = vmatprep.subr.mxu0 0.0
          %8279 = vmatpush1.msra.mxu0 %v8191
          %8280 = vmatprep.subr.mxu0 0.0
          %8281 = vmatpush1.msra.mxu0 %v8192
          %8282 = vmatprep.subr.mxu0 0.0
          %8283 = vmatpush1.msra.mxu0 %v8193
          %8284 = vmatprep.subr.mxu0 0.0
          %8285 = vmatpush1.msra.mxu0 %v8194
          %8286 = vmatprep.subr.mxu0 0.0
          %8287 = vmatpush1.msra.mxu0 %v8195
          %8288 = vmatprep.subr.mxu0 0.0
          %8289 = vmatpush1.msra.mxu0 %v8196
          %8290 = vmatprep.subr.mxu0 0.0
          %8291 = vmatpush1.msra.mxu0 %v8197
          %8292 = vmatprep.subr.mxu0 0.0
          %8293 = vmatpush1.msra.mxu0 %v8198
          %8294 = vmatprep.subr.mxu0 0.0
          %8295 = vmatpush1.msra.mxu0 %v8199
          %8296 = vmatprep.subr.mxu0 0.0
          %8297 = vmatpush1.msra.mxu0 %v8200
          %8298 = vmatprep.subr.mxu0 0.0
          %8299 = vmatpush1.msra.mxu0 %v8201
          %8300 = vmatprep.subr.mxu0 0.0
          %8301 = vmatpush1.msra.mxu0 %v8202
          %8302 = vmatprep.subr.mxu0 0.0
          %8303 = vmatpush1.msra.mxu0 %v8203
          %8304 = vmatprep.subr.mxu0 0.0
          %8305 = vmatpush1.msra.mxu0 %v8204
          %8306 = vmatprep.subr.mxu0 0.0
          %8307 = vmatpush1.msra.mxu0 %v8205
          %8308 = vmatprep.subr.mxu0 0.0
          %8309 = vmatpush1.msra.mxu0 %v8206
          %8310 = vmatprep.subr.mxu0 0.0
          %8311 = vmatpush1.msra.mxu0 %v8207
          %8312 = vmatprep.subr.mxu0 0.0
          %8313 = vmatpush1.msra.mxu0 %v8208
          %8314 = vmatprep.subr.mxu0 0.0
          %8315 = vmatpush1.msra.mxu0 %v8209
          %8316 = vmatprep.subr.mxu0 0.0
          %8317 = vmatpush1.msra.mxu0 %v8210
          %8318 = vmatprep.subr.mxu0 0.0
          %8319 = vmatpush1.msra.mxu0 %v8211
          %8320 = vmatprep.subr.mxu0 0.0
          %8321 = vmatpush1.msra.mxu0 %v8212
          %8322 = vmatprep.subr.mxu0 0.0
          %8323 = vmatpush1.msra.mxu0 %v8213
          %8324 = vmatprep.subr.mxu0 0.0
          %8325 = vmatpush1.msra.mxu0 %v8214
          %8326 = vmatprep.subr.mxu0 0.0
          %8327 = vmatpush1.msra.mxu0 %v8215
          %8328 = vmatprep.subr.mxu0 0.0
          %8329 = vmatpush1.msra.mxu0 %v8216
          %8330 = vmatprep.subr.mxu0 0.0
          %8331 = vmatpush1.msra.mxu0 %v8217
          %8332 = vmatprep.subr.mxu0 0.0
          %8333 = vmatpush1.msra.mxu0 %v8218
          %8334 = vmatprep.subr.mxu0 0.0
          %8335 = vmatpush1.msra.mxu0 %v8219
          %8336 = vmatprep.subr.mxu0 0.0
          %8337 = vmatpush1.msra.mxu0 %v8220
          %8338 = vmatprep.subr.mxu0 0.0
          %8339 = vmatpush1.msra.mxu0 %v8221
          %8340 = vmatprep.subr.mxu0 0.0
          %8341 = vmatpush1.msra.mxu0 %v8222
          %8342 = vmatprep.mubr.f32.mxu0 %v8187
          %8343 = vmatmul.mubr.f32.gmra.mrb[0].mxu0 %v8186
          %v8344 = vpop.f32.mrb[0].mxu0
          %v8345 = vadd.f32 %v8276, %v8344
          %v8346 = vpop.f32.mrb[0].mxu0
          %8347 = vdwg.mxu0
          %8348 = vmatprep.subr.mxu0 0.0
          %8349 = vmatpush1.msra.mxu0 %v8223
          %8350 = vmatprep.subr.mxu0 0.0
          %8351 = vmatpush1.msra.mxu0 %v8224
          %8352 = vmatprep.subr.mxu0 0.0
          %8353 = vmatpush1.msra.mxu0 %v8225
          %8354 = vmatprep.subr.mxu0 0.0
          %8355 = vmatpush1.msra.mxu0 %v8226
          %8356 = vmatprep.subr.mxu0 0.0
          %8357 = vmatpush1.msra.mxu0 %v8227
          %8358 = vmatprep.subr.mxu0 0.0
          %8359 = vmatpush1.msra.mxu0 %v8228
          %8360 = vmatprep.subr.mxu0 0.0
          %8361 = vmatpush1.msra.mxu0 %v8229
          %8362 = vmatprep.subr.mxu0 0.0
          %8363 = vmatpush1.msra.mxu0 %v8230
          %8364 = vmatprep.subr.mxu0 0.0
          %8365 = vmatpush1.msra.mxu0 %v8231
          %8366 = vmatprep.subr.mxu0 0.0
          %8367 = vmatpush1.msra.mxu0 %v8232
          %8368 = vmatprep.subr.mxu0 0.0
          %8369 = vmatpush1.msra.mxu0 %v8233
          %8370 = vmatprep.subr.mxu0 0.0
          %8371 = vmatpush1.msra.mxu0 %v8234
          %8372 = vmatprep.subr.mxu0 0.0
          %8373 = vmatpush1.msra.mxu0 %v8235
          %8374 = vmatprep.subr.mxu0 0.0
          %8375 = vmatpush1.msra.mxu0 %v8236
          %8376 = vmatprep.subr.mxu0 0.0
          %8377 = vmatpush1.msra.mxu0 %v8237
          %8378 = vmatprep.subr.mxu0 0.0
          %8379 = vmatpush1.msra.mxu0 %v8238
          %8380 = vmatprep.subr.mxu0 0.0
          %8381 = vmatpush1.msra.mxu0 %v8239
          %8382 = vmatprep.subr.mxu0 0.0
          %8383 = vmatpush1.msra.mxu0 %v8240
          %8384 = vmatprep.subr.mxu0 0.0
          %8385 = vmatpush1.msra.mxu0 %v8241
          %8386 = vmatprep.subr.mxu0 0.0
          %8387 = vmatpush1.msra.mxu0 %v8242
          %8388 = vmatprep.subr.mxu0 0.0
          %8389 = vmatpush1.msra.mxu0 %v8243
          %8390 = vmatprep.subr.mxu0 0.0
          %8391 = vmatpush1.msra.mxu0 %v8244
          %8392 = vmatprep.subr.mxu0 0.0
          %8393 = vmatpush1.msra.mxu0 %v8245
          %8394 = vmatprep.subr.mxu0 0.0
          %8395 = vmatpush1.msra.mxu0 %v8246
          %8396 = vmatprep.subr.mxu0 0.0
          %8397 = vmatpush1.msra.mxu0 %v8247
          %8398 = vmatprep.subr.mxu0 0.0
          %8399 = vmatpush1.msra.mxu0 %v8248
          %8400 = vmatprep.subr.mxu0 0.0
          %8401 = vmatpush1.msra.mxu0 %v8249
          %8402 = vmatprep.subr.mxu0 0.0
          %8403 = vmatpush1.msra.mxu0 %v8250
          %8404 = vmatprep.subr.mxu0 0.0
          %8405 = vmatpush1.msra.mxu0 %v8251
          %8406 = vmatprep.subr.mxu0 0.0
          %8407 = vmatpush1.msra.mxu0 %v8252
          %8408 = vmatprep.subr.mxu0 0.0
          %8409 = vmatpush1.msra.mxu0 %v8253
          %8410 = vmatprep.subr.mxu0 0.0
          %8411 = vmatpush1.msra.mxu0 %v8254
          %8412 = vmatprep.mubr.f32.mxu0 %v8189
          %8413 = vmatmul.mubr.f32.gmra.mrb[0].mxu0 %v8188
          %v8414 = vpop.f32.mrb[0].mxu0
          %v8415 = vadd.f32 %v8345, %v8414
          %v8416 = vpop.f32.mrb[0].mxu0
          %8417 = vdwg.mxu0
          %8418 = vmatprep.subr.mxu0 0.0
          %8419 = vmatpush1.msra.mxu0 %v8255
          %8420 = vmatprep.subr.mxu0 0.0
          %8421 = vmatpush1.msra.mxu0 %v8256
          %8422 = vmatprep.subr.mxu0 0.0
          %8423 = vmatpush1.msra.mxu0 %v8257
          %8424 = vmatprep.subr.mxu0 0.0
          %8425 = vmatpush1.msra.mxu0 %v8258
          %8426 = vmatprep.subr.mxu0 0.0
          %8427 = vmatpush1.msra.mxu0 %v8259
          %8428 = vmatprep.subr.mxu0 0.0
          %8429 = vmatpush1.msra.mxu0 %v8260
          %8430 = vmatprep.subr.mxu0 0.0
          %8431 = vmatpush1.msra.mxu0 %v8261
          %8432 = vmatprep.subr.mxu0 0.0
          %8433 = vmatpush1.msra.mxu0 %v8262
          %8434 = vmatprep.subr.mxu0 0.0
          %8435 = vmatpush1.msra.mxu0 %v8263
          %8436 = vmatprep.subr.mxu0 0.0
          %8437 = vmatpush1.msra.mxu0 %v8264
          %8438 = vmatprep.subr.mxu0 0.0
          %8439 = vmatpush1.msra.mxu0 %v8265
          %8440 = vmatprep.subr.mxu0 0.0
          %8441 = vmatpush1.msra.mxu0 %v8266
          %8442 = vmatprep.subr.mxu0 0.0
          %8443 = vmatpush1.msra.mxu0 %v8267
          %8444 = vmatprep.subr.mxu0 0.0
          %8445 = vmatpush1.msra.mxu0 %v8268
          %8446 = vmatprep.subr.mxu0 0.0
          %8447 = vmatpush1.msra.mxu0 %v8269
          %8448 = vmatprep.subr.mxu0 0.0
          %8449 = vmatpush1.msra.mxu0 %v8270
          %8450 = vmatprep.subr.mxu0 0.0
          %8451 = vmatpush1.msra.mxu0 0.0
          %8452 = vmatprep.subr.mxu0 0.0
          %8453 = vmatpush1.msra.mxu0 0.0
          %8454 = vmatprep.subr.mxu0 0.0
          %8455 = vmatpush1.msra.mxu0 0.0
          %8456 = vmatprep.subr.mxu0 0.0
          %8457 = vmatpush1.msra.mxu0 0.0
          %8458 = vmatprep.subr.mxu0 0.0
          %8459 = vmatpush1.msra.mxu0 0.0
          %8460 = vmatprep.subr.mxu0 0.0
          %8461 = vmatpush1.msra.mxu0 0.0
          %8462 = vmatprep.subr.mxu0 0.0
          %8463 = vmatpush1.msra.mxu0 0.0
          %8464 = vmatprep.subr.mxu0 0.0
          %8465 = vmatpush1.msra.mxu0 0.0
          %8466 = vmatprep.subr.mxu0 0.0
          %8467 = vmatpush1.msra.mxu0 0.0
          %8468 = vmatprep.subr.mxu0 0.0
          %8469 = vmatpush1.msra.mxu0 0.0
          %8470 = vmatprep.subr.mxu0 0.0
          %8471 = vmatpush1.msra.mxu0 0.0
          %8472 = vmatprep.subr.mxu0 0.0
          %8473 = vmatpush1.msra.mxu0 0.0
          %8474 = vmatprep.subr.mxu0 0.0
          %8475 = vmatpush1.msra.mxu0 0.0
          %8476 = vmatprep.subr.mxu0 0.0
          %8477 = vmatpush1.msra.mxu0 0.0
          %8478 = vmatprep.subr.mxu0 0.0
          %8479 = vmatpush1.msra.mxu0 0.0
          %8480 = vmatprep.subr.mxu0 0.0
          %8481 = vmatpush1.msra.mxu0 0.0
          %8482 = vmatprep.mubr.f32.mxu0 0.0
          %8483 = vmatmul.mubr.f32.gmra.mrb[0].mxu0 %v8190
          %v8484 = vpop.f32.mrb[0].mxu0
          %v8485 = vadd.f32 %v8415, %v8484
          %v8486 = vpop.f32.mrb[0].mxu0
          %8487 = vdwg.mxu0
          %8488 = vst [vmem:[%s240] sm:$0xff] %v8485
        $region48: #{encoder_linear_forward.1} parent=39 // pred_fallthru
          _
        %s8489 = sand.u32 %s153, 1
        %s8490 = scalar_lea.sflag [#allocation4], %s8489
        %s8491 = sand.u32 %s153, 1
        %s8492 = smul.addr %s8491, 8
        %s8493 = scalar_lea.vmem [#allocation3], %s8492
        // Predicated region
        $region49: #{encoder_linear_forward.1} parent=39 // pred_check
          %p8494 = pneg %p163
        $region50: #{encoder_linear_forward.1} parent=39 // pred_check_branch
          %8496 = sbr.rel (%p8494) target = $region52
        $region51: #{encoder_linear_forward.1} parent=39 // pred_region
          %s8498 = ssub.s32 128, 128
          %8499 = vsyncadd %s8490, %s8498
          %s8500 = smul.addr %s23, 128
          %s8501 = scalar_lea.hbm %s5, %s8500
          %s8503 = sshll.u32 %s8493, 4
          %s8504 = int_to_ptr.vmem [resolvable:$true] %s8503
          %8506 = dma.vmem_to_hbm [thread:$0]  %s8504, 128, %s8501, %s8490
        $region52: #{encoder_linear_forward.1} parent=39 // pred_fallthru
          _
      $region40: #{encoder_linear_forward.1} parent=5 // pred_fallthru
        _
      %p8507 = scmp.le.s32.totalorder 2, %s14
      // Predicated region
      $region53: #{encoder_linear_forward.1} parent=5 // pred_check
        %p8508 = pneg %p8507
      $region54: #{encoder_linear_forward.1} parent=5 // pred_check_branch
        %8510 = sbr.rel (%p8508) target = $region56
      $region55: #{encoder_linear_forward.1} parent=5 // pred_region
        %s8511 = ssub.s32 %s14, 2
        // Predicated region
        $region57: #{encoder_linear_forward.1} parent=55 // pred_check
          %p8512 = pneg %p169
        $region58: #{encoder_linear_forward.1} parent=55 // pred_check_branch
          %8514 = sbr.rel (%p8512) target = $region60
        $region59: #{encoder_linear_forward.1} parent=55 // pred_region
          %s8515 = sand.u32 %s154, 1
          %s8516 = scalar_lea.sflag [#allocation4], %s8515
          %s8517 = sand.u32 %s154, 1
          %s8518 = smul.addr %s8517, 8
          %s8519 = scalar_lea.vmem [#allocation3], %s8518
          %8520 = dma.done %s8516, 128
        $region60: #{encoder_linear_forward.1} parent=55 // pred_fallthru
          _
      $region56: #{encoder_linear_forward.1} parent=5 // pred_fallthru
        _
    $region6: #{encoder_linear_forward.1} parent=1 // loop_footer
      %s18 = sadd.s32 1, %s14
    $region7: #{encoder_linear_forward.1} parent=1 // loop_footer_branch
      %13 = sbr.rel target = $region3
    $region8: #{encoder_linear_forward.1} parent=1 // loop_exit
      _
    %8521 = vsyncpa [#allocation4], 1
    %s8522 = scalar_lea.sflag [#allocation4], 1
    %8523 = vsyncpa %s8522, 1

</llo_original>
